<compile_context>
chip_gen: v7x
topology: tpu7x:2x2x1
jax: 0.10.0
libtpu: 0.0.40
codegen_flags: <defaults>
</compile_context>

<pallas_src>
import functools

import jax
import jax.numpy as jnp
from jax.experimental import pallas as pl
from jax.experimental.pallas import tpu as pltpu

LN_EPS = 1e-5            # torch.nn.LayerNorm default
SQRT_HALF = 0.7071067811865476


def _round_up(n, m):
    return ((n + m - 1) // m) * m


# ----------------------------- kernel ---------------------------------------

def _layernorm(x, gamma, beta):
    # single-pass statistics: mean and E[x^2] in one sweep; var clamped >= 0.
    mu = jnp.mean(x, axis=-1, keepdims=True)
    ex2 = jnp.mean(x * x, axis=-1, keepdims=True)
    var = jnp.maximum(ex2 - mu * mu, 0.0)
    inv = jax.lax.rsqrt(var + LN_EPS)
    return (x - mu) * inv * gamma + beta


def _gelu_erf(x):
    # exact erf-based GELU, matching torch.nn.GELU() default
    return 0.5 * x * (1.0 + jax.lax.erf(x * SQRT_HALF))


def _gelu_tanh(x):
    # tanh approximation -> transcendental on the EUP slot (v6e/v7x VALU win),
    # ~1e-3 deviation from torch's exact GELU.
    return jax.nn.gelu(x, approximate=True)


def _mm(h, w_ref, bias):
    # cast the f32 activation to the weight dtype (bf16) for the MXU,
    # accumulate in f32, add bias in f32.
    return jnp.dot(h.astype(w_ref.dtype), w_ref[...],
                   preferred_element_type=jnp.float32) + bias


def encoder_kernel(x_ref,
                   w1_ref, r1w1_ref, r1w2_ref,
                   w2_ref, r2w1_ref, r2w2_ref,
                   w3_ref,
                   v1024_ref, v512_ref, b3_ref,
                   o_ref, *, approximate_gelu=False):
    # v1024 rows: 0 b1, 1 g1, 2 be1, 3 r1b1, 4 r1g1, 5 r1be1, 6 r1b2, 7 r1g2, 8 r1be2
    # v512  rows: 0 b2, 1 g2, 2 be2, 3 r2b1, 4 r2g1, 5 r2be1, 6 r2b2, 7 r2g2, 8 r2be2
    gelu = _gelu_tanh if approximate_gelu else _gelu_erf

    def row(ref, i):
        return ref[i:i + 1, :]          # static slice, shape (1, dim)

    x = x_ref[...].astype(jnp.float32)

    # --- Linear(input_dim, 1024) -> LN -> GELU ---
    h = _mm(x, w1_ref, row(v1024_ref, 0))
    h = gelu(_layernorm(h, row(v1024_ref, 1), row(v1024_ref, 2)))

    # --- ResidualBlock(1024) ---
    t = _mm(h, r1w1_ref, row(v1024_ref, 3))
    t = gelu(_layernorm(t, row(v1024_ref, 4), row(v1024_ref, 5)))
    # TODO(synk): Dropout(0.05) treated as identity (eval-mode semantics).
    t = _mm(t, r1w2_ref, row(v1024_ref, 6))
    h = h + _layernorm(t, row(v1024_ref, 7), row(v1024_ref, 8))

    # --- Linear(1024, 512) -> LN -> GELU ---
    h = _mm(h, w2_ref, row(v512_ref, 0))
    h = gelu(_layernorm(h, row(v512_ref, 1), row(v512_ref, 2)))

    # --- ResidualBlock(512) ---
    t = _mm(h, r2w1_ref, row(v512_ref, 3))
    t = gelu(_layernorm(t, row(v512_ref, 4), row(v512_ref, 5)))
    t = _mm(t, r2w2_ref, row(v512_ref, 6))
    h = h + _layernorm(t, row(v512_ref, 7), row(v512_ref, 8))

    # --- Linear(512, latent) padded to a lane-dense 128-wide block ---
    out = _mm(h, w3_ref, b3_ref[...])
    o_ref[...] = out.astype(o_ref.dtype)


# ----------------------------- wrapper ---------------------------------------

def encoder_forward(x, kernel_params, latent_dim, tile_b=256,
                    gelu_approximate=False):
    (w1, r1w1, r1w2, w2, r2w1, r2w2, w3p, v1024, v512, b3p) = kernel_params
    B = x.shape[0]
    in_pad = w1.shape[0]          # lane-padded input width  (>=128)
    n_pad = w3p.shape[1]          # lane-padded output width (>=128)

    # pad x's feature dim to the lane-padded width of w1 (w1's extra rows are
    # zero, so the padding is a numerical no-op).
    if x.shape[1] != in_pad:
        x = jnp.pad(x, ((0, 0), (0, in_pad - x.shape[1])))

    # batch tile: multiple of 8 sublanes, <= tile_b, chosen so the grid has
    # >=2 steps whenever B allows it (keeps both v7x TensorCores busy).
    tb = min(tile_b, _round_up(max(pl.cdiv(B, 2), 8), 8))
    b_pad = _round_up(B, tb)
    if b_pad != B:
        x = jnp.pad(x, ((0, b_pad - B), (0, 0)))
    grid = (b_pad // tb,)

    def resident(p):
        # constant block index -> operand DMA'd once, VMEM-resident across steps
        return pl.BlockSpec(p.shape, lambda i: (0, 0))

    in_specs = [pl.BlockSpec((tb, in_pad), lambda i: (i, 0))]
    in_specs += [resident(p) for p in kernel_params]
    out_specs = pl.BlockSpec((tb, n_pad), lambda i: (i, 0))

    # VMEM budget: weights x2 (default BlockSpec double-buffering), double-
    # buffered x/out tiles, in-kernel f32 intermediates, headroom.  Clamped to
    # 48 MiB so it always fits v7x's 64 MiB physical VMEM; the computed value
    # (~25-32 MiB) stays under the clamp, so v5e/v6e aren't starved either.
    param_bytes = 2 * sum(int(p.size) * p.dtype.itemsize for p in kernel_params)
    io_bytes = 2 * tb * (in_pad + n_pad) * x.dtype.itemsize
    interm_bytes = 10 * tb * 1024 * 4
    vmem_limit = min(param_bytes + io_bytes + interm_bytes + (8 << 20), 48 << 20)

    kernel = functools.partial(encoder_kernel, approximate_gelu=gelu_approximate)
    out = pl.pallas_call(
        kernel,
        out_shape=jax.ShapeDtypeStruct((b_pad, n_pad), x.dtype),
        grid=grid,
        in_specs=in_specs,
        out_specs=out_specs,
        compiler_params=pltpu.CompilerParams(
            dimension_semantics=("parallel",),     # megacore batch sharding
            vmem_limit_bytes=vmem_limit,
        ),
    )(x, *kernel_params)
    return out[:B, :latent_dim]


# ----------------- deterministic parameter construction ----------------------

def _linear_params(key, fan_in, fan_out):
    kw, kb = jax.random.split(key)
    bound = 1.0 / float(fan_in) ** 0.5
    w = jax.random.uniform(kw, (fan_in, fan_out), jnp.float32, -bound, bound)
    b = jax.random.uniform(kb, (fan_out,), jnp.float32, -bound, bound)
    return w, b


def make_raw_params(key, input_dim, latent_dim):
    """Torch-layout (but (in,out)-transposed) f32 parameters."""
    ks = jax.random.split(key, 7)
    w1, b1 = _linear_params(ks[0], input_dim, 1024)
    r1w1, r1b1 = _linear_params(ks[1], 1024, 1024)
    r1w2, r1b2 = _linear_params(ks[2], 1024, 1024)
    w2, b2 = _linear_params(ks[3], 1024, 512)
    r2w1, r2b1 = _linear_params(ks[4], 512, 512)
    r2w2, r2b2 = _linear_params(ks[5], 512, 512)
    w3, b3 = _linear_params(ks[6], 512, latent_dim)
    ones, zeros = jnp.ones, jnp.zeros
    return dict(
        w1=w1, b1=b1, g1=ones(1024), be1=zeros(1024),
        r1w1=r1w1, r1b1=r1b1, r1g1=ones(1024), r1be1=zeros(1024),
        r1w2=r1w2, r1b2=r1b2, r1g2=ones(1024), r1be2=zeros(1024),
        w2=w2, b2=b2, g2=ones(512), be2=zeros(512),
        r2w1=r2w1, r2b1=r2b1, r2g1=ones(512), r2be1=zeros(512),
        r2w2=r2w2, r2b2=r2b2, r2g2=ones(512), r2be2=zeros(512),
        w3=w3, b3=b3,
    )


def pack_params(raw, input_dim, latent_dim, weight_dtype=jnp.bfloat16):
    """Kernel operand layout: bf16 weights (w1 rows / w3 cols lane-padded),
    packed f32 bias/gamma/beta vectors, padded f32 b3 row."""
    in_pad = max(128, _round_up(input_dim, 128))
    n_pad = max(128, _round_up(latent_dim, 128))
    w1p = jnp.zeros((in_pad, 1024), jnp.float32).at[:input_dim, :].set(raw["w1"])
    w3p = jnp.zeros((512, n_pad), jnp.float32).at[:, :latent_dim].set(raw["w3"])
    b3p = jnp.zeros((1, n_pad), jnp.float32).at[0, :latent_dim].set(raw["b3"])
    v1024 = jnp.stack([raw[k] for k in
                       ("b1", "g1", "be1", "r1b1", "r1g1", "r1be1",
                        "r1b2", "r1g2", "r1be2")]).astype(jnp.float32)
    v512 = jnp.stack([raw[k] for k in
                      ("b2", "g2", "be2", "r2b1", "r2g1", "r2be1",
                       "r2b2", "r2g2", "r2be2")]).astype(jnp.float32)
    wd = weight_dtype
    return (w1p.astype(wd), raw["r1w1"].astype(wd), raw["r1w2"].astype(wd),
            raw["w2"].astype(wd), raw["r2w1"].astype(wd), raw["r2w2"].astype(wd),
            w3p.astype(wd), v1024, v512, b3p)


# -------------------- pure-JAX reference (same numerics) ---------------------

def encoder_ref(x, raw, weight_dtype=jnp.bfloat16):
    wd = weight_dtype

    def mm(h, w, b):
        return jnp.dot(h.astype(wd), w.astype(wd),
                       preferred_element_type=jnp.float32) + b

    def ln(v, g, b):
        mu = v.mean(-1, keepdims=True)
        var = ((v - mu) ** 2).mean(-1, keepdims=True)
        return (v - mu) * jax.lax.rsqrt(var + LN_EPS) * g + b

    def gelu(v):
        return 0.5 * v * (1.0 + jax.lax.erf(v * SQRT_HALF))

    h = gelu(ln(mm(x, raw["w1"], raw["b1"]), raw["g1"], raw["be1"]))
    t = gelu(ln(mm(h, raw["r1w1"], raw["r1b1"]), raw["r1g1"], raw["r1be1"]))
    h = h + ln(mm(t, raw["r1w2"], raw["r1b2"]), raw["r1g2"], raw["r1be2"])
    h = gelu(ln(mm(h, raw["w2"], raw["b2"]), raw["g2"], raw["be2"]))
    t = gelu(ln(mm(h, raw["r2w1"], raw["r2b1"]), raw["r2g1"], raw["r2be1"]))
    h = h + ln(mm(t, raw["r2w2"], raw["r2b2"]), raw["r2g2"], raw["r2be2"])
    return mm(h, raw["w3"], raw["b3"])


if __name__ == "__main__":
    INPUT_DIM, LATENT_DIM = 32, 16

    key = jax.random.PRNGKey(0)
    kp, kx1, kx2 = jax.random.split(key, 3)
    raw = make_raw_params(kp, INPUT_DIM, LATENT_DIM)
    kernel_params = pack_params(raw, INPUT_DIM, LATENT_DIM)

    # small single-tile case and a multi-tile case (exercises grid + padding)
    for b, kk in ((8, kx1), (200, kx2)):
        x = jax.random.normal(kk, (b, INPUT_DIM), jnp.float32)
        out = jax.block_until_ready(encoder_forward(x, kernel_params, LATENT_DIM))
        ref = encoder_ref(x, raw)
        assert out.shape == (b, LATENT_DIM), out.shape
        err = float(jnp.max(jnp.abs(out - ref)))
        assert err < 1e-2, err

    print("KERNEL_OK")
</pallas_src>

<mosaic_0001>
module attributes {stable_mosaic.version = 11 : i64} {
  func.func @encoder_kernel(%arg0: i32, %arg1: memref<8x128xf32, #tpu.memory_space<vmem>>, %arg2: memref<128x1024xbf16, #tpu.memory_space<vmem>>, %arg3: memref<1024x1024xbf16, #tpu.memory_space<vmem>>, %arg4: memref<1024x1024xbf16, #tpu.memory_space<vmem>>, %arg5: memref<1024x512xbf16, #tpu.memory_space<vmem>>, %arg6: memref<512x512xbf16, #tpu.memory_space<vmem>>, %arg7: memref<512x512xbf16, #tpu.memory_space<vmem>>, %arg8: memref<512x128xbf16, #tpu.memory_space<vmem>>, %arg9: memref<9x1024xf32, #tpu.memory_space<vmem>>, %arg10: memref<9x512xf32, #tpu.memory_space<vmem>>, %arg11: memref<1x128xf32, #tpu.memory_space<vmem>>, %arg12: memref<8x128xf32, #tpu.memory_space<vmem>>) attributes {dimension_semantics = [#tpu.dimension_semantics<parallel>], iteration_bounds = array<i64: 1>, scalar_prefetch = 0 : i64, scratch_operands = 0 : i64, tpu.core_type = #tpu.core_type<tc>, window_params = [{transform_indices = @transform_0, window_bounds = array<i64: 8, 128>}, {pipeline_mode = #tpu.pipeline_mode<synchronous>, transform_indices = @transform_1, window_bounds = array<i64: 128, 1024>}, {pipeline_mode = #tpu.pipeline_mode<synchronous>, transform_indices = @transform_2, window_bounds = array<i64: 1024, 1024>}, {pipeline_mode = #tpu.pipeline_mode<synchronous>, transform_indices = @transform_3, window_bounds = array<i64: 1024, 1024>}, {pipeline_mode = #tpu.pipeline_mode<synchronous>, transform_indices = @transform_4, window_bounds = array<i64: 1024, 512>}, {pipeline_mode = #tpu.pipeline_mode<synchronous>, transform_indices = @transform_5, window_bounds = array<i64: 512, 512>}, {pipeline_mode = #tpu.pipeline_mode<synchronous>, transform_indices = @transform_6, window_bounds = array<i64: 512, 512>}, {pipeline_mode = #tpu.pipeline_mode<synchronous>, transform_indices = @transform_7, window_bounds = array<i64: 512, 128>}, {pipeline_mode = #tpu.pipeline_mode<synchronous>, transform_indices = @transform_8, window_bounds = array<i64: 9, 1024>}, {pipeline_mode = #tpu.pipeline_mode<synchronous>, transform_indices = @transform_9, window_bounds = array<i64: 9, 512>}, {pipeline_mode = #tpu.pipeline_mode<synchronous>, transform_indices = @transform_10, window_bounds = array<i64: 1, 128>}, {transform_indices = @transform_11, window_bounds = array<i64: 8, 128>}]} {
    %c0 = arith.constant 0 : index
    %c0_0 = arith.constant 0 : index
    %0 = vector.load %arg1[%c0, %c0_0] : memref<8x128xf32, #tpu.memory_space<vmem>>, vector<8x128xf32>
    %c0_1 = arith.constant 0 : index
    %c0_2 = arith.constant 0 : index
    %1 = vector.load %arg9[%c0_1, %c0_2] : memref<9x1024xf32, #tpu.memory_space<vmem>>, vector<1x1024xf32>
    %2 = arith.truncf %0 : vector<8x128xf32> to vector<8x128xbf16>
    %c0_3 = arith.constant 0 : index
    %c0_4 = arith.constant 0 : index
    %3 = vector.load %arg2[%c0_3, %c0_4] : memref<128x1024xbf16, #tpu.memory_space<vmem>>, vector<128x1024xbf16>
    %cst = arith.constant dense<0.000000e+00> : vector<8x1024xf32>
    %4 = tpu.matmul %2, %3, %cst {dimension_numbers = #tpu.dot_dimension_numbers<[1], [0], [0], [1], [0, 0, 1, 1], [], []>} : vector<8x128xbf16>, vector<128x1024xbf16>, vector<8x1024xf32> -> vector<8x1024xf32>
    %5 = vector.broadcast %1 : vector<1x1024xf32> to vector<8x1024xf32>
    %6 = arith.addf %4, %5 : vector<8x1024xf32>
    %c1 = arith.constant 1 : index
    %c0_5 = arith.constant 0 : index
    %7 = vector.load %arg9[%c1, %c0_5] : memref<9x1024xf32, #tpu.memory_space<vmem>>, vector<1x1024xf32>
    %c2 = arith.constant 2 : index
    %c0_6 = arith.constant 0 : index
    %8 = vector.load %arg9[%c2, %c0_6] : memref<9x1024xf32, #tpu.memory_space<vmem>>, vector<1x1024xf32>
    %cst_7 = arith.constant dense<0.000000e+00> : vector<8xf32>
    %9 = vector.multi_reduction <add>, %6, %cst_7 [1] : vector<8x1024xf32> to vector<8xf32>
    %10 = vector.shape_cast %9 : vector<8xf32> to vector<8x1xf32>
    %cst_8 = arith.constant 1.024000e+03 : f32
    %11 = vector.broadcast %cst_8 : f32 to vector<8x1xf32>
    %12 = arith.divf %10, %11 : vector<8x1xf32>
    %13 = arith.mulf %6, %6 : vector<8x1024xf32>
    %cst_9 = arith.constant dense<0.000000e+00> : vector<8xf32>
    %14 = vector.multi_reduction <add>, %13, %cst_9 [1] : vector<8x1024xf32> to vector<8xf32>
    %15 = vector.shape_cast %14 : vector<8xf32> to vector<8x1xf32>
    %cst_10 = arith.constant 1.024000e+03 : f32
    %16 = vector.broadcast %cst_10 : f32 to vector<8x1xf32>
    %17 = arith.divf %15, %16 : vector<8x1xf32>
    %18 = arith.mulf %12, %12 : vector<8x1xf32>
    %19 = arith.subf %17, %18 : vector<8x1xf32>
    %cst_11 = arith.constant 0.000000e+00 : f32
    %20 = vector.broadcast %cst_11 : f32 to vector<8x1xf32>
    %21 = arith.maximumf %19, %20 : vector<8x1xf32>
    %cst_12 = arith.constant 9.99999974E-6 : f32
    %22 = vector.broadcast %cst_12 : f32 to vector<8x1xf32>
    %23 = arith.addf %21, %22 : vector<8x1xf32>
    %24 = math.rsqrt %23 : vector<8x1xf32>
    %25 = vector.broadcast %12 : vector<8x1xf32> to vector<8x1024xf32>
    %26 = arith.subf %6, %25 : vector<8x1024xf32>
    %27 = vector.broadcast %24 : vector<8x1xf32> to vector<8x1024xf32>
    %28 = arith.mulf %26, %27 : vector<8x1024xf32>
    %29 = vector.broadcast %7 : vector<1x1024xf32> to vector<8x1024xf32>
    %30 = arith.mulf %28, %29 : vector<8x1024xf32>
    %31 = vector.broadcast %8 : vector<1x1024xf32> to vector<8x1024xf32>
    %32 = arith.addf %30, %31 : vector<8x1024xf32>
    %cst_13 = arith.constant 5.000000e-01 : f32
    %33 = vector.broadcast %cst_13 : f32 to vector<8x1024xf32>
    %34 = arith.mulf %33, %32 : vector<8x1024xf32>
    %cst_14 = arith.constant 0.707106769 : f32
    %35 = vector.broadcast %cst_14 : f32 to vector<8x1024xf32>
    %36 = arith.mulf %32, %35 : vector<8x1024xf32>
    %37 = math.erf %36 : vector<8x1024xf32>
    %cst_15 = arith.constant 1.000000e+00 : f32
    %38 = vector.broadcast %cst_15 : f32 to vector<8x1024xf32>
    %39 = arith.addf %38, %37 : vector<8x1024xf32>
    %40 = arith.mulf %34, %39 : vector<8x1024xf32>
    %c3 = arith.constant 3 : index
    %c0_16 = arith.constant 0 : index
    %41 = vector.load %arg9[%c3, %c0_16] : memref<9x1024xf32, #tpu.memory_space<vmem>>, vector<1x1024xf32>
    %42 = arith.truncf %40 : vector<8x1024xf32> to vector<8x1024xbf16>
    %c0_17 = arith.constant 0 : index
    %c0_18 = arith.constant 0 : index
    %43 = vector.load %arg3[%c0_17, %c0_18] : memref<1024x1024xbf16, #tpu.memory_space<vmem>>, vector<1024x1024xbf16>
    %cst_19 = arith.constant dense<0.000000e+00> : vector<8x1024xf32>
    %44 = tpu.matmul %42, %43, %cst_19 {dimension_numbers = #tpu.dot_dimension_numbers<[1], [0], [0], [1], [0, 0, 1, 1], [], []>} : vector<8x1024xbf16>, vector<1024x1024xbf16>, vector<8x1024xf32> -> vector<8x1024xf32>
    %45 = vector.broadcast %41 : vector<1x1024xf32> to vector<8x1024xf32>
    %46 = arith.addf %44, %45 : vector<8x1024xf32>
    %c4 = arith.constant 4 : index
    %c0_20 = arith.constant 0 : index
    %47 = vector.load %arg9[%c4, %c0_20] : memref<9x1024xf32, #tpu.memory_space<vmem>>, vector<1x1024xf32>
    %c5 = arith.constant 5 : index
    %c0_21 = arith.constant 0 : index
    %48 = vector.load %arg9[%c5, %c0_21] : memref<9x1024xf32, #tpu.memory_space<vmem>>, vector<1x1024xf32>
    %cst_22 = arith.constant dense<0.000000e+00> : vector<8xf32>
    %49 = vector.multi_reduction <add>, %46, %cst_22 [1] : vector<8x1024xf32> to vector<8xf32>
    %50 = vector.shape_cast %49 : vector<8xf32> to vector<8x1xf32>
    %cst_23 = arith.constant 1.024000e+03 : f32
    %51 = vector.broadcast %cst_23 : f32 to vector<8x1xf32>
    %52 = arith.divf %50, %51 : vector<8x1xf32>
    %53 = arith.mulf %46, %46 : vector<8x1024xf32>
    %cst_24 = arith.constant dense<0.000000e+00> : vector<8xf32>
    %54 = vector.multi_reduction <add>, %53, %cst_24 [1] : vector<8x1024xf32> to vector<8xf32>
    %55 = vector.shape_cast %54 : vector<8xf32> to vector<8x1xf32>
    %cst_25 = arith.constant 1.024000e+03 : f32
    %56 = vector.broadcast %cst_25 : f32 to vector<8x1xf32>
    %57 = arith.divf %55, %56 : vector<8x1xf32>
    %58 = arith.mulf %52, %52 : vector<8x1xf32>
    %59 = arith.subf %57, %58 : vector<8x1xf32>
    %cst_26 = arith.constant 0.000000e+00 : f32
    %60 = vector.broadcast %cst_26 : f32 to vector<8x1xf32>
    %61 = arith.maximumf %59, %60 : vector<8x1xf32>
    %cst_27 = arith.constant 9.99999974E-6 : f32
    %62 = vector.broadcast %cst_27 : f32 to vector<8x1xf32>
    %63 = arith.addf %61, %62 : vector<8x1xf32>
    %64 = math.rsqrt %63 : vector<8x1xf32>
    %65 = vector.broadcast %52 : vector<8x1xf32> to vector<8x1024xf32>
    %66 = arith.subf %46, %65 : vector<8x1024xf32>
    %67 = vector.broadcast %64 : vector<8x1xf32> to vector<8x1024xf32>
    %68 = arith.mulf %66, %67 : vector<8x1024xf32>
    %69 = vector.broadcast %47 : vector<1x1024xf32> to vector<8x1024xf32>
    %70 = arith.mulf %68, %69 : vector<8x1024xf32>
    %71 = vector.broadcast %48 : vector<1x1024xf32> to vector<8x1024xf32>
    %72 = arith.addf %70, %71 : vector<8x1024xf32>
    %cst_28 = arith.constant 5.000000e-01 : f32
    %73 = vector.broadcast %cst_28 : f32 to vector<8x1024xf32>
    %74 = arith.mulf %73, %72 : vector<8x1024xf32>
    %cst_29 = arith.constant 0.707106769 : f32
    %75 = vector.broadcast %cst_29 : f32 to vector<8x1024xf32>
    %76 = arith.mulf %72, %75 : vector<8x1024xf32>
    %77 = math.erf %76 : vector<8x1024xf32>
    %cst_30 = arith.constant 1.000000e+00 : f32
    %78 = vector.broadcast %cst_30 : f32 to vector<8x1024xf32>
    %79 = arith.addf %78, %77 : vector<8x1024xf32>
    %80 = arith.mulf %74, %79 : vector<8x1024xf32>
    %c6 = arith.constant 6 : index
    %c0_31 = arith.constant 0 : index
    %81 = vector.load %arg9[%c6, %c0_31] : memref<9x1024xf32, #tpu.memory_space<vmem>>, vector<1x1024xf32>
    %82 = arith.truncf %80 : vector<8x1024xf32> to vector<8x1024xbf16>
    %c0_32 = arith.constant 0 : index
    %c0_33 = arith.constant 0 : index
    %83 = vector.load %arg4[%c0_32, %c0_33] : memref<1024x1024xbf16, #tpu.memory_space<vmem>>, vector<1024x1024xbf16>
    %cst_34 = arith.constant dense<0.000000e+00> : vector<8x1024xf32>
    %84 = tpu.matmul %82, %83, %cst_34 {dimension_numbers = #tpu.dot_dimension_numbers<[1], [0], [0], [1], [0, 0, 1, 1], [], []>} : vector<8x1024xbf16>, vector<1024x1024xbf16>, vector<8x1024xf32> -> vector<8x1024xf32>
    %85 = vector.broadcast %81 : vector<1x1024xf32> to vector<8x1024xf32>
    %86 = arith.addf %84, %85 : vector<8x1024xf32>
    %c7 = arith.constant 7 : index
    %c0_35 = arith.constant 0 : index
    %87 = vector.load %arg9[%c7, %c0_35] : memref<9x1024xf32, #tpu.memory_space<vmem>>, vector<1x1024xf32>
    %c8 = arith.constant 8 : index
    %c0_36 = arith.constant 0 : index
    %88 = vector.load %arg9[%c8, %c0_36] : memref<9x1024xf32, #tpu.memory_space<vmem>>, vector<1x1024xf32>
    %cst_37 = arith.constant dense<0.000000e+00> : vector<8xf32>
    %89 = vector.multi_reduction <add>, %86, %cst_37 [1] : vector<8x1024xf32> to vector<8xf32>
    %90 = vector.shape_cast %89 : vector<8xf32> to vector<8x1xf32>
    %cst_38 = arith.constant 1.024000e+03 : f32
    %91 = vector.broadcast %cst_38 : f32 to vector<8x1xf32>
    %92 = arith.divf %90, %91 : vector<8x1xf32>
    %93 = arith.mulf %86, %86 : vector<8x1024xf32>
    %cst_39 = arith.constant dense<0.000000e+00> : vector<8xf32>
    %94 = vector.multi_reduction <add>, %93, %cst_39 [1] : vector<8x1024xf32> to vector<8xf32>
    %95 = vector.shape_cast %94 : vector<8xf32> to vector<8x1xf32>
    %cst_40 = arith.constant 1.024000e+03 : f32
    %96 = vector.broadcast %cst_40 : f32 to vector<8x1xf32>
    %97 = arith.divf %95, %96 : vector<8x1xf32>
    %98 = arith.mulf %92, %92 : vector<8x1xf32>
    %99 = arith.subf %97, %98 : vector<8x1xf32>
    %cst_41 = arith.constant 0.000000e+00 : f32
    %100 = vector.broadcast %cst_41 : f32 to vector<8x1xf32>
    %101 = arith.maximumf %99, %100 : vector<8x1xf32>
    %cst_42 = arith.constant 9.99999974E-6 : f32
    %102 = vector.broadcast %cst_42 : f32 to vector<8x1xf32>
    %103 = arith.addf %101, %102 : vector<8x1xf32>
    %104 = math.rsqrt %103 : vector<8x1xf32>
    %105 = vector.broadcast %92 : vector<8x1xf32> to vector<8x1024xf32>
    %106 = arith.subf %86, %105 : vector<8x1024xf32>
    %107 = vector.broadcast %104 : vector<8x1xf32> to vector<8x1024xf32>
    %108 = arith.mulf %106, %107 : vector<8x1024xf32>
    %109 = vector.broadcast %87 : vector<1x1024xf32> to vector<8x1024xf32>
    %110 = arith.mulf %108, %109 : vector<8x1024xf32>
    %111 = vector.broadcast %88 : vector<1x1024xf32> to vector<8x1024xf32>
    %112 = arith.addf %110, %111 : vector<8x1024xf32>
    %113 = arith.addf %40, %112 : vector<8x1024xf32>
    %c0_43 = arith.constant 0 : index
    %c0_44 = arith.constant 0 : index
    %114 = vector.load %arg10[%c0_43, %c0_44] : memref<9x512xf32, #tpu.memory_space<vmem>>, vector<1x512xf32>
    %115 = arith.truncf %113 : vector<8x1024xf32> to vector<8x1024xbf16>
    %c0_45 = arith.constant 0 : index
    %c0_46 = arith.constant 0 : index
    %116 = vector.load %arg5[%c0_45, %c0_46] : memref<1024x512xbf16, #tpu.memory_space<vmem>>, vector<1024x512xbf16>
    %cst_47 = arith.constant dense<0.000000e+00> : vector<8x512xf32>
    %117 = tpu.matmul %115, %116, %cst_47 {dimension_numbers = #tpu.dot_dimension_numbers<[1], [0], [0], [1], [0, 0, 1, 1], [], []>} : vector<8x1024xbf16>, vector<1024x512xbf16>, vector<8x512xf32> -> vector<8x512xf32>
    %118 = vector.broadcast %114 : vector<1x512xf32> to vector<8x512xf32>
    %119 = arith.addf %117, %118 : vector<8x512xf32>
    %c1_48 = arith.constant 1 : index
    %c0_49 = arith.constant 0 : index
    %120 = vector.load %arg10[%c1_48, %c0_49] : memref<9x512xf32, #tpu.memory_space<vmem>>, vector<1x512xf32>
    %c2_50 = arith.constant 2 : index
    %c0_51 = arith.constant 0 : index
    %121 = vector.load %arg10[%c2_50, %c0_51] : memref<9x512xf32, #tpu.memory_space<vmem>>, vector<1x512xf32>
    %cst_52 = arith.constant dense<0.000000e+00> : vector<8xf32>
    %122 = vector.multi_reduction <add>, %119, %cst_52 [1] : vector<8x512xf32> to vector<8xf32>
    %123 = vector.shape_cast %122 : vector<8xf32> to vector<8x1xf32>
    %cst_53 = arith.constant 5.120000e+02 : f32
    %124 = vector.broadcast %cst_53 : f32 to vector<8x1xf32>
    %125 = arith.divf %123, %124 : vector<8x1xf32>
    %126 = arith.mulf %119, %119 : vector<8x512xf32>
    %cst_54 = arith.constant dense<0.000000e+00> : vector<8xf32>
    %127 = vector.multi_reduction <add>, %126, %cst_54 [1] : vector<8x512xf32> to vector<8xf32>
    %128 = vector.shape_cast %127 : vector<8xf32> to vector<8x1xf32>
    %cst_55 = arith.constant 5.120000e+02 : f32
    %129 = vector.broadcast %cst_55 : f32 to vector<8x1xf32>
    %130 = arith.divf %128, %129 : vector<8x1xf32>
    %131 = arith.mulf %125, %125 : vector<8x1xf32>
    %132 = arith.subf %130, %131 : vector<8x1xf32>
    %cst_56 = arith.constant 0.000000e+00 : f32
    %133 = vector.broadcast %cst_56 : f32 to vector<8x1xf32>
    %134 = arith.maximumf %132, %133 : vector<8x1xf32>
    %cst_57 = arith.constant 9.99999974E-6 : f32
    %135 = vector.broadcast %cst_57 : f32 to vector<8x1xf32>
    %136 = arith.addf %134, %135 : vector<8x1xf32>
    %137 = math.rsqrt %136 : vector<8x1xf32>
    %138 = vector.broadcast %125 : vector<8x1xf32> to vector<8x512xf32>
    %139 = arith.subf %119, %138 : vector<8x512xf32>
    %140 = vector.broadcast %137 : vector<8x1xf32> to vector<8x512xf32>
    %141 = arith.mulf %139, %140 : vector<8x512xf32>
    %142 = vector.broadcast %120 : vector<1x512xf32> to vector<8x512xf32>
    %143 = arith.mulf %141, %142 : vector<8x512xf32>
    %144 = vector.broadcast %121 : vector<1x512xf32> to vector<8x512xf32>
    %145 = arith.addf %143, %144 : vector<8x512xf32>
    %cst_58 = arith.constant 5.000000e-01 : f32
    %146 = vector.broadcast %cst_58 : f32 to vector<8x512xf32>
    %147 = arith.mulf %146, %145 : vector<8x512xf32>
    %cst_59 = arith.constant 0.707106769 : f32
    %148 = vector.broadcast %cst_59 : f32 to vector<8x512xf32>
    %149 = arith.mulf %145, %148 : vector<8x512xf32>
    %150 = math.erf %149 : vector<8x512xf32>
    %cst_60 = arith.constant 1.000000e+00 : f32
    %151 = vector.broadcast %cst_60 : f32 to vector<8x512xf32>
    %152 = arith.addf %151, %150 : vector<8x512xf32>
    %153 = arith.mulf %147, %152 : vector<8x512xf32>
    %c3_61 = arith.constant 3 : index
    %c0_62 = arith.constant 0 : index
    %154 = vector.load %arg10[%c3_61, %c0_62] : memref<9x512xf32, #tpu.memory_space<vmem>>, vector<1x512xf32>
    %155 = arith.truncf %153 : vector<8x512xf32> to vector<8x512xbf16>
    %c0_63 = arith.constant 0 : index
    %c0_64 = arith.constant 0 : index
    %156 = vector.load %arg6[%c0_63, %c0_64] : memref<512x512xbf16, #tpu.memory_space<vmem>>, vector<512x512xbf16>
    %cst_65 = arith.constant dense<0.000000e+00> : vector<8x512xf32>
    %157 = tpu.matmul %155, %156, %cst_65 {dimension_numbers = #tpu.dot_dimension_numbers<[1], [0], [0], [1], [0, 0, 1, 1], [], []>} : vector<8x512xbf16>, vector<512x512xbf16>, vector<8x512xf32> -> vector<8x512xf32>
    %158 = vector.broadcast %154 : vector<1x512xf32> to vector<8x512xf32>
    %159 = arith.addf %157, %158 : vector<8x512xf32>
    %c4_66 = arith.constant 4 : index
    %c0_67 = arith.constant 0 : index
    %160 = vector.load %arg10[%c4_66, %c0_67] : memref<9x512xf32, #tpu.memory_space<vmem>>, vector<1x512xf32>
    %c5_68 = arith.constant 5 : index
    %c0_69 = arith.constant 0 : index
    %161 = vector.load %arg10[%c5_68, %c0_69] : memref<9x512xf32, #tpu.memory_space<vmem>>, vector<1x512xf32>
    %cst_70 = arith.constant dense<0.000000e+00> : vector<8xf32>
    %162 = vector.multi_reduction <add>, %159, %cst_70 [1] : vector<8x512xf32> to vector<8xf32>
    %163 = vector.shape_cast %162 : vector<8xf32> to vector<8x1xf32>
    %cst_71 = arith.constant 5.120000e+02 : f32
    %164 = vector.broadcast %cst_71 : f32 to vector<8x1xf32>
    %165 = arith.divf %163, %164 : vector<8x1xf32>
    %166 = arith.mulf %159, %159 : vector<8x512xf32>
    %cst_72 = arith.constant dense<0.000000e+00> : vector<8xf32>
    %167 = vector.multi_reduction <add>, %166, %cst_72 [1] : vector<8x512xf32> to vector<8xf32>
    %168 = vector.shape_cast %167 : vector<8xf32> to vector<8x1xf32>
    %cst_73 = arith.constant 5.120000e+02 : f32
    %169 = vector.broadcast %cst_73 : f32 to vector<8x1xf32>
    %170 = arith.divf %168, %169 : vector<8x1xf32>
    %171 = arith.mulf %165, %165 : vector<8x1xf32>
    %172 = arith.subf %170, %171 : vector<8x1xf32>
    %cst_74 = arith.constant 0.000000e+00 : f32
    %173 = vector.broadcast %cst_74 : f32 to vector<8x1xf32>
    %174 = arith.maximumf %172, %173 : vector<8x1xf32>
    %cst_75 = arith.constant 9.99999974E-6 : f32
    %175 = vector.broadcast %cst_75 : f32 to vector<8x1xf32>
    %176 = arith.addf %174, %175 : vector<8x1xf32>
    %177 = math.rsqrt %176 : vector<8x1xf32>
    %178 = vector.broadcast %165 : vector<8x1xf32> to vector<8x512xf32>
    %179 = arith.subf %159, %178 : vector<8x512xf32>
    %180 = vector.broadcast %177 : vector<8x1xf32> to vector<8x512xf32>
    %181 = arith.mulf %179, %180 : vector<8x512xf32>
    %182 = vector.broadcast %160 : vector<1x512xf32> to vector<8x512xf32>
    %183 = arith.mulf %181, %182 : vector<8x512xf32>
    %184 = vector.broadcast %161 : vector<1x512xf32> to vector<8x512xf32>
    %185 = arith.addf %183, %184 : vector<8x512xf32>
    %cst_76 = arith.constant 5.000000e-01 : f32
    %186 = vector.broadcast %cst_76 : f32 to vector<8x512xf32>
    %187 = arith.mulf %186, %185 : vector<8x512xf32>
    %cst_77 = arith.constant 0.707106769 : f32
    %188 = vector.broadcast %cst_77 : f32 to vector<8x512xf32>
    %189 = arith.mulf %185, %188 : vector<8x512xf32>
    %190 = math.erf %189 : vector<8x512xf32>
    %cst_78 = arith.constant 1.000000e+00 : f32
    %191 = vector.broadcast %cst_78 : f32 to vector<8x512xf32>
    %192 = arith.addf %191, %190 : vector<8x512xf32>
    %193 = arith.mulf %187, %192 : vector<8x512xf32>
    %c6_79 = arith.constant 6 : index
    %c0_80 = arith.constant 0 : index
    %194 = vector.load %arg10[%c6_79, %c0_80] : memref<9x512xf32, #tpu.memory_space<vmem>>, vector<1x512xf32>
    %195 = arith.truncf %193 : vector<8x512xf32> to vector<8x512xbf16>
    %c0_81 = arith.constant 0 : index
    %c0_82 = arith.constant 0 : index
    %196 = vector.load %arg7[%c0_81, %c0_82] : memref<512x512xbf16, #tpu.memory_space<vmem>>, vector<512x512xbf16>
    %cst_83 = arith.constant dense<0.000000e+00> : vector<8x512xf32>
    %197 = tpu.matmul %195, %196, %cst_83 {dimension_numbers = #tpu.dot_dimension_numbers<[1], [0], [0], [1], [0, 0, 1, 1], [], []>} : vector<8x512xbf16>, vector<512x512xbf16>, vector<8x512xf32> -> vector<8x512xf32>
    %198 = vector.broadcast %194 : vector<1x512xf32> to vector<8x512xf32>
    %199 = arith.addf %197, %198 : vector<8x512xf32>
    %c7_84 = arith.constant 7 : index
    %c0_85 = arith.constant 0 : index
    %200 = vector.load %arg10[%c7_84, %c0_85] : memref<9x512xf32, #tpu.memory_space<vmem>>, vector<1x512xf32>
    %c8_86 = arith.constant 8 : index
    %c0_87 = arith.constant 0 : index
    %201 = vector.load %arg10[%c8_86, %c0_87] : memref<9x512xf32, #tpu.memory_space<vmem>>, vector<1x512xf32>
    %cst_88 = arith.constant dense<0.000000e+00> : vector<8xf32>
    %202 = vector.multi_reduction <add>, %199, %cst_88 [1] : vector<8x512xf32> to vector<8xf32>
    %203 = vector.shape_cast %202 : vector<8xf32> to vector<8x1xf32>
    %cst_89 = arith.constant 5.120000e+02 : f32
    %204 = vector.broadcast %cst_89 : f32 to vector<8x1xf32>
    %205 = arith.divf %203, %204 : vector<8x1xf32>
    %206 = arith.mulf %199, %199 : vector<8x512xf32>
    %cst_90 = arith.constant dense<0.000000e+00> : vector<8xf32>
    %207 = vector.multi_reduction <add>, %206, %cst_90 [1] : vector<8x512xf32> to vector<8xf32>
    %208 = vector.shape_cast %207 : vector<8xf32> to vector<8x1xf32>
    %cst_91 = arith.constant 5.120000e+02 : f32
    %209 = vector.broadcast %cst_91 : f32 to vector<8x1xf32>
    %210 = arith.divf %208, %209 : vector<8x1xf32>
    %211 = arith.mulf %205, %205 : vector<8x1xf32>
    %212 = arith.subf %210, %211 : vector<8x1xf32>
    %cst_92 = arith.constant 0.000000e+00 : f32
    %213 = vector.broadcast %cst_92 : f32 to vector<8x1xf32>
    %214 = arith.maximumf %212, %213 : vector<8x1xf32>
    %cst_93 = arith.constant 9.99999974E-6 : f32
    %215 = vector.broadcast %cst_93 : f32 to vector<8x1xf32>
    %216 = arith.addf %214, %215 : vector<8x1xf32>
    %217 = math.rsqrt %216 : vector<8x1xf32>
    %218 = vector.broadcast %205 : vector<8x1xf32> to vector<8x512xf32>
    %219 = arith.subf %199, %218 : vector<8x512xf32>
    %220 = vector.broadcast %217 : vector<8x1xf32> to vector<8x512xf32>
    %221 = arith.mulf %219, %220 : vector<8x512xf32>
    %222 = vector.broadcast %200 : vector<1x512xf32> to vector<8x512xf32>
    %223 = arith.mulf %221, %222 : vector<8x512xf32>
    %224 = vector.broadcast %201 : vector<1x512xf32> to vector<8x512xf32>
    %225 = arith.addf %223, %224 : vector<8x512xf32>
    %226 = arith.addf %153, %225 : vector<8x512xf32>
    %c0_94 = arith.constant 0 : index
    %c0_95 = arith.constant 0 : index
    %227 = vector.load %arg11[%c0_94, %c0_95] : memref<1x128xf32, #tpu.memory_space<vmem>>, vector<1x128xf32>
    %228 = arith.truncf %226 : vector<8x512xf32> to vector<8x512xbf16>
    %c0_96 = arith.constant 0 : index
    %c0_97 = arith.constant 0 : index
    %229 = vector.load %arg8[%c0_96, %c0_97] : memref<512x128xbf16, #tpu.memory_space<vmem>>, vector<512x128xbf16>
    %cst_98 = arith.constant dense<0.000000e+00> : vector<8x128xf32>
    %230 = tpu.matmul %228, %229, %cst_98 {dimension_numbers = #tpu.dot_dimension_numbers<[1], [0], [0], [1], [0, 0, 1, 1], [], []>} : vector<8x512xbf16>, vector<512x128xbf16>, vector<8x128xf32> -> vector<8x128xf32>
    %231 = vector.broadcast %227 : vector<1x128xf32> to vector<8x128xf32>
    %232 = arith.addf %230, %231 : vector<8x128xf32>
    %c0_99 = arith.constant 0 : index
    %c0_100 = arith.constant 0 : index
    %233 = vector.load %arg12[%c0_99, %c0_100] : memref<8x128xf32, #tpu.memory_space<vmem>>, vector<8x128xf32>
    tpu.vector_store %arg12[%c0_99, %c0_100], %232 {strides = array<i32>} : memref<8x128xf32, #tpu.memory_space<vmem>>, vector<8x128xf32>,
    return
  }
  func.func @transform_0(%arg0: i32) -> (i32, i32) {
    %c0_i32 = arith.constant 0 : i32
    %c0_i32_0 = arith.constant 0 : i32
    return %arg0, %c0_i32 : i32, i32
  }
  func.func @transform_1(%arg0: i32) -> (i32, i32) {
    %c0_i32 = arith.constant 0 : i32
    %c0_i32_0 = arith.constant 0 : i32
    %c0_i32_1 = arith.constant 0 : i32
    return %c0_i32, %c0_i32_0 : i32, i32
  }
  func.func @transform_2(%arg0: i32) -> (i32, i32) {
    %c0_i32 = arith.constant 0 : i32
    %c0_i32_0 = arith.constant 0 : i32
    %c0_i32_1 = arith.constant 0 : i32
    return %c0_i32, %c0_i32_0 : i32, i32
  }
  func.func @transform_3(%arg0: i32) -> (i32, i32) {
    %c0_i32 = arith.constant 0 : i32
    %c0_i32_0 = arith.constant 0 : i32
    %c0_i32_1 = arith.constant 0 : i32
    return %c0_i32, %c0_i32_0 : i32, i32
  }
  func.func @transform_4(%arg0: i32) -> (i32, i32) {
    %c0_i32 = arith.constant 0 : i32
    %c0_i32_0 = arith.constant 0 : i32
    %c0_i32_1 = arith.constant 0 : i32
    return %c0_i32, %c0_i32_0 : i32, i32
  }
  func.func @transform_5(%arg0: i32) -> (i32, i32) {
    %c0_i32 = arith.constant 0 : i32
    %c0_i32_0 = arith.constant 0 : i32
    %c0_i32_1 = arith.constant 0 : i32
    return %c0_i32, %c0_i32_0 : i32, i32
  }
  func.func @transform_6(%arg0: i32) -> (i32, i32) {
    %c0_i32 = arith.constant 0 : i32
    %c0_i32_0 = arith.constant 0 : i32
    %c0_i32_1 = arith.constant 0 : i32
    return %c0_i32, %c0_i32_0 : i32, i32
  }
  func.func @transform_7(%arg0: i32) -> (i32, i32) {
    %c0_i32 = arith.constant 0 : i32
    %c0_i32_0 = arith.constant 0 : i32
    %c0_i32_1 = arith.constant 0 : i32
    return %c0_i32, %c0_i32_0 : i32, i32
  }
  func.func @transform_8(%arg0: i32) -> (i32, i32) {
    %c0_i32 = arith.constant 0 : i32
    %c0_i32_0 = arith.constant 0 : i32
    %c0_i32_1 = arith.constant 0 : i32
    return %c0_i32, %c0_i32_0 : i32, i32
  }
  func.func @transform_9(%arg0: i32) -> (i32, i32) {
    %c0_i32 = arith.constant 0 : i32
    %c0_i32_0 = arith.constant 0 : i32
    %c0_i32_1 = arith.constant 0 : i32
    return %c0_i32, %c0_i32_0 : i32, i32
  }
  func.func @transform_10(%arg0: i32) -> (i32, i32) {
    %c0_i32 = arith.constant 0 : i32
    %c0_i32_0 = arith.constant 0 : i32
    %c0_i32_1 = arith.constant 0 : i32
    return %c0_i32, %c0_i32_0 : i32, i32
  }
  func.func @transform_11(%arg0: i32) -> (i32, i32) {
    %c0_i32 = arith.constant 0 : i32
    %c0_i32_0 = arith.constant 0 : i32
    return %arg0, %c0_i32 : i32, i32
  }
}

</mosaic_0001>

<llo_original>
// kernel: tpu_custom_call.1
$region0: #{tpu_custom_call.1}
  #allocation0 [shape = 'u32[]', space=smem, size = 0x4, offset = 0x4, fixed_abs, tag = 'smem constant byte address 0x4 - core index']
  #allocation1 [shape = 'u32[144,128]{1,0:T(1,128)}', space=vmem, size = 0x12000, scoped, tag = 'internal scratch']
  %s0 = inlined_call_operand.hbm [shape: f32[8,128], index: 0, kind: input, shape index: {}]
  %s1 = inlined_call_operand.hbm [shape: bf16[128,1024], index: 1, kind: input, shape index: {}]
  %s2 = inlined_call_operand.hbm [shape: bf16[1024,1024], index: 2, kind: input, shape index: {}]
  %s3 = inlined_call_operand.hbm [shape: bf16[1024,1024], index: 3, kind: input, shape index: {}]
  %s4 = inlined_call_operand.hbm [shape: bf16[1024,512], index: 4, kind: input, shape index: {}]
  %s5 = inlined_call_operand.hbm [shape: bf16[512,512], index: 5, kind: input, shape index: {}]
  %s6 = inlined_call_operand.hbm [shape: bf16[512,512], index: 6, kind: input, shape index: {}]
  %s7 = inlined_call_operand.hbm [shape: bf16[512,128], index: 7, kind: input, shape index: {}]
  %s8 = inlined_call_operand.hbm [shape: f32[9,1024], index: 8, kind: input, shape index: {}]
  %s9 = inlined_call_operand.hbm [shape: f32[9,512], index: 9, kind: input, shape index: {}]
  %s10 = inlined_call_operand.hbm [shape: f32[1,128], index: 10, kind: input, shape index: {}]
  %s11 = inlined_call_operand.hbm [shape: f32[8,128], index: 11, kind: output, shape index: {}]
  %s12 = sld [smem:[#allocation0]]
  $region98: #{tpu_custom_call.1} parent=0
    _
  %s14 = ssub.s32 1, %s12
  %s15 = scalar_select 0, %s14, %s12
  $region1: #{tpu_custom_call.1} parent=0
    #allocation2 [shape = 'u8[4096]{0}', space=vmem, size = 0x1000, scoped, tag = 'input window, operand 0, single buffered']
    #allocation3 [shape = 's32[1]{0}', space=sflag, size = 0x4, scoped, tag = 'scoped memory for tpu_custom_call.1']
    #allocation4 [shape = 's32[1]{0}', space=sflag, size = 0x4, scoped, tag = 'scoped memory for tpu_custom_call.1']
    #allocation5 [shape = 'u8[262144]{0}', space=vmem, size = 0x40000, scoped, tag = 'input window, operand 1, single buffered']
    #allocation6 [shape = 's32[1]{0}', space=sflag, size = 0x4, scoped, tag = 'scoped memory for tpu_custom_call.1']
    #allocation7 [shape = 'u8[2097152]{0}', space=vmem, size = 0x200000, scoped, tag = 'input window, operand 2, single buffered']
    #allocation8 [shape = 'u8[2097152]{0}', space=vmem, size = 0x200000, scoped, tag = 'input window, operand 3, single buffered']
    #allocation9 [shape = 's32[1]{0}', space=sflag, size = 0x4, scoped, tag = 'scoped memory for tpu_custom_call.1']
    #allocation10 [shape = 'u8[1048576]{0}', space=vmem, size = 0x100000, scoped, tag = 'input window, operand 4, single buffered']
    #allocation11 [shape = 'u8[524288]{0}', space=vmem, size = 0x80000, scoped, tag = 'input window, operand 5, single buffered']
    #allocation12 [shape = 's32[1]{0}', space=sflag, size = 0x4, scoped, tag = 'scoped memory for tpu_custom_call.1']
    #allocation13 [shape = 'u8[524288]{0}', space=vmem, size = 0x80000, scoped, tag = 'input window, operand 6, single buffered']
    #allocation14 [shape = 'u8[131072]{0}', space=vmem, size = 0x20000, scoped, tag = 'input window, operand 7, single buffered']
    #allocation15 [shape = 's32[1]{0}', space=sflag, size = 0x4, scoped, tag = 'scoped memory for tpu_custom_call.1']
    #allocation16 [shape = 'u8[65536]{0}', space=vmem, size = 0x10000, scoped, tag = 'input window, operand 8, single buffered']
    #allocation17 [shape = 'u8[32768]{0}', space=vmem, size = 0x8000, scoped, tag = 'input window, operand 9, single buffered']
    #allocation18 [shape = 's32[1]{0}', space=sflag, size = 0x4, scoped, tag = 'scoped memory for tpu_custom_call.1']
    #allocation19 [shape = 'u8[512]{0}', space=vmem, size = 0x400, scoped, tag = 'input window, operand 10, single buffered']
    #allocation20 [shape = 'u8[4096]{0}', space=vmem, size = 0x1000, scoped, tag = 'output window, operand 0, single buffered']
    %16 = vsyncpa [#allocation3], 0
    %17 = vsyncpa [#allocation6], 0
    %18 = vsyncpa [#allocation9], 0
    %19 = vsyncpa [#allocation12], 0
    %20 = vsyncpa [#allocation15], 0
    %21 = vsyncpa [#allocation18], 0
    %22 = vsyncpa [#allocation4], 0
    // Predicated region
    $region2: #{tpu_custom_call.1} parent=1 // pred_check
      _
    $region3: #{tpu_custom_call.1} parent=1 // pred_check_branch
      %24 = sbr.rel (0) target = $region5
    $region4: #{tpu_custom_call.1} parent=1 // pred_region
      %s26 = ssub.s32 128, 128
      %27 = vsyncadd [#allocation3], %s26
      %s29 = sshll.u32 [#allocation2], 4
      %s30 = int_to_ptr.vmem [resolvable:$true] %s29
      %32 = dma.hbm_to_vmem [thread:$0]  %s0, 128, %s30, [#allocation3]
    $region5: #{tpu_custom_call.1} parent=1 // pred_fallthru
      _
    // Predicated region
    $region6: #{tpu_custom_call.1} parent=1 // pred_check
      _
    $region7: #{tpu_custom_call.1} parent=1 // pred_check_branch
      %34 = sbr.rel (0) target = $region9
    $region8: #{tpu_custom_call.1} parent=1 // pred_region
      %s36 = ssub.s32 8192, 8192
      %37 = vsyncadd [#allocation6], %s36
      %s38 = sshll.u32 [#allocation5], 4
      %s39 = int_to_ptr.vmem [resolvable:$true] %s38
      %44 = dma.hbm_to_vmem [thread:$0]  %s1, 8192, %s39, [#allocation6], 512, 512, 32
    $region9: #{tpu_custom_call.1} parent=1 // pred_fallthru
      _
    // Predicated region
    $region10: #{tpu_custom_call.1} parent=1 // pred_check
      _
    $region11: #{tpu_custom_call.1} parent=1 // pred_check_branch
      %46 = sbr.rel (0) target = $region13
    $region12: #{tpu_custom_call.1} parent=1 // pred_region
      %s48 = ssub.s32 65536, 65536
      %49 = vsyncadd [#allocation6], %s48
      %s50 = sshll.u32 [#allocation7], 4
      %s51 = int_to_ptr.vmem [resolvable:$true] %s50
      %56 = dma.hbm_to_vmem [thread:$0]  %s2, 65536, %s51, [#allocation6], 512, 512, 32
    $region13: #{tpu_custom_call.1} parent=1 // pred_fallthru
      _
    // Predicated region
    $region14: #{tpu_custom_call.1} parent=1 // pred_check
      _
    $region15: #{tpu_custom_call.1} parent=1 // pred_check_branch
      %58 = sbr.rel (0) target = $region17
    $region16: #{tpu_custom_call.1} parent=1 // pred_region
      %s60 = ssub.s32 65536, 65536
      %61 = vsyncadd [#allocation9], %s60
      %s62 = sshll.u32 [#allocation8], 4
      %s63 = int_to_ptr.vmem [resolvable:$true] %s62
      %68 = dma.hbm_to_vmem [thread:$0]  %s3, 65536, %s63, [#allocation9], 512, 512, 32
    $region17: #{tpu_custom_call.1} parent=1 // pred_fallthru
      _
    // Predicated region
    $region18: #{tpu_custom_call.1} parent=1 // pred_check
      _
    $region19: #{tpu_custom_call.1} parent=1 // pred_check_branch
      %70 = sbr.rel (0) target = $region21
    $region20: #{tpu_custom_call.1} parent=1 // pred_region
      %s72 = ssub.s32 32768, 32768
      %73 = vsyncadd [#allocation9], %s72
      %s74 = sshll.u32 [#allocation10], 4
      %s75 = int_to_ptr.vmem [resolvable:$true] %s74
      %80 = dma.hbm_to_vmem [thread:$0]  %s4, 32768, %s75, [#allocation9], 256, 256, 16
    $region21: #{tpu_custom_call.1} parent=1 // pred_fallthru
      _
    // Predicated region
    $region22: #{tpu_custom_call.1} parent=1 // pred_check
      _
    $region23: #{tpu_custom_call.1} parent=1 // pred_check_branch
      %82 = sbr.rel (0) target = $region25
    $region24: #{tpu_custom_call.1} parent=1 // pred_region
      %s84 = ssub.s32 16384, 16384
      %85 = vsyncadd [#allocation12], %s84
      %s86 = sshll.u32 [#allocation11], 4
      %s87 = int_to_ptr.vmem [resolvable:$true] %s86
      %92 = dma.hbm_to_vmem [thread:$0]  %s5, 16384, %s87, [#allocation12], 256, 256, 16
    $region25: #{tpu_custom_call.1} parent=1 // pred_fallthru
      _
    // Predicated region
    $region26: #{tpu_custom_call.1} parent=1 // pred_check
      _
    $region27: #{tpu_custom_call.1} parent=1 // pred_check_branch
      %94 = sbr.rel (0) target = $region29
    $region28: #{tpu_custom_call.1} parent=1 // pred_region
      %s96 = ssub.s32 16384, 16384
      %97 = vsyncadd [#allocation12], %s96
      %s98 = sshll.u32 [#allocation13], 4
      %s99 = int_to_ptr.vmem [resolvable:$true] %s98
      %104 = dma.hbm_to_vmem [thread:$0]  %s6, 16384, %s99, [#allocation12], 256, 256, 16
    $region29: #{tpu_custom_call.1} parent=1 // pred_fallthru
      _
    // Predicated region
    $region30: #{tpu_custom_call.1} parent=1 // pred_check
      _
    $region31: #{tpu_custom_call.1} parent=1 // pred_check_branch
      %106 = sbr.rel (0) target = $region33
    $region32: #{tpu_custom_call.1} parent=1 // pred_region
      %s108 = ssub.s32 4096, 4096
      %109 = vsyncadd [#allocation15], %s108
      %s110 = sshll.u32 [#allocation14], 4
      %s111 = int_to_ptr.vmem [resolvable:$true] %s110
      %116 = dma.hbm_to_vmem [thread:$0]  %s7, 4096, %s111, [#allocation15], 64, 64, 4
    $region33: #{tpu_custom_call.1} parent=1 // pred_fallthru
      _
    // Predicated region
    $region34: #{tpu_custom_call.1} parent=1 // pred_check
      _
    $region35: #{tpu_custom_call.1} parent=1 // pred_check_branch
      %118 = sbr.rel (0) target = $region37
    $region36: #{tpu_custom_call.1} parent=1 // pred_region
      %s120 = ssub.s32 2048, 2048
      %121 = vsyncadd [#allocation15], %s120
      %s122 = sshll.u32 [#allocation16], 4
      %s123 = int_to_ptr.vmem [resolvable:$true] %s122
      %128 = dma.hbm_to_vmem [thread:$0]  %s8, 2048, %s123, [#allocation15], 1024, 1024, 64
    $region37: #{tpu_custom_call.1} parent=1 // pred_fallthru
      _
    // Predicated region
    $region38: #{tpu_custom_call.1} parent=1 // pred_check
      _
    $region39: #{tpu_custom_call.1} parent=1 // pred_check_branch
      %130 = sbr.rel (0) target = $region41
    $region40: #{tpu_custom_call.1} parent=1 // pred_region
      %s132 = ssub.s32 1024, 1024
      %133 = vsyncadd [#allocation18], %s132
      %s134 = sshll.u32 [#allocation17], 4
      %s135 = int_to_ptr.vmem [resolvable:$true] %s134
      %140 = dma.hbm_to_vmem [thread:$0]  %s9, 1024, %s135, [#allocation18], 512, 512, 32
    $region41: #{tpu_custom_call.1} parent=1 // pred_fallthru
      _
    // Predicated region
    $region42: #{tpu_custom_call.1} parent=1 // pred_check
      _
    $region43: #{tpu_custom_call.1} parent=1 // pred_check_branch
      %142 = sbr.rel (0) target = $region45
    $region44: #{tpu_custom_call.1} parent=1 // pred_region
      %s144 = ssub.s32 16, 16
      %145 = vsyncadd [#allocation18], %s144
      %s147 = sshll.u32 [#allocation19], 4
      %s148 = int_to_ptr.vmem [resolvable:$true] %s147
      %150 = dma.hbm_to_vmem [thread:$0]  %s10, 16, %s148, [#allocation18]
    $region45: #{tpu_custom_call.1} parent=1 // pred_fallthru
      _
    // Predicated region
    $region46: #{tpu_custom_call.1} parent=1 // pred_check
      _
    $region47: #{tpu_custom_call.1} parent=1 // pred_check_branch
      %152 = sbr.rel (0) target = $region49
    $region48: #{tpu_custom_call.1} parent=1 // pred_region
      %153 = dma.done [#allocation3], 128
    $region49: #{tpu_custom_call.1} parent=1 // pred_fallthru
      _
    // Predicated region
    $region50: #{tpu_custom_call.1} parent=1 // pred_check
      _
    $region51: #{tpu_custom_call.1} parent=1 // pred_check_branch
      %155 = sbr.rel (0) target = $region53
    $region52: #{tpu_custom_call.1} parent=1 // pred_region
      %156 = dma.done [#allocation6], 8192
    $region53: #{tpu_custom_call.1} parent=1 // pred_fallthru
      _
    // Predicated region
    $region54: #{tpu_custom_call.1} parent=1 // pred_check
      _
    $region55: #{tpu_custom_call.1} parent=1 // pred_check_branch
      %158 = sbr.rel (0) target = $region57
    $region56: #{tpu_custom_call.1} parent=1 // pred_region
      %159 = dma.done [#allocation6], 65536
    $region57: #{tpu_custom_call.1} parent=1 // pred_fallthru
      _
    // Predicated region
    $region58: #{tpu_custom_call.1} parent=1 // pred_check
      _
    $region59: #{tpu_custom_call.1} parent=1 // pred_check_branch
      %161 = sbr.rel (0) target = $region61
    $region60: #{tpu_custom_call.1} parent=1 // pred_region
      %162 = dma.done [#allocation9], 65536
    $region61: #{tpu_custom_call.1} parent=1 // pred_fallthru
      _
    // Predicated region
    $region62: #{tpu_custom_call.1} parent=1 // pred_check
      _
    $region63: #{tpu_custom_call.1} parent=1 // pred_check_branch
      %164 = sbr.rel (0) target = $region65
    $region64: #{tpu_custom_call.1} parent=1 // pred_region
      %165 = dma.done [#allocation9], 32768
    $region65: #{tpu_custom_call.1} parent=1 // pred_fallthru
      _
    // Predicated region
    $region66: #{tpu_custom_call.1} parent=1 // pred_check
      _
    $region67: #{tpu_custom_call.1} parent=1 // pred_check_branch
      %167 = sbr.rel (0) target = $region69
    $region68: #{tpu_custom_call.1} parent=1 // pred_region
      %168 = dma.done [#allocation12], 16384
    $region69: #{tpu_custom_call.1} parent=1 // pred_fallthru
      _
    // Predicated region
    $region70: #{tpu_custom_call.1} parent=1 // pred_check
      _
    $region71: #{tpu_custom_call.1} parent=1 // pred_check_branch
      %170 = sbr.rel (0) target = $region73
    $region72: #{tpu_custom_call.1} parent=1 // pred_region
      %171 = dma.done [#allocation12], 16384
    $region73: #{tpu_custom_call.1} parent=1 // pred_fallthru
      _
    // Predicated region
    $region74: #{tpu_custom_call.1} parent=1 // pred_check
      _
    $region75: #{tpu_custom_call.1} parent=1 // pred_check_branch
      %173 = sbr.rel (0) target = $region77
    $region76: #{tpu_custom_call.1} parent=1 // pred_region
      %174 = dma.done [#allocation15], 4096
    $region77: #{tpu_custom_call.1} parent=1 // pred_fallthru
      _
    // Predicated region
    $region78: #{tpu_custom_call.1} parent=1 // pred_check
      _
    $region79: #{tpu_custom_call.1} parent=1 // pred_check_branch
      %176 = sbr.rel (0) target = $region81
    $region80: #{tpu_custom_call.1} parent=1 // pred_region
      %177 = dma.done [#allocation15], 2048
    $region81: #{tpu_custom_call.1} parent=1 // pred_fallthru
      _
    // Predicated region
    $region82: #{tpu_custom_call.1} parent=1 // pred_check
      _
    $region83: #{tpu_custom_call.1} parent=1 // pred_check_branch
      %179 = sbr.rel (0) target = $region85
    $region84: #{tpu_custom_call.1} parent=1 // pred_region
      %180 = dma.done [#allocation18], 1024
    $region85: #{tpu_custom_call.1} parent=1 // pred_fallthru
      _
    // Predicated region
    $region86: #{tpu_custom_call.1} parent=1 // pred_check
      _
    $region87: #{tpu_custom_call.1} parent=1 // pred_check_branch
      %182 = sbr.rel (0) target = $region89
    $region88: #{tpu_custom_call.1} parent=1 // pred_region
      %183 = dma.done [#allocation18], 16
    $region89: #{tpu_custom_call.1} parent=1 // pred_fallthru
      _
    %v185 = vld [vmem:[#allocation2] sm:$0xff]
    %v186 = vld [vmem:[#allocation16] ss:$8 sm:$0xf]
    %v187 = vld [vmem:[#allocation16] ss:$8 sm:$0xf0]
    %v188 = vor.u32 %v186, %v187
    %v189 = vpack.c.bf16 %v185, %v185
    %v190 = vld [vmem:[#allocation5] sm:$0xff]
    %v191 = vld [vmem:[#allocation5 + $0x8] sm:$0xff]
    %v192 = vld [vmem:[#allocation5 + $0x10] sm:$0xff]
    %v193 = vld [vmem:[#allocation5 + $0x18] sm:$0xff]
    %v194 = vld [vmem:[#allocation5 + $0x20] sm:$0xff]
    %v195 = vld [vmem:[#allocation5 + $0x28] sm:$0xff]
    %v196 = vld [vmem:[#allocation5 + $0x30] sm:$0xff]
    %v197 = vld [vmem:[#allocation5 + $0x38] sm:$0xff]
    %v198 = vld [vmem:[#allocation5 + $0x40] sm:$0xff]
    %v199 = vld [vmem:[#allocation5 + $0x48] sm:$0xff]
    %v200 = vld [vmem:[#allocation5 + $0x50] sm:$0xff]
    %v201 = vld [vmem:[#allocation5 + $0x58] sm:$0xff]
    %v202 = vld [vmem:[#allocation5 + $0x60] sm:$0xff]
    %v203 = vld [vmem:[#allocation5 + $0x68] sm:$0xff]
    %v204 = vld [vmem:[#allocation5 + $0x70] sm:$0xff]
    %v205 = vld [vmem:[#allocation5 + $0x78] sm:$0xff]
    %v206 = vld [vmem:[#allocation5 + $0x80] sm:$0xff]
    %v207 = vld [vmem:[#allocation5 + $0x88] sm:$0xff]
    %v208 = vld [vmem:[#allocation5 + $0x90] sm:$0xff]
    %v209 = vld [vmem:[#allocation5 + $0x98] sm:$0xff]
    %v210 = vld [vmem:[#allocation5 + $0xa0] sm:$0xff]
    %v211 = vld [vmem:[#allocation5 + $0xa8] sm:$0xff]
    %v212 = vld [vmem:[#allocation5 + $0xb0] sm:$0xff]
    %v213 = vld [vmem:[#allocation5 + $0xb8] sm:$0xff]
    %v214 = vld [vmem:[#allocation5 + $0xc0] sm:$0xff]
    %v215 = vld [vmem:[#allocation5 + $0xc8] sm:$0xff]
    %v216 = vld [vmem:[#allocation5 + $0xd0] sm:$0xff]
    %v217 = vld [vmem:[#allocation5 + $0xd8] sm:$0xff]
    %v218 = vld [vmem:[#allocation5 + $0xe0] sm:$0xff]
    %v219 = vld [vmem:[#allocation5 + $0xe8] sm:$0xff]
    %v220 = vld [vmem:[#allocation5 + $0xf0] sm:$0xff]
    %v221 = vld [vmem:[#allocation5 + $0xf8] sm:$0xff]
    %v222 = vld [vmem:[#allocation5 + $0x100] sm:$0xff]
    %v223 = vld [vmem:[#allocation5 + $0x108] sm:$0xff]
    %v224 = vld [vmem:[#allocation5 + $0x110] sm:$0xff]
    %v225 = vld [vmem:[#allocation5 + $0x118] sm:$0xff]
    %v226 = vld [vmem:[#allocation5 + $0x120] sm:$0xff]
    %v227 = vld [vmem:[#allocation5 + $0x128] sm:$0xff]
    %v228 = vld [vmem:[#allocation5 + $0x130] sm:$0xff]
    %v229 = vld [vmem:[#allocation5 + $0x138] sm:$0xff]
    %v230 = vld [vmem:[#allocation5 + $0x140] sm:$0xff]
    %v231 = vld [vmem:[#allocation5 + $0x148] sm:$0xff]
    %v232 = vld [vmem:[#allocation5 + $0x150] sm:$0xff]
    %v233 = vld [vmem:[#allocation5 + $0x158] sm:$0xff]
    %v234 = vld [vmem:[#allocation5 + $0x160] sm:$0xff]
    %v235 = vld [vmem:[#allocation5 + $0x168] sm:$0xff]
    %v236 = vld [vmem:[#allocation5 + $0x170] sm:$0xff]
    %v237 = vld [vmem:[#allocation5 + $0x178] sm:$0xff]
    %v238 = vld [vmem:[#allocation5 + $0x180] sm:$0xff]
    %v239 = vld [vmem:[#allocation5 + $0x188] sm:$0xff]
    %v240 = vld [vmem:[#allocation5 + $0x190] sm:$0xff]
    %v241 = vld [vmem:[#allocation5 + $0x198] sm:$0xff]
    %v242 = vld [vmem:[#allocation5 + $0x1a0] sm:$0xff]
    %v243 = vld [vmem:[#allocation5 + $0x1a8] sm:$0xff]
    %v244 = vld [vmem:[#allocation5 + $0x1b0] sm:$0xff]
    %v245 = vld [vmem:[#allocation5 + $0x1b8] sm:$0xff]
    %v246 = vld [vmem:[#allocation5 + $0x1c0] sm:$0xff]
    %v247 = vld [vmem:[#allocation5 + $0x1c8] sm:$0xff]
    %v248 = vld [vmem:[#allocation5 + $0x1d0] sm:$0xff]
    %v249 = vld [vmem:[#allocation5 + $0x1d8] sm:$0xff]
    %v250 = vld [vmem:[#allocation5 + $0x1e0] sm:$0xff]
    %v251 = vld [vmem:[#allocation5 + $0x1e8] sm:$0xff]
    %v252 = vld [vmem:[#allocation5 + $0x1f0] sm:$0xff]
    %v253 = vld [vmem:[#allocation5 + $0x1f8] sm:$0xff]
    %v255 = vlaneseq
    %v256 = vshrl.u32 %v255, 7
    %v257 = vsub.s32 0, %v256
    %v258 = vrot.slane %v188, %v257
    %v259 = vlaneseq
    %v260 = vshrl.u32 %v259, 7
    %v261 = vsub.s32 1, %v260
    %v262 = vrot.slane %v188, %v261
    %v263 = vlaneseq
    %v264 = vshrl.u32 %v263, 7
    %v265 = vsub.s32 2, %v264
    %v266 = vrot.slane %v188, %v265
    %v267 = vlaneseq
    %v268 = vshrl.u32 %v267, 7
    %v269 = vsub.s32 3, %v268
    %v270 = vrot.slane %v188, %v269
    %v271 = vlaneseq
    %v272 = vshrl.u32 %v271, 7
    %v273 = vsub.s32 4, %v272
    %v274 = vrot.slane %v188, %v273
    %v275 = vlaneseq
    %v276 = vshrl.u32 %v275, 7
    %v277 = vsub.s32 5, %v276
    %v278 = vrot.slane %v188, %v277
    %v279 = vlaneseq
    %v280 = vshrl.u32 %v279, 7
    %v281 = vsub.s32 6, %v280
    %v282 = vrot.slane %v188, %v281
    %v283 = vlaneseq
    %v284 = vshrl.u32 %v283, 7
    %v285 = vsub.s32 7, %v284
    %v286 = vrot.slane %v188, %v285
    %v359 = vunpack.c.l.b16 %v190
    %v360 = vunpack.c.h.b16 %v190
    %v361 = vunpack.c.l.b16 %v191
    %v362 = vunpack.c.h.b16 %v191
    %v363 = vunpack.c.l.b16 %v192
    %v364 = vunpack.c.h.b16 %v192
    %v365 = vunpack.c.l.b16 %v193
    %v366 = vunpack.c.h.b16 %v193
    %v367 = vunpack.c.l.b16 %v194
    %v368 = vunpack.c.h.b16 %v194
    %v369 = vunpack.c.l.b16 %v195
    %v370 = vunpack.c.h.b16 %v195
    %v371 = vunpack.c.l.b16 %v196
    %v372 = vunpack.c.h.b16 %v196
    %v373 = vunpack.c.l.b16 %v197
    %v374 = vunpack.c.h.b16 %v197
    %v375 = vunpack.c.l.b16 %v198
    %v376 = vunpack.c.h.b16 %v198
    %v377 = vunpack.c.l.b16 %v199
    %v378 = vunpack.c.h.b16 %v199
    %v379 = vunpack.c.l.b16 %v200
    %v380 = vunpack.c.h.b16 %v200
    %v381 = vunpack.c.l.b16 %v201
    %v382 = vunpack.c.h.b16 %v201
    %v383 = vunpack.c.l.b16 %v202
    %v384 = vunpack.c.h.b16 %v202
    %v385 = vunpack.c.l.b16 %v203
    %v386 = vunpack.c.h.b16 %v203
    %v387 = vunpack.c.l.b16 %v204
    %v388 = vunpack.c.h.b16 %v204
    %v389 = vunpack.c.l.b16 %v205
    %v390 = vunpack.c.h.b16 %v205
    %v391 = vunpack.c.l.b16 %v206
    %v392 = vunpack.c.h.b16 %v206
    %v393 = vunpack.c.l.b16 %v207
    %v394 = vunpack.c.h.b16 %v207
    %v395 = vunpack.c.l.b16 %v208
    %v396 = vunpack.c.h.b16 %v208
    %v397 = vunpack.c.l.b16 %v209
    %v398 = vunpack.c.h.b16 %v209
    %v399 = vunpack.c.l.b16 %v210
    %v400 = vunpack.c.h.b16 %v210
    %v401 = vunpack.c.l.b16 %v211
    %v402 = vunpack.c.h.b16 %v211
    %v403 = vunpack.c.l.b16 %v212
    %v404 = vunpack.c.h.b16 %v212
    %v405 = vunpack.c.l.b16 %v213
    %v406 = vunpack.c.h.b16 %v213
    %v407 = vunpack.c.l.b16 %v214
    %v408 = vunpack.c.h.b16 %v214
    %v409 = vunpack.c.l.b16 %v215
    %v410 = vunpack.c.h.b16 %v215
    %v411 = vunpack.c.l.b16 %v216
    %v412 = vunpack.c.h.b16 %v216
    %v413 = vunpack.c.l.b16 %v217
    %v414 = vunpack.c.h.b16 %v217
    %v415 = vunpack.c.l.b16 %v218
    %v416 = vunpack.c.h.b16 %v218
    %v417 = vunpack.c.l.b16 %v219
    %v418 = vunpack.c.h.b16 %v219
    %v419 = vunpack.c.l.b16 %v220
    %v420 = vunpack.c.h.b16 %v220
    %v421 = vunpack.c.l.b16 %v221
    %v422 = vunpack.c.h.b16 %v221
    %v423 = vunpack.c.l.b16 %v222
    %v424 = vunpack.c.h.b16 %v222
    %v425 = vunpack.c.l.b16 %v223
    %v426 = vunpack.c.h.b16 %v223
    %v427 = vunpack.c.l.b16 %v224
    %v428 = vunpack.c.h.b16 %v224
    %v429 = vunpack.c.l.b16 %v225
    %v430 = vunpack.c.h.b16 %v225
    %v431 = vunpack.c.l.b16 %v226
    %v432 = vunpack.c.h.b16 %v226
    %v433 = vunpack.c.l.b16 %v227
    %v434 = vunpack.c.h.b16 %v227
    %v435 = vunpack.c.l.b16 %v228
    %v436 = vunpack.c.h.b16 %v228
    %v437 = vunpack.c.l.b16 %v229
    %v438 = vunpack.c.h.b16 %v229
    %v439 = vunpack.c.l.b16 %v230
    %v440 = vunpack.c.h.b16 %v230
    %v441 = vunpack.c.l.b16 %v231
    %v442 = vunpack.c.h.b16 %v231
    %v443 = vunpack.c.l.b16 %v232
    %v444 = vunpack.c.h.b16 %v232
    %v445 = vunpack.c.l.b16 %v233
    %v446 = vunpack.c.h.b16 %v233
    %v447 = vunpack.c.l.b16 %v234
    %v448 = vunpack.c.h.b16 %v234
    %v449 = vunpack.c.l.b16 %v235
    %v450 = vunpack.c.h.b16 %v235
    %v451 = vunpack.c.l.b16 %v236
    %v452 = vunpack.c.h.b16 %v236
    %v453 = vunpack.c.l.b16 %v237
    %v454 = vunpack.c.h.b16 %v237
    %v455 = vunpack.c.l.b16 %v238
    %v456 = vunpack.c.h.b16 %v238
    %v457 = vunpack.c.l.b16 %v239
    %v458 = vunpack.c.h.b16 %v239
    %v459 = vunpack.c.l.b16 %v240
    %v460 = vunpack.c.h.b16 %v240
    %v461 = vunpack.c.l.b16 %v241
    %v462 = vunpack.c.h.b16 %v241
    %v463 = vunpack.c.l.b16 %v242
    %v464 = vunpack.c.h.b16 %v242
    %v465 = vunpack.c.l.b16 %v243
    %v466 = vunpack.c.h.b16 %v243
    %v467 = vunpack.c.l.b16 %v244
    %v468 = vunpack.c.h.b16 %v244
    %v469 = vunpack.c.l.b16 %v245
    %v470 = vunpack.c.h.b16 %v245
    %v471 = vunpack.c.l.b16 %v246
    %v472 = vunpack.c.h.b16 %v246
    %v473 = vunpack.c.l.b16 %v247
    %v474 = vunpack.c.h.b16 %v247
    %v475 = vunpack.c.l.b16 %v248
    %v476 = vunpack.c.h.b16 %v248
    %v477 = vunpack.c.l.b16 %v249
    %v478 = vunpack.c.h.b16 %v249
    %v479 = vunpack.c.l.b16 %v250
    %v480 = vunpack.c.h.b16 %v250
    %v481 = vunpack.c.l.b16 %v251
    %v482 = vunpack.c.h.b16 %v251
    %v483 = vunpack.c.l.b16 %v252
    %v484 = vunpack.c.h.b16 %v252
    %v485 = vunpack.c.l.b16 %v253
    %v486 = vunpack.c.h.b16 %v253
    %v487 = vpack.c.b16 %v367, %v359
    %v488 = vpack.c.b16 %v368, %v360
    %v489 = vpack.c.b16 %v369, %v361
    %v490 = vpack.c.b16 %v370, %v362
    %v491 = vpack.c.b16 %v371, %v363
    %v492 = vpack.c.b16 %v372, %v364
    %v493 = vpack.c.b16 %v373, %v365
    %v494 = vpack.c.b16 %v374, %v366
    %v495 = vpack.c.b16 %v383, %v375
    %v496 = vpack.c.b16 %v384, %v376
    %v497 = vpack.c.b16 %v385, %v377
    %v498 = vpack.c.b16 %v386, %v378
    %v499 = vpack.c.b16 %v387, %v379
    %v500 = vpack.c.b16 %v388, %v380
    %v501 = vpack.c.b16 %v389, %v381
    %v502 = vpack.c.b16 %v390, %v382
    %v503 = vpack.c.b16 %v399, %v391
    %v504 = vpack.c.b16 %v400, %v392
    %v505 = vpack.c.b16 %v401, %v393
    %v506 = vpack.c.b16 %v402, %v394
    %v507 = vpack.c.b16 %v403, %v395
    %v508 = vpack.c.b16 %v404, %v396
    %v509 = vpack.c.b16 %v405, %v397
    %v510 = vpack.c.b16 %v406, %v398
    %v511 = vpack.c.b16 %v415, %v407
    %v512 = vpack.c.b16 %v416, %v408
    %v513 = vpack.c.b16 %v417, %v409
    %v514 = vpack.c.b16 %v418, %v410
    %v515 = vpack.c.b16 %v419, %v411
    %v516 = vpack.c.b16 %v420, %v412
    %v517 = vpack.c.b16 %v421, %v413
    %v518 = vpack.c.b16 %v422, %v414
    %v519 = vpack.c.b16 %v431, %v423
    %v520 = vpack.c.b16 %v432, %v424
    %v521 = vpack.c.b16 %v433, %v425
    %v522 = vpack.c.b16 %v434, %v426
    %v523 = vpack.c.b16 %v435, %v427
    %v524 = vpack.c.b16 %v436, %v428
    %v525 = vpack.c.b16 %v437, %v429
    %v526 = vpack.c.b16 %v438, %v430
    %v527 = vpack.c.b16 %v447, %v439
    %v528 = vpack.c.b16 %v448, %v440
    %v529 = vpack.c.b16 %v449, %v441
    %v530 = vpack.c.b16 %v450, %v442
    %v531 = vpack.c.b16 %v451, %v443
    %v532 = vpack.c.b16 %v452, %v444
    %v533 = vpack.c.b16 %v453, %v445
    %v534 = vpack.c.b16 %v454, %v446
    %v535 = vpack.c.b16 %v463, %v455
    %v536 = vpack.c.b16 %v464, %v456
    %v537 = vpack.c.b16 %v465, %v457
    %v538 = vpack.c.b16 %v466, %v458
    %v539 = vpack.c.b16 %v467, %v459
    %v540 = vpack.c.b16 %v468, %v460
    %v541 = vpack.c.b16 %v469, %v461
    %v542 = vpack.c.b16 %v470, %v462
    %v543 = vpack.c.b16 %v479, %v471
    %v544 = vpack.c.b16 %v480, %v472
    %v545 = vpack.c.b16 %v481, %v473
    %v546 = vpack.c.b16 %v482, %v474
    %v547 = vpack.c.b16 %v483, %v475
    %v548 = vpack.c.b16 %v484, %v476
    %v549 = vpack.c.b16 %v485, %v477
    %v550 = vpack.c.b16 %v486, %v478
    %615 = vmatprep.subr.bf16.mxu0 %v488
    %616 = vmatpush1.bf16.msra.mxu0 %v487
    %617 = vmatprep.subr.bf16.mxu0 %v496
    %618 = vmatpush1.bf16.msra.mxu0 %v495
    %619 = vmatprep.subr.bf16.mxu0 %v504
    %620 = vmatpush1.bf16.msra.mxu0 %v503
    %621 = vmatprep.subr.bf16.mxu0 %v512
    %622 = vmatpush1.bf16.msra.mxu0 %v511
    %623 = vmatprep.subr.bf16.mxu0 %v520
    %624 = vmatpush1.bf16.msra.mxu0 %v519
    %625 = vmatprep.subr.bf16.mxu0 %v528
    %626 = vmatpush1.bf16.msra.mxu0 %v527
    %627 = vmatprep.subr.bf16.mxu0 %v536
    %628 = vmatpush1.bf16.msra.mxu0 %v535
    %629 = vmatprep.subr.bf16.mxu0 %v544
    %630 = vmatpush1.bf16.msra.mxu0 %v543
    %631 = vmatprep.subr.bf16.mxu0 0
    %632 = vmatpush1.bf16.msra.mxu0 0
    %633 = vmatprep.subr.bf16.mxu0 0
    %634 = vmatpush1.bf16.msra.mxu0 0
    %635 = vmatprep.subr.bf16.mxu0 0
    %636 = vmatpush1.bf16.msra.mxu0 0
    %637 = vmatprep.subr.bf16.mxu0 0
    %638 = vmatpush1.bf16.msra.mxu0 0
    %639 = vmatprep.subr.bf16.mxu0 0
    %640 = vmatpush1.bf16.msra.mxu0 0
    %641 = vmatprep.subr.bf16.mxu0 0
    %642 = vmatpush1.bf16.msra.mxu0 0
    %643 = vmatprep.subr.bf16.mxu0 0
    %644 = vmatpush1.bf16.msra.mxu0 0
    %645 = vmatprep.subr.bf16.mxu0 0
    %646 = vmatpush1.bf16.msra.mxu0 0
    %647 = vmatprep.mubr.bf16.mxu0 0
    %648 = vmatmul.mubr.bf16.gmra.mrb[0].mxu0 %v189
    %v649 = vpop.f32.mrb[0].mxu0
    %v650 = vadd.f32 %v258, %v649
    %v651 = vpop.f32.mrb[0].mxu0
    %v652 = vadd.f32 %v262, %v651
    %v653 = vpop.f32.mrb[0].mxu0
    %v654 = vpop.f32.mrb[0].mxu0
    %655 = vdwg.mxu0
    %656 = vmatprep.subr.bf16.mxu0 %v490
    %657 = vmatpush1.bf16.msra.mxu0 %v489
    %658 = vmatprep.subr.bf16.mxu0 %v498
    %659 = vmatpush1.bf16.msra.mxu0 %v497
    %660 = vmatprep.subr.bf16.mxu0 %v506
    %661 = vmatpush1.bf16.msra.mxu0 %v505
    %662 = vmatprep.subr.bf16.mxu0 %v514
    %663 = vmatpush1.bf16.msra.mxu0 %v513
    %664 = vmatprep.subr.bf16.mxu0 %v522
    %665 = vmatpush1.bf16.msra.mxu0 %v521
    %666 = vmatprep.subr.bf16.mxu0 %v530
    %667 = vmatpush1.bf16.msra.mxu0 %v529
    %668 = vmatprep.subr.bf16.mxu0 %v538
    %669 = vmatpush1.bf16.msra.mxu0 %v537
    %670 = vmatprep.subr.bf16.mxu0 %v546
    %671 = vmatpush1.bf16.msra.mxu0 %v545
    %672 = vmatprep.subr.bf16.mxu0 0
    %673 = vmatpush1.bf16.msra.mxu0 0
    %674 = vmatprep.subr.bf16.mxu0 0
    %675 = vmatpush1.bf16.msra.mxu0 0
    %676 = vmatprep.subr.bf16.mxu0 0
    %677 = vmatpush1.bf16.msra.mxu0 0
    %678 = vmatprep.subr.bf16.mxu0 0
    %679 = vmatpush1.bf16.msra.mxu0 0
    %680 = vmatprep.subr.bf16.mxu0 0
    %681 = vmatpush1.bf16.msra.mxu0 0
    %682 = vmatprep.subr.bf16.mxu0 0
    %683 = vmatpush1.bf16.msra.mxu0 0
    %684 = vmatprep.subr.bf16.mxu0 0
    %685 = vmatpush1.bf16.msra.mxu0 0
    %686 = vmatprep.subr.bf16.mxu0 0
    %687 = vmatpush1.bf16.msra.mxu0 0
    %688 = vmatprep.mubr.bf16.mxu0 0
    %689 = vmatmul.mubr.bf16.gmra.mrb[0].mxu0 %v189
    %v690 = vpop.f32.mrb[0].mxu0
    %v691 = vadd.f32 %v266, %v690
    %v692 = vpop.f32.mrb[0].mxu0
    %v693 = vadd.f32 %v270, %v692
    %v694 = vpop.f32.mrb[0].mxu0
    %v695 = vpop.f32.mrb[0].mxu0
    %696 = vdwg.mxu0
    %697 = vmatprep.subr.bf16.mxu0 %v492
    %698 = vmatpush1.bf16.msra.mxu0 %v491
    %699 = vmatprep.subr.bf16.mxu0 %v500
    %700 = vmatpush1.bf16.msra.mxu0 %v499
    %701 = vmatprep.subr.bf16.mxu0 %v508
    %702 = vmatpush1.bf16.msra.mxu0 %v507
    %703 = vmatprep.subr.bf16.mxu0 %v516
    %704 = vmatpush1.bf16.msra.mxu0 %v515
    %705 = vmatprep.subr.bf16.mxu0 %v524
    %706 = vmatpush1.bf16.msra.mxu0 %v523
    %707 = vmatprep.subr.bf16.mxu0 %v532
    %708 = vmatpush1.bf16.msra.mxu0 %v531
    %709 = vmatprep.subr.bf16.mxu0 %v540
    %710 = vmatpush1.bf16.msra.mxu0 %v539
    %711 = vmatprep.subr.bf16.mxu0 %v548
    %712 = vmatpush1.bf16.msra.mxu0 %v547
    %713 = vmatprep.subr.bf16.mxu0 0
    %714 = vmatpush1.bf16.msra.mxu0 0
    %715 = vmatprep.subr.bf16.mxu0 0
    %716 = vmatpush1.bf16.msra.mxu0 0
    %717 = vmatprep.subr.bf16.mxu0 0
    %718 = vmatpush1.bf16.msra.mxu0 0
    %719 = vmatprep.subr.bf16.mxu0 0
    %720 = vmatpush1.bf16.msra.mxu0 0
    %721 = vmatprep.subr.bf16.mxu0 0
    %722 = vmatpush1.bf16.msra.mxu0 0
    %723 = vmatprep.subr.bf16.mxu0 0
    %724 = vmatpush1.bf16.msra.mxu0 0
    %725 = vmatprep.subr.bf16.mxu0 0
    %726 = vmatpush1.bf16.msra.mxu0 0
    %727 = vmatprep.subr.bf16.mxu0 0
    %728 = vmatpush1.bf16.msra.mxu0 0
    %729 = vmatprep.mubr.bf16.mxu0 0
    %730 = vmatmul.mubr.bf16.gmra.mrb[0].mxu0 %v189
    %v731 = vpop.f32.mrb[0].mxu0
    %v732 = vadd.f32 %v274, %v731
    %v733 = vpop.f32.mrb[0].mxu0
    %v734 = vadd.f32 %v278, %v733
    %v735 = vpop.f32.mrb[0].mxu0
    %v736 = vpop.f32.mrb[0].mxu0
    %737 = vdwg.mxu0
    %738 = vmatprep.subr.bf16.mxu0 %v494
    %739 = vmatpush1.bf16.msra.mxu0 %v493
    %740 = vmatprep.subr.bf16.mxu0 %v502
    %741 = vmatpush1.bf16.msra.mxu0 %v501
    %742 = vmatprep.subr.bf16.mxu0 %v510
    %743 = vmatpush1.bf16.msra.mxu0 %v509
    %744 = vmatprep.subr.bf16.mxu0 %v518
    %745 = vmatpush1.bf16.msra.mxu0 %v517
    %746 = vmatprep.subr.bf16.mxu0 %v526
    %747 = vmatpush1.bf16.msra.mxu0 %v525
    %748 = vmatprep.subr.bf16.mxu0 %v534
    %749 = vmatpush1.bf16.msra.mxu0 %v533
    %750 = vmatprep.subr.bf16.mxu0 %v542
    %751 = vmatpush1.bf16.msra.mxu0 %v541
    %752 = vmatprep.subr.bf16.mxu0 %v550
    %753 = vmatpush1.bf16.msra.mxu0 %v549
    %754 = vmatprep.subr.bf16.mxu0 0
    %755 = vmatpush1.bf16.msra.mxu0 0
    %756 = vmatprep.subr.bf16.mxu0 0
    %757 = vmatpush1.bf16.msra.mxu0 0
    %758 = vmatprep.subr.bf16.mxu0 0
    %759 = vmatpush1.bf16.msra.mxu0 0
    %760 = vmatprep.subr.bf16.mxu0 0
    %761 = vmatpush1.bf16.msra.mxu0 0
    %762 = vmatprep.subr.bf16.mxu0 0
    %763 = vmatpush1.bf16.msra.mxu0 0
    %764 = vmatprep.subr.bf16.mxu0 0
    %765 = vmatpush1.bf16.msra.mxu0 0
    %766 = vmatprep.subr.bf16.mxu0 0
    %767 = vmatpush1.bf16.msra.mxu0 0
    %768 = vmatprep.subr.bf16.mxu0 0
    %769 = vmatpush1.bf16.msra.mxu0 0
    %770 = vmatprep.mubr.bf16.mxu0 0
    %771 = vmatmul.mubr.bf16.gmra.mrb[0].mxu0 %v189
    %v772 = vpop.f32.mrb[0].mxu0
    %v773 = vadd.f32 %v282, %v772
    %v774 = vpop.f32.mrb[0].mxu0
    %v775 = vadd.f32 %v286, %v774
    %v776 = vpop.f32.mrb[0].mxu0
    %v777 = vpop.f32.mrb[0].mxu0
    %778 = vdwg.mxu0
    %s779 = scalar_lea.vmem [#allocation16], 1
    %v780 = vld [vmem:[%s779] ss:$8 sm:$0xf]
    %v781 = vld [vmem:[%s779] ss:$8 sm:$0xf0]
    %v782 = vor.u32 %v780, %v781
    %s783 = scalar_lea.vmem [#allocation16], 2
    %v784 = vld [vmem:[%s783] ss:$8 sm:$0xf]
    %v785 = vld [vmem:[%s783] ss:$8 sm:$0xf0]
    %v786 = vor.u32 %v784, %v785
    %v787 = vadd.f32 %v650, %v652
    %v788 = vadd.f32 %v787, %v691
    %v789 = vadd.f32 %v788, %v693
    %v790 = vadd.f32 %v789, %v732
    %v791 = vadd.f32 %v790, %v734
    %v792 = vadd.f32 %v791, %v773
    %v793 = vadd.f32 %v792, %v775
    %794 = vadd.xlane.f32.xlu0 %v793
    %v795 = vpop.xlane.xlu0 %794
    %v796 = vrcp.pop 1024.0
    %v797 = vmul.f32 %v795, %v796
    %v798 = vmul.f32 %v650, %v650
    %v799 = vmul.f32 %v652, %v652
    %v800 = vmul.f32 %v691, %v691
    %v801 = vmul.f32 %v693, %v693
    %v802 = vmul.f32 %v732, %v732
    %v803 = vmul.f32 %v734, %v734
    %v804 = vmul.f32 %v773, %v773
    %v805 = vmul.f32 %v775, %v775
    %v806 = vadd.f32 %v798, %v799
    %v807 = vadd.f32 %v806, %v800
    %v808 = vadd.f32 %v807, %v801
    %v809 = vadd.f32 %v808, %v802
    %v810 = vadd.f32 %v809, %v803
    %v811 = vadd.f32 %v810, %v804
    %v812 = vadd.f32 %v811, %v805
    %813 = vadd.xlane.f32.xlu0 %v812
    %v814 = vpop.xlane.xlu0 %813
    %v815 = vmul.f32 %v814, %v796
    %v816 = vmul.f32 %v797, %v797
    %v817 = vsub.f32 %v815, %v816
    %v818 = vmax.f32 %v817, 0.0
    %v819 = vadd.f32 %v818, 1e-05
    %v820 = vrsqrt.pop %v819
    %v821 = vsub.f32 %v650, %v797
    %v822 = vsub.f32 %v652, %v797
    %v823 = vsub.f32 %v691, %v797
    %v824 = vsub.f32 %v693, %v797
    %v825 = vsub.f32 %v732, %v797
    %v826 = vsub.f32 %v734, %v797
    %v827 = vsub.f32 %v773, %v797
    %v828 = vsub.f32 %v775, %v797
    %v829 = vmul.f32 %v821, %v820
    %v830 = vmul.f32 %v822, %v820
    %v831 = vmul.f32 %v823, %v820
    %v832 = vmul.f32 %v824, %v820
    %v833 = vmul.f32 %v825, %v820
    %v834 = vmul.f32 %v826, %v820
    %v835 = vmul.f32 %v827, %v820
    %v836 = vmul.f32 %v828, %v820
    %v838 = vlaneseq
    %v839 = vshrl.u32 %v838, 7
    %v840 = vsub.s32 0, %v839
    %v841 = vrot.slane %v782, %v840
    %v842 = vlaneseq
    %v843 = vshrl.u32 %v842, 7
    %v844 = vsub.s32 1, %v843
    %v845 = vrot.slane %v782, %v844
    %v846 = vlaneseq
    %v847 = vshrl.u32 %v846, 7
    %v848 = vsub.s32 2, %v847
    %v849 = vrot.slane %v782, %v848
    %v850 = vlaneseq
    %v851 = vshrl.u32 %v850, 7
    %v852 = vsub.s32 3, %v851
    %v853 = vrot.slane %v782, %v852
    %v854 = vlaneseq
    %v855 = vshrl.u32 %v854, 7
    %v856 = vsub.s32 4, %v855
    %v857 = vrot.slane %v782, %v856
    %v858 = vlaneseq
    %v859 = vshrl.u32 %v858, 7
    %v860 = vsub.s32 5, %v859
    %v861 = vrot.slane %v782, %v860
    %v862 = vlaneseq
    %v863 = vshrl.u32 %v862, 7
    %v864 = vsub.s32 6, %v863
    %v865 = vrot.slane %v782, %v864
    %v866 = vlaneseq
    %v867 = vshrl.u32 %v866, 7
    %v868 = vsub.s32 7, %v867
    %v869 = vrot.slane %v782, %v868
    %v878 = vmul.f32 %v829, %v841
    %v879 = vmul.f32 %v830, %v845
    %v880 = vmul.f32 %v831, %v849
    %v881 = vmul.f32 %v832, %v853
    %v882 = vmul.f32 %v833, %v857
    %v883 = vmul.f32 %v834, %v861
    %v884 = vmul.f32 %v835, %v865
    %v885 = vmul.f32 %v836, %v869
    %v887 = vlaneseq
    %v888 = vshrl.u32 %v887, 7
    %v889 = vsub.s32 0, %v888
    %v890 = vrot.slane %v786, %v889
    %v891 = vlaneseq
    %v892 = vshrl.u32 %v891, 7
    %v893 = vsub.s32 1, %v892
    %v894 = vrot.slane %v786, %v893
    %v895 = vlaneseq
    %v896 = vshrl.u32 %v895, 7
    %v897 = vsub.s32 2, %v896
    %v898 = vrot.slane %v786, %v897
    %v899 = vlaneseq
    %v900 = vshrl.u32 %v899, 7
    %v901 = vsub.s32 3, %v900
    %v902 = vrot.slane %v786, %v901
    %v903 = vlaneseq
    %v904 = vshrl.u32 %v903, 7
    %v905 = vsub.s32 4, %v904
    %v906 = vrot.slane %v786, %v905
    %v907 = vlaneseq
    %v908 = vshrl.u32 %v907, 7
    %v909 = vsub.s32 5, %v908
    %v910 = vrot.slane %v786, %v909
    %v911 = vlaneseq
    %v912 = vshrl.u32 %v911, 7
    %v913 = vsub.s32 6, %v912
    %v914 = vrot.slane %v786, %v913
    %v915 = vlaneseq
    %v916 = vshrl.u32 %v915, 7
    %v917 = vsub.s32 7, %v916
    %v918 = vrot.slane %v786, %v917
    %v927 = vadd.f32 %v878, %v890
    %v928 = vadd.f32 %v879, %v894
    %v929 = vadd.f32 %v880, %v898
    %v930 = vadd.f32 %v881, %v902
    %v931 = vadd.f32 %v882, %v906
    %v932 = vadd.f32 %v883, %v910
    %v933 = vadd.f32 %v884, %v914
    %v934 = vadd.f32 %v885, %v918
    %v935 = vmul.f32 %v927, 0.5
    %v936 = vmul.f32 %v928, 0.5
    %v937 = vmul.f32 %v929, 0.5
    %v938 = vmul.f32 %v930, 0.5
    %v939 = vmul.f32 %v931, 0.5
    %v940 = vmul.f32 %v932, 0.5
    %v941 = vmul.f32 %v933, 0.5
    %v942 = vmul.f32 %v934, 0.5
    %v943 = vmul.f32 %v927, 0.70710677
    %v944 = vmul.f32 %v928, 0.70710677
    %v945 = vmul.f32 %v929, 0.70710677
    %v946 = vmul.f32 %v930, 0.70710677
    %v947 = vmul.f32 %v931, 0.70710677
    %v948 = vmul.f32 %v932, 0.70710677
    %v949 = vmul.f32 %v933, 0.70710677
    %v950 = vmul.f32 %v934, 0.70710677
    %v951 = verf.f32.pop %v943
    %v952 = verf.f32.pop %v944
    %v953 = verf.f32.pop %v945
    %v954 = verf.f32.pop %v946
    %v955 = verf.f32.pop %v947
    %v956 = verf.f32.pop %v948
    %v957 = verf.f32.pop %v949
    %v958 = verf.f32.pop %v950
    %v959 = vadd.f32 %v951, 1.0
    %v960 = vadd.f32 %v952, 1.0
    %v961 = vadd.f32 %v953, 1.0
    %v962 = vadd.f32 %v954, 1.0
    %v963 = vadd.f32 %v955, 1.0
    %v964 = vadd.f32 %v956, 1.0
    %v965 = vadd.f32 %v957, 1.0
    %v966 = vadd.f32 %v958, 1.0
    %v967 = vmul.f32 %v935, %v959
    %v968 = vmul.f32 %v936, %v960
    %v969 = vmul.f32 %v937, %v961
    %v970 = vmul.f32 %v938, %v962
    %v971 = vmul.f32 %v939, %v963
    %v972 = vmul.f32 %v940, %v964
    %v973 = vmul.f32 %v941, %v965
    %v974 = vmul.f32 %v942, %v966
    %s975 = scalar_lea.vmem [#allocation16], 3
    %v976 = vld [vmem:[%s975] ss:$8 sm:$0xf]
    %v977 = vld [vmem:[%s975] ss:$8 sm:$0xf0]
    %v978 = vor.u32 %v976, %v977
    %v979 = vpack.c.bf16 %v967, %v967
    %v980 = vpack.c.bf16 %v968, %v968
    %v981 = vpack.c.bf16 %v969, %v969
    %v982 = vpack.c.bf16 %v970, %v970
    %v983 = vpack.c.bf16 %v971, %v971
    %v984 = vpack.c.bf16 %v972, %v972
    %v985 = vpack.c.bf16 %v973, %v973
    %v986 = vpack.c.bf16 %v974, %v974
    %v987 = vld [vmem:[#allocation7] sm:$0xff]
    %v988 = vld [vmem:[#allocation7 + $0x8] sm:$0xff]
    %v989 = vld [vmem:[#allocation7 + $0x10] sm:$0xff]
    %v990 = vld [vmem:[#allocation7 + $0x18] sm:$0xff]
    %v991 = vld [vmem:[#allocation7 + $0x20] sm:$0xff]
    %v992 = vld [vmem:[#allocation7 + $0x28] sm:$0xff]
    %v993 = vld [vmem:[#allocation7 + $0x30] sm:$0xff]
    %v994 = vld [vmem:[#allocation7 + $0x38] sm:$0xff]
    %v995 = vld [vmem:[#allocation7 + $0x40] sm:$0xff]
    %v996 = vld [vmem:[#allocation7 + $0x48] sm:$0xff]
    %v997 = vld [vmem:[#allocation7 + $0x50] sm:$0xff]
    %v998 = vld [vmem:[#allocation7 + $0x58] sm:$0xff]
    %v999 = vld [vmem:[#allocation7 + $0x60] sm:$0xff]
    %v1000 = vld [vmem:[#allocation7 + $0x68] sm:$0xff]
    %v1001 = vld [vmem:[#allocation7 + $0x70] sm:$0xff]
    %v1002 = vld [vmem:[#allocation7 + $0x78] sm:$0xff]
    %v1003 = vld [vmem:[#allocation7 + $0x80] sm:$0xff]
    %v1004 = vld [vmem:[#allocation7 + $0x88] sm:$0xff]
    %v1005 = vld [vmem:[#allocation7 + $0x90] sm:$0xff]
    %v1006 = vld [vmem:[#allocation7 + $0x98] sm:$0xff]
    %v1007 = vld [vmem:[#allocation7 + $0xa0] sm:$0xff]
    %v1008 = vld [vmem:[#allocation7 + $0xa8] sm:$0xff]
    %v1009 = vld [vmem:[#allocation7 + $0xb0] sm:$0xff]
    %v1010 = vld [vmem:[#allocation7 + $0xb8] sm:$0xff]
    %v1011 = vld [vmem:[#allocation7 + $0xc0] sm:$0xff]
    %v1012 = vld [vmem:[#allocation7 + $0xc8] sm:$0xff]
    %v1013 = vld [vmem:[#allocation7 + $0xd0] sm:$0xff]
    %v1014 = vld [vmem:[#allocation7 + $0xd8] sm:$0xff]
    %v1015 = vld [vmem:[#allocation7 + $0xe0] sm:$0xff]
    %v1016 = vld [vmem:[#allocation7 + $0xe8] sm:$0xff]
    %v1017 = vld [vmem:[#allocation7 + $0xf0] sm:$0xff]
    %v1018 = vld [vmem:[#allocation7 + $0xf8] sm:$0xff]
    %v1019 = vld [vmem:[#allocation7 + $0x100] sm:$0xff]
    %v1020 = vld [vmem:[#allocation7 + $0x108] sm:$0xff]
    %v1021 = vld [vmem:[#allocation7 + $0x110] sm:$0xff]
    %v1022 = vld [vmem:[#allocation7 + $0x118] sm:$0xff]
    %v1023 = vld [vmem:[#allocation7 + $0x120] sm:$0xff]
    %v1024 = vld [vmem:[#allocation7 + $0x128] sm:$0xff]
    %v1025 = vld [vmem:[#allocation7 + $0x130] sm:$0xff]
    %v1026 = vld [vmem:[#allocation7 + $0x138] sm:$0xff]
    %v1027 = vld [vmem:[#allocation7 + $0x140] sm:$0xff]
    %v1028 = vld [vmem:[#allocation7 + $0x148] sm:$0xff]
    %v1029 = vld [vmem:[#allocation7 + $0x150] sm:$0xff]
    %v1030 = vld [vmem:[#allocation7 + $0x158] sm:$0xff]
    %v1031 = vld [vmem:[#allocation7 + $0x160] sm:$0xff]
    %v1032 = vld [vmem:[#allocation7 + $0x168] sm:$0xff]
    %v1033 = vld [vmem:[#allocation7 + $0x170] sm:$0xff]
    %v1034 = vld [vmem:[#allocation7 + $0x178] sm:$0xff]
    %v1035 = vld [vmem:[#allocation7 + $0x180] sm:$0xff]
    %v1036 = vld [vmem:[#allocation7 + $0x188] sm:$0xff]
    %v1037 = vld [vmem:[#allocation7 + $0x190] sm:$0xff]
    %v1038 = vld [vmem:[#allocation7 + $0x198] sm:$0xff]
    %v1039 = vld [vmem:[#allocation7 + $0x1a0] sm:$0xff]
    %v1040 = vld [vmem:[#allocation7 + $0x1a8] sm:$0xff]
    %v1041 = vld [vmem:[#allocation7 + $0x1b0] sm:$0xff]
    %v1042 = vld [vmem:[#allocation7 + $0x1b8] sm:$0xff]
    %v1043 = vld [vmem:[#allocation7 + $0x1c0] sm:$0xff]
    %v1044 = vld [vmem:[#allocation7 + $0x1c8] sm:$0xff]
    %v1045 = vld [vmem:[#allocation7 + $0x1d0] sm:$0xff]
    %v1046 = vld [vmem:[#allocation7 + $0x1d8] sm:$0xff]
    %v1047 = vld [vmem:[#allocation7 + $0x1e0] sm:$0xff]
    %v1048 = vld [vmem:[#allocation7 + $0x1e8] sm:$0xff]
    %v1049 = vld [vmem:[#allocation7 + $0x1f0] sm:$0xff]
    %v1050 = vld [vmem:[#allocation7 + $0x1f8] sm:$0xff]
    %v1051 = vld [vmem:[#allocation7 + $0x200] sm:$0xff]
    %v1052 = vld [vmem:[#allocation7 + $0x208] sm:$0xff]
    %v1053 = vld [vmem:[#allocation7 + $0x210] sm:$0xff]
    %v1054 = vld [vmem:[#allocation7 + $0x218] sm:$0xff]
    %v1055 = vld [vmem:[#allocation7 + $0x220] sm:$0xff]
    %v1056 = vld [vmem:[#allocation7 + $0x228] sm:$0xff]
    %v1057 = vld [vmem:[#allocation7 + $0x230] sm:$0xff]
    %v1058 = vld [vmem:[#allocation7 + $0x238] sm:$0xff]
    %v1059 = vld [vmem:[#allocation7 + $0x240] sm:$0xff]
    %v1060 = vld [vmem:[#allocation7 + $0x248] sm:$0xff]
    %v1061 = vld [vmem:[#allocation7 + $0x250] sm:$0xff]
    %v1062 = vld [vmem:[#allocation7 + $0x258] sm:$0xff]
    %v1063 = vld [vmem:[#allocation7 + $0x260] sm:$0xff]
    %v1064 = vld [vmem:[#allocation7 + $0x268] sm:$0xff]
    %v1065 = vld [vmem:[#allocation7 + $0x270] sm:$0xff]
    %v1066 = vld [vmem:[#allocation7 + $0x278] sm:$0xff]
    %v1067 = vld [vmem:[#allocation7 + $0x280] sm:$0xff]
    %v1068 = vld [vmem:[#allocation7 + $0x288] sm:$0xff]
    %v1069 = vld [vmem:[#allocation7 + $0x290] sm:$0xff]
    %v1070 = vld [vmem:[#allocation7 + $0x298] sm:$0xff]
    %v1071 = vld [vmem:[#allocation7 + $0x2a0] sm:$0xff]
    %v1072 = vld [vmem:[#allocation7 + $0x2a8] sm:$0xff]
    %v1073 = vld [vmem:[#allocation7 + $0x2b0] sm:$0xff]
    %v1074 = vld [vmem:[#allocation7 + $0x2b8] sm:$0xff]
    %v1075 = vld [vmem:[#allocation7 + $0x2c0] sm:$0xff]
    %v1076 = vld [vmem:[#allocation7 + $0x2c8] sm:$0xff]
    %v1077 = vld [vmem:[#allocation7 + $0x2d0] sm:$0xff]
    %v1078 = vld [vmem:[#allocation7 + $0x2d8] sm:$0xff]
    %v1079 = vld [vmem:[#allocation7 + $0x2e0] sm:$0xff]
    %v1080 = vld [vmem:[#allocation7 + $0x2e8] sm:$0xff]
    %v1081 = vld [vmem:[#allocation7 + $0x2f0] sm:$0xff]
    %v1082 = vld [vmem:[#allocation7 + $0x2f8] sm:$0xff]
    %v1083 = vld [vmem:[#allocation7 + $0x300] sm:$0xff]
    %v1084 = vld [vmem:[#allocation7 + $0x308] sm:$0xff]
    %v1085 = vld [vmem:[#allocation7 + $0x310] sm:$0xff]
    %v1086 = vld [vmem:[#allocation7 + $0x318] sm:$0xff]
    %v1087 = vld [vmem:[#allocation7 + $0x320] sm:$0xff]
    %v1088 = vld [vmem:[#allocation7 + $0x328] sm:$0xff]
    %v1089 = vld [vmem:[#allocation7 + $0x330] sm:$0xff]
    %v1090 = vld [vmem:[#allocation7 + $0x338] sm:$0xff]
    %v1091 = vld [vmem:[#allocation7 + $0x340] sm:$0xff]
    %v1092 = vld [vmem:[#allocation7 + $0x348] sm:$0xff]
    %v1093 = vld [vmem:[#allocation7 + $0x350] sm:$0xff]
    %v1094 = vld [vmem:[#allocation7 + $0x358] sm:$0xff]
    %v1095 = vld [vmem:[#allocation7 + $0x360] sm:$0xff]
    %v1096 = vld [vmem:[#allocation7 + $0x368] sm:$0xff]
    %v1097 = vld [vmem:[#allocation7 + $0x370] sm:$0xff]
    %v1098 = vld [vmem:[#allocation7 + $0x378] sm:$0xff]
    %v1099 = vld [vmem:[#allocation7 + $0x380] sm:$0xff]
    %v1100 = vld [vmem:[#allocation7 + $0x388] sm:$0xff]
    %v1101 = vld [vmem:[#allocation7 + $0x390] sm:$0xff]
    %v1102 = vld [vmem:[#allocation7 + $0x398] sm:$0xff]
    %v1103 = vld [vmem:[#allocation7 + $0x3a0] sm:$0xff]
    %v1104 = vld [vmem:[#allocation7 + $0x3a8] sm:$0xff]
    %v1105 = vld [vmem:[#allocation7 + $0x3b0] sm:$0xff]
    %v1106 = vld [vmem:[#allocation7 + $0x3b8] sm:$0xff]
    %v1107 = vld [vmem:[#allocation7 + $0x3c0] sm:$0xff]
    %v1108 = vld [vmem:[#allocation7 + $0x3c8] sm:$0xff]
    %v1109 = vld [vmem:[#allocation7 + $0x3d0] sm:$0xff]
    %v1110 = vld [vmem:[#allocation7 + $0x3d8] sm:$0xff]
    %v1111 = vld [vmem:[#allocation7 + $0x3e0] sm:$0xff]
    %v1112 = vld [vmem:[#allocation7 + $0x3e8] sm:$0xff]
    %v1113 = vld [vmem:[#allocation7 + $0x3f0] sm:$0xff]
    %v1114 = vld [vmem:[#allocation7 + $0x3f8] sm:$0xff]
    %v1115 = vld [vmem:[#allocation7 + $0x400] sm:$0xff]
    %v1116 = vld [vmem:[#allocation7 + $0x408] sm:$0xff]
    %v1117 = vld [vmem:[#allocation7 + $0x410] sm:$0xff]
    %v1118 = vld [vmem:[#allocation7 + $0x418] sm:$0xff]
    %v1119 = vld [vmem:[#allocation7 + $0x420] sm:$0xff]
    %v1120 = vld [vmem:[#allocation7 + $0x428] sm:$0xff]
    %v1121 = vld [vmem:[#allocation7 + $0x430] sm:$0xff]
    %v1122 = vld [vmem:[#allocation7 + $0x438] sm:$0xff]
    %v1123 = vld [vmem:[#allocation7 + $0x440] sm:$0xff]
    %v1124 = vld [vmem:[#allocation7 + $0x448] sm:$0xff]
    %v1125 = vld [vmem:[#allocation7 + $0x450] sm:$0xff]
    %v1126 = vld [vmem:[#allocation7 + $0x458] sm:$0xff]
    %v1127 = vld [vmem:[#allocation7 + $0x460] sm:$0xff]
    %v1128 = vld [vmem:[#allocation7 + $0x468] sm:$0xff]
    %v1129 = vld [vmem:[#allocation7 + $0x470] sm:$0xff]
    %v1130 = vld [vmem:[#allocation7 + $0x478] sm:$0xff]
    %v1131 = vld [vmem:[#allocation7 + $0x480] sm:$0xff]
    %v1132 = vld [vmem:[#allocation7 + $0x488] sm:$0xff]
    %v1133 = vld [vmem:[#allocation7 + $0x490] sm:$0xff]
    %v1134 = vld [vmem:[#allocation7 + $0x498] sm:$0xff]
    %v1135 = vld [vmem:[#allocation7 + $0x4a0] sm:$0xff]
    %v1136 = vld [vmem:[#allocation7 + $0x4a8] sm:$0xff]
    %v1137 = vld [vmem:[#allocation7 + $0x4b0] sm:$0xff]
    %v1138 = vld [vmem:[#allocation7 + $0x4b8] sm:$0xff]
    %v1139 = vld [vmem:[#allocation7 + $0x4c0] sm:$0xff]
    %v1140 = vld [vmem:[#allocation7 + $0x4c8] sm:$0xff]
    %v1141 = vld [vmem:[#allocation7 + $0x4d0] sm:$0xff]
    %v1142 = vld [vmem:[#allocation7 + $0x4d8] sm:$0xff]
    %v1143 = vld [vmem:[#allocation7 + $0x4e0] sm:$0xff]
    %v1144 = vld [vmem:[#allocation7 + $0x4e8] sm:$0xff]
    %v1145 = vld [vmem:[#allocation7 + $0x4f0] sm:$0xff]
    %v1146 = vld [vmem:[#allocation7 + $0x4f8] sm:$0xff]
    %v1147 = vld [vmem:[#allocation7 + $0x500] sm:$0xff]
    %v1148 = vld [vmem:[#allocation7 + $0x508] sm:$0xff]
    %v1149 = vld [vmem:[#allocation7 + $0x510] sm:$0xff]
    %v1150 = vld [vmem:[#allocation7 + $0x518] sm:$0xff]
    %v1151 = vld [vmem:[#allocation7 + $0x520] sm:$0xff]
    %v1152 = vld [vmem:[#allocation7 + $0x528] sm:$0xff]
    %v1153 = vld [vmem:[#allocation7 + $0x530] sm:$0xff]
    %v1154 = vld [vmem:[#allocation7 + $0x538] sm:$0xff]
    %v1155 = vld [vmem:[#allocation7 + $0x540] sm:$0xff]
    %v1156 = vld [vmem:[#allocation7 + $0x548] sm:$0xff]
    %v1157 = vld [vmem:[#allocation7 + $0x550] sm:$0xff]
    %v1158 = vld [vmem:[#allocation7 + $0x558] sm:$0xff]
    %v1159 = vld [vmem:[#allocation7 + $0x560] sm:$0xff]
    %v1160 = vld [vmem:[#allocation7 + $0x568] sm:$0xff]
    %v1161 = vld [vmem:[#allocation7 + $0x570] sm:$0xff]
    %v1162 = vld [vmem:[#allocation7 + $0x578] sm:$0xff]
    %v1163 = vld [vmem:[#allocation7 + $0x580] sm:$0xff]
    %v1164 = vld [vmem:[#allocation7 + $0x588] sm:$0xff]
    %v1165 = vld [vmem:[#allocation7 + $0x590] sm:$0xff]
    %v1166 = vld [vmem:[#allocation7 + $0x598] sm:$0xff]
    %v1167 = vld [vmem:[#allocation7 + $0x5a0] sm:$0xff]
    %v1168 = vld [vmem:[#allocation7 + $0x5a8] sm:$0xff]
    %v1169 = vld [vmem:[#allocation7 + $0x5b0] sm:$0xff]
    %v1170 = vld [vmem:[#allocation7 + $0x5b8] sm:$0xff]
    %v1171 = vld [vmem:[#allocation7 + $0x5c0] sm:$0xff]
    %v1172 = vld [vmem:[#allocation7 + $0x5c8] sm:$0xff]
    %v1173 = vld [vmem:[#allocation7 + $0x5d0] sm:$0xff]
    %v1174 = vld [vmem:[#allocation7 + $0x5d8] sm:$0xff]
    %v1175 = vld [vmem:[#allocation7 + $0x5e0] sm:$0xff]
    %v1176 = vld [vmem:[#allocation7 + $0x5e8] sm:$0xff]
    %v1177 = vld [vmem:[#allocation7 + $0x5f0] sm:$0xff]
    %v1178 = vld [vmem:[#allocation7 + $0x5f8] sm:$0xff]
    %v1179 = vld [vmem:[#allocation7 + $0x600] sm:$0xff]
    %v1180 = vld [vmem:[#allocation7 + $0x608] sm:$0xff]
    %v1181 = vld [vmem:[#allocation7 + $0x610] sm:$0xff]
    %v1182 = vld [vmem:[#allocation7 + $0x618] sm:$0xff]
    %v1183 = vld [vmem:[#allocation7 + $0x620] sm:$0xff]
    %v1184 = vld [vmem:[#allocation7 + $0x628] sm:$0xff]
    %v1185 = vld [vmem:[#allocation7 + $0x630] sm:$0xff]
    %v1186 = vld [vmem:[#allocation7 + $0x638] sm:$0xff]
    %v1187 = vld [vmem:[#allocation7 + $0x640] sm:$0xff]
    %v1188 = vld [vmem:[#allocation7 + $0x648] sm:$0xff]
    %v1189 = vld [vmem:[#allocation7 + $0x650] sm:$0xff]
    %v1190 = vld [vmem:[#allocation7 + $0x658] sm:$0xff]
    %v1191 = vld [vmem:[#allocation7 + $0x660] sm:$0xff]
    %v1192 = vld [vmem:[#allocation7 + $0x668] sm:$0xff]
    %v1193 = vld [vmem:[#allocation7 + $0x670] sm:$0xff]
    %v1194 = vld [vmem:[#allocation7 + $0x678] sm:$0xff]
    %v1195 = vld [vmem:[#allocation7 + $0x680] sm:$0xff]
    %v1196 = vld [vmem:[#allocation7 + $0x688] sm:$0xff]
    %v1197 = vld [vmem:[#allocation7 + $0x690] sm:$0xff]
    %v1198 = vld [vmem:[#allocation7 + $0x698] sm:$0xff]
    %v1199 = vld [vmem:[#allocation7 + $0x6a0] sm:$0xff]
    %v1200 = vld [vmem:[#allocation7 + $0x6a8] sm:$0xff]
    %v1201 = vld [vmem:[#allocation7 + $0x6b0] sm:$0xff]
    %v1202 = vld [vmem:[#allocation7 + $0x6b8] sm:$0xff]
    %v1203 = vld [vmem:[#allocation7 + $0x6c0] sm:$0xff]
    %v1204 = vld [vmem:[#allocation7 + $0x6c8] sm:$0xff]
    %v1205 = vld [vmem:[#allocation7 + $0x6d0] sm:$0xff]
    %v1206 = vld [vmem:[#allocation7 + $0x6d8] sm:$0xff]
    %v1207 = vld [vmem:[#allocation7 + $0x6e0] sm:$0xff]
    %v1208 = vld [vmem:[#allocation7 + $0x6e8] sm:$0xff]
    %v1209 = vld [vmem:[#allocation7 + $0x6f0] sm:$0xff]
    %v1210 = vld [vmem:[#allocation7 + $0x6f8] sm:$0xff]
    %v1211 = vld [vmem:[#allocation7 + $0x700] sm:$0xff]
    %v1212 = vld [vmem:[#allocation7 + $0x708] sm:$0xff]
    %v1213 = vld [vmem:[#allocation7 + $0x710] sm:$0xff]
    %v1214 = vld [vmem:[#allocation7 + $0x718] sm:$0xff]
    %v1215 = vld [vmem:[#allocation7 + $0x720] sm:$0xff]
    %v1216 = vld [vmem:[#allocation7 + $0x728] sm:$0xff]
    %v1217 = vld [vmem:[#allocation7 + $0x730] sm:$0xff]
    %v1218 = vld [vmem:[#allocation7 + $0x738] sm:$0xff]
    %v1219 = vld [vmem:[#allocation7 + $0x740] sm:$0xff]
    %v1220 = vld [vmem:[#allocation7 + $0x748] sm:$0xff]
    %v1221 = vld [vmem:[#allocation7 + $0x750] sm:$0xff]
    %v1222 = vld [vmem:[#allocation7 + $0x758] sm:$0xff]
    %v1223 = vld [vmem:[#allocation7 + $0x760] sm:$0xff]
    %v1224 = vld [vmem:[#allocation7 + $0x768] sm:$0xff]
    %v1225 = vld [vmem:[#allocation7 + $0x770] sm:$0xff]
    %v1226 = vld [vmem:[#allocation7 + $0x778] sm:$0xff]
    %v1227 = vld [vmem:[#allocation7 + $0x780] sm:$0xff]
    %v1228 = vld [vmem:[#allocation7 + $0x788] sm:$0xff]
    %v1229 = vld [vmem:[#allocation7 + $0x790] sm:$0xff]
    %v1230 = vld [vmem:[#allocation7 + $0x798] sm:$0xff]
    %v1231 = vld [vmem:[#allocation7 + $0x7a0] sm:$0xff]
    %v1232 = vld [vmem:[#allocation7 + $0x7a8] sm:$0xff]
    %v1233 = vld [vmem:[#allocation7 + $0x7b0] sm:$0xff]
    %v1234 = vld [vmem:[#allocation7 + $0x7b8] sm:$0xff]
    %v1235 = vld [vmem:[#allocation7 + $0x7c0] sm:$0xff]
    %v1236 = vld [vmem:[#allocation7 + $0x7c8] sm:$0xff]
    %v1237 = vld [vmem:[#allocation7 + $0x7d0] sm:$0xff]
    %v1238 = vld [vmem:[#allocation7 + $0x7d8] sm:$0xff]
    %v1239 = vld [vmem:[#allocation7 + $0x7e0] sm:$0xff]
    %v1240 = vld [vmem:[#allocation7 + $0x7e8] sm:$0xff]
    %v1241 = vld [vmem:[#allocation7 + $0x7f0] sm:$0xff]
    %v1242 = vld [vmem:[#allocation7 + $0x7f8] sm:$0xff]
    %v1243 = vld [vmem:[#allocation7 + $0x800] sm:$0xff]
    %v1244 = vld [vmem:[#allocation7 + $0x808] sm:$0xff]
    %v1245 = vld [vmem:[#allocation7 + $0x810] sm:$0xff]
    %v1246 = vld [vmem:[#allocation7 + $0x818] sm:$0xff]
    %v1247 = vld [vmem:[#allocation7 + $0x820] sm:$0xff]
    %v1248 = vld [vmem:[#allocation7 + $0x828] sm:$0xff]
    %v1249 = vld [vmem:[#allocation7 + $0x830] sm:$0xff]
    %v1250 = vld [vmem:[#allocation7 + $0x838] sm:$0xff]
    %v1251 = vld [vmem:[#allocation7 + $0x840] sm:$0xff]
    %v1252 = vld [vmem:[#allocation7 + $0x848] sm:$0xff]
    %v1253 = vld [vmem:[#allocation7 + $0x850] sm:$0xff]
    %v1254 = vld [vmem:[#allocation7 + $0x858] sm:$0xff]
    %v1255 = vld [vmem:[#allocation7 + $0x860] sm:$0xff]
    %v1256 = vld [vmem:[#allocation7 + $0x868] sm:$0xff]
    %v1257 = vld [vmem:[#allocation7 + $0x870] sm:$0xff]
    %v1258 = vld [vmem:[#allocation7 + $0x878] sm:$0xff]
    %v1259 = vld [vmem:[#allocation7 + $0x880] sm:$0xff]
    %v1260 = vld [vmem:[#allocation7 + $0x888] sm:$0xff]
    %v1261 = vld [vmem:[#allocation7 + $0x890] sm:$0xff]
    %v1262 = vld [vmem:[#allocation7 + $0x898] sm:$0xff]
    %v1263 = vld [vmem:[#allocation7 + $0x8a0] sm:$0xff]
    %v1264 = vld [vmem:[#allocation7 + $0x8a8] sm:$0xff]
    %v1265 = vld [vmem:[#allocation7 + $0x8b0] sm:$0xff]
    %v1266 = vld [vmem:[#allocation7 + $0x8b8] sm:$0xff]
    %v1267 = vld [vmem:[#allocation7 + $0x8c0] sm:$0xff]
    %v1268 = vld [vmem:[#allocation7 + $0x8c8] sm:$0xff]
    %v1269 = vld [vmem:[#allocation7 + $0x8d0] sm:$0xff]
    %v1270 = vld [vmem:[#allocation7 + $0x8d8] sm:$0xff]
    %v1271 = vld [vmem:[#allocation7 + $0x8e0] sm:$0xff]
    %v1272 = vld [vmem:[#allocation7 + $0x8e8] sm:$0xff]
    %v1273 = vld [vmem:[#allocation7 + $0x8f0] sm:$0xff]
    %v1274 = vld [vmem:[#allocation7 + $0x8f8] sm:$0xff]
    %v1275 = vld [vmem:[#allocation7 + $0x900] sm:$0xff]
    %v1276 = vld [vmem:[#allocation7 + $0x908] sm:$0xff]
    %v1277 = vld [vmem:[#allocation7 + $0x910] sm:$0xff]
    %v1278 = vld [vmem:[#allocation7 + $0x918] sm:$0xff]
    %v1279 = vld [vmem:[#allocation7 + $0x920] sm:$0xff]
    %v1280 = vld [vmem:[#allocation7 + $0x928] sm:$0xff]
    %v1281 = vld [vmem:[#allocation7 + $0x930] sm:$0xff]
    %v1282 = vld [vmem:[#allocation7 + $0x938] sm:$0xff]
    %v1283 = vld [vmem:[#allocation7 + $0x940] sm:$0xff]
    %v1284 = vld [vmem:[#allocation7 + $0x948] sm:$0xff]
    %v1285 = vld [vmem:[#allocation7 + $0x950] sm:$0xff]
    %v1286 = vld [vmem:[#allocation7 + $0x958] sm:$0xff]
    %v1287 = vld [vmem:[#allocation7 + $0x960] sm:$0xff]
    %v1288 = vld [vmem:[#allocation7 + $0x968] sm:$0xff]
    %v1289 = vld [vmem:[#allocation7 + $0x970] sm:$0xff]
    %v1290 = vld [vmem:[#allocation7 + $0x978] sm:$0xff]
    %v1291 = vld [vmem:[#allocation7 + $0x980] sm:$0xff]
    %v1292 = vld [vmem:[#allocation7 + $0x988] sm:$0xff]
    %v1293 = vld [vmem:[#allocation7 + $0x990] sm:$0xff]
    %v1294 = vld [vmem:[#allocation7 + $0x998] sm:$0xff]
    %v1295 = vld [vmem:[#allocation7 + $0x9a0] sm:$0xff]
    %v1296 = vld [vmem:[#allocation7 + $0x9a8] sm:$0xff]
    %v1297 = vld [vmem:[#allocation7 + $0x9b0] sm:$0xff]
    %v1298 = vld [vmem:[#allocation7 + $0x9b8] sm:$0xff]
    %v1299 = vld [vmem:[#allocation7 + $0x9c0] sm:$0xff]
    %v1300 = vld [vmem:[#allocation7 + $0x9c8] sm:$0xff]
    %v1301 = vld [vmem:[#allocation7 + $0x9d0] sm:$0xff]
    %v1302 = vld [vmem:[#allocation7 + $0x9d8] sm:$0xff]
    %v1303 = vld [vmem:[#allocation7 + $0x9e0] sm:$0xff]
    %v1304 = vld [vmem:[#allocation7 + $0x9e8] sm:$0xff]
    %v1305 = vld [vmem:[#allocation7 + $0x9f0] sm:$0xff]
    %v1306 = vld [vmem:[#allocation7 + $0x9f8] sm:$0xff]
    %v1307 = vld [vmem:[#allocation7 + $0xa00] sm:$0xff]
    %v1308 = vld [vmem:[#allocation7 + $0xa08] sm:$0xff]
    %v1309 = vld [vmem:[#allocation7 + $0xa10] sm:$0xff]
    %v1310 = vld [vmem:[#allocation7 + $0xa18] sm:$0xff]
    %v1311 = vld [vmem:[#allocation7 + $0xa20] sm:$0xff]
    %v1312 = vld [vmem:[#allocation7 + $0xa28] sm:$0xff]
    %v1313 = vld [vmem:[#allocation7 + $0xa30] sm:$0xff]
    %v1314 = vld [vmem:[#allocation7 + $0xa38] sm:$0xff]
    %v1315 = vld [vmem:[#allocation7 + $0xa40] sm:$0xff]
    %v1316 = vld [vmem:[#allocation7 + $0xa48] sm:$0xff]
    %v1317 = vld [vmem:[#allocation7 + $0xa50] sm:$0xff]
    %v1318 = vld [vmem:[#allocation7 + $0xa58] sm:$0xff]
    %v1319 = vld [vmem:[#allocation7 + $0xa60] sm:$0xff]
    %v1320 = vld [vmem:[#allocation7 + $0xa68] sm:$0xff]
    %v1321 = vld [vmem:[#allocation7 + $0xa70] sm:$0xff]
    %v1322 = vld [vmem:[#allocation7 + $0xa78] sm:$0xff]
    %v1323 = vld [vmem:[#allocation7 + $0xa80] sm:$0xff]
    %v1324 = vld [vmem:[#allocation7 + $0xa88] sm:$0xff]
    %v1325 = vld [vmem:[#allocation7 + $0xa90] sm:$0xff]
    %v1326 = vld [vmem:[#allocation7 + $0xa98] sm:$0xff]
    %v1327 = vld [vmem:[#allocation7 + $0xaa0] sm:$0xff]
    %v1328 = vld [vmem:[#allocation7 + $0xaa8] sm:$0xff]
    %v1329 = vld [vmem:[#allocation7 + $0xab0] sm:$0xff]
    %v1330 = vld [vmem:[#allocation7 + $0xab8] sm:$0xff]
    %v1331 = vld [vmem:[#allocation7 + $0xac0] sm:$0xff]
    %v1332 = vld [vmem:[#allocation7 + $0xac8] sm:$0xff]
    %v1333 = vld [vmem:[#allocation7 + $0xad0] sm:$0xff]
    %v1334 = vld [vmem:[#allocation7 + $0xad8] sm:$0xff]
    %v1335 = vld [vmem:[#allocation7 + $0xae0] sm:$0xff]
    %v1336 = vld [vmem:[#allocation7 + $0xae8] sm:$0xff]
    %v1337 = vld [vmem:[#allocation7 + $0xaf0] sm:$0xff]
    %v1338 = vld [vmem:[#allocation7 + $0xaf8] sm:$0xff]
    %v1339 = vld [vmem:[#allocation7 + $0xb00] sm:$0xff]
    %v1340 = vld [vmem:[#allocation7 + $0xb08] sm:$0xff]
    %v1341 = vld [vmem:[#allocation7 + $0xb10] sm:$0xff]
    %v1342 = vld [vmem:[#allocation7 + $0xb18] sm:$0xff]
    %v1343 = vld [vmem:[#allocation7 + $0xb20] sm:$0xff]
    %v1344 = vld [vmem:[#allocation7 + $0xb28] sm:$0xff]
    %v1345 = vld [vmem:[#allocation7 + $0xb30] sm:$0xff]
    %v1346 = vld [vmem:[#allocation7 + $0xb38] sm:$0xff]
    %v1347 = vld [vmem:[#allocation7 + $0xb40] sm:$0xff]
    %v1348 = vld [vmem:[#allocation7 + $0xb48] sm:$0xff]
    %v1349 = vld [vmem:[#allocation7 + $0xb50] sm:$0xff]
    %v1350 = vld [vmem:[#allocation7 + $0xb58] sm:$0xff]
    %v1351 = vld [vmem:[#allocation7 + $0xb60] sm:$0xff]
    %v1352 = vld [vmem:[#allocation7 + $0xb68] sm:$0xff]
    %v1353 = vld [vmem:[#allocation7 + $0xb70] sm:$0xff]
    %v1354 = vld [vmem:[#allocation7 + $0xb78] sm:$0xff]
    %v1355 = vld [vmem:[#allocation7 + $0xb80] sm:$0xff]
    %v1356 = vld [vmem:[#allocation7 + $0xb88] sm:$0xff]
    %v1357 = vld [vmem:[#allocation7 + $0xb90] sm:$0xff]
    %v1358 = vld [vmem:[#allocation7 + $0xb98] sm:$0xff]
    %v1359 = vld [vmem:[#allocation7 + $0xba0] sm:$0xff]
    %v1360 = vld [vmem:[#allocation7 + $0xba8] sm:$0xff]
    %v1361 = vld [vmem:[#allocation7 + $0xbb0] sm:$0xff]
    %v1362 = vld [vmem:[#allocation7 + $0xbb8] sm:$0xff]
    %v1363 = vld [vmem:[#allocation7 + $0xbc0] sm:$0xff]
    %v1364 = vld [vmem:[#allocation7 + $0xbc8] sm:$0xff]
    %v1365 = vld [vmem:[#allocation7 + $0xbd0] sm:$0xff]
    %v1366 = vld [vmem:[#allocation7 + $0xbd8] sm:$0xff]
    %v1367 = vld [vmem:[#allocation7 + $0xbe0] sm:$0xff]
    %v1368 = vld [vmem:[#allocation7 + $0xbe8] sm:$0xff]
    %v1369 = vld [vmem:[#allocation7 + $0xbf0] sm:$0xff]
    %v1370 = vld [vmem:[#allocation7 + $0xbf8] sm:$0xff]
    %v1371 = vld [vmem:[#allocation7 + $0xc00] sm:$0xff]
    %v1372 = vld [vmem:[#allocation7 + $0xc08] sm:$0xff]
    %v1373 = vld [vmem:[#allocation7 + $0xc10] sm:$0xff]
    %v1374 = vld [vmem:[#allocation7 + $0xc18] sm:$0xff]
    %v1375 = vld [vmem:[#allocation7 + $0xc20] sm:$0xff]
    %v1376 = vld [vmem:[#allocation7 + $0xc28] sm:$0xff]
    %v1377 = vld [vmem:[#allocation7 + $0xc30] sm:$0xff]
    %v1378 = vld [vmem:[#allocation7 + $0xc38] sm:$0xff]
    %v1379 = vld [vmem:[#allocation7 + $0xc40] sm:$0xff]
    %v1380 = vld [vmem:[#allocation7 + $0xc48] sm:$0xff]
    %v1381 = vld [vmem:[#allocation7 + $0xc50] sm:$0xff]
    %v1382 = vld [vmem:[#allocation7 + $0xc58] sm:$0xff]
    %v1383 = vld [vmem:[#allocation7 + $0xc60] sm:$0xff]
    %v1384 = vld [vmem:[#allocation7 + $0xc68] sm:$0xff]
    %v1385 = vld [vmem:[#allocation7 + $0xc70] sm:$0xff]
    %v1386 = vld [vmem:[#allocation7 + $0xc78] sm:$0xff]
    %v1387 = vld [vmem:[#allocation7 + $0xc80] sm:$0xff]
    %v1388 = vld [vmem:[#allocation7 + $0xc88] sm:$0xff]
    %v1389 = vld [vmem:[#allocation7 + $0xc90] sm:$0xff]
    %v1390 = vld [vmem:[#allocation7 + $0xc98] sm:$0xff]
    %v1391 = vld [vmem:[#allocation7 + $0xca0] sm:$0xff]
    %v1392 = vld [vmem:[#allocation7 + $0xca8] sm:$0xff]
    %v1393 = vld [vmem:[#allocation7 + $0xcb0] sm:$0xff]
    %v1394 = vld [vmem:[#allocation7 + $0xcb8] sm:$0xff]
    %v1395 = vld [vmem:[#allocation7 + $0xcc0] sm:$0xff]
    %v1396 = vld [vmem:[#allocation7 + $0xcc8] sm:$0xff]
    %v1397 = vld [vmem:[#allocation7 + $0xcd0] sm:$0xff]
    %v1398 = vld [vmem:[#allocation7 + $0xcd8] sm:$0xff]
    %v1399 = vld [vmem:[#allocation7 + $0xce0] sm:$0xff]
    %v1400 = vld [vmem:[#allocation7 + $0xce8] sm:$0xff]
    %v1401 = vld [vmem:[#allocation7 + $0xcf0] sm:$0xff]
    %v1402 = vld [vmem:[#allocation7 + $0xcf8] sm:$0xff]
    %v1403 = vld [vmem:[#allocation7 + $0xd00] sm:$0xff]
    %v1404 = vld [vmem:[#allocation7 + $0xd08] sm:$0xff]
    %v1405 = vld [vmem:[#allocation7 + $0xd10] sm:$0xff]
    %v1406 = vld [vmem:[#allocation7 + $0xd18] sm:$0xff]
    %v1407 = vld [vmem:[#allocation7 + $0xd20] sm:$0xff]
    %v1408 = vld [vmem:[#allocation7 + $0xd28] sm:$0xff]
    %v1409 = vld [vmem:[#allocation7 + $0xd30] sm:$0xff]
    %v1410 = vld [vmem:[#allocation7 + $0xd38] sm:$0xff]
    %v1411 = vld [vmem:[#allocation7 + $0xd40] sm:$0xff]
    %v1412 = vld [vmem:[#allocation7 + $0xd48] sm:$0xff]
    %v1413 = vld [vmem:[#allocation7 + $0xd50] sm:$0xff]
    %v1414 = vld [vmem:[#allocation7 + $0xd58] sm:$0xff]
    %v1415 = vld [vmem:[#allocation7 + $0xd60] sm:$0xff]
    %v1416 = vld [vmem:[#allocation7 + $0xd68] sm:$0xff]
    %v1417 = vld [vmem:[#allocation7 + $0xd70] sm:$0xff]
    %v1418 = vld [vmem:[#allocation7 + $0xd78] sm:$0xff]
    %v1419 = vld [vmem:[#allocation7 + $0xd80] sm:$0xff]
    %v1420 = vld [vmem:[#allocation7 + $0xd88] sm:$0xff]
    %v1421 = vld [vmem:[#allocation7 + $0xd90] sm:$0xff]
    %v1422 = vld [vmem:[#allocation7 + $0xd98] sm:$0xff]
    %v1423 = vld [vmem:[#allocation7 + $0xda0] sm:$0xff]
    %v1424 = vld [vmem:[#allocation7 + $0xda8] sm:$0xff]
    %v1425 = vld [vmem:[#allocation7 + $0xdb0] sm:$0xff]
    %v1426 = vld [vmem:[#allocation7 + $0xdb8] sm:$0xff]
    %v1427 = vld [vmem:[#allocation7 + $0xdc0] sm:$0xff]
    %v1428 = vld [vmem:[#allocation7 + $0xdc8] sm:$0xff]
    %v1429 = vld [vmem:[#allocation7 + $0xdd0] sm:$0xff]
    %v1430 = vld [vmem:[#allocation7 + $0xdd8] sm:$0xff]
    %v1431 = vld [vmem:[#allocation7 + $0xde0] sm:$0xff]
    %v1432 = vld [vmem:[#allocation7 + $0xde8] sm:$0xff]
    %v1433 = vld [vmem:[#allocation7 + $0xdf0] sm:$0xff]
    %v1434 = vld [vmem:[#allocation7 + $0xdf8] sm:$0xff]
    %v1435 = vld [vmem:[#allocation7 + $0xe00] sm:$0xff]
    %v1436 = vld [vmem:[#allocation7 + $0xe08] sm:$0xff]
    %v1437 = vld [vmem:[#allocation7 + $0xe10] sm:$0xff]
    %v1438 = vld [vmem:[#allocation7 + $0xe18] sm:$0xff]
    %v1439 = vld [vmem:[#allocation7 + $0xe20] sm:$0xff]
    %v1440 = vld [vmem:[#allocation7 + $0xe28] sm:$0xff]
    %v1441 = vld [vmem:[#allocation7 + $0xe30] sm:$0xff]
    %v1442 = vld [vmem:[#allocation7 + $0xe38] sm:$0xff]
    %v1443 = vld [vmem:[#allocation7 + $0xe40] sm:$0xff]
    %v1444 = vld [vmem:[#allocation7 + $0xe48] sm:$0xff]
    %v1445 = vld [vmem:[#allocation7 + $0xe50] sm:$0xff]
    %v1446 = vld [vmem:[#allocation7 + $0xe58] sm:$0xff]
    %v1447 = vld [vmem:[#allocation7 + $0xe60] sm:$0xff]
    %v1448 = vld [vmem:[#allocation7 + $0xe68] sm:$0xff]
    %v1449 = vld [vmem:[#allocation7 + $0xe70] sm:$0xff]
    %v1450 = vld [vmem:[#allocation7 + $0xe78] sm:$0xff]
    %v1451 = vld [vmem:[#allocation7 + $0xe80] sm:$0xff]
    %v1452 = vld [vmem:[#allocation7 + $0xe88] sm:$0xff]
    %v1453 = vld [vmem:[#allocation7 + $0xe90] sm:$0xff]
    %v1454 = vld [vmem:[#allocation7 + $0xe98] sm:$0xff]
    %v1455 = vld [vmem:[#allocation7 + $0xea0] sm:$0xff]
    %v1456 = vld [vmem:[#allocation7 + $0xea8] sm:$0xff]
    %v1457 = vld [vmem:[#allocation7 + $0xeb0] sm:$0xff]
    %v1458 = vld [vmem:[#allocation7 + $0xeb8] sm:$0xff]
    %v1459 = vld [vmem:[#allocation7 + $0xec0] sm:$0xff]
    %v1460 = vld [vmem:[#allocation7 + $0xec8] sm:$0xff]
    %v1461 = vld [vmem:[#allocation7 + $0xed0] sm:$0xff]
    %v1462 = vld [vmem:[#allocation7 + $0xed8] sm:$0xff]
    %v1463 = vld [vmem:[#allocation7 + $0xee0] sm:$0xff]
    %v1464 = vld [vmem:[#allocation7 + $0xee8] sm:$0xff]
    %v1465 = vld [vmem:[#allocation7 + $0xef0] sm:$0xff]
    %v1466 = vld [vmem:[#allocation7 + $0xef8] sm:$0xff]
    %v1467 = vld [vmem:[#allocation7 + $0xf00] sm:$0xff]
    %v1468 = vld [vmem:[#allocation7 + $0xf08] sm:$0xff]
    %v1469 = vld [vmem:[#allocation7 + $0xf10] sm:$0xff]
    %v1470 = vld [vmem:[#allocation7 + $0xf18] sm:$0xff]
    %v1471 = vld [vmem:[#allocation7 + $0xf20] sm:$0xff]
    %v1472 = vld [vmem:[#allocation7 + $0xf28] sm:$0xff]
    %v1473 = vld [vmem:[#allocation7 + $0xf30] sm:$0xff]
    %v1474 = vld [vmem:[#allocation7 + $0xf38] sm:$0xff]
    %v1475 = vld [vmem:[#allocation7 + $0xf40] sm:$0xff]
    %v1476 = vld [vmem:[#allocation7 + $0xf48] sm:$0xff]
    %v1477 = vld [vmem:[#allocation7 + $0xf50] sm:$0xff]
    %v1478 = vld [vmem:[#allocation7 + $0xf58] sm:$0xff]
    %v1479 = vld [vmem:[#allocation7 + $0xf60] sm:$0xff]
    %v1480 = vld [vmem:[#allocation7 + $0xf68] sm:$0xff]
    %v1481 = vld [vmem:[#allocation7 + $0xf70] sm:$0xff]
    %v1482 = vld [vmem:[#allocation7 + $0xf78] sm:$0xff]
    %v1483 = vld [vmem:[#allocation7 + $0xf80] sm:$0xff]
    %v1484 = vld [vmem:[#allocation7 + $0xf88] sm:$0xff]
    %v1485 = vld [vmem:[#allocation7 + $0xf90] sm:$0xff]
    %v1486 = vld [vmem:[#allocation7 + $0xf98] sm:$0xff]
    %v1487 = vld [vmem:[#allocation7 + $0xfa0] sm:$0xff]
    %v1488 = vld [vmem:[#allocation7 + $0xfa8] sm:$0xff]
    %v1489 = vld [vmem:[#allocation7 + $0xfb0] sm:$0xff]
    %v1490 = vld [vmem:[#allocation7 + $0xfb8] sm:$0xff]
    %v1491 = vld [vmem:[#allocation7 + $0xfc0] sm:$0xff]
    %v1492 = vld [vmem:[#allocation7 + $0xfc8] sm:$0xff]
    %v1493 = vld [vmem:[#allocation7 + $0xfd0] sm:$0xff]
    %v1494 = vld [vmem:[#allocation7 + $0xfd8] sm:$0xff]
    %v1495 = vld [vmem:[#allocation7 + $0xfe0] sm:$0xff]
    %v1496 = vld [vmem:[#allocation7 + $0xfe8] sm:$0xff]
    %v1497 = vld [vmem:[#allocation7 + $0xff0] sm:$0xff]
    %v1498 = vld [vmem:[#allocation7 + $0xff8] sm:$0xff]
    %v1500 = vlaneseq
    %v1501 = vshrl.u32 %v1500, 7
    %v1502 = vsub.s32 0, %v1501
    %v1503 = vrot.slane %v978, %v1502
    %v1504 = vlaneseq
    %v1505 = vshrl.u32 %v1504, 7
    %v1506 = vsub.s32 1, %v1505
    %v1507 = vrot.slane %v978, %v1506
    %v1508 = vlaneseq
    %v1509 = vshrl.u32 %v1508, 7
    %v1510 = vsub.s32 2, %v1509
    %v1511 = vrot.slane %v978, %v1510
    %v1512 = vlaneseq
    %v1513 = vshrl.u32 %v1512, 7
    %v1514 = vsub.s32 3, %v1513
    %v1515 = vrot.slane %v978, %v1514
    %v1516 = vlaneseq
    %v1517 = vshrl.u32 %v1516, 7
    %v1518 = vsub.s32 4, %v1517
    %v1519 = vrot.slane %v978, %v1518
    %v1520 = vlaneseq
    %v1521 = vshrl.u32 %v1520, 7
    %v1522 = vsub.s32 5, %v1521
    %v1523 = vrot.slane %v978, %v1522
    %v1524 = vlaneseq
    %v1525 = vshrl.u32 %v1524, 7
    %v1526 = vsub.s32 6, %v1525
    %v1527 = vrot.slane %v978, %v1526
    %v1528 = vlaneseq
    %v1529 = vshrl.u32 %v1528, 7
    %v1530 = vsub.s32 7, %v1529
    %v1531 = vrot.slane %v978, %v1530
    %v2052 = vunpack.c.l.b16 %v987
    %v2053 = vunpack.c.h.b16 %v987
    %v2054 = vunpack.c.l.b16 %v988
    %v2055 = vunpack.c.h.b16 %v988
    %v2056 = vunpack.c.l.b16 %v989
    %v2057 = vunpack.c.h.b16 %v989
    %v2058 = vunpack.c.l.b16 %v990
    %v2059 = vunpack.c.h.b16 %v990
    %v2060 = vunpack.c.l.b16 %v991
    %v2061 = vunpack.c.h.b16 %v991
    %v2062 = vunpack.c.l.b16 %v992
    %v2063 = vunpack.c.h.b16 %v992
    %v2064 = vunpack.c.l.b16 %v993
    %v2065 = vunpack.c.h.b16 %v993
    %v2066 = vunpack.c.l.b16 %v994
    %v2067 = vunpack.c.h.b16 %v994
    %v2068 = vunpack.c.l.b16 %v995
    %v2069 = vunpack.c.h.b16 %v995
    %v2070 = vunpack.c.l.b16 %v996
    %v2071 = vunpack.c.h.b16 %v996
    %v2072 = vunpack.c.l.b16 %v997
    %v2073 = vunpack.c.h.b16 %v997
    %v2074 = vunpack.c.l.b16 %v998
    %v2075 = vunpack.c.h.b16 %v998
    %v2076 = vunpack.c.l.b16 %v999
    %v2077 = vunpack.c.h.b16 %v999
    %v2078 = vunpack.c.l.b16 %v1000
    %v2079 = vunpack.c.h.b16 %v1000
    %v2080 = vunpack.c.l.b16 %v1001
    %v2081 = vunpack.c.h.b16 %v1001
    %v2082 = vunpack.c.l.b16 %v1002
    %v2083 = vunpack.c.h.b16 %v1002
    %v2084 = vunpack.c.l.b16 %v1003
    %v2085 = vunpack.c.h.b16 %v1003
    %v2086 = vunpack.c.l.b16 %v1004
    %v2087 = vunpack.c.h.b16 %v1004
    %v2088 = vunpack.c.l.b16 %v1005
    %v2089 = vunpack.c.h.b16 %v1005
    %v2090 = vunpack.c.l.b16 %v1006
    %v2091 = vunpack.c.h.b16 %v1006
    %v2092 = vunpack.c.l.b16 %v1007
    %v2093 = vunpack.c.h.b16 %v1007
    %v2094 = vunpack.c.l.b16 %v1008
    %v2095 = vunpack.c.h.b16 %v1008
    %v2096 = vunpack.c.l.b16 %v1009
    %v2097 = vunpack.c.h.b16 %v1009
    %v2098 = vunpack.c.l.b16 %v1010
    %v2099 = vunpack.c.h.b16 %v1010
    %v2100 = vunpack.c.l.b16 %v1011
    %v2101 = vunpack.c.h.b16 %v1011
    %v2102 = vunpack.c.l.b16 %v1012
    %v2103 = vunpack.c.h.b16 %v1012
    %v2104 = vunpack.c.l.b16 %v1013
    %v2105 = vunpack.c.h.b16 %v1013
    %v2106 = vunpack.c.l.b16 %v1014
    %v2107 = vunpack.c.h.b16 %v1014
    %v2108 = vunpack.c.l.b16 %v1015
    %v2109 = vunpack.c.h.b16 %v1015
    %v2110 = vunpack.c.l.b16 %v1016
    %v2111 = vunpack.c.h.b16 %v1016
    %v2112 = vunpack.c.l.b16 %v1017
    %v2113 = vunpack.c.h.b16 %v1017
    %v2114 = vunpack.c.l.b16 %v1018
    %v2115 = vunpack.c.h.b16 %v1018
    %v2116 = vunpack.c.l.b16 %v1019
    %v2117 = vunpack.c.h.b16 %v1019
    %v2118 = vunpack.c.l.b16 %v1020
    %v2119 = vunpack.c.h.b16 %v1020
    %v2120 = vunpack.c.l.b16 %v1021
    %v2121 = vunpack.c.h.b16 %v1021
    %v2122 = vunpack.c.l.b16 %v1022
    %v2123 = vunpack.c.h.b16 %v1022
    %v2124 = vunpack.c.l.b16 %v1023
    %v2125 = vunpack.c.h.b16 %v1023
    %v2126 = vunpack.c.l.b16 %v1024
    %v2127 = vunpack.c.h.b16 %v1024
    %v2128 = vunpack.c.l.b16 %v1025
    %v2129 = vunpack.c.h.b16 %v1025
    %v2130 = vunpack.c.l.b16 %v1026
    %v2131 = vunpack.c.h.b16 %v1026
    %v2132 = vunpack.c.l.b16 %v1027
    %v2133 = vunpack.c.h.b16 %v1027
    %v2134 = vunpack.c.l.b16 %v1028
    %v2135 = vunpack.c.h.b16 %v1028
    %v2136 = vunpack.c.l.b16 %v1029
    %v2137 = vunpack.c.h.b16 %v1029
    %v2138 = vunpack.c.l.b16 %v1030
    %v2139 = vunpack.c.h.b16 %v1030
    %v2140 = vunpack.c.l.b16 %v1031
    %v2141 = vunpack.c.h.b16 %v1031
    %v2142 = vunpack.c.l.b16 %v1032
    %v2143 = vunpack.c.h.b16 %v1032
    %v2144 = vunpack.c.l.b16 %v1033
    %v2145 = vunpack.c.h.b16 %v1033
    %v2146 = vunpack.c.l.b16 %v1034
    %v2147 = vunpack.c.h.b16 %v1034
    %v2148 = vunpack.c.l.b16 %v1035
    %v2149 = vunpack.c.h.b16 %v1035
    %v2150 = vunpack.c.l.b16 %v1036
    %v2151 = vunpack.c.h.b16 %v1036
    %v2152 = vunpack.c.l.b16 %v1037
    %v2153 = vunpack.c.h.b16 %v1037
    %v2154 = vunpack.c.l.b16 %v1038
    %v2155 = vunpack.c.h.b16 %v1038
    %v2156 = vunpack.c.l.b16 %v1039
    %v2157 = vunpack.c.h.b16 %v1039
    %v2158 = vunpack.c.l.b16 %v1040
    %v2159 = vunpack.c.h.b16 %v1040
    %v2160 = vunpack.c.l.b16 %v1041
    %v2161 = vunpack.c.h.b16 %v1041
    %v2162 = vunpack.c.l.b16 %v1042
    %v2163 = vunpack.c.h.b16 %v1042
    %v2164 = vunpack.c.l.b16 %v1043
    %v2165 = vunpack.c.h.b16 %v1043
    %v2166 = vunpack.c.l.b16 %v1044
    %v2167 = vunpack.c.h.b16 %v1044
    %v2168 = vunpack.c.l.b16 %v1045
    %v2169 = vunpack.c.h.b16 %v1045
    %v2170 = vunpack.c.l.b16 %v1046
    %v2171 = vunpack.c.h.b16 %v1046
    %v2172 = vunpack.c.l.b16 %v1047
    %v2173 = vunpack.c.h.b16 %v1047
    %v2174 = vunpack.c.l.b16 %v1048
    %v2175 = vunpack.c.h.b16 %v1048
    %v2176 = vunpack.c.l.b16 %v1049
    %v2177 = vunpack.c.h.b16 %v1049
    %v2178 = vunpack.c.l.b16 %v1050
    %v2179 = vunpack.c.h.b16 %v1050
    %v2180 = vunpack.c.l.b16 %v1051
    %v2181 = vunpack.c.h.b16 %v1051
    %v2182 = vunpack.c.l.b16 %v1052
    %v2183 = vunpack.c.h.b16 %v1052
    %v2184 = vunpack.c.l.b16 %v1053
    %v2185 = vunpack.c.h.b16 %v1053
    %v2186 = vunpack.c.l.b16 %v1054
    %v2187 = vunpack.c.h.b16 %v1054
    %v2188 = vunpack.c.l.b16 %v1055
    %v2189 = vunpack.c.h.b16 %v1055
    %v2190 = vunpack.c.l.b16 %v1056
    %v2191 = vunpack.c.h.b16 %v1056
    %v2192 = vunpack.c.l.b16 %v1057
    %v2193 = vunpack.c.h.b16 %v1057
    %v2194 = vunpack.c.l.b16 %v1058
    %v2195 = vunpack.c.h.b16 %v1058
    %v2196 = vunpack.c.l.b16 %v1059
    %v2197 = vunpack.c.h.b16 %v1059
    %v2198 = vunpack.c.l.b16 %v1060
    %v2199 = vunpack.c.h.b16 %v1060
    %v2200 = vunpack.c.l.b16 %v1061
    %v2201 = vunpack.c.h.b16 %v1061
    %v2202 = vunpack.c.l.b16 %v1062
    %v2203 = vunpack.c.h.b16 %v1062
    %v2204 = vunpack.c.l.b16 %v1063
    %v2205 = vunpack.c.h.b16 %v1063
    %v2206 = vunpack.c.l.b16 %v1064
    %v2207 = vunpack.c.h.b16 %v1064
    %v2208 = vunpack.c.l.b16 %v1065
    %v2209 = vunpack.c.h.b16 %v1065
    %v2210 = vunpack.c.l.b16 %v1066
    %v2211 = vunpack.c.h.b16 %v1066
    %v2212 = vunpack.c.l.b16 %v1067
    %v2213 = vunpack.c.h.b16 %v1067
    %v2214 = vunpack.c.l.b16 %v1068
    %v2215 = vunpack.c.h.b16 %v1068
    %v2216 = vunpack.c.l.b16 %v1069
    %v2217 = vunpack.c.h.b16 %v1069
    %v2218 = vunpack.c.l.b16 %v1070
    %v2219 = vunpack.c.h.b16 %v1070
    %v2220 = vunpack.c.l.b16 %v1071
    %v2221 = vunpack.c.h.b16 %v1071
    %v2222 = vunpack.c.l.b16 %v1072
    %v2223 = vunpack.c.h.b16 %v1072
    %v2224 = vunpack.c.l.b16 %v1073
    %v2225 = vunpack.c.h.b16 %v1073
    %v2226 = vunpack.c.l.b16 %v1074
    %v2227 = vunpack.c.h.b16 %v1074
    %v2228 = vunpack.c.l.b16 %v1075
    %v2229 = vunpack.c.h.b16 %v1075
    %v2230 = vunpack.c.l.b16 %v1076
    %v2231 = vunpack.c.h.b16 %v1076
    %v2232 = vunpack.c.l.b16 %v1077
    %v2233 = vunpack.c.h.b16 %v1077
    %v2234 = vunpack.c.l.b16 %v1078
    %v2235 = vunpack.c.h.b16 %v1078
    %v2236 = vunpack.c.l.b16 %v1079
    %v2237 = vunpack.c.h.b16 %v1079
    %v2238 = vunpack.c.l.b16 %v1080
    %v2239 = vunpack.c.h.b16 %v1080
    %v2240 = vunpack.c.l.b16 %v1081
    %v2241 = vunpack.c.h.b16 %v1081
    %v2242 = vunpack.c.l.b16 %v1082
    %v2243 = vunpack.c.h.b16 %v1082
    %v2244 = vunpack.c.l.b16 %v1083
    %v2245 = vunpack.c.h.b16 %v1083
    %v2246 = vunpack.c.l.b16 %v1084
    %v2247 = vunpack.c.h.b16 %v1084
    %v2248 = vunpack.c.l.b16 %v1085
    %v2249 = vunpack.c.h.b16 %v1085
    %v2250 = vunpack.c.l.b16 %v1086
    %v2251 = vunpack.c.h.b16 %v1086
    %v2252 = vunpack.c.l.b16 %v1087
    %v2253 = vunpack.c.h.b16 %v1087
    %v2254 = vunpack.c.l.b16 %v1088
    %v2255 = vunpack.c.h.b16 %v1088
    %v2256 = vunpack.c.l.b16 %v1089
    %v2257 = vunpack.c.h.b16 %v1089
    %v2258 = vunpack.c.l.b16 %v1090
    %v2259 = vunpack.c.h.b16 %v1090
    %v2260 = vunpack.c.l.b16 %v1091
    %v2261 = vunpack.c.h.b16 %v1091
    %v2262 = vunpack.c.l.b16 %v1092
    %v2263 = vunpack.c.h.b16 %v1092
    %v2264 = vunpack.c.l.b16 %v1093
    %v2265 = vunpack.c.h.b16 %v1093
    %v2266 = vunpack.c.l.b16 %v1094
    %v2267 = vunpack.c.h.b16 %v1094
    %v2268 = vunpack.c.l.b16 %v1095
    %v2269 = vunpack.c.h.b16 %v1095
    %v2270 = vunpack.c.l.b16 %v1096
    %v2271 = vunpack.c.h.b16 %v1096
    %v2272 = vunpack.c.l.b16 %v1097
    %v2273 = vunpack.c.h.b16 %v1097
    %v2274 = vunpack.c.l.b16 %v1098
    %v2275 = vunpack.c.h.b16 %v1098
    %v2276 = vunpack.c.l.b16 %v1099
    %v2277 = vunpack.c.h.b16 %v1099
    %v2278 = vunpack.c.l.b16 %v1100
    %v2279 = vunpack.c.h.b16 %v1100
    %v2280 = vunpack.c.l.b16 %v1101
    %v2281 = vunpack.c.h.b16 %v1101
    %v2282 = vunpack.c.l.b16 %v1102
    %v2283 = vunpack.c.h.b16 %v1102
    %v2284 = vunpack.c.l.b16 %v1103
    %v2285 = vunpack.c.h.b16 %v1103
    %v2286 = vunpack.c.l.b16 %v1104
    %v2287 = vunpack.c.h.b16 %v1104
    %v2288 = vunpack.c.l.b16 %v1105
    %v2289 = vunpack.c.h.b16 %v1105
    %v2290 = vunpack.c.l.b16 %v1106
    %v2291 = vunpack.c.h.b16 %v1106
    %v2292 = vunpack.c.l.b16 %v1107
    %v2293 = vunpack.c.h.b16 %v1107
    %v2294 = vunpack.c.l.b16 %v1108
    %v2295 = vunpack.c.h.b16 %v1108
    %v2296 = vunpack.c.l.b16 %v1109
    %v2297 = vunpack.c.h.b16 %v1109
    %v2298 = vunpack.c.l.b16 %v1110
    %v2299 = vunpack.c.h.b16 %v1110
    %v2300 = vunpack.c.l.b16 %v1111
    %v2301 = vunpack.c.h.b16 %v1111
    %v2302 = vunpack.c.l.b16 %v1112
    %v2303 = vunpack.c.h.b16 %v1112
    %v2304 = vunpack.c.l.b16 %v1113
    %v2305 = vunpack.c.h.b16 %v1113
    %v2306 = vunpack.c.l.b16 %v1114
    %v2307 = vunpack.c.h.b16 %v1114
    %v2308 = vunpack.c.l.b16 %v1115
    %v2309 = vunpack.c.h.b16 %v1115
    %v2310 = vunpack.c.l.b16 %v1116
    %v2311 = vunpack.c.h.b16 %v1116
    %v2312 = vunpack.c.l.b16 %v1117
    %v2313 = vunpack.c.h.b16 %v1117
    %v2314 = vunpack.c.l.b16 %v1118
    %v2315 = vunpack.c.h.b16 %v1118
    %v2316 = vunpack.c.l.b16 %v1119
    %v2317 = vunpack.c.h.b16 %v1119
    %v2318 = vunpack.c.l.b16 %v1120
    %v2319 = vunpack.c.h.b16 %v1120
    %v2320 = vunpack.c.l.b16 %v1121
    %v2321 = vunpack.c.h.b16 %v1121
    %v2322 = vunpack.c.l.b16 %v1122
    %v2323 = vunpack.c.h.b16 %v1122
    %v2324 = vunpack.c.l.b16 %v1123
    %v2325 = vunpack.c.h.b16 %v1123
    %v2326 = vunpack.c.l.b16 %v1124
    %v2327 = vunpack.c.h.b16 %v1124
    %v2328 = vunpack.c.l.b16 %v1125
    %v2329 = vunpack.c.h.b16 %v1125
    %v2330 = vunpack.c.l.b16 %v1126
    %v2331 = vunpack.c.h.b16 %v1126
    %v2332 = vunpack.c.l.b16 %v1127
    %v2333 = vunpack.c.h.b16 %v1127
    %v2334 = vunpack.c.l.b16 %v1128
    %v2335 = vunpack.c.h.b16 %v1128
    %v2336 = vunpack.c.l.b16 %v1129
    %v2337 = vunpack.c.h.b16 %v1129
    %v2338 = vunpack.c.l.b16 %v1130
    %v2339 = vunpack.c.h.b16 %v1130
    %v2340 = vunpack.c.l.b16 %v1131
    %v2341 = vunpack.c.h.b16 %v1131
    %v2342 = vunpack.c.l.b16 %v1132
    %v2343 = vunpack.c.h.b16 %v1132
    %v2344 = vunpack.c.l.b16 %v1133
    %v2345 = vunpack.c.h.b16 %v1133
    %v2346 = vunpack.c.l.b16 %v1134
    %v2347 = vunpack.c.h.b16 %v1134
    %v2348 = vunpack.c.l.b16 %v1135
    %v2349 = vunpack.c.h.b16 %v1135
    %v2350 = vunpack.c.l.b16 %v1136
    %v2351 = vunpack.c.h.b16 %v1136
    %v2352 = vunpack.c.l.b16 %v1137
    %v2353 = vunpack.c.h.b16 %v1137
    %v2354 = vunpack.c.l.b16 %v1138
    %v2355 = vunpack.c.h.b16 %v1138
    %v2356 = vunpack.c.l.b16 %v1139
    %v2357 = vunpack.c.h.b16 %v1139
    %v2358 = vunpack.c.l.b16 %v1140
    %v2359 = vunpack.c.h.b16 %v1140
    %v2360 = vunpack.c.l.b16 %v1141
    %v2361 = vunpack.c.h.b16 %v1141
    %v2362 = vunpack.c.l.b16 %v1142
    %v2363 = vunpack.c.h.b16 %v1142
    %v2364 = vunpack.c.l.b16 %v1143
    %v2365 = vunpack.c.h.b16 %v1143
    %v2366 = vunpack.c.l.b16 %v1144
    %v2367 = vunpack.c.h.b16 %v1144
    %v2368 = vunpack.c.l.b16 %v1145
    %v2369 = vunpack.c.h.b16 %v1145
    %v2370 = vunpack.c.l.b16 %v1146
    %v2371 = vunpack.c.h.b16 %v1146
    %v2372 = vunpack.c.l.b16 %v1147
    %v2373 = vunpack.c.h.b16 %v1147
    %v2374 = vunpack.c.l.b16 %v1148
    %v2375 = vunpack.c.h.b16 %v1148
    %v2376 = vunpack.c.l.b16 %v1149
    %v2377 = vunpack.c.h.b16 %v1149
    %v2378 = vunpack.c.l.b16 %v1150
    %v2379 = vunpack.c.h.b16 %v1150
    %v2380 = vunpack.c.l.b16 %v1151
    %v2381 = vunpack.c.h.b16 %v1151
    %v2382 = vunpack.c.l.b16 %v1152
    %v2383 = vunpack.c.h.b16 %v1152
    %v2384 = vunpack.c.l.b16 %v1153
    %v2385 = vunpack.c.h.b16 %v1153
    %v2386 = vunpack.c.l.b16 %v1154
    %v2387 = vunpack.c.h.b16 %v1154
    %v2388 = vunpack.c.l.b16 %v1155
    %v2389 = vunpack.c.h.b16 %v1155
    %v2390 = vunpack.c.l.b16 %v1156
    %v2391 = vunpack.c.h.b16 %v1156
    %v2392 = vunpack.c.l.b16 %v1157
    %v2393 = vunpack.c.h.b16 %v1157
    %v2394 = vunpack.c.l.b16 %v1158
    %v2395 = vunpack.c.h.b16 %v1158
    %v2396 = vunpack.c.l.b16 %v1159
    %v2397 = vunpack.c.h.b16 %v1159
    %v2398 = vunpack.c.l.b16 %v1160
    %v2399 = vunpack.c.h.b16 %v1160
    %v2400 = vunpack.c.l.b16 %v1161
    %v2401 = vunpack.c.h.b16 %v1161
    %v2402 = vunpack.c.l.b16 %v1162
    %v2403 = vunpack.c.h.b16 %v1162
    %v2404 = vunpack.c.l.b16 %v1163
    %v2405 = vunpack.c.h.b16 %v1163
    %v2406 = vunpack.c.l.b16 %v1164
    %v2407 = vunpack.c.h.b16 %v1164
    %v2408 = vunpack.c.l.b16 %v1165
    %v2409 = vunpack.c.h.b16 %v1165
    %v2410 = vunpack.c.l.b16 %v1166
    %v2411 = vunpack.c.h.b16 %v1166
    %v2412 = vunpack.c.l.b16 %v1167
    %v2413 = vunpack.c.h.b16 %v1167
    %v2414 = vunpack.c.l.b16 %v1168
    %v2415 = vunpack.c.h.b16 %v1168
    %v2416 = vunpack.c.l.b16 %v1169
    %v2417 = vunpack.c.h.b16 %v1169
    %v2418 = vunpack.c.l.b16 %v1170
    %v2419 = vunpack.c.h.b16 %v1170
    %v2420 = vunpack.c.l.b16 %v1171
    %v2421 = vunpack.c.h.b16 %v1171
    %v2422 = vunpack.c.l.b16 %v1172
    %v2423 = vunpack.c.h.b16 %v1172
    %v2424 = vunpack.c.l.b16 %v1173
    %v2425 = vunpack.c.h.b16 %v1173
    %v2426 = vunpack.c.l.b16 %v1174
    %v2427 = vunpack.c.h.b16 %v1174
    %v2428 = vunpack.c.l.b16 %v1175
    %v2429 = vunpack.c.h.b16 %v1175
    %v2430 = vunpack.c.l.b16 %v1176
    %v2431 = vunpack.c.h.b16 %v1176
    %v2432 = vunpack.c.l.b16 %v1177
    %v2433 = vunpack.c.h.b16 %v1177
    %v2434 = vunpack.c.l.b16 %v1178
    %v2435 = vunpack.c.h.b16 %v1178
    %v2436 = vunpack.c.l.b16 %v1179
    %v2437 = vunpack.c.h.b16 %v1179
    %v2438 = vunpack.c.l.b16 %v1180
    %v2439 = vunpack.c.h.b16 %v1180
    %v2440 = vunpack.c.l.b16 %v1181
    %v2441 = vunpack.c.h.b16 %v1181
    %v2442 = vunpack.c.l.b16 %v1182
    %v2443 = vunpack.c.h.b16 %v1182
    %v2444 = vunpack.c.l.b16 %v1183
    %v2445 = vunpack.c.h.b16 %v1183
    %v2446 = vunpack.c.l.b16 %v1184
    %v2447 = vunpack.c.h.b16 %v1184
    %v2448 = vunpack.c.l.b16 %v1185
    %v2449 = vunpack.c.h.b16 %v1185
    %v2450 = vunpack.c.l.b16 %v1186
    %v2451 = vunpack.c.h.b16 %v1186
    %v2452 = vunpack.c.l.b16 %v1187
    %v2453 = vunpack.c.h.b16 %v1187
    %v2454 = vunpack.c.l.b16 %v1188
    %v2455 = vunpack.c.h.b16 %v1188
    %v2456 = vunpack.c.l.b16 %v1189
    %v2457 = vunpack.c.h.b16 %v1189
    %v2458 = vunpack.c.l.b16 %v1190
    %v2459 = vunpack.c.h.b16 %v1190
    %v2460 = vunpack.c.l.b16 %v1191
    %v2461 = vunpack.c.h.b16 %v1191
    %v2462 = vunpack.c.l.b16 %v1192
    %v2463 = vunpack.c.h.b16 %v1192
    %v2464 = vunpack.c.l.b16 %v1193
    %v2465 = vunpack.c.h.b16 %v1193
    %v2466 = vunpack.c.l.b16 %v1194
    %v2467 = vunpack.c.h.b16 %v1194
    %v2468 = vunpack.c.l.b16 %v1195
    %v2469 = vunpack.c.h.b16 %v1195
    %v2470 = vunpack.c.l.b16 %v1196
    %v2471 = vunpack.c.h.b16 %v1196
    %v2472 = vunpack.c.l.b16 %v1197
    %v2473 = vunpack.c.h.b16 %v1197
    %v2474 = vunpack.c.l.b16 %v1198
    %v2475 = vunpack.c.h.b16 %v1198
    %v2476 = vunpack.c.l.b16 %v1199
    %v2477 = vunpack.c.h.b16 %v1199
    %v2478 = vunpack.c.l.b16 %v1200
    %v2479 = vunpack.c.h.b16 %v1200
    %v2480 = vunpack.c.l.b16 %v1201
    %v2481 = vunpack.c.h.b16 %v1201
    %v2482 = vunpack.c.l.b16 %v1202
    %v2483 = vunpack.c.h.b16 %v1202
    %v2484 = vunpack.c.l.b16 %v1203
    %v2485 = vunpack.c.h.b16 %v1203
    %v2486 = vunpack.c.l.b16 %v1204
    %v2487 = vunpack.c.h.b16 %v1204
    %v2488 = vunpack.c.l.b16 %v1205
    %v2489 = vunpack.c.h.b16 %v1205
    %v2490 = vunpack.c.l.b16 %v1206
    %v2491 = vunpack.c.h.b16 %v1206
    %v2492 = vunpack.c.l.b16 %v1207
    %v2493 = vunpack.c.h.b16 %v1207
    %v2494 = vunpack.c.l.b16 %v1208
    %v2495 = vunpack.c.h.b16 %v1208
    %v2496 = vunpack.c.l.b16 %v1209
    %v2497 = vunpack.c.h.b16 %v1209
    %v2498 = vunpack.c.l.b16 %v1210
    %v2499 = vunpack.c.h.b16 %v1210
    %v2500 = vunpack.c.l.b16 %v1211
    %v2501 = vunpack.c.h.b16 %v1211
    %v2502 = vunpack.c.l.b16 %v1212
    %v2503 = vunpack.c.h.b16 %v1212
    %v2504 = vunpack.c.l.b16 %v1213
    %v2505 = vunpack.c.h.b16 %v1213
    %v2506 = vunpack.c.l.b16 %v1214
    %v2507 = vunpack.c.h.b16 %v1214
    %v2508 = vunpack.c.l.b16 %v1215
    %v2509 = vunpack.c.h.b16 %v1215
    %v2510 = vunpack.c.l.b16 %v1216
    %v2511 = vunpack.c.h.b16 %v1216
    %v2512 = vunpack.c.l.b16 %v1217
    %v2513 = vunpack.c.h.b16 %v1217
    %v2514 = vunpack.c.l.b16 %v1218
    %v2515 = vunpack.c.h.b16 %v1218
    %v2516 = vunpack.c.l.b16 %v1219
    %v2517 = vunpack.c.h.b16 %v1219
    %v2518 = vunpack.c.l.b16 %v1220
    %v2519 = vunpack.c.h.b16 %v1220
    %v2520 = vunpack.c.l.b16 %v1221
    %v2521 = vunpack.c.h.b16 %v1221
    %v2522 = vunpack.c.l.b16 %v1222
    %v2523 = vunpack.c.h.b16 %v1222
    %v2524 = vunpack.c.l.b16 %v1223
    %v2525 = vunpack.c.h.b16 %v1223
    %v2526 = vunpack.c.l.b16 %v1224
    %v2527 = vunpack.c.h.b16 %v1224
    %v2528 = vunpack.c.l.b16 %v1225
    %v2529 = vunpack.c.h.b16 %v1225
    %v2530 = vunpack.c.l.b16 %v1226
    %v2531 = vunpack.c.h.b16 %v1226
    %v2532 = vunpack.c.l.b16 %v1227
    %v2533 = vunpack.c.h.b16 %v1227
    %v2534 = vunpack.c.l.b16 %v1228
    %v2535 = vunpack.c.h.b16 %v1228
    %v2536 = vunpack.c.l.b16 %v1229
    %v2537 = vunpack.c.h.b16 %v1229
    %v2538 = vunpack.c.l.b16 %v1230
    %v2539 = vunpack.c.h.b16 %v1230
    %v2540 = vunpack.c.l.b16 %v1231
    %v2541 = vunpack.c.h.b16 %v1231
    %v2542 = vunpack.c.l.b16 %v1232
    %v2543 = vunpack.c.h.b16 %v1232
    %v2544 = vunpack.c.l.b16 %v1233
    %v2545 = vunpack.c.h.b16 %v1233
    %v2546 = vunpack.c.l.b16 %v1234
    %v2547 = vunpack.c.h.b16 %v1234
    %v2548 = vunpack.c.l.b16 %v1235
    %v2549 = vunpack.c.h.b16 %v1235
    %v2550 = vunpack.c.l.b16 %v1236
    %v2551 = vunpack.c.h.b16 %v1236
    %v2552 = vunpack.c.l.b16 %v1237
    %v2553 = vunpack.c.h.b16 %v1237
    %v2554 = vunpack.c.l.b16 %v1238
    %v2555 = vunpack.c.h.b16 %v1238
    %v2556 = vunpack.c.l.b16 %v1239
    %v2557 = vunpack.c.h.b16 %v1239
    %v2558 = vunpack.c.l.b16 %v1240
    %v2559 = vunpack.c.h.b16 %v1240
    %v2560 = vunpack.c.l.b16 %v1241
    %v2561 = vunpack.c.h.b16 %v1241
    %v2562 = vunpack.c.l.b16 %v1242
    %v2563 = vunpack.c.h.b16 %v1242
    %v2564 = vunpack.c.l.b16 %v1243
    %v2565 = vunpack.c.h.b16 %v1243
    %v2566 = vunpack.c.l.b16 %v1244
    %v2567 = vunpack.c.h.b16 %v1244
    %v2568 = vunpack.c.l.b16 %v1245
    %v2569 = vunpack.c.h.b16 %v1245
    %v2570 = vunpack.c.l.b16 %v1246
    %v2571 = vunpack.c.h.b16 %v1246
    %v2572 = vunpack.c.l.b16 %v1247
    %v2573 = vunpack.c.h.b16 %v1247
    %v2574 = vunpack.c.l.b16 %v1248
    %v2575 = vunpack.c.h.b16 %v1248
    %v2576 = vunpack.c.l.b16 %v1249
    %v2577 = vunpack.c.h.b16 %v1249
    %v2578 = vunpack.c.l.b16 %v1250
    %v2579 = vunpack.c.h.b16 %v1250
    %v2580 = vunpack.c.l.b16 %v1251
    %v2581 = vunpack.c.h.b16 %v1251
    %v2582 = vunpack.c.l.b16 %v1252
    %v2583 = vunpack.c.h.b16 %v1252
    %v2584 = vunpack.c.l.b16 %v1253
    %v2585 = vunpack.c.h.b16 %v1253
    %v2586 = vunpack.c.l.b16 %v1254
    %v2587 = vunpack.c.h.b16 %v1254
    %v2588 = vunpack.c.l.b16 %v1255
    %v2589 = vunpack.c.h.b16 %v1255
    %v2590 = vunpack.c.l.b16 %v1256
    %v2591 = vunpack.c.h.b16 %v1256
    %v2592 = vunpack.c.l.b16 %v1257
    %v2593 = vunpack.c.h.b16 %v1257
    %v2594 = vunpack.c.l.b16 %v1258
    %v2595 = vunpack.c.h.b16 %v1258
    %v2596 = vunpack.c.l.b16 %v1259
    %v2597 = vunpack.c.h.b16 %v1259
    %v2598 = vunpack.c.l.b16 %v1260
    %v2599 = vunpack.c.h.b16 %v1260
    %v2600 = vunpack.c.l.b16 %v1261
    %v2601 = vunpack.c.h.b16 %v1261
    %v2602 = vunpack.c.l.b16 %v1262
    %v2603 = vunpack.c.h.b16 %v1262
    %v2604 = vunpack.c.l.b16 %v1263
    %v2605 = vunpack.c.h.b16 %v1263
    %v2606 = vunpack.c.l.b16 %v1264
    %v2607 = vunpack.c.h.b16 %v1264
    %v2608 = vunpack.c.l.b16 %v1265
    %v2609 = vunpack.c.h.b16 %v1265
    %v2610 = vunpack.c.l.b16 %v1266
    %v2611 = vunpack.c.h.b16 %v1266
    %v2612 = vunpack.c.l.b16 %v1267
    %v2613 = vunpack.c.h.b16 %v1267
    %v2614 = vunpack.c.l.b16 %v1268
    %v2615 = vunpack.c.h.b16 %v1268
    %v2616 = vunpack.c.l.b16 %v1269
    %v2617 = vunpack.c.h.b16 %v1269
    %v2618 = vunpack.c.l.b16 %v1270
    %v2619 = vunpack.c.h.b16 %v1270
    %v2620 = vunpack.c.l.b16 %v1271
    %v2621 = vunpack.c.h.b16 %v1271
    %v2622 = vunpack.c.l.b16 %v1272
    %v2623 = vunpack.c.h.b16 %v1272
    %v2624 = vunpack.c.l.b16 %v1273
    %v2625 = vunpack.c.h.b16 %v1273
    %v2626 = vunpack.c.l.b16 %v1274
    %v2627 = vunpack.c.h.b16 %v1274
    %v2628 = vunpack.c.l.b16 %v1275
    %v2629 = vunpack.c.h.b16 %v1275
    %v2630 = vunpack.c.l.b16 %v1276
    %v2631 = vunpack.c.h.b16 %v1276
    %v2632 = vunpack.c.l.b16 %v1277
    %v2633 = vunpack.c.h.b16 %v1277
    %v2634 = vunpack.c.l.b16 %v1278
    %v2635 = vunpack.c.h.b16 %v1278
    %v2636 = vunpack.c.l.b16 %v1279
    %v2637 = vunpack.c.h.b16 %v1279
    %v2638 = vunpack.c.l.b16 %v1280
    %v2639 = vunpack.c.h.b16 %v1280
    %v2640 = vunpack.c.l.b16 %v1281
    %v2641 = vunpack.c.h.b16 %v1281
    %v2642 = vunpack.c.l.b16 %v1282
    %v2643 = vunpack.c.h.b16 %v1282
    %v2644 = vunpack.c.l.b16 %v1283
    %v2645 = vunpack.c.h.b16 %v1283
    %v2646 = vunpack.c.l.b16 %v1284
    %v2647 = vunpack.c.h.b16 %v1284
    %v2648 = vunpack.c.l.b16 %v1285
    %v2649 = vunpack.c.h.b16 %v1285
    %v2650 = vunpack.c.l.b16 %v1286
    %v2651 = vunpack.c.h.b16 %v1286
    %v2652 = vunpack.c.l.b16 %v1287
    %v2653 = vunpack.c.h.b16 %v1287
    %v2654 = vunpack.c.l.b16 %v1288
    %v2655 = vunpack.c.h.b16 %v1288
    %v2656 = vunpack.c.l.b16 %v1289
    %v2657 = vunpack.c.h.b16 %v1289
    %v2658 = vunpack.c.l.b16 %v1290
    %v2659 = vunpack.c.h.b16 %v1290
    %v2660 = vunpack.c.l.b16 %v1291
    %v2661 = vunpack.c.h.b16 %v1291
    %v2662 = vunpack.c.l.b16 %v1292
    %v2663 = vunpack.c.h.b16 %v1292
    %v2664 = vunpack.c.l.b16 %v1293
    %v2665 = vunpack.c.h.b16 %v1293
    %v2666 = vunpack.c.l.b16 %v1294
    %v2667 = vunpack.c.h.b16 %v1294
    %v2668 = vunpack.c.l.b16 %v1295
    %v2669 = vunpack.c.h.b16 %v1295
    %v2670 = vunpack.c.l.b16 %v1296
    %v2671 = vunpack.c.h.b16 %v1296
    %v2672 = vunpack.c.l.b16 %v1297
    %v2673 = vunpack.c.h.b16 %v1297
    %v2674 = vunpack.c.l.b16 %v1298
    %v2675 = vunpack.c.h.b16 %v1298
    %v2676 = vunpack.c.l.b16 %v1299
    %v2677 = vunpack.c.h.b16 %v1299
    %v2678 = vunpack.c.l.b16 %v1300
    %v2679 = vunpack.c.h.b16 %v1300
    %v2680 = vunpack.c.l.b16 %v1301
    %v2681 = vunpack.c.h.b16 %v1301
    %v2682 = vunpack.c.l.b16 %v1302
    %v2683 = vunpack.c.h.b16 %v1302
    %v2684 = vunpack.c.l.b16 %v1303
    %v2685 = vunpack.c.h.b16 %v1303
    %v2686 = vunpack.c.l.b16 %v1304
    %v2687 = vunpack.c.h.b16 %v1304
    %v2688 = vunpack.c.l.b16 %v1305
    %v2689 = vunpack.c.h.b16 %v1305
    %v2690 = vunpack.c.l.b16 %v1306
    %v2691 = vunpack.c.h.b16 %v1306
    %v2692 = vunpack.c.l.b16 %v1307
    %v2693 = vunpack.c.h.b16 %v1307
    %v2694 = vunpack.c.l.b16 %v1308
    %v2695 = vunpack.c.h.b16 %v1308
    %v2696 = vunpack.c.l.b16 %v1309
    %v2697 = vunpack.c.h.b16 %v1309
    %v2698 = vunpack.c.l.b16 %v1310
    %v2699 = vunpack.c.h.b16 %v1310
    %v2700 = vunpack.c.l.b16 %v1311
    %v2701 = vunpack.c.h.b16 %v1311
    %v2702 = vunpack.c.l.b16 %v1312
    %v2703 = vunpack.c.h.b16 %v1312
    %v2704 = vunpack.c.l.b16 %v1313
    %v2705 = vunpack.c.h.b16 %v1313
    %v2706 = vunpack.c.l.b16 %v1314
    %v2707 = vunpack.c.h.b16 %v1314
    %v2708 = vunpack.c.l.b16 %v1315
    %v2709 = vunpack.c.h.b16 %v1315
    %v2710 = vunpack.c.l.b16 %v1316
    %v2711 = vunpack.c.h.b16 %v1316
    %v2712 = vunpack.c.l.b16 %v1317
    %v2713 = vunpack.c.h.b16 %v1317
    %v2714 = vunpack.c.l.b16 %v1318
    %v2715 = vunpack.c.h.b16 %v1318
    %v2716 = vunpack.c.l.b16 %v1319
    %v2717 = vunpack.c.h.b16 %v1319
    %v2718 = vunpack.c.l.b16 %v1320
    %v2719 = vunpack.c.h.b16 %v1320
    %v2720 = vunpack.c.l.b16 %v1321
    %v2721 = vunpack.c.h.b16 %v1321
    %v2722 = vunpack.c.l.b16 %v1322
    %v2723 = vunpack.c.h.b16 %v1322
    %v2724 = vunpack.c.l.b16 %v1323
    %v2725 = vunpack.c.h.b16 %v1323
    %v2726 = vunpack.c.l.b16 %v1324
    %v2727 = vunpack.c.h.b16 %v1324
    %v2728 = vunpack.c.l.b16 %v1325
    %v2729 = vunpack.c.h.b16 %v1325
    %v2730 = vunpack.c.l.b16 %v1326
    %v2731 = vunpack.c.h.b16 %v1326
    %v2732 = vunpack.c.l.b16 %v1327
    %v2733 = vunpack.c.h.b16 %v1327
    %v2734 = vunpack.c.l.b16 %v1328
    %v2735 = vunpack.c.h.b16 %v1328
    %v2736 = vunpack.c.l.b16 %v1329
    %v2737 = vunpack.c.h.b16 %v1329
    %v2738 = vunpack.c.l.b16 %v1330
    %v2739 = vunpack.c.h.b16 %v1330
    %v2740 = vunpack.c.l.b16 %v1331
    %v2741 = vunpack.c.h.b16 %v1331
    %v2742 = vunpack.c.l.b16 %v1332
    %v2743 = vunpack.c.h.b16 %v1332
    %v2744 = vunpack.c.l.b16 %v1333
    %v2745 = vunpack.c.h.b16 %v1333
    %v2746 = vunpack.c.l.b16 %v1334
    %v2747 = vunpack.c.h.b16 %v1334
    %v2748 = vunpack.c.l.b16 %v1335
    %v2749 = vunpack.c.h.b16 %v1335
    %v2750 = vunpack.c.l.b16 %v1336
    %v2751 = vunpack.c.h.b16 %v1336
    %v2752 = vunpack.c.l.b16 %v1337
    %v2753 = vunpack.c.h.b16 %v1337
    %v2754 = vunpack.c.l.b16 %v1338
    %v2755 = vunpack.c.h.b16 %v1338
    %v2756 = vunpack.c.l.b16 %v1339
    %v2757 = vunpack.c.h.b16 %v1339
    %v2758 = vunpack.c.l.b16 %v1340
    %v2759 = vunpack.c.h.b16 %v1340
    %v2760 = vunpack.c.l.b16 %v1341
    %v2761 = vunpack.c.h.b16 %v1341
    %v2762 = vunpack.c.l.b16 %v1342
    %v2763 = vunpack.c.h.b16 %v1342
    %v2764 = vunpack.c.l.b16 %v1343
    %v2765 = vunpack.c.h.b16 %v1343
    %v2766 = vunpack.c.l.b16 %v1344
    %v2767 = vunpack.c.h.b16 %v1344
    %v2768 = vunpack.c.l.b16 %v1345
    %v2769 = vunpack.c.h.b16 %v1345
    %v2770 = vunpack.c.l.b16 %v1346
    %v2771 = vunpack.c.h.b16 %v1346
    %v2772 = vunpack.c.l.b16 %v1347
    %v2773 = vunpack.c.h.b16 %v1347
    %v2774 = vunpack.c.l.b16 %v1348
    %v2775 = vunpack.c.h.b16 %v1348
    %v2776 = vunpack.c.l.b16 %v1349
    %v2777 = vunpack.c.h.b16 %v1349
    %v2778 = vunpack.c.l.b16 %v1350
    %v2779 = vunpack.c.h.b16 %v1350
    %v2780 = vunpack.c.l.b16 %v1351
    %v2781 = vunpack.c.h.b16 %v1351
    %v2782 = vunpack.c.l.b16 %v1352
    %v2783 = vunpack.c.h.b16 %v1352
    %v2784 = vunpack.c.l.b16 %v1353
    %v2785 = vunpack.c.h.b16 %v1353
    %v2786 = vunpack.c.l.b16 %v1354
    %v2787 = vunpack.c.h.b16 %v1354
    %v2788 = vunpack.c.l.b16 %v1355
    %v2789 = vunpack.c.h.b16 %v1355
    %v2790 = vunpack.c.l.b16 %v1356
    %v2791 = vunpack.c.h.b16 %v1356
    %v2792 = vunpack.c.l.b16 %v1357
    %v2793 = vunpack.c.h.b16 %v1357
    %v2794 = vunpack.c.l.b16 %v1358
    %v2795 = vunpack.c.h.b16 %v1358
    %v2796 = vunpack.c.l.b16 %v1359
    %v2797 = vunpack.c.h.b16 %v1359
    %v2798 = vunpack.c.l.b16 %v1360
    %v2799 = vunpack.c.h.b16 %v1360
    %v2800 = vunpack.c.l.b16 %v1361
    %v2801 = vunpack.c.h.b16 %v1361
    %v2802 = vunpack.c.l.b16 %v1362
    %v2803 = vunpack.c.h.b16 %v1362
    %v2804 = vunpack.c.l.b16 %v1363
    %v2805 = vunpack.c.h.b16 %v1363
    %v2806 = vunpack.c.l.b16 %v1364
    %v2807 = vunpack.c.h.b16 %v1364
    %v2808 = vunpack.c.l.b16 %v1365
    %v2809 = vunpack.c.h.b16 %v1365
    %v2810 = vunpack.c.l.b16 %v1366
    %v2811 = vunpack.c.h.b16 %v1366
    %v2812 = vunpack.c.l.b16 %v1367
    %v2813 = vunpack.c.h.b16 %v1367
    %v2814 = vunpack.c.l.b16 %v1368
    %v2815 = vunpack.c.h.b16 %v1368
    %v2816 = vunpack.c.l.b16 %v1369
    %v2817 = vunpack.c.h.b16 %v1369
    %v2818 = vunpack.c.l.b16 %v1370
    %v2819 = vunpack.c.h.b16 %v1370
    %v2820 = vunpack.c.l.b16 %v1371
    %v2821 = vunpack.c.h.b16 %v1371
    %v2822 = vunpack.c.l.b16 %v1372
    %v2823 = vunpack.c.h.b16 %v1372
    %v2824 = vunpack.c.l.b16 %v1373
    %v2825 = vunpack.c.h.b16 %v1373
    %v2826 = vunpack.c.l.b16 %v1374
    %v2827 = vunpack.c.h.b16 %v1374
    %v2828 = vunpack.c.l.b16 %v1375
    %v2829 = vunpack.c.h.b16 %v1375
    %v2830 = vunpack.c.l.b16 %v1376
    %v2831 = vunpack.c.h.b16 %v1376
    %v2832 = vunpack.c.l.b16 %v1377
    %v2833 = vunpack.c.h.b16 %v1377
    %v2834 = vunpack.c.l.b16 %v1378
    %v2835 = vunpack.c.h.b16 %v1378
    %v2836 = vunpack.c.l.b16 %v1379
    %v2837 = vunpack.c.h.b16 %v1379
    %v2838 = vunpack.c.l.b16 %v1380
    %v2839 = vunpack.c.h.b16 %v1380
    %v2840 = vunpack.c.l.b16 %v1381
    %v2841 = vunpack.c.h.b16 %v1381
    %v2842 = vunpack.c.l.b16 %v1382
    %v2843 = vunpack.c.h.b16 %v1382
    %v2844 = vunpack.c.l.b16 %v1383
    %v2845 = vunpack.c.h.b16 %v1383
    %v2846 = vunpack.c.l.b16 %v1384
    %v2847 = vunpack.c.h.b16 %v1384
    %v2848 = vunpack.c.l.b16 %v1385
    %v2849 = vunpack.c.h.b16 %v1385
    %v2850 = vunpack.c.l.b16 %v1386
    %v2851 = vunpack.c.h.b16 %v1386
    %v2852 = vunpack.c.l.b16 %v1387
    %v2853 = vunpack.c.h.b16 %v1387
    %v2854 = vunpack.c.l.b16 %v1388
    %v2855 = vunpack.c.h.b16 %v1388
    %v2856 = vunpack.c.l.b16 %v1389
    %v2857 = vunpack.c.h.b16 %v1389
    %v2858 = vunpack.c.l.b16 %v1390
    %v2859 = vunpack.c.h.b16 %v1390
    %v2860 = vunpack.c.l.b16 %v1391
    %v2861 = vunpack.c.h.b16 %v1391
    %v2862 = vunpack.c.l.b16 %v1392
    %v2863 = vunpack.c.h.b16 %v1392
    %v2864 = vunpack.c.l.b16 %v1393
    %v2865 = vunpack.c.h.b16 %v1393
    %v2866 = vunpack.c.l.b16 %v1394
    %v2867 = vunpack.c.h.b16 %v1394
    %v2868 = vunpack.c.l.b16 %v1395
    %v2869 = vunpack.c.h.b16 %v1395
    %v2870 = vunpack.c.l.b16 %v1396
    %v2871 = vunpack.c.h.b16 %v1396
    %v2872 = vunpack.c.l.b16 %v1397
    %v2873 = vunpack.c.h.b16 %v1397
    %v2874 = vunpack.c.l.b16 %v1398
    %v2875 = vunpack.c.h.b16 %v1398
    %v2876 = vunpack.c.l.b16 %v1399
    %v2877 = vunpack.c.h.b16 %v1399
    %v2878 = vunpack.c.l.b16 %v1400
    %v2879 = vunpack.c.h.b16 %v1400
    %v2880 = vunpack.c.l.b16 %v1401
    %v2881 = vunpack.c.h.b16 %v1401
    %v2882 = vunpack.c.l.b16 %v1402
    %v2883 = vunpack.c.h.b16 %v1402
    %v2884 = vunpack.c.l.b16 %v1403
    %v2885 = vunpack.c.h.b16 %v1403
    %v2886 = vunpack.c.l.b16 %v1404
    %v2887 = vunpack.c.h.b16 %v1404
    %v2888 = vunpack.c.l.b16 %v1405
    %v2889 = vunpack.c.h.b16 %v1405
    %v2890 = vunpack.c.l.b16 %v1406
    %v2891 = vunpack.c.h.b16 %v1406
    %v2892 = vunpack.c.l.b16 %v1407
    %v2893 = vunpack.c.h.b16 %v1407
    %v2894 = vunpack.c.l.b16 %v1408
    %v2895 = vunpack.c.h.b16 %v1408
    %v2896 = vunpack.c.l.b16 %v1409
    %v2897 = vunpack.c.h.b16 %v1409
    %v2898 = vunpack.c.l.b16 %v1410
    %v2899 = vunpack.c.h.b16 %v1410
    %v2900 = vunpack.c.l.b16 %v1411
    %v2901 = vunpack.c.h.b16 %v1411
    %v2902 = vunpack.c.l.b16 %v1412
    %v2903 = vunpack.c.h.b16 %v1412
    %v2904 = vunpack.c.l.b16 %v1413
    %v2905 = vunpack.c.h.b16 %v1413
    %v2906 = vunpack.c.l.b16 %v1414
    %v2907 = vunpack.c.h.b16 %v1414
    %v2908 = vunpack.c.l.b16 %v1415
    %v2909 = vunpack.c.h.b16 %v1415
    %v2910 = vunpack.c.l.b16 %v1416
    %v2911 = vunpack.c.h.b16 %v1416
    %v2912 = vunpack.c.l.b16 %v1417
    %v2913 = vunpack.c.h.b16 %v1417
    %v2914 = vunpack.c.l.b16 %v1418
    %v2915 = vunpack.c.h.b16 %v1418
    %v2916 = vunpack.c.l.b16 %v1419
    %v2917 = vunpack.c.h.b16 %v1419
    %v2918 = vunpack.c.l.b16 %v1420
    %v2919 = vunpack.c.h.b16 %v1420
    %v2920 = vunpack.c.l.b16 %v1421
    %v2921 = vunpack.c.h.b16 %v1421
    %v2922 = vunpack.c.l.b16 %v1422
    %v2923 = vunpack.c.h.b16 %v1422
    %v2924 = vunpack.c.l.b16 %v1423
    %v2925 = vunpack.c.h.b16 %v1423
    %v2926 = vunpack.c.l.b16 %v1424
    %v2927 = vunpack.c.h.b16 %v1424
    %v2928 = vunpack.c.l.b16 %v1425
    %v2929 = vunpack.c.h.b16 %v1425
    %v2930 = vunpack.c.l.b16 %v1426
    %v2931 = vunpack.c.h.b16 %v1426
    %v2932 = vunpack.c.l.b16 %v1427
    %v2933 = vunpack.c.h.b16 %v1427
    %v2934 = vunpack.c.l.b16 %v1428
    %v2935 = vunpack.c.h.b16 %v1428
    %v2936 = vunpack.c.l.b16 %v1429
    %v2937 = vunpack.c.h.b16 %v1429
    %v2938 = vunpack.c.l.b16 %v1430
    %v2939 = vunpack.c.h.b16 %v1430
    %v2940 = vunpack.c.l.b16 %v1431
    %v2941 = vunpack.c.h.b16 %v1431
    %v2942 = vunpack.c.l.b16 %v1432
    %v2943 = vunpack.c.h.b16 %v1432
    %v2944 = vunpack.c.l.b16 %v1433
    %v2945 = vunpack.c.h.b16 %v1433
    %v2946 = vunpack.c.l.b16 %v1434
    %v2947 = vunpack.c.h.b16 %v1434
    %v2948 = vunpack.c.l.b16 %v1435
    %v2949 = vunpack.c.h.b16 %v1435
    %v2950 = vunpack.c.l.b16 %v1436
    %v2951 = vunpack.c.h.b16 %v1436
    %v2952 = vunpack.c.l.b16 %v1437
    %v2953 = vunpack.c.h.b16 %v1437
    %v2954 = vunpack.c.l.b16 %v1438
    %v2955 = vunpack.c.h.b16 %v1438
    %v2956 = vunpack.c.l.b16 %v1439
    %v2957 = vunpack.c.h.b16 %v1439
    %v2958 = vunpack.c.l.b16 %v1440
    %v2959 = vunpack.c.h.b16 %v1440
    %v2960 = vunpack.c.l.b16 %v1441
    %v2961 = vunpack.c.h.b16 %v1441
    %v2962 = vunpack.c.l.b16 %v1442
    %v2963 = vunpack.c.h.b16 %v1442
    %v2964 = vunpack.c.l.b16 %v1443
    %v2965 = vunpack.c.h.b16 %v1443
    %v2966 = vunpack.c.l.b16 %v1444
    %v2967 = vunpack.c.h.b16 %v1444
    %v2968 = vunpack.c.l.b16 %v1445
    %v2969 = vunpack.c.h.b16 %v1445
    %v2970 = vunpack.c.l.b16 %v1446
    %v2971 = vunpack.c.h.b16 %v1446
    %v2972 = vunpack.c.l.b16 %v1447
    %v2973 = vunpack.c.h.b16 %v1447
    %v2974 = vunpack.c.l.b16 %v1448
    %v2975 = vunpack.c.h.b16 %v1448
    %v2976 = vunpack.c.l.b16 %v1449
    %v2977 = vunpack.c.h.b16 %v1449
    %v2978 = vunpack.c.l.b16 %v1450
    %v2979 = vunpack.c.h.b16 %v1450
    %v2980 = vunpack.c.l.b16 %v1451
    %v2981 = vunpack.c.h.b16 %v1451
    %v2982 = vunpack.c.l.b16 %v1452
    %v2983 = vunpack.c.h.b16 %v1452
    %v2984 = vunpack.c.l.b16 %v1453
    %v2985 = vunpack.c.h.b16 %v1453
    %v2986 = vunpack.c.l.b16 %v1454
    %v2987 = vunpack.c.h.b16 %v1454
    %v2988 = vunpack.c.l.b16 %v1455
    %v2989 = vunpack.c.h.b16 %v1455
    %v2990 = vunpack.c.l.b16 %v1456
    %v2991 = vunpack.c.h.b16 %v1456
    %v2992 = vunpack.c.l.b16 %v1457
    %v2993 = vunpack.c.h.b16 %v1457
    %v2994 = vunpack.c.l.b16 %v1458
    %v2995 = vunpack.c.h.b16 %v1458
    %v2996 = vunpack.c.l.b16 %v1459
    %v2997 = vunpack.c.h.b16 %v1459
    %v2998 = vunpack.c.l.b16 %v1460
    %v2999 = vunpack.c.h.b16 %v1460
    %v3000 = vunpack.c.l.b16 %v1461
    %v3001 = vunpack.c.h.b16 %v1461
    %v3002 = vunpack.c.l.b16 %v1462
    %v3003 = vunpack.c.h.b16 %v1462
    %v3004 = vunpack.c.l.b16 %v1463
    %v3005 = vunpack.c.h.b16 %v1463
    %v3006 = vunpack.c.l.b16 %v1464
    %v3007 = vunpack.c.h.b16 %v1464
    %v3008 = vunpack.c.l.b16 %v1465
    %v3009 = vunpack.c.h.b16 %v1465
    %v3010 = vunpack.c.l.b16 %v1466
    %v3011 = vunpack.c.h.b16 %v1466
    %v3012 = vunpack.c.l.b16 %v1467
    %v3013 = vunpack.c.h.b16 %v1467
    %v3014 = vunpack.c.l.b16 %v1468
    %v3015 = vunpack.c.h.b16 %v1468
    %v3016 = vunpack.c.l.b16 %v1469
    %v3017 = vunpack.c.h.b16 %v1469
    %v3018 = vunpack.c.l.b16 %v1470
    %v3019 = vunpack.c.h.b16 %v1470
    %v3020 = vunpack.c.l.b16 %v1471
    %v3021 = vunpack.c.h.b16 %v1471
    %v3022 = vunpack.c.l.b16 %v1472
    %v3023 = vunpack.c.h.b16 %v1472
    %v3024 = vunpack.c.l.b16 %v1473
    %v3025 = vunpack.c.h.b16 %v1473
    %v3026 = vunpack.c.l.b16 %v1474
    %v3027 = vunpack.c.h.b16 %v1474
    %v3028 = vunpack.c.l.b16 %v1475
    %v3029 = vunpack.c.h.b16 %v1475
    %v3030 = vunpack.c.l.b16 %v1476
    %v3031 = vunpack.c.h.b16 %v1476
    %v3032 = vunpack.c.l.b16 %v1477
    %v3033 = vunpack.c.h.b16 %v1477
    %v3034 = vunpack.c.l.b16 %v1478
    %v3035 = vunpack.c.h.b16 %v1478
    %v3036 = vunpack.c.l.b16 %v1479
    %v3037 = vunpack.c.h.b16 %v1479
    %v3038 = vunpack.c.l.b16 %v1480
    %v3039 = vunpack.c.h.b16 %v1480
    %v3040 = vunpack.c.l.b16 %v1481
    %v3041 = vunpack.c.h.b16 %v1481
    %v3042 = vunpack.c.l.b16 %v1482
    %v3043 = vunpack.c.h.b16 %v1482
    %v3044 = vunpack.c.l.b16 %v1483
    %v3045 = vunpack.c.h.b16 %v1483
    %v3046 = vunpack.c.l.b16 %v1484
    %v3047 = vunpack.c.h.b16 %v1484
    %v3048 = vunpack.c.l.b16 %v1485
    %v3049 = vunpack.c.h.b16 %v1485
    %v3050 = vunpack.c.l.b16 %v1486
    %v3051 = vunpack.c.h.b16 %v1486
    %v3052 = vunpack.c.l.b16 %v1487
    %v3053 = vunpack.c.h.b16 %v1487
    %v3054 = vunpack.c.l.b16 %v1488
    %v3055 = vunpack.c.h.b16 %v1488
    %v3056 = vunpack.c.l.b16 %v1489
    %v3057 = vunpack.c.h.b16 %v1489
    %v3058 = vunpack.c.l.b16 %v1490
    %v3059 = vunpack.c.h.b16 %v1490
    %v3060 = vunpack.c.l.b16 %v1491
    %v3061 = vunpack.c.h.b16 %v1491
    %v3062 = vunpack.c.l.b16 %v1492
    %v3063 = vunpack.c.h.b16 %v1492
    %v3064 = vunpack.c.l.b16 %v1493
    %v3065 = vunpack.c.h.b16 %v1493
    %v3066 = vunpack.c.l.b16 %v1494
    %v3067 = vunpack.c.h.b16 %v1494
    %v3068 = vunpack.c.l.b16 %v1495
    %v3069 = vunpack.c.h.b16 %v1495
    %v3070 = vunpack.c.l.b16 %v1496
    %v3071 = vunpack.c.h.b16 %v1496
    %v3072 = vunpack.c.l.b16 %v1497
    %v3073 = vunpack.c.h.b16 %v1497
    %v3074 = vunpack.c.l.b16 %v1498
    %v3075 = vunpack.c.h.b16 %v1498
    %v3076 = vpack.c.b16 %v2060, %v2052
    %v3077 = vpack.c.b16 %v2061, %v2053
    %v3078 = vpack.c.b16 %v2062, %v2054
    %v3079 = vpack.c.b16 %v2063, %v2055
    %v3080 = vpack.c.b16 %v2064, %v2056
    %v3081 = vpack.c.b16 %v2065, %v2057
    %v3082 = vpack.c.b16 %v2066, %v2058
    %v3083 = vpack.c.b16 %v2067, %v2059
    %v3084 = vpack.c.b16 %v2076, %v2068
    %v3085 = vpack.c.b16 %v2077, %v2069
    %v3086 = vpack.c.b16 %v2078, %v2070
    %v3087 = vpack.c.b16 %v2079, %v2071
    %v3088 = vpack.c.b16 %v2080, %v2072
    %v3089 = vpack.c.b16 %v2081, %v2073
    %v3090 = vpack.c.b16 %v2082, %v2074
    %v3091 = vpack.c.b16 %v2083, %v2075
    %v3092 = vpack.c.b16 %v2092, %v2084
    %v3093 = vpack.c.b16 %v2093, %v2085
    %v3094 = vpack.c.b16 %v2094, %v2086
    %v3095 = vpack.c.b16 %v2095, %v2087
    %v3096 = vpack.c.b16 %v2096, %v2088
    %v3097 = vpack.c.b16 %v2097, %v2089
    %v3098 = vpack.c.b16 %v2098, %v2090
    %v3099 = vpack.c.b16 %v2099, %v2091
    %v3100 = vpack.c.b16 %v2108, %v2100
    %v3101 = vpack.c.b16 %v2109, %v2101
    %v3102 = vpack.c.b16 %v2110, %v2102
    %v3103 = vpack.c.b16 %v2111, %v2103
    %v3104 = vpack.c.b16 %v2112, %v2104
    %v3105 = vpack.c.b16 %v2113, %v2105
    %v3106 = vpack.c.b16 %v2114, %v2106
    %v3107 = vpack.c.b16 %v2115, %v2107
    %v3108 = vpack.c.b16 %v2124, %v2116
    %v3109 = vpack.c.b16 %v2125, %v2117
    %v3110 = vpack.c.b16 %v2126, %v2118
    %v3111 = vpack.c.b16 %v2127, %v2119
    %v3112 = vpack.c.b16 %v2128, %v2120
    %v3113 = vpack.c.b16 %v2129, %v2121
    %v3114 = vpack.c.b16 %v2130, %v2122
    %v3115 = vpack.c.b16 %v2131, %v2123
    %v3116 = vpack.c.b16 %v2140, %v2132
    %v3117 = vpack.c.b16 %v2141, %v2133
    %v3118 = vpack.c.b16 %v2142, %v2134
    %v3119 = vpack.c.b16 %v2143, %v2135
    %v3120 = vpack.c.b16 %v2144, %v2136
    %v3121 = vpack.c.b16 %v2145, %v2137
    %v3122 = vpack.c.b16 %v2146, %v2138
    %v3123 = vpack.c.b16 %v2147, %v2139
    %v3124 = vpack.c.b16 %v2156, %v2148
    %v3125 = vpack.c.b16 %v2157, %v2149
    %v3126 = vpack.c.b16 %v2158, %v2150
    %v3127 = vpack.c.b16 %v2159, %v2151
    %v3128 = vpack.c.b16 %v2160, %v2152
    %v3129 = vpack.c.b16 %v2161, %v2153
    %v3130 = vpack.c.b16 %v2162, %v2154
    %v3131 = vpack.c.b16 %v2163, %v2155
    %v3132 = vpack.c.b16 %v2172, %v2164
    %v3133 = vpack.c.b16 %v2173, %v2165
    %v3134 = vpack.c.b16 %v2174, %v2166
    %v3135 = vpack.c.b16 %v2175, %v2167
    %v3136 = vpack.c.b16 %v2176, %v2168
    %v3137 = vpack.c.b16 %v2177, %v2169
    %v3138 = vpack.c.b16 %v2178, %v2170
    %v3139 = vpack.c.b16 %v2179, %v2171
    %v3140 = vpack.c.b16 %v2188, %v2180
    %v3141 = vpack.c.b16 %v2189, %v2181
    %v3142 = vpack.c.b16 %v2190, %v2182
    %v3143 = vpack.c.b16 %v2191, %v2183
    %v3144 = vpack.c.b16 %v2192, %v2184
    %v3145 = vpack.c.b16 %v2193, %v2185
    %v3146 = vpack.c.b16 %v2194, %v2186
    %v3147 = vpack.c.b16 %v2195, %v2187
    %v3148 = vpack.c.b16 %v2204, %v2196
    %v3149 = vpack.c.b16 %v2205, %v2197
    %v3150 = vpack.c.b16 %v2206, %v2198
    %v3151 = vpack.c.b16 %v2207, %v2199
    %v3152 = vpack.c.b16 %v2208, %v2200
    %v3153 = vpack.c.b16 %v2209, %v2201
    %v3154 = vpack.c.b16 %v2210, %v2202
    %v3155 = vpack.c.b16 %v2211, %v2203
    %v3156 = vpack.c.b16 %v2220, %v2212
    %v3157 = vpack.c.b16 %v2221, %v2213
    %v3158 = vpack.c.b16 %v2222, %v2214
    %v3159 = vpack.c.b16 %v2223, %v2215
    %v3160 = vpack.c.b16 %v2224, %v2216
    %v3161 = vpack.c.b16 %v2225, %v2217
    %v3162 = vpack.c.b16 %v2226, %v2218
    %v3163 = vpack.c.b16 %v2227, %v2219
    %v3164 = vpack.c.b16 %v2236, %v2228
    %v3165 = vpack.c.b16 %v2237, %v2229
    %v3166 = vpack.c.b16 %v2238, %v2230
    %v3167 = vpack.c.b16 %v2239, %v2231
    %v3168 = vpack.c.b16 %v2240, %v2232
    %v3169 = vpack.c.b16 %v2241, %v2233
    %v3170 = vpack.c.b16 %v2242, %v2234
    %v3171 = vpack.c.b16 %v2243, %v2235
    %v3172 = vpack.c.b16 %v2252, %v2244
    %v3173 = vpack.c.b16 %v2253, %v2245
    %v3174 = vpack.c.b16 %v2254, %v2246
    %v3175 = vpack.c.b16 %v2255, %v2247
    %v3176 = vpack.c.b16 %v2256, %v2248
    %v3177 = vpack.c.b16 %v2257, %v2249
    %v3178 = vpack.c.b16 %v2258, %v2250
    %v3179 = vpack.c.b16 %v2259, %v2251
    %v3180 = vpack.c.b16 %v2268, %v2260
    %v3181 = vpack.c.b16 %v2269, %v2261
    %v3182 = vpack.c.b16 %v2270, %v2262
    %v3183 = vpack.c.b16 %v2271, %v2263
    %v3184 = vpack.c.b16 %v2272, %v2264
    %v3185 = vpack.c.b16 %v2273, %v2265
    %v3186 = vpack.c.b16 %v2274, %v2266
    %v3187 = vpack.c.b16 %v2275, %v2267
    %v3188 = vpack.c.b16 %v2284, %v2276
    %v3189 = vpack.c.b16 %v2285, %v2277
    %v3190 = vpack.c.b16 %v2286, %v2278
    %v3191 = vpack.c.b16 %v2287, %v2279
    %v3192 = vpack.c.b16 %v2288, %v2280
    %v3193 = vpack.c.b16 %v2289, %v2281
    %v3194 = vpack.c.b16 %v2290, %v2282
    %v3195 = vpack.c.b16 %v2291, %v2283
    %v3196 = vpack.c.b16 %v2300, %v2292
    %v3197 = vpack.c.b16 %v2301, %v2293
    %v3198 = vpack.c.b16 %v2302, %v2294
    %v3199 = vpack.c.b16 %v2303, %v2295
    %v3200 = vpack.c.b16 %v2304, %v2296
    %v3201 = vpack.c.b16 %v2305, %v2297
    %v3202 = vpack.c.b16 %v2306, %v2298
    %v3203 = vpack.c.b16 %v2307, %v2299
    %v3204 = vpack.c.b16 %v2316, %v2308
    %v3205 = vpack.c.b16 %v2317, %v2309
    %v3206 = vpack.c.b16 %v2318, %v2310
    %v3207 = vpack.c.b16 %v2319, %v2311
    %v3208 = vpack.c.b16 %v2320, %v2312
    %v3209 = vpack.c.b16 %v2321, %v2313
    %v3210 = vpack.c.b16 %v2322, %v2314
    %v3211 = vpack.c.b16 %v2323, %v2315
    %v3212 = vpack.c.b16 %v2332, %v2324
    %v3213 = vpack.c.b16 %v2333, %v2325
    %v3214 = vpack.c.b16 %v2334, %v2326
    %v3215 = vpack.c.b16 %v2335, %v2327
    %v3216 = vpack.c.b16 %v2336, %v2328
    %v3217 = vpack.c.b16 %v2337, %v2329
    %v3218 = vpack.c.b16 %v2338, %v2330
    %v3219 = vpack.c.b16 %v2339, %v2331
    %v3220 = vpack.c.b16 %v2348, %v2340
    %v3221 = vpack.c.b16 %v2349, %v2341
    %v3222 = vpack.c.b16 %v2350, %v2342
    %v3223 = vpack.c.b16 %v2351, %v2343
    %v3224 = vpack.c.b16 %v2352, %v2344
    %v3225 = vpack.c.b16 %v2353, %v2345
    %v3226 = vpack.c.b16 %v2354, %v2346
    %v3227 = vpack.c.b16 %v2355, %v2347
    %v3228 = vpack.c.b16 %v2364, %v2356
    %v3229 = vpack.c.b16 %v2365, %v2357
    %v3230 = vpack.c.b16 %v2366, %v2358
    %v3231 = vpack.c.b16 %v2367, %v2359
    %v3232 = vpack.c.b16 %v2368, %v2360
    %v3233 = vpack.c.b16 %v2369, %v2361
    %v3234 = vpack.c.b16 %v2370, %v2362
    %v3235 = vpack.c.b16 %v2371, %v2363
    %v3236 = vpack.c.b16 %v2380, %v2372
    %v3237 = vpack.c.b16 %v2381, %v2373
    %v3238 = vpack.c.b16 %v2382, %v2374
    %v3239 = vpack.c.b16 %v2383, %v2375
    %v3240 = vpack.c.b16 %v2384, %v2376
    %v3241 = vpack.c.b16 %v2385, %v2377
    %v3242 = vpack.c.b16 %v2386, %v2378
    %v3243 = vpack.c.b16 %v2387, %v2379
    %v3244 = vpack.c.b16 %v2396, %v2388
    %v3245 = vpack.c.b16 %v2397, %v2389
    %v3246 = vpack.c.b16 %v2398, %v2390
    %v3247 = vpack.c.b16 %v2399, %v2391
    %v3248 = vpack.c.b16 %v2400, %v2392
    %v3249 = vpack.c.b16 %v2401, %v2393
    %v3250 = vpack.c.b16 %v2402, %v2394
    %v3251 = vpack.c.b16 %v2403, %v2395
    %v3252 = vpack.c.b16 %v2412, %v2404
    %v3253 = vpack.c.b16 %v2413, %v2405
    %v3254 = vpack.c.b16 %v2414, %v2406
    %v3255 = vpack.c.b16 %v2415, %v2407
    %v3256 = vpack.c.b16 %v2416, %v2408
    %v3257 = vpack.c.b16 %v2417, %v2409
    %v3258 = vpack.c.b16 %v2418, %v2410
    %v3259 = vpack.c.b16 %v2419, %v2411
    %v3260 = vpack.c.b16 %v2428, %v2420
    %v3261 = vpack.c.b16 %v2429, %v2421
    %v3262 = vpack.c.b16 %v2430, %v2422
    %v3263 = vpack.c.b16 %v2431, %v2423
    %v3264 = vpack.c.b16 %v2432, %v2424
    %v3265 = vpack.c.b16 %v2433, %v2425
    %v3266 = vpack.c.b16 %v2434, %v2426
    %v3267 = vpack.c.b16 %v2435, %v2427
    %v3268 = vpack.c.b16 %v2444, %v2436
    %v3269 = vpack.c.b16 %v2445, %v2437
    %v3270 = vpack.c.b16 %v2446, %v2438
    %v3271 = vpack.c.b16 %v2447, %v2439
    %v3272 = vpack.c.b16 %v2448, %v2440
    %v3273 = vpack.c.b16 %v2449, %v2441
    %v3274 = vpack.c.b16 %v2450, %v2442
    %v3275 = vpack.c.b16 %v2451, %v2443
    %v3276 = vpack.c.b16 %v2460, %v2452
    %v3277 = vpack.c.b16 %v2461, %v2453
    %v3278 = vpack.c.b16 %v2462, %v2454
    %v3279 = vpack.c.b16 %v2463, %v2455
    %v3280 = vpack.c.b16 %v2464, %v2456
    %v3281 = vpack.c.b16 %v2465, %v2457
    %v3282 = vpack.c.b16 %v2466, %v2458
    %v3283 = vpack.c.b16 %v2467, %v2459
    %v3284 = vpack.c.b16 %v2476, %v2468
    %v3285 = vpack.c.b16 %v2477, %v2469
    %v3286 = vpack.c.b16 %v2478, %v2470
    %v3287 = vpack.c.b16 %v2479, %v2471
    %v3288 = vpack.c.b16 %v2480, %v2472
    %v3289 = vpack.c.b16 %v2481, %v2473
    %v3290 = vpack.c.b16 %v2482, %v2474
    %v3291 = vpack.c.b16 %v2483, %v2475
    %v3292 = vpack.c.b16 %v2492, %v2484
    %v3293 = vpack.c.b16 %v2493, %v2485
    %v3294 = vpack.c.b16 %v2494, %v2486
    %v3295 = vpack.c.b16 %v2495, %v2487
    %v3296 = vpack.c.b16 %v2496, %v2488
    %v3297 = vpack.c.b16 %v2497, %v2489
    %v3298 = vpack.c.b16 %v2498, %v2490
    %v3299 = vpack.c.b16 %v2499, %v2491
    %v3300 = vpack.c.b16 %v2508, %v2500
    %v3301 = vpack.c.b16 %v2509, %v2501
    %v3302 = vpack.c.b16 %v2510, %v2502
    %v3303 = vpack.c.b16 %v2511, %v2503
    %v3304 = vpack.c.b16 %v2512, %v2504
    %v3305 = vpack.c.b16 %v2513, %v2505
    %v3306 = vpack.c.b16 %v2514, %v2506
    %v3307 = vpack.c.b16 %v2515, %v2507
    %v3308 = vpack.c.b16 %v2524, %v2516
    %v3309 = vpack.c.b16 %v2525, %v2517
    %v3310 = vpack.c.b16 %v2526, %v2518
    %v3311 = vpack.c.b16 %v2527, %v2519
    %v3312 = vpack.c.b16 %v2528, %v2520
    %v3313 = vpack.c.b16 %v2529, %v2521
    %v3314 = vpack.c.b16 %v2530, %v2522
    %v3315 = vpack.c.b16 %v2531, %v2523
    %v3316 = vpack.c.b16 %v2540, %v2532
    %v3317 = vpack.c.b16 %v2541, %v2533
    %v3318 = vpack.c.b16 %v2542, %v2534
    %v3319 = vpack.c.b16 %v2543, %v2535
    %v3320 = vpack.c.b16 %v2544, %v2536
    %v3321 = vpack.c.b16 %v2545, %v2537
    %v3322 = vpack.c.b16 %v2546, %v2538
    %v3323 = vpack.c.b16 %v2547, %v2539
    %v3324 = vpack.c.b16 %v2556, %v2548
    %v3325 = vpack.c.b16 %v2557, %v2549
    %v3326 = vpack.c.b16 %v2558, %v2550
    %v3327 = vpack.c.b16 %v2559, %v2551
    %v3328 = vpack.c.b16 %v2560, %v2552
    %v3329 = vpack.c.b16 %v2561, %v2553
    %v3330 = vpack.c.b16 %v2562, %v2554
    %v3331 = vpack.c.b16 %v2563, %v2555
    %v3332 = vpack.c.b16 %v2572, %v2564
    %v3333 = vpack.c.b16 %v2573, %v2565
    %v3334 = vpack.c.b16 %v2574, %v2566
    %v3335 = vpack.c.b16 %v2575, %v2567
    %v3336 = vpack.c.b16 %v2576, %v2568
    %v3337 = vpack.c.b16 %v2577, %v2569
    %v3338 = vpack.c.b16 %v2578, %v2570
    %v3339 = vpack.c.b16 %v2579, %v2571
    %v3340 = vpack.c.b16 %v2588, %v2580
    %v3341 = vpack.c.b16 %v2589, %v2581
    %v3342 = vpack.c.b16 %v2590, %v2582
    %v3343 = vpack.c.b16 %v2591, %v2583
    %v3344 = vpack.c.b16 %v2592, %v2584
    %v3345 = vpack.c.b16 %v2593, %v2585
    %v3346 = vpack.c.b16 %v2594, %v2586
    %v3347 = vpack.c.b16 %v2595, %v2587
    %v3348 = vpack.c.b16 %v2604, %v2596
    %v3349 = vpack.c.b16 %v2605, %v2597
    %v3350 = vpack.c.b16 %v2606, %v2598
    %v3351 = vpack.c.b16 %v2607, %v2599
    %v3352 = vpack.c.b16 %v2608, %v2600
    %v3353 = vpack.c.b16 %v2609, %v2601
    %v3354 = vpack.c.b16 %v2610, %v2602
    %v3355 = vpack.c.b16 %v2611, %v2603
    %v3356 = vpack.c.b16 %v2620, %v2612
    %v3357 = vpack.c.b16 %v2621, %v2613
    %v3358 = vpack.c.b16 %v2622, %v2614
    %v3359 = vpack.c.b16 %v2623, %v2615
    %v3360 = vpack.c.b16 %v2624, %v2616
    %v3361 = vpack.c.b16 %v2625, %v2617
    %v3362 = vpack.c.b16 %v2626, %v2618
    %v3363 = vpack.c.b16 %v2627, %v2619
    %v3364 = vpack.c.b16 %v2636, %v2628
    %v3365 = vpack.c.b16 %v2637, %v2629
    %v3366 = vpack.c.b16 %v2638, %v2630
    %v3367 = vpack.c.b16 %v2639, %v2631
    %v3368 = vpack.c.b16 %v2640, %v2632
    %v3369 = vpack.c.b16 %v2641, %v2633
    %v3370 = vpack.c.b16 %v2642, %v2634
    %v3371 = vpack.c.b16 %v2643, %v2635
    %v3372 = vpack.c.b16 %v2652, %v2644
    %v3373 = vpack.c.b16 %v2653, %v2645
    %v3374 = vpack.c.b16 %v2654, %v2646
    %v3375 = vpack.c.b16 %v2655, %v2647
    %v3376 = vpack.c.b16 %v2656, %v2648
    %v3377 = vpack.c.b16 %v2657, %v2649
    %v3378 = vpack.c.b16 %v2658, %v2650
    %v3379 = vpack.c.b16 %v2659, %v2651
    %v3380 = vpack.c.b16 %v2668, %v2660
    %v3381 = vpack.c.b16 %v2669, %v2661
    %v3382 = vpack.c.b16 %v2670, %v2662
    %v3383 = vpack.c.b16 %v2671, %v2663
    %v3384 = vpack.c.b16 %v2672, %v2664
    %v3385 = vpack.c.b16 %v2673, %v2665
    %v3386 = vpack.c.b16 %v2674, %v2666
    %v3387 = vpack.c.b16 %v2675, %v2667
    %v3388 = vpack.c.b16 %v2684, %v2676
    %v3389 = vpack.c.b16 %v2685, %v2677
    %v3390 = vpack.c.b16 %v2686, %v2678
    %v3391 = vpack.c.b16 %v2687, %v2679
    %v3392 = vpack.c.b16 %v2688, %v2680
    %v3393 = vpack.c.b16 %v2689, %v2681
    %v3394 = vpack.c.b16 %v2690, %v2682
    %v3395 = vpack.c.b16 %v2691, %v2683
    %v3396 = vpack.c.b16 %v2700, %v2692
    %v3397 = vpack.c.b16 %v2701, %v2693
    %v3398 = vpack.c.b16 %v2702, %v2694
    %v3399 = vpack.c.b16 %v2703, %v2695
    %v3400 = vpack.c.b16 %v2704, %v2696
    %v3401 = vpack.c.b16 %v2705, %v2697
    %v3402 = vpack.c.b16 %v2706, %v2698
    %v3403 = vpack.c.b16 %v2707, %v2699
    %v3404 = vpack.c.b16 %v2716, %v2708
    %v3405 = vpack.c.b16 %v2717, %v2709
    %v3406 = vpack.c.b16 %v2718, %v2710
    %v3407 = vpack.c.b16 %v2719, %v2711
    %v3408 = vpack.c.b16 %v2720, %v2712
    %v3409 = vpack.c.b16 %v2721, %v2713
    %v3410 = vpack.c.b16 %v2722, %v2714
    %v3411 = vpack.c.b16 %v2723, %v2715
    %v3412 = vpack.c.b16 %v2732, %v2724
    %v3413 = vpack.c.b16 %v2733, %v2725
    %v3414 = vpack.c.b16 %v2734, %v2726
    %v3415 = vpack.c.b16 %v2735, %v2727
    %v3416 = vpack.c.b16 %v2736, %v2728
    %v3417 = vpack.c.b16 %v2737, %v2729
    %v3418 = vpack.c.b16 %v2738, %v2730
    %v3419 = vpack.c.b16 %v2739, %v2731
    %v3420 = vpack.c.b16 %v2748, %v2740
    %v3421 = vpack.c.b16 %v2749, %v2741
    %v3422 = vpack.c.b16 %v2750, %v2742
    %v3423 = vpack.c.b16 %v2751, %v2743
    %v3424 = vpack.c.b16 %v2752, %v2744
    %v3425 = vpack.c.b16 %v2753, %v2745
    %v3426 = vpack.c.b16 %v2754, %v2746
    %v3427 = vpack.c.b16 %v2755, %v2747
    %v3428 = vpack.c.b16 %v2764, %v2756
    %v3429 = vpack.c.b16 %v2765, %v2757
    %v3430 = vpack.c.b16 %v2766, %v2758
    %v3431 = vpack.c.b16 %v2767, %v2759
    %v3432 = vpack.c.b16 %v2768, %v2760
    %v3433 = vpack.c.b16 %v2769, %v2761
    %v3434 = vpack.c.b16 %v2770, %v2762
    %v3435 = vpack.c.b16 %v2771, %v2763
    %v3436 = vpack.c.b16 %v2780, %v2772
    %v3437 = vpack.c.b16 %v2781, %v2773
    %v3438 = vpack.c.b16 %v2782, %v2774
    %v3439 = vpack.c.b16 %v2783, %v2775
    %v3440 = vpack.c.b16 %v2784, %v2776
    %v3441 = vpack.c.b16 %v2785, %v2777
    %v3442 = vpack.c.b16 %v2786, %v2778
    %v3443 = vpack.c.b16 %v2787, %v2779
    %v3444 = vpack.c.b16 %v2796, %v2788
    %v3445 = vpack.c.b16 %v2797, %v2789
    %v3446 = vpack.c.b16 %v2798, %v2790
    %v3447 = vpack.c.b16 %v2799, %v2791
    %v3448 = vpack.c.b16 %v2800, %v2792
    %v3449 = vpack.c.b16 %v2801, %v2793
    %v3450 = vpack.c.b16 %v2802, %v2794
    %v3451 = vpack.c.b16 %v2803, %v2795
    %v3452 = vpack.c.b16 %v2812, %v2804
    %v3453 = vpack.c.b16 %v2813, %v2805
    %v3454 = vpack.c.b16 %v2814, %v2806
    %v3455 = vpack.c.b16 %v2815, %v2807
    %v3456 = vpack.c.b16 %v2816, %v2808
    %v3457 = vpack.c.b16 %v2817, %v2809
    %v3458 = vpack.c.b16 %v2818, %v2810
    %v3459 = vpack.c.b16 %v2819, %v2811
    %v3460 = vpack.c.b16 %v2828, %v2820
    %v3461 = vpack.c.b16 %v2829, %v2821
    %v3462 = vpack.c.b16 %v2830, %v2822
    %v3463 = vpack.c.b16 %v2831, %v2823
    %v3464 = vpack.c.b16 %v2832, %v2824
    %v3465 = vpack.c.b16 %v2833, %v2825
    %v3466 = vpack.c.b16 %v2834, %v2826
    %v3467 = vpack.c.b16 %v2835, %v2827
    %v3468 = vpack.c.b16 %v2844, %v2836
    %v3469 = vpack.c.b16 %v2845, %v2837
    %v3470 = vpack.c.b16 %v2846, %v2838
    %v3471 = vpack.c.b16 %v2847, %v2839
    %v3472 = vpack.c.b16 %v2848, %v2840
    %v3473 = vpack.c.b16 %v2849, %v2841
    %v3474 = vpack.c.b16 %v2850, %v2842
    %v3475 = vpack.c.b16 %v2851, %v2843
    %v3476 = vpack.c.b16 %v2860, %v2852
    %v3477 = vpack.c.b16 %v2861, %v2853
    %v3478 = vpack.c.b16 %v2862, %v2854
    %v3479 = vpack.c.b16 %v2863, %v2855
    %v3480 = vpack.c.b16 %v2864, %v2856
    %v3481 = vpack.c.b16 %v2865, %v2857
    %v3482 = vpack.c.b16 %v2866, %v2858
    %v3483 = vpack.c.b16 %v2867, %v2859
    %v3484 = vpack.c.b16 %v2876, %v2868
    %v3485 = vpack.c.b16 %v2877, %v2869
    %v3486 = vpack.c.b16 %v2878, %v2870
    %v3487 = vpack.c.b16 %v2879, %v2871
    %v3488 = vpack.c.b16 %v2880, %v2872
    %v3489 = vpack.c.b16 %v2881, %v2873
    %v3490 = vpack.c.b16 %v2882, %v2874
    %v3491 = vpack.c.b16 %v2883, %v2875
    %v3492 = vpack.c.b16 %v2892, %v2884
    %v3493 = vpack.c.b16 %v2893, %v2885
    %v3494 = vpack.c.b16 %v2894, %v2886
    %v3495 = vpack.c.b16 %v2895, %v2887
    %v3496 = vpack.c.b16 %v2896, %v2888
    %v3497 = vpack.c.b16 %v2897, %v2889
    %v3498 = vpack.c.b16 %v2898, %v2890
    %v3499 = vpack.c.b16 %v2899, %v2891
    %v3500 = vpack.c.b16 %v2908, %v2900
    %v3501 = vpack.c.b16 %v2909, %v2901
    %v3502 = vpack.c.b16 %v2910, %v2902
    %v3503 = vpack.c.b16 %v2911, %v2903
    %v3504 = vpack.c.b16 %v2912, %v2904
    %v3505 = vpack.c.b16 %v2913, %v2905
    %v3506 = vpack.c.b16 %v2914, %v2906
    %v3507 = vpack.c.b16 %v2915, %v2907
    %v3508 = vpack.c.b16 %v2924, %v2916
    %v3509 = vpack.c.b16 %v2925, %v2917
    %v3510 = vpack.c.b16 %v2926, %v2918
    %v3511 = vpack.c.b16 %v2927, %v2919
    %v3512 = vpack.c.b16 %v2928, %v2920
    %v3513 = vpack.c.b16 %v2929, %v2921
    %v3514 = vpack.c.b16 %v2930, %v2922
    %v3515 = vpack.c.b16 %v2931, %v2923
    %v3516 = vpack.c.b16 %v2940, %v2932
    %v3517 = vpack.c.b16 %v2941, %v2933
    %v3518 = vpack.c.b16 %v2942, %v2934
    %v3519 = vpack.c.b16 %v2943, %v2935
    %v3520 = vpack.c.b16 %v2944, %v2936
    %v3521 = vpack.c.b16 %v2945, %v2937
    %v3522 = vpack.c.b16 %v2946, %v2938
    %v3523 = vpack.c.b16 %v2947, %v2939
    %v3524 = vpack.c.b16 %v2956, %v2948
    %v3525 = vpack.c.b16 %v2957, %v2949
    %v3526 = vpack.c.b16 %v2958, %v2950
    %v3527 = vpack.c.b16 %v2959, %v2951
    %v3528 = vpack.c.b16 %v2960, %v2952
    %v3529 = vpack.c.b16 %v2961, %v2953
    %v3530 = vpack.c.b16 %v2962, %v2954
    %v3531 = vpack.c.b16 %v2963, %v2955
    %v3532 = vpack.c.b16 %v2972, %v2964
    %v3533 = vpack.c.b16 %v2973, %v2965
    %v3534 = vpack.c.b16 %v2974, %v2966
    %v3535 = vpack.c.b16 %v2975, %v2967
    %v3536 = vpack.c.b16 %v2976, %v2968
    %v3537 = vpack.c.b16 %v2977, %v2969
    %v3538 = vpack.c.b16 %v2978, %v2970
    %v3539 = vpack.c.b16 %v2979, %v2971
    %v3540 = vpack.c.b16 %v2988, %v2980
    %v3541 = vpack.c.b16 %v2989, %v2981
    %v3542 = vpack.c.b16 %v2990, %v2982
    %v3543 = vpack.c.b16 %v2991, %v2983
    %v3544 = vpack.c.b16 %v2992, %v2984
    %v3545 = vpack.c.b16 %v2993, %v2985
    %v3546 = vpack.c.b16 %v2994, %v2986
    %v3547 = vpack.c.b16 %v2995, %v2987
    %v3548 = vpack.c.b16 %v3004, %v2996
    %v3549 = vpack.c.b16 %v3005, %v2997
    %v3550 = vpack.c.b16 %v3006, %v2998
    %v3551 = vpack.c.b16 %v3007, %v2999
    %v3552 = vpack.c.b16 %v3008, %v3000
    %v3553 = vpack.c.b16 %v3009, %v3001
    %v3554 = vpack.c.b16 %v3010, %v3002
    %v3555 = vpack.c.b16 %v3011, %v3003
    %v3556 = vpack.c.b16 %v3020, %v3012
    %v3557 = vpack.c.b16 %v3021, %v3013
    %v3558 = vpack.c.b16 %v3022, %v3014
    %v3559 = vpack.c.b16 %v3023, %v3015
    %v3560 = vpack.c.b16 %v3024, %v3016
    %v3561 = vpack.c.b16 %v3025, %v3017
    %v3562 = vpack.c.b16 %v3026, %v3018
    %v3563 = vpack.c.b16 %v3027, %v3019
    %v3564 = vpack.c.b16 %v3036, %v3028
    %v3565 = vpack.c.b16 %v3037, %v3029
    %v3566 = vpack.c.b16 %v3038, %v3030
    %v3567 = vpack.c.b16 %v3039, %v3031
    %v3568 = vpack.c.b16 %v3040, %v3032
    %v3569 = vpack.c.b16 %v3041, %v3033
    %v3570 = vpack.c.b16 %v3042, %v3034
    %v3571 = vpack.c.b16 %v3043, %v3035
    %v3572 = vpack.c.b16 %v3052, %v3044
    %v3573 = vpack.c.b16 %v3053, %v3045
    %v3574 = vpack.c.b16 %v3054, %v3046
    %v3575 = vpack.c.b16 %v3055, %v3047
    %v3576 = vpack.c.b16 %v3056, %v3048
    %v3577 = vpack.c.b16 %v3057, %v3049
    %v3578 = vpack.c.b16 %v3058, %v3050
    %v3579 = vpack.c.b16 %v3059, %v3051
    %v3580 = vpack.c.b16 %v3068, %v3060
    %v3581 = vpack.c.b16 %v3069, %v3061
    %v3582 = vpack.c.b16 %v3070, %v3062
    %v3583 = vpack.c.b16 %v3071, %v3063
    %v3584 = vpack.c.b16 %v3072, %v3064
    %v3585 = vpack.c.b16 %v3073, %v3065
    %v3586 = vpack.c.b16 %v3074, %v3066
    %v3587 = vpack.c.b16 %v3075, %v3067
    %4100 = vmatprep.subr.bf16.mxu0 %v3077
    %4101 = vmatpush1.bf16.msra.mxu0 %v3076
    %4102 = vmatprep.subr.bf16.mxu0 %v3085
    %4103 = vmatpush1.bf16.msra.mxu0 %v3084
    %4104 = vmatprep.subr.bf16.mxu0 %v3093
    %4105 = vmatpush1.bf16.msra.mxu0 %v3092
    %4106 = vmatprep.subr.bf16.mxu0 %v3101
    %4107 = vmatpush1.bf16.msra.mxu0 %v3100
    %4108 = vmatprep.subr.bf16.mxu0 %v3109
    %4109 = vmatpush1.bf16.msra.mxu0 %v3108
    %4110 = vmatprep.subr.bf16.mxu0 %v3117
    %4111 = vmatpush1.bf16.msra.mxu0 %v3116
    %4112 = vmatprep.subr.bf16.mxu0 %v3125
    %4113 = vmatpush1.bf16.msra.mxu0 %v3124
    %4114 = vmatprep.subr.bf16.mxu0 %v3133
    %4115 = vmatpush1.bf16.msra.mxu0 %v3132
    %4116 = vmatprep.subr.bf16.mxu0 %v3141
    %4117 = vmatpush1.bf16.msra.mxu0 %v3140
    %4118 = vmatprep.subr.bf16.mxu0 %v3149
    %4119 = vmatpush1.bf16.msra.mxu0 %v3148
    %4120 = vmatprep.subr.bf16.mxu0 %v3157
    %4121 = vmatpush1.bf16.msra.mxu0 %v3156
    %4122 = vmatprep.subr.bf16.mxu0 %v3165
    %4123 = vmatpush1.bf16.msra.mxu0 %v3164
    %4124 = vmatprep.subr.bf16.mxu0 %v3173
    %4125 = vmatpush1.bf16.msra.mxu0 %v3172
    %4126 = vmatprep.subr.bf16.mxu0 %v3181
    %4127 = vmatpush1.bf16.msra.mxu0 %v3180
    %4128 = vmatprep.subr.bf16.mxu0 %v3189
    %4129 = vmatpush1.bf16.msra.mxu0 %v3188
    %4130 = vmatprep.subr.bf16.mxu0 %v3197
    %4131 = vmatpush1.bf16.msra.mxu0 %v3196
    %4132 = vmatprep.mubr.bf16.mxu0 %v980
    %4133 = vmatmul.mubr.bf16.gmra.mrb[0].mxu0 %v979
    %v4134 = vpop.f32.mrb[0].mxu0
    %v4135 = vadd.f32 %v1503, %v4134
    %v4136 = vpop.f32.mrb[0].mxu0
    %v4137 = vadd.f32 %v1507, %v4136
    %v4138 = vpop.f32.mrb[0].mxu0
    %v4139 = vpop.f32.mrb[0].mxu0
    %4140 = vdwg.mxu0
    %4141 = vmatprep.subr.bf16.mxu0 %v3205
    %4142 = vmatpush1.bf16.msra.mxu0 %v3204
    %4143 = vmatprep.subr.bf16.mxu0 %v3213
    %4144 = vmatpush1.bf16.msra.mxu0 %v3212
    %4145 = vmatprep.subr.bf16.mxu0 %v3221
    %4146 = vmatpush1.bf16.msra.mxu0 %v3220
    %4147 = vmatprep.subr.bf16.mxu0 %v3229
    %4148 = vmatpush1.bf16.msra.mxu0 %v3228
    %4149 = vmatprep.subr.bf16.mxu0 %v3237
    %4150 = vmatpush1.bf16.msra.mxu0 %v3236
    %4151 = vmatprep.subr.bf16.mxu0 %v3245
    %4152 = vmatpush1.bf16.msra.mxu0 %v3244
    %4153 = vmatprep.subr.bf16.mxu0 %v3253
    %4154 = vmatpush1.bf16.msra.mxu0 %v3252
    %4155 = vmatprep.subr.bf16.mxu0 %v3261
    %4156 = vmatpush1.bf16.msra.mxu0 %v3260
    %4157 = vmatprep.subr.bf16.mxu0 %v3269
    %4158 = vmatpush1.bf16.msra.mxu0 %v3268
    %4159 = vmatprep.subr.bf16.mxu0 %v3277
    %4160 = vmatpush1.bf16.msra.mxu0 %v3276
    %4161 = vmatprep.subr.bf16.mxu0 %v3285
    %4162 = vmatpush1.bf16.msra.mxu0 %v3284
    %4163 = vmatprep.subr.bf16.mxu0 %v3293
    %4164 = vmatpush1.bf16.msra.mxu0 %v3292
    %4165 = vmatprep.subr.bf16.mxu0 %v3301
    %4166 = vmatpush1.bf16.msra.mxu0 %v3300
    %4167 = vmatprep.subr.bf16.mxu0 %v3309
    %4168 = vmatpush1.bf16.msra.mxu0 %v3308
    %4169 = vmatprep.subr.bf16.mxu0 %v3317
    %4170 = vmatpush1.bf16.msra.mxu0 %v3316
    %4171 = vmatprep.subr.bf16.mxu0 %v3325
    %4172 = vmatpush1.bf16.msra.mxu0 %v3324
    %4173 = vmatprep.mubr.bf16.mxu0 %v982
    %4174 = vmatmul.mubr.bf16.gmra.mrb[0].mxu0 %v981
    %v4175 = vpop.f32.mrb[0].mxu0
    %v4176 = vadd.f32 %v4135, %v4175
    %v4177 = vpop.f32.mrb[0].mxu0
    %v4178 = vadd.f32 %v4137, %v4177
    %v4179 = vpop.f32.mrb[0].mxu0
    %v4180 = vpop.f32.mrb[0].mxu0
    %4181 = vdwg.mxu0
    %4182 = vmatprep.subr.bf16.mxu0 %v3333
    %4183 = vmatpush1.bf16.msra.mxu0 %v3332
    %4184 = vmatprep.subr.bf16.mxu0 %v3341
    %4185 = vmatpush1.bf16.msra.mxu0 %v3340
    %4186 = vmatprep.subr.bf16.mxu0 %v3349
    %4187 = vmatpush1.bf16.msra.mxu0 %v3348
    %4188 = vmatprep.subr.bf16.mxu0 %v3357
    %4189 = vmatpush1.bf16.msra.mxu0 %v3356
    %4190 = vmatprep.subr.bf16.mxu0 %v3365
    %4191 = vmatpush1.bf16.msra.mxu0 %v3364
    %4192 = vmatprep.subr.bf16.mxu0 %v3373
    %4193 = vmatpush1.bf16.msra.mxu0 %v3372
    %4194 = vmatprep.subr.bf16.mxu0 %v3381
    %4195 = vmatpush1.bf16.msra.mxu0 %v3380
    %4196 = vmatprep.subr.bf16.mxu0 %v3389
    %4197 = vmatpush1.bf16.msra.mxu0 %v3388
    %4198 = vmatprep.subr.bf16.mxu0 %v3397
    %4199 = vmatpush1.bf16.msra.mxu0 %v3396
    %4200 = vmatprep.subr.bf16.mxu0 %v3405
    %4201 = vmatpush1.bf16.msra.mxu0 %v3404
    %4202 = vmatprep.subr.bf16.mxu0 %v3413
    %4203 = vmatpush1.bf16.msra.mxu0 %v3412
    %4204 = vmatprep.subr.bf16.mxu0 %v3421
    %4205 = vmatpush1.bf16.msra.mxu0 %v3420
    %4206 = vmatprep.subr.bf16.mxu0 %v3429
    %4207 = vmatpush1.bf16.msra.mxu0 %v3428
    %4208 = vmatprep.subr.bf16.mxu0 %v3437
    %4209 = vmatpush1.bf16.msra.mxu0 %v3436
    %4210 = vmatprep.subr.bf16.mxu0 %v3445
    %4211 = vmatpush1.bf16.msra.mxu0 %v3444
    %4212 = vmatprep.subr.bf16.mxu0 %v3453
    %4213 = vmatpush1.bf16.msra.mxu0 %v3452
    %4214 = vmatprep.mubr.bf16.mxu0 %v984
    %4215 = vmatmul.mubr.bf16.gmra.mrb[0].mxu0 %v983
    %v4216 = vpop.f32.mrb[0].mxu0
    %v4217 = vadd.f32 %v4176, %v4216
    %v4218 = vpop.f32.mrb[0].mxu0
    %v4219 = vadd.f32 %v4178, %v4218
    %v4220 = vpop.f32.mrb[0].mxu0
    %v4221 = vpop.f32.mrb[0].mxu0
    %4222 = vdwg.mxu0
    %4223 = vmatprep.subr.bf16.mxu0 %v3461
    %4224 = vmatpush1.bf16.msra.mxu0 %v3460
    %4225 = vmatprep.subr.bf16.mxu0 %v3469
    %4226 = vmatpush1.bf16.msra.mxu0 %v3468
    %4227 = vmatprep.subr.bf16.mxu0 %v3477
    %4228 = vmatpush1.bf16.msra.mxu0 %v3476
    %4229 = vmatprep.subr.bf16.mxu0 %v3485
    %4230 = vmatpush1.bf16.msra.mxu0 %v3484
    %4231 = vmatprep.subr.bf16.mxu0 %v3493
    %4232 = vmatpush1.bf16.msra.mxu0 %v3492
    %4233 = vmatprep.subr.bf16.mxu0 %v3501
    %4234 = vmatpush1.bf16.msra.mxu0 %v3500
    %4235 = vmatprep.subr.bf16.mxu0 %v3509
    %4236 = vmatpush1.bf16.msra.mxu0 %v3508
    %4237 = vmatprep.subr.bf16.mxu0 %v3517
    %4238 = vmatpush1.bf16.msra.mxu0 %v3516
    %4239 = vmatprep.subr.bf16.mxu0 %v3525
    %4240 = vmatpush1.bf16.msra.mxu0 %v3524
    %4241 = vmatprep.subr.bf16.mxu0 %v3533
    %4242 = vmatpush1.bf16.msra.mxu0 %v3532
    %4243 = vmatprep.subr.bf16.mxu0 %v3541
    %4244 = vmatpush1.bf16.msra.mxu0 %v3540
    %4245 = vmatprep.subr.bf16.mxu0 %v3549
    %4246 = vmatpush1.bf16.msra.mxu0 %v3548
    %4247 = vmatprep.subr.bf16.mxu0 %v3557
    %4248 = vmatpush1.bf16.msra.mxu0 %v3556
    %4249 = vmatprep.subr.bf16.mxu0 %v3565
    %4250 = vmatpush1.bf16.msra.mxu0 %v3564
    %4251 = vmatprep.subr.bf16.mxu0 %v3573
    %4252 = vmatpush1.bf16.msra.mxu0 %v3572
    %4253 = vmatprep.subr.bf16.mxu0 %v3581
    %4254 = vmatpush1.bf16.msra.mxu0 %v3580
    %4255 = vmatprep.mubr.bf16.mxu0 %v986
    %4256 = vmatmul.mubr.bf16.gmra.mrb[0].mxu0 %v985
    %v4257 = vpop.f32.mrb[0].mxu0
    %v4258 = vadd.f32 %v4217, %v4257
    %v4259 = vpop.f32.mrb[0].mxu0
    %v4260 = vadd.f32 %v4219, %v4259
    %v4261 = vpop.f32.mrb[0].mxu0
    %v4262 = vpop.f32.mrb[0].mxu0
    %4263 = vdwg.mxu0
    %4264 = vmatprep.subr.bf16.mxu0 %v3079
    %4265 = vmatpush1.bf16.msra.mxu0 %v3078
    %4266 = vmatprep.subr.bf16.mxu0 %v3087
    %4267 = vmatpush1.bf16.msra.mxu0 %v3086
    %4268 = vmatprep.subr.bf16.mxu0 %v3095
    %4269 = vmatpush1.bf16.msra.mxu0 %v3094
    %4270 = vmatprep.subr.bf16.mxu0 %v3103
    %4271 = vmatpush1.bf16.msra.mxu0 %v3102
    %4272 = vmatprep.subr.bf16.mxu0 %v3111
    %4273 = vmatpush1.bf16.msra.mxu0 %v3110
    %4274 = vmatprep.subr.bf16.mxu0 %v3119
    %4275 = vmatpush1.bf16.msra.mxu0 %v3118
    %4276 = vmatprep.subr.bf16.mxu0 %v3127
    %4277 = vmatpush1.bf16.msra.mxu0 %v3126
    %4278 = vmatprep.subr.bf16.mxu0 %v3135
    %4279 = vmatpush1.bf16.msra.mxu0 %v3134
    %4280 = vmatprep.subr.bf16.mxu0 %v3143
    %4281 = vmatpush1.bf16.msra.mxu0 %v3142
    %4282 = vmatprep.subr.bf16.mxu0 %v3151
    %4283 = vmatpush1.bf16.msra.mxu0 %v3150
    %4284 = vmatprep.subr.bf16.mxu0 %v3159
    %4285 = vmatpush1.bf16.msra.mxu0 %v3158
    %4286 = vmatprep.subr.bf16.mxu0 %v3167
    %4287 = vmatpush1.bf16.msra.mxu0 %v3166
    %4288 = vmatprep.subr.bf16.mxu0 %v3175
    %4289 = vmatpush1.bf16.msra.mxu0 %v3174
    %4290 = vmatprep.subr.bf16.mxu0 %v3183
    %4291 = vmatpush1.bf16.msra.mxu0 %v3182
    %4292 = vmatprep.subr.bf16.mxu0 %v3191
    %4293 = vmatpush1.bf16.msra.mxu0 %v3190
    %4294 = vmatprep.subr.bf16.mxu0 %v3199
    %4295 = vmatpush1.bf16.msra.mxu0 %v3198
    %4296 = vmatprep.mubr.bf16.mxu0 %v980
    %4297 = vmatmul.mubr.bf16.gmra.mrb[0].mxu0 %v979
    %v4298 = vpop.f32.mrb[0].mxu0
    %v4299 = vadd.f32 %v1511, %v4298
    %v4300 = vpop.f32.mrb[0].mxu0
    %v4301 = vadd.f32 %v1515, %v4300
    %v4302 = vpop.f32.mrb[0].mxu0
    %v4303 = vpop.f32.mrb[0].mxu0
    %4304 = vdwg.mxu0
    %4305 = vmatprep.subr.bf16.mxu0 %v3207
    %4306 = vmatpush1.bf16.msra.mxu0 %v3206
    %4307 = vmatprep.subr.bf16.mxu0 %v3215
    %4308 = vmatpush1.bf16.msra.mxu0 %v3214
    %4309 = vmatprep.subr.bf16.mxu0 %v3223
    %4310 = vmatpush1.bf16.msra.mxu0 %v3222
    %4311 = vmatprep.subr.bf16.mxu0 %v3231
    %4312 = vmatpush1.bf16.msra.mxu0 %v3230
    %4313 = vmatprep.subr.bf16.mxu0 %v3239
    %4314 = vmatpush1.bf16.msra.mxu0 %v3238
    %4315 = vmatprep.subr.bf16.mxu0 %v3247
    %4316 = vmatpush1.bf16.msra.mxu0 %v3246
    %4317 = vmatprep.subr.bf16.mxu0 %v3255
    %4318 = vmatpush1.bf16.msra.mxu0 %v3254
    %4319 = vmatprep.subr.bf16.mxu0 %v3263
    %4320 = vmatpush1.bf16.msra.mxu0 %v3262
    %4321 = vmatprep.subr.bf16.mxu0 %v3271
    %4322 = vmatpush1.bf16.msra.mxu0 %v3270
    %4323 = vmatprep.subr.bf16.mxu0 %v3279
    %4324 = vmatpush1.bf16.msra.mxu0 %v3278
    %4325 = vmatprep.subr.bf16.mxu0 %v3287
    %4326 = vmatpush1.bf16.msra.mxu0 %v3286
    %4327 = vmatprep.subr.bf16.mxu0 %v3295
    %4328 = vmatpush1.bf16.msra.mxu0 %v3294
    %4329 = vmatprep.subr.bf16.mxu0 %v3303
    %4330 = vmatpush1.bf16.msra.mxu0 %v3302
    %4331 = vmatprep.subr.bf16.mxu0 %v3311
    %4332 = vmatpush1.bf16.msra.mxu0 %v3310
    %4333 = vmatprep.subr.bf16.mxu0 %v3319
    %4334 = vmatpush1.bf16.msra.mxu0 %v3318
    %4335 = vmatprep.subr.bf16.mxu0 %v3327
    %4336 = vmatpush1.bf16.msra.mxu0 %v3326
    %4337 = vmatprep.mubr.bf16.mxu0 %v982
    %4338 = vmatmul.mubr.bf16.gmra.mrb[0].mxu0 %v981
    %v4339 = vpop.f32.mrb[0].mxu0
    %v4340 = vadd.f32 %v4299, %v4339
    %v4341 = vpop.f32.mrb[0].mxu0
    %v4342 = vadd.f32 %v4301, %v4341
    %v4343 = vpop.f32.mrb[0].mxu0
    %v4344 = vpop.f32.mrb[0].mxu0
    %4345 = vdwg.mxu0
    %4346 = vmatprep.subr.bf16.mxu0 %v3335
    %4347 = vmatpush1.bf16.msra.mxu0 %v3334
    %4348 = vmatprep.subr.bf16.mxu0 %v3343
    %4349 = vmatpush1.bf16.msra.mxu0 %v3342
    %4350 = vmatprep.subr.bf16.mxu0 %v3351
    %4351 = vmatpush1.bf16.msra.mxu0 %v3350
    %4352 = vmatprep.subr.bf16.mxu0 %v3359
    %4353 = vmatpush1.bf16.msra.mxu0 %v3358
    %4354 = vmatprep.subr.bf16.mxu0 %v3367
    %4355 = vmatpush1.bf16.msra.mxu0 %v3366
    %4356 = vmatprep.subr.bf16.mxu0 %v3375
    %4357 = vmatpush1.bf16.msra.mxu0 %v3374
    %4358 = vmatprep.subr.bf16.mxu0 %v3383
    %4359 = vmatpush1.bf16.msra.mxu0 %v3382
    %4360 = vmatprep.subr.bf16.mxu0 %v3391
    %4361 = vmatpush1.bf16.msra.mxu0 %v3390
    %4362 = vmatprep.subr.bf16.mxu0 %v3399
    %4363 = vmatpush1.bf16.msra.mxu0 %v3398
    %4364 = vmatprep.subr.bf16.mxu0 %v3407
    %4365 = vmatpush1.bf16.msra.mxu0 %v3406
    %4366 = vmatprep.subr.bf16.mxu0 %v3415
    %4367 = vmatpush1.bf16.msra.mxu0 %v3414
    %4368 = vmatprep.subr.bf16.mxu0 %v3423
    %4369 = vmatpush1.bf16.msra.mxu0 %v3422
    %4370 = vmatprep.subr.bf16.mxu0 %v3431
    %4371 = vmatpush1.bf16.msra.mxu0 %v3430
    %4372 = vmatprep.subr.bf16.mxu0 %v3439
    %4373 = vmatpush1.bf16.msra.mxu0 %v3438
    %4374 = vmatprep.subr.bf16.mxu0 %v3447
    %4375 = vmatpush1.bf16.msra.mxu0 %v3446
    %4376 = vmatprep.subr.bf16.mxu0 %v3455
    %4377 = vmatpush1.bf16.msra.mxu0 %v3454
    %4378 = vmatprep.mubr.bf16.mxu0 %v984
    %4379 = vmatmul.mubr.bf16.gmra.mrb[0].mxu0 %v983
    %v4380 = vpop.f32.mrb[0].mxu0
    %v4381 = vadd.f32 %v4340, %v4380
    %v4382 = vpop.f32.mrb[0].mxu0
    %v4383 = vadd.f32 %v4342, %v4382
    %v4384 = vpop.f32.mrb[0].mxu0
    %v4385 = vpop.f32.mrb[0].mxu0
    %4386 = vdwg.mxu0
    %4387 = vmatprep.subr.bf16.mxu0 %v3463
    %4388 = vmatpush1.bf16.msra.mxu0 %v3462
    %4389 = vmatprep.subr.bf16.mxu0 %v3471
    %4390 = vmatpush1.bf16.msra.mxu0 %v3470
    %4391 = vmatprep.subr.bf16.mxu0 %v3479
    %4392 = vmatpush1.bf16.msra.mxu0 %v3478
    %4393 = vmatprep.subr.bf16.mxu0 %v3487
    %4394 = vmatpush1.bf16.msra.mxu0 %v3486
    %4395 = vmatprep.subr.bf16.mxu0 %v3495
    %4396 = vmatpush1.bf16.msra.mxu0 %v3494
    %4397 = vmatprep.subr.bf16.mxu0 %v3503
    %4398 = vmatpush1.bf16.msra.mxu0 %v3502
    %4399 = vmatprep.subr.bf16.mxu0 %v3511
    %4400 = vmatpush1.bf16.msra.mxu0 %v3510
    %4401 = vmatprep.subr.bf16.mxu0 %v3519
    %4402 = vmatpush1.bf16.msra.mxu0 %v3518
    %4403 = vmatprep.subr.bf16.mxu0 %v3527
    %4404 = vmatpush1.bf16.msra.mxu0 %v3526
    %4405 = vmatprep.subr.bf16.mxu0 %v3535
    %4406 = vmatpush1.bf16.msra.mxu0 %v3534
    %4407 = vmatprep.subr.bf16.mxu0 %v3543
    %4408 = vmatpush1.bf16.msra.mxu0 %v3542
    %4409 = vmatprep.subr.bf16.mxu0 %v3551
    %4410 = vmatpush1.bf16.msra.mxu0 %v3550
    %4411 = vmatprep.subr.bf16.mxu0 %v3559
    %4412 = vmatpush1.bf16.msra.mxu0 %v3558
    %4413 = vmatprep.subr.bf16.mxu0 %v3567
    %4414 = vmatpush1.bf16.msra.mxu0 %v3566
    %4415 = vmatprep.subr.bf16.mxu0 %v3575
    %4416 = vmatpush1.bf16.msra.mxu0 %v3574
    %4417 = vmatprep.subr.bf16.mxu0 %v3583
    %4418 = vmatpush1.bf16.msra.mxu0 %v3582
    %4419 = vmatprep.mubr.bf16.mxu0 %v986
    %4420 = vmatmul.mubr.bf16.gmra.mrb[0].mxu0 %v985
    %v4421 = vpop.f32.mrb[0].mxu0
    %v4422 = vadd.f32 %v4381, %v4421
    %v4423 = vpop.f32.mrb[0].mxu0
    %v4424 = vadd.f32 %v4383, %v4423
    %v4425 = vpop.f32.mrb[0].mxu0
    %v4426 = vpop.f32.mrb[0].mxu0
    %4427 = vdwg.mxu0
    %4428 = vmatprep.subr.bf16.mxu0 %v3081
    %4429 = vmatpush1.bf16.msra.mxu0 %v3080
    %4430 = vmatprep.subr.bf16.mxu0 %v3089
    %4431 = vmatpush1.bf16.msra.mxu0 %v3088
    %4432 = vmatprep.subr.bf16.mxu0 %v3097
    %4433 = vmatpush1.bf16.msra.mxu0 %v3096
    %4434 = vmatprep.subr.bf16.mxu0 %v3105
    %4435 = vmatpush1.bf16.msra.mxu0 %v3104
    %4436 = vmatprep.subr.bf16.mxu0 %v3113
    %4437 = vmatpush1.bf16.msra.mxu0 %v3112
    %4438 = vmatprep.subr.bf16.mxu0 %v3121
    %4439 = vmatpush1.bf16.msra.mxu0 %v3120
    %4440 = vmatprep.subr.bf16.mxu0 %v3129
    %4441 = vmatpush1.bf16.msra.mxu0 %v3128
    %4442 = vmatprep.subr.bf16.mxu0 %v3137
    %4443 = vmatpush1.bf16.msra.mxu0 %v3136
    %4444 = vmatprep.subr.bf16.mxu0 %v3145
    %4445 = vmatpush1.bf16.msra.mxu0 %v3144
    %4446 = vmatprep.subr.bf16.mxu0 %v3153
    %4447 = vmatpush1.bf16.msra.mxu0 %v3152
    %4448 = vmatprep.subr.bf16.mxu0 %v3161
    %4449 = vmatpush1.bf16.msra.mxu0 %v3160
    %4450 = vmatprep.subr.bf16.mxu0 %v3169
    %4451 = vmatpush1.bf16.msra.mxu0 %v3168
    %4452 = vmatprep.subr.bf16.mxu0 %v3177
    %4453 = vmatpush1.bf16.msra.mxu0 %v3176
    %4454 = vmatprep.subr.bf16.mxu0 %v3185
    %4455 = vmatpush1.bf16.msra.mxu0 %v3184
    %4456 = vmatprep.subr.bf16.mxu0 %v3193
    %4457 = vmatpush1.bf16.msra.mxu0 %v3192
    %4458 = vmatprep.subr.bf16.mxu0 %v3201
    %4459 = vmatpush1.bf16.msra.mxu0 %v3200
    %4460 = vmatprep.mubr.bf16.mxu0 %v980
    %4461 = vmatmul.mubr.bf16.gmra.mrb[0].mxu0 %v979
    %v4462 = vpop.f32.mrb[0].mxu0
    %v4463 = vadd.f32 %v1519, %v4462
    %v4464 = vpop.f32.mrb[0].mxu0
    %v4465 = vadd.f32 %v1523, %v4464
    %v4466 = vpop.f32.mrb[0].mxu0
    %v4467 = vpop.f32.mrb[0].mxu0
    %4468 = vdwg.mxu0
    %4469 = vmatprep.subr.bf16.mxu0 %v3209
    %4470 = vmatpush1.bf16.msra.mxu0 %v3208
    %4471 = vmatprep.subr.bf16.mxu0 %v3217
    %4472 = vmatpush1.bf16.msra.mxu0 %v3216
    %4473 = vmatprep.subr.bf16.mxu0 %v3225
    %4474 = vmatpush1.bf16.msra.mxu0 %v3224
    %4475 = vmatprep.subr.bf16.mxu0 %v3233
    %4476 = vmatpush1.bf16.msra.mxu0 %v3232
    %4477 = vmatprep.subr.bf16.mxu0 %v3241
    %4478 = vmatpush1.bf16.msra.mxu0 %v3240
    %4479 = vmatprep.subr.bf16.mxu0 %v3249
    %4480 = vmatpush1.bf16.msra.mxu0 %v3248
    %4481 = vmatprep.subr.bf16.mxu0 %v3257
    %4482 = vmatpush1.bf16.msra.mxu0 %v3256
    %4483 = vmatprep.subr.bf16.mxu0 %v3265
    %4484 = vmatpush1.bf16.msra.mxu0 %v3264
    %4485 = vmatprep.subr.bf16.mxu0 %v3273
    %4486 = vmatpush1.bf16.msra.mxu0 %v3272
    %4487 = vmatprep.subr.bf16.mxu0 %v3281
    %4488 = vmatpush1.bf16.msra.mxu0 %v3280
    %4489 = vmatprep.subr.bf16.mxu0 %v3289
    %4490 = vmatpush1.bf16.msra.mxu0 %v3288
    %4491 = vmatprep.subr.bf16.mxu0 %v3297
    %4492 = vmatpush1.bf16.msra.mxu0 %v3296
    %4493 = vmatprep.subr.bf16.mxu0 %v3305
    %4494 = vmatpush1.bf16.msra.mxu0 %v3304
    %4495 = vmatprep.subr.bf16.mxu0 %v3313
    %4496 = vmatpush1.bf16.msra.mxu0 %v3312
    %4497 = vmatprep.subr.bf16.mxu0 %v3321
    %4498 = vmatpush1.bf16.msra.mxu0 %v3320
    %4499 = vmatprep.subr.bf16.mxu0 %v3329
    %4500 = vmatpush1.bf16.msra.mxu0 %v3328
    %4501 = vmatprep.mubr.bf16.mxu0 %v982
    %4502 = vmatmul.mubr.bf16.gmra.mrb[0].mxu0 %v981
    %v4503 = vpop.f32.mrb[0].mxu0
    %v4504 = vadd.f32 %v4463, %v4503
    %v4505 = vpop.f32.mrb[0].mxu0
    %v4506 = vadd.f32 %v4465, %v4505
    %v4507 = vpop.f32.mrb[0].mxu0
    %v4508 = vpop.f32.mrb[0].mxu0
    %4509 = vdwg.mxu0
    %4510 = vmatprep.subr.bf16.mxu0 %v3337
    %4511 = vmatpush1.bf16.msra.mxu0 %v3336
    %4512 = vmatprep.subr.bf16.mxu0 %v3345
    %4513 = vmatpush1.bf16.msra.mxu0 %v3344
    %4514 = vmatprep.subr.bf16.mxu0 %v3353
    %4515 = vmatpush1.bf16.msra.mxu0 %v3352
    %4516 = vmatprep.subr.bf16.mxu0 %v3361
    %4517 = vmatpush1.bf16.msra.mxu0 %v3360
    %4518 = vmatprep.subr.bf16.mxu0 %v3369
    %4519 = vmatpush1.bf16.msra.mxu0 %v3368
    %4520 = vmatprep.subr.bf16.mxu0 %v3377
    %4521 = vmatpush1.bf16.msra.mxu0 %v3376
    %4522 = vmatprep.subr.bf16.mxu0 %v3385
    %4523 = vmatpush1.bf16.msra.mxu0 %v3384
    %4524 = vmatprep.subr.bf16.mxu0 %v3393
    %4525 = vmatpush1.bf16.msra.mxu0 %v3392
    %4526 = vmatprep.subr.bf16.mxu0 %v3401
    %4527 = vmatpush1.bf16.msra.mxu0 %v3400
    %4528 = vmatprep.subr.bf16.mxu0 %v3409
    %4529 = vmatpush1.bf16.msra.mxu0 %v3408
    %4530 = vmatprep.subr.bf16.mxu0 %v3417
    %4531 = vmatpush1.bf16.msra.mxu0 %v3416
    %4532 = vmatprep.subr.bf16.mxu0 %v3425
    %4533 = vmatpush1.bf16.msra.mxu0 %v3424
    %4534 = vmatprep.subr.bf16.mxu0 %v3433
    %4535 = vmatpush1.bf16.msra.mxu0 %v3432
    %4536 = vmatprep.subr.bf16.mxu0 %v3441
    %4537 = vmatpush1.bf16.msra.mxu0 %v3440
    %4538 = vmatprep.subr.bf16.mxu0 %v3449
    %4539 = vmatpush1.bf16.msra.mxu0 %v3448
    %4540 = vmatprep.subr.bf16.mxu0 %v3457
    %4541 = vmatpush1.bf16.msra.mxu0 %v3456
    %4542 = vmatprep.mubr.bf16.mxu0 %v984
    %4543 = vmatmul.mubr.bf16.gmra.mrb[0].mxu0 %v983
    %v4544 = vpop.f32.mrb[0].mxu0
    %v4545 = vadd.f32 %v4504, %v4544
    %v4546 = vpop.f32.mrb[0].mxu0
    %v4547 = vadd.f32 %v4506, %v4546
    %v4548 = vpop.f32.mrb[0].mxu0
    %v4549 = vpop.f32.mrb[0].mxu0
    %4550 = vdwg.mxu0
    %4551 = vmatprep.subr.bf16.mxu0 %v3465
    %4552 = vmatpush1.bf16.msra.mxu0 %v3464
    %4553 = vmatprep.subr.bf16.mxu0 %v3473
    %4554 = vmatpush1.bf16.msra.mxu0 %v3472
    %4555 = vmatprep.subr.bf16.mxu0 %v3481
    %4556 = vmatpush1.bf16.msra.mxu0 %v3480
    %4557 = vmatprep.subr.bf16.mxu0 %v3489
    %4558 = vmatpush1.bf16.msra.mxu0 %v3488
    %4559 = vmatprep.subr.bf16.mxu0 %v3497
    %4560 = vmatpush1.bf16.msra.mxu0 %v3496
    %4561 = vmatprep.subr.bf16.mxu0 %v3505
    %4562 = vmatpush1.bf16.msra.mxu0 %v3504
    %4563 = vmatprep.subr.bf16.mxu0 %v3513
    %4564 = vmatpush1.bf16.msra.mxu0 %v3512
    %4565 = vmatprep.subr.bf16.mxu0 %v3521
    %4566 = vmatpush1.bf16.msra.mxu0 %v3520
    %4567 = vmatprep.subr.bf16.mxu0 %v3529
    %4568 = vmatpush1.bf16.msra.mxu0 %v3528
    %4569 = vmatprep.subr.bf16.mxu0 %v3537
    %4570 = vmatpush1.bf16.msra.mxu0 %v3536
    %4571 = vmatprep.subr.bf16.mxu0 %v3545
    %4572 = vmatpush1.bf16.msra.mxu0 %v3544
    %4573 = vmatprep.subr.bf16.mxu0 %v3553
    %4574 = vmatpush1.bf16.msra.mxu0 %v3552
    %4575 = vmatprep.subr.bf16.mxu0 %v3561
    %4576 = vmatpush1.bf16.msra.mxu0 %v3560
    %4577 = vmatprep.subr.bf16.mxu0 %v3569
    %4578 = vmatpush1.bf16.msra.mxu0 %v3568
    %4579 = vmatprep.subr.bf16.mxu0 %v3577
    %4580 = vmatpush1.bf16.msra.mxu0 %v3576
    %4581 = vmatprep.subr.bf16.mxu0 %v3585
    %4582 = vmatpush1.bf16.msra.mxu0 %v3584
    %4583 = vmatprep.mubr.bf16.mxu0 %v986
    %4584 = vmatmul.mubr.bf16.gmra.mrb[0].mxu0 %v985
    %v4585 = vpop.f32.mrb[0].mxu0
    %v4586 = vadd.f32 %v4545, %v4585
    %v4587 = vpop.f32.mrb[0].mxu0
    %v4588 = vadd.f32 %v4547, %v4587
    %v4589 = vpop.f32.mrb[0].mxu0
    %v4590 = vpop.f32.mrb[0].mxu0
    %4591 = vdwg.mxu0
    %4592 = vmatprep.subr.bf16.mxu0 %v3083
    %4593 = vmatpush1.bf16.msra.mxu0 %v3082
    %4594 = vmatprep.subr.bf16.mxu0 %v3091
    %4595 = vmatpush1.bf16.msra.mxu0 %v3090
    %4596 = vmatprep.subr.bf16.mxu0 %v3099
    %4597 = vmatpush1.bf16.msra.mxu0 %v3098
    %4598 = vmatprep.subr.bf16.mxu0 %v3107
    %4599 = vmatpush1.bf16.msra.mxu0 %v3106
    %4600 = vmatprep.subr.bf16.mxu0 %v3115
    %4601 = vmatpush1.bf16.msra.mxu0 %v3114
    %4602 = vmatprep.subr.bf16.mxu0 %v3123
    %4603 = vmatpush1.bf16.msra.mxu0 %v3122
    %4604 = vmatprep.subr.bf16.mxu0 %v3131
    %4605 = vmatpush1.bf16.msra.mxu0 %v3130
    %4606 = vmatprep.subr.bf16.mxu0 %v3139
    %4607 = vmatpush1.bf16.msra.mxu0 %v3138
    %4608 = vmatprep.subr.bf16.mxu0 %v3147
    %4609 = vmatpush1.bf16.msra.mxu0 %v3146
    %4610 = vmatprep.subr.bf16.mxu0 %v3155
    %4611 = vmatpush1.bf16.msra.mxu0 %v3154
    %4612 = vmatprep.subr.bf16.mxu0 %v3163
    %4613 = vmatpush1.bf16.msra.mxu0 %v3162
    %4614 = vmatprep.subr.bf16.mxu0 %v3171
    %4615 = vmatpush1.bf16.msra.mxu0 %v3170
    %4616 = vmatprep.subr.bf16.mxu0 %v3179
    %4617 = vmatpush1.bf16.msra.mxu0 %v3178
    %4618 = vmatprep.subr.bf16.mxu0 %v3187
    %4619 = vmatpush1.bf16.msra.mxu0 %v3186
    %4620 = vmatprep.subr.bf16.mxu0 %v3195
    %4621 = vmatpush1.bf16.msra.mxu0 %v3194
    %4622 = vmatprep.subr.bf16.mxu0 %v3203
    %4623 = vmatpush1.bf16.msra.mxu0 %v3202
    %4624 = vmatprep.mubr.bf16.mxu0 %v980
    %4625 = vmatmul.mubr.bf16.gmra.mrb[0].mxu0 %v979
    %v4626 = vpop.f32.mrb[0].mxu0
    %v4627 = vadd.f32 %v1527, %v4626
    %v4628 = vpop.f32.mrb[0].mxu0
    %v4629 = vadd.f32 %v1531, %v4628
    %v4630 = vpop.f32.mrb[0].mxu0
    %v4631 = vpop.f32.mrb[0].mxu0
    %4632 = vdwg.mxu0
    %4633 = vmatprep.subr.bf16.mxu0 %v3211
    %4634 = vmatpush1.bf16.msra.mxu0 %v3210
    %4635 = vmatprep.subr.bf16.mxu0 %v3219
    %4636 = vmatpush1.bf16.msra.mxu0 %v3218
    %4637 = vmatprep.subr.bf16.mxu0 %v3227
    %4638 = vmatpush1.bf16.msra.mxu0 %v3226
    %4639 = vmatprep.subr.bf16.mxu0 %v3235
    %4640 = vmatpush1.bf16.msra.mxu0 %v3234
    %4641 = vmatprep.subr.bf16.mxu0 %v3243
    %4642 = vmatpush1.bf16.msra.mxu0 %v3242
    %4643 = vmatprep.subr.bf16.mxu0 %v3251
    %4644 = vmatpush1.bf16.msra.mxu0 %v3250
    %4645 = vmatprep.subr.bf16.mxu0 %v3259
    %4646 = vmatpush1.bf16.msra.mxu0 %v3258
    %4647 = vmatprep.subr.bf16.mxu0 %v3267
    %4648 = vmatpush1.bf16.msra.mxu0 %v3266
    %4649 = vmatprep.subr.bf16.mxu0 %v3275
    %4650 = vmatpush1.bf16.msra.mxu0 %v3274
    %4651 = vmatprep.subr.bf16.mxu0 %v3283
    %4652 = vmatpush1.bf16.msra.mxu0 %v3282
    %4653 = vmatprep.subr.bf16.mxu0 %v3291
    %4654 = vmatpush1.bf16.msra.mxu0 %v3290
    %4655 = vmatprep.subr.bf16.mxu0 %v3299
    %4656 = vmatpush1.bf16.msra.mxu0 %v3298
    %4657 = vmatprep.subr.bf16.mxu0 %v3307
    %4658 = vmatpush1.bf16.msra.mxu0 %v3306
    %4659 = vmatprep.subr.bf16.mxu0 %v3315
    %4660 = vmatpush1.bf16.msra.mxu0 %v3314
    %4661 = vmatprep.subr.bf16.mxu0 %v3323
    %4662 = vmatpush1.bf16.msra.mxu0 %v3322
    %4663 = vmatprep.subr.bf16.mxu0 %v3331
    %4664 = vmatpush1.bf16.msra.mxu0 %v3330
    %4665 = vmatprep.mubr.bf16.mxu0 %v982
    %4666 = vmatmul.mubr.bf16.gmra.mrb[0].mxu0 %v981
    %v4667 = vpop.f32.mrb[0].mxu0
    %v4668 = vadd.f32 %v4627, %v4667
    %v4669 = vpop.f32.mrb[0].mxu0
    %v4670 = vadd.f32 %v4629, %v4669
    %v4671 = vpop.f32.mrb[0].mxu0
    %v4672 = vpop.f32.mrb[0].mxu0
    %4673 = vdwg.mxu0
    %4674 = vmatprep.subr.bf16.mxu0 %v3339
    %4675 = vmatpush1.bf16.msra.mxu0 %v3338
    %4676 = vmatprep.subr.bf16.mxu0 %v3347
    %4677 = vmatpush1.bf16.msra.mxu0 %v3346
    %4678 = vmatprep.subr.bf16.mxu0 %v3355
    %4679 = vmatpush1.bf16.msra.mxu0 %v3354
    %4680 = vmatprep.subr.bf16.mxu0 %v3363
    %4681 = vmatpush1.bf16.msra.mxu0 %v3362
    %4682 = vmatprep.subr.bf16.mxu0 %v3371
    %4683 = vmatpush1.bf16.msra.mxu0 %v3370
    %4684 = vmatprep.subr.bf16.mxu0 %v3379
    %4685 = vmatpush1.bf16.msra.mxu0 %v3378
    %4686 = vmatprep.subr.bf16.mxu0 %v3387
    %4687 = vmatpush1.bf16.msra.mxu0 %v3386
    %4688 = vmatprep.subr.bf16.mxu0 %v3395
    %4689 = vmatpush1.bf16.msra.mxu0 %v3394
    %4690 = vmatprep.subr.bf16.mxu0 %v3403
    %4691 = vmatpush1.bf16.msra.mxu0 %v3402
    %4692 = vmatprep.subr.bf16.mxu0 %v3411
    %4693 = vmatpush1.bf16.msra.mxu0 %v3410
    %4694 = vmatprep.subr.bf16.mxu0 %v3419
    %4695 = vmatpush1.bf16.msra.mxu0 %v3418
    %4696 = vmatprep.subr.bf16.mxu0 %v3427
    %4697 = vmatpush1.bf16.msra.mxu0 %v3426
    %4698 = vmatprep.subr.bf16.mxu0 %v3435
    %4699 = vmatpush1.bf16.msra.mxu0 %v3434
    %4700 = vmatprep.subr.bf16.mxu0 %v3443
    %4701 = vmatpush1.bf16.msra.mxu0 %v3442
    %4702 = vmatprep.subr.bf16.mxu0 %v3451
    %4703 = vmatpush1.bf16.msra.mxu0 %v3450
    %4704 = vmatprep.subr.bf16.mxu0 %v3459
    %4705 = vmatpush1.bf16.msra.mxu0 %v3458
    %4706 = vmatprep.mubr.bf16.mxu0 %v984
    %4707 = vmatmul.mubr.bf16.gmra.mrb[0].mxu0 %v983
    %v4708 = vpop.f32.mrb[0].mxu0
    %v4709 = vadd.f32 %v4668, %v4708
    %v4710 = vpop.f32.mrb[0].mxu0
    %v4711 = vadd.f32 %v4670, %v4710
    %v4712 = vpop.f32.mrb[0].mxu0
    %v4713 = vpop.f32.mrb[0].mxu0
    %4714 = vdwg.mxu0
    %4715 = vmatprep.subr.bf16.mxu0 %v3467
    %4716 = vmatpush1.bf16.msra.mxu0 %v3466
    %4717 = vmatprep.subr.bf16.mxu0 %v3475
    %4718 = vmatpush1.bf16.msra.mxu0 %v3474
    %4719 = vmatprep.subr.bf16.mxu0 %v3483
    %4720 = vmatpush1.bf16.msra.mxu0 %v3482
    %4721 = vmatprep.subr.bf16.mxu0 %v3491
    %4722 = vmatpush1.bf16.msra.mxu0 %v3490
    %4723 = vmatprep.subr.bf16.mxu0 %v3499
    %4724 = vmatpush1.bf16.msra.mxu0 %v3498
    %4725 = vmatprep.subr.bf16.mxu0 %v3507
    %4726 = vmatpush1.bf16.msra.mxu0 %v3506
    %4727 = vmatprep.subr.bf16.mxu0 %v3515
    %4728 = vmatpush1.bf16.msra.mxu0 %v3514
    %4729 = vmatprep.subr.bf16.mxu0 %v3523
    %4730 = vmatpush1.bf16.msra.mxu0 %v3522
    %4731 = vmatprep.subr.bf16.mxu0 %v3531
    %4732 = vmatpush1.bf16.msra.mxu0 %v3530
    %4733 = vmatprep.subr.bf16.mxu0 %v3539
    %4734 = vmatpush1.bf16.msra.mxu0 %v3538
    %4735 = vmatprep.subr.bf16.mxu0 %v3547
    %4736 = vmatpush1.bf16.msra.mxu0 %v3546
    %4737 = vmatprep.subr.bf16.mxu0 %v3555
    %4738 = vmatpush1.bf16.msra.mxu0 %v3554
    %4739 = vmatprep.subr.bf16.mxu0 %v3563
    %4740 = vmatpush1.bf16.msra.mxu0 %v3562
    %4741 = vmatprep.subr.bf16.mxu0 %v3571
    %4742 = vmatpush1.bf16.msra.mxu0 %v3570
    %4743 = vmatprep.subr.bf16.mxu0 %v3579
    %4744 = vmatpush1.bf16.msra.mxu0 %v3578
    %4745 = vmatprep.subr.bf16.mxu0 %v3587
    %4746 = vmatpush1.bf16.msra.mxu0 %v3586
    %4747 = vmatprep.mubr.bf16.mxu0 %v986
    %4748 = vmatmul.mubr.bf16.gmra.mrb[0].mxu0 %v985
    %v4749 = vpop.f32.mrb[0].mxu0
    %v4750 = vadd.f32 %v4709, %v4749
    %v4751 = vpop.f32.mrb[0].mxu0
    %v4752 = vadd.f32 %v4711, %v4751
    %v4753 = vpop.f32.mrb[0].mxu0
    %v4754 = vpop.f32.mrb[0].mxu0
    %4755 = vdwg.mxu0
    %s4756 = scalar_lea.vmem [#allocation16], 4
    %v4757 = vld [vmem:[%s4756] ss:$8 sm:$0xf]
    %v4758 = vld [vmem:[%s4756] ss:$8 sm:$0xf0]
    %v4759 = vor.u32 %v4757, %v4758
    %s4760 = scalar_lea.vmem [#allocation16], 5
    %v4761 = vld [vmem:[%s4760] ss:$8 sm:$0xf]
    %v4762 = vld [vmem:[%s4760] ss:$8 sm:$0xf0]
    %v4763 = vor.u32 %v4761, %v4762
    %v4764 = vadd.f32 %v4258, %v4260
    %v4765 = vadd.f32 %v4764, %v4422
    %v4766 = vadd.f32 %v4765, %v4424
    %v4767 = vadd.f32 %v4766, %v4586
    %v4768 = vadd.f32 %v4767, %v4588
    %v4769 = vadd.f32 %v4768, %v4750
    %v4770 = vadd.f32 %v4769, %v4752
    %4771 = vadd.xlane.f32.xlu0 %v4770
    %v4772 = vpop.xlane.xlu0 %4771
    %v4773 = vmul.f32 %v4772, %v796
    %v4774 = vmul.f32 %v4258, %v4258
    %v4775 = vmul.f32 %v4260, %v4260
    %v4776 = vmul.f32 %v4422, %v4422
    %v4777 = vmul.f32 %v4424, %v4424
    %v4778 = vmul.f32 %v4586, %v4586
    %v4779 = vmul.f32 %v4588, %v4588
    %v4780 = vmul.f32 %v4750, %v4750
    %v4781 = vmul.f32 %v4752, %v4752
    %v4782 = vadd.f32 %v4774, %v4775
    %v4783 = vadd.f32 %v4782, %v4776
    %v4784 = vadd.f32 %v4783, %v4777
    %v4785 = vadd.f32 %v4784, %v4778
    %v4786 = vadd.f32 %v4785, %v4779
    %v4787 = vadd.f32 %v4786, %v4780
    %v4788 = vadd.f32 %v4787, %v4781
    %4789 = vadd.xlane.f32.xlu0 %v4788
    %v4790 = vpop.xlane.xlu0 %4789
    %v4791 = vmul.f32 %v4790, %v796
    %v4792 = vmul.f32 %v4773, %v4773
    %v4793 = vsub.f32 %v4791, %v4792
    %v4794 = vmax.f32 %v4793, 0.0
    %v4795 = vadd.f32 %v4794, 1e-05
    %v4796 = vrsqrt.pop %v4795
    %v4797 = vsub.f32 %v4258, %v4773
    %v4798 = vsub.f32 %v4260, %v4773
    %v4799 = vsub.f32 %v4422, %v4773
    %v4800 = vsub.f32 %v4424, %v4773
    %v4801 = vsub.f32 %v4586, %v4773
    %v4802 = vsub.f32 %v4588, %v4773
    %v4803 = vsub.f32 %v4750, %v4773
    %v4804 = vsub.f32 %v4752, %v4773
    %v4805 = vmul.f32 %v4797, %v4796
    %v4806 = vmul.f32 %v4798, %v4796
    %v4807 = vmul.f32 %v4799, %v4796
    %v4808 = vmul.f32 %v4800, %v4796
    %v4809 = vmul.f32 %v4801, %v4796
    %v4810 = vmul.f32 %v4802, %v4796
    %v4811 = vmul.f32 %v4803, %v4796
    %v4812 = vmul.f32 %v4804, %v4796
    %v4814 = vlaneseq
    %v4815 = vshrl.u32 %v4814, 7
    %v4816 = vsub.s32 0, %v4815
    %v4817 = vrot.slane %v4759, %v4816
    %v4818 = vlaneseq
    %v4819 = vshrl.u32 %v4818, 7
    %v4820 = vsub.s32 1, %v4819
    %v4821 = vrot.slane %v4759, %v4820
    %v4822 = vlaneseq
    %v4823 = vshrl.u32 %v4822, 7
    %v4824 = vsub.s32 2, %v4823
    %v4825 = vrot.slane %v4759, %v4824
    %v4826 = vlaneseq
    %v4827 = vshrl.u32 %v4826, 7
    %v4828 = vsub.s32 3, %v4827
    %v4829 = vrot.slane %v4759, %v4828
    %v4830 = vlaneseq
    %v4831 = vshrl.u32 %v4830, 7
    %v4832 = vsub.s32 4, %v4831
    %v4833 = vrot.slane %v4759, %v4832
    %v4834 = vlaneseq
    %v4835 = vshrl.u32 %v4834, 7
    %v4836 = vsub.s32 5, %v4835
    %v4837 = vrot.slane %v4759, %v4836
    %v4838 = vlaneseq
    %v4839 = vshrl.u32 %v4838, 7
    %v4840 = vsub.s32 6, %v4839
    %v4841 = vrot.slane %v4759, %v4840
    %v4842 = vlaneseq
    %v4843 = vshrl.u32 %v4842, 7
    %v4844 = vsub.s32 7, %v4843
    %v4845 = vrot.slane %v4759, %v4844
    %v4854 = vmul.f32 %v4805, %v4817
    %v4855 = vmul.f32 %v4806, %v4821
    %v4856 = vmul.f32 %v4807, %v4825
    %v4857 = vmul.f32 %v4808, %v4829
    %v4858 = vmul.f32 %v4809, %v4833
    %v4859 = vmul.f32 %v4810, %v4837
    %v4860 = vmul.f32 %v4811, %v4841
    %v4861 = vmul.f32 %v4812, %v4845
    %v4863 = vlaneseq
    %v4864 = vshrl.u32 %v4863, 7
    %v4865 = vsub.s32 0, %v4864
    %v4866 = vrot.slane %v4763, %v4865
    %v4867 = vlaneseq
    %v4868 = vshrl.u32 %v4867, 7
    %v4869 = vsub.s32 1, %v4868
    %v4870 = vrot.slane %v4763, %v4869
    %v4871 = vlaneseq
    %v4872 = vshrl.u32 %v4871, 7
    %v4873 = vsub.s32 2, %v4872
    %v4874 = vrot.slane %v4763, %v4873
    %v4875 = vlaneseq
    %v4876 = vshrl.u32 %v4875, 7
    %v4877 = vsub.s32 3, %v4876
    %v4878 = vrot.slane %v4763, %v4877
    %v4879 = vlaneseq
    %v4880 = vshrl.u32 %v4879, 7
    %v4881 = vsub.s32 4, %v4880
    %v4882 = vrot.slane %v4763, %v4881
    %v4883 = vlaneseq
    %v4884 = vshrl.u32 %v4883, 7
    %v4885 = vsub.s32 5, %v4884
    %v4886 = vrot.slane %v4763, %v4885
    %v4887 = vlaneseq
    %v4888 = vshrl.u32 %v4887, 7
    %v4889 = vsub.s32 6, %v4888
    %v4890 = vrot.slane %v4763, %v4889
    %v4891 = vlaneseq
    %v4892 = vshrl.u32 %v4891, 7
    %v4893 = vsub.s32 7, %v4892
    %v4894 = vrot.slane %v4763, %v4893
    %v4903 = vadd.f32 %v4854, %v4866
    %v4904 = vadd.f32 %v4855, %v4870
    %v4905 = vadd.f32 %v4856, %v4874
    %v4906 = vadd.f32 %v4857, %v4878
    %v4907 = vadd.f32 %v4858, %v4882
    %v4908 = vadd.f32 %v4859, %v4886
    %v4909 = vadd.f32 %v4860, %v4890
    %v4910 = vadd.f32 %v4861, %v4894
    %v4911 = vmul.f32 %v4903, 0.5
    %v4912 = vmul.f32 %v4904, 0.5
    %v4913 = vmul.f32 %v4905, 0.5
    %v4914 = vmul.f32 %v4906, 0.5
    %v4915 = vmul.f32 %v4907, 0.5
    %v4916 = vmul.f32 %v4908, 0.5
    %v4917 = vmul.f32 %v4909, 0.5
    %v4918 = vmul.f32 %v4910, 0.5
    %v4919 = vmul.f32 %v4903, 0.70710677
    %v4920 = vmul.f32 %v4904, 0.70710677
    %v4921 = vmul.f32 %v4905, 0.70710677
    %v4922 = vmul.f32 %v4906, 0.70710677
    %v4923 = vmul.f32 %v4907, 0.70710677
    %v4924 = vmul.f32 %v4908, 0.70710677
    %v4925 = vmul.f32 %v4909, 0.70710677
    %v4926 = vmul.f32 %v4910, 0.70710677
    %v4927 = verf.f32.pop %v4919
    %v4928 = verf.f32.pop %v4920
    %v4929 = verf.f32.pop %v4921
    %v4930 = verf.f32.pop %v4922
    %v4931 = verf.f32.pop %v4923
    %v4932 = verf.f32.pop %v4924
    %v4933 = verf.f32.pop %v4925
    %v4934 = verf.f32.pop %v4926
    %v4935 = vadd.f32 %v4927, 1.0
    %v4936 = vadd.f32 %v4928, 1.0
    %v4937 = vadd.f32 %v4929, 1.0
    %v4938 = vadd.f32 %v4930, 1.0
    %v4939 = vadd.f32 %v4931, 1.0
    %v4940 = vadd.f32 %v4932, 1.0
    %v4941 = vadd.f32 %v4933, 1.0
    %v4942 = vadd.f32 %v4934, 1.0
    %v4943 = vmul.f32 %v4911, %v4935
    %v4944 = vmul.f32 %v4912, %v4936
    %v4945 = vmul.f32 %v4913, %v4937
    %v4946 = vmul.f32 %v4914, %v4938
    %v4947 = vmul.f32 %v4915, %v4939
    %v4948 = vmul.f32 %v4916, %v4940
    %v4949 = vmul.f32 %v4917, %v4941
    %v4950 = vmul.f32 %v4918, %v4942
    %s4951 = scalar_lea.vmem [#allocation16], 6
    %v4952 = vld [vmem:[%s4951] ss:$8 sm:$0xf]
    %v4953 = vld [vmem:[%s4951] ss:$8 sm:$0xf0]
    %v4954 = vor.u32 %v4952, %v4953
    %v4955 = vpack.c.bf16 %v4943, %v4943
    %v4956 = vpack.c.bf16 %v4944, %v4944
    %v4957 = vpack.c.bf16 %v4945, %v4945
    %v4958 = vpack.c.bf16 %v4946, %v4946
    %v4959 = vpack.c.bf16 %v4947, %v4947
    %v4960 = vpack.c.bf16 %v4948, %v4948
    %v4961 = vpack.c.bf16 %v4949, %v4949
    %v4962 = vpack.c.bf16 %v4950, %v4950
    %v4963 = vld [vmem:[#allocation8] sm:$0xff]
    %v4964 = vld [vmem:[#allocation8 + $0x8] sm:$0xff]
    %v4965 = vld [vmem:[#allocation8 + $0x10] sm:$0xff]
    %v4966 = vld [vmem:[#allocation8 + $0x18] sm:$0xff]
    %v4967 = vld [vmem:[#allocation8 + $0x20] sm:$0xff]
    %v4968 = vld [vmem:[#allocation8 + $0x28] sm:$0xff]
    %v4969 = vld [vmem:[#allocation8 + $0x30] sm:$0xff]
    %v4970 = vld [vmem:[#allocation8 + $0x38] sm:$0xff]
    %v4971 = vld [vmem:[#allocation8 + $0x40] sm:$0xff]
    %v4972 = vld [vmem:[#allocation8 + $0x48] sm:$0xff]
    %v4973 = vld [vmem:[#allocation8 + $0x50] sm:$0xff]
    %v4974 = vld [vmem:[#allocation8 + $0x58] sm:$0xff]
    %v4975 = vld [vmem:[#allocation8 + $0x60] sm:$0xff]
    %v4976 = vld [vmem:[#allocation8 + $0x68] sm:$0xff]
    %v4977 = vld [vmem:[#allocation8 + $0x70] sm:$0xff]
    %v4978 = vld [vmem:[#allocation8 + $0x78] sm:$0xff]
    %v4979 = vld [vmem:[#allocation8 + $0x80] sm:$0xff]
    %v4980 = vld [vmem:[#allocation8 + $0x88] sm:$0xff]
    %v4981 = vld [vmem:[#allocation8 + $0x90] sm:$0xff]
    %v4982 = vld [vmem:[#allocation8 + $0x98] sm:$0xff]
    %v4983 = vld [vmem:[#allocation8 + $0xa0] sm:$0xff]
    %v4984 = vld [vmem:[#allocation8 + $0xa8] sm:$0xff]
    %v4985 = vld [vmem:[#allocation8 + $0xb0] sm:$0xff]
    %v4986 = vld [vmem:[#allocation8 + $0xb8] sm:$0xff]
    %v4987 = vld [vmem:[#allocation8 + $0xc0] sm:$0xff]
    %v4988 = vld [vmem:[#allocation8 + $0xc8] sm:$0xff]
    %v4989 = vld [vmem:[#allocation8 + $0xd0] sm:$0xff]
    %v4990 = vld [vmem:[#allocation8 + $0xd8] sm:$0xff]
    %v4991 = vld [vmem:[#allocation8 + $0xe0] sm:$0xff]
    %v4992 = vld [vmem:[#allocation8 + $0xe8] sm:$0xff]
    %v4993 = vld [vmem:[#allocation8 + $0xf0] sm:$0xff]
    %v4994 = vld [vmem:[#allocation8 + $0xf8] sm:$0xff]
    %v4995 = vld [vmem:[#allocation8 + $0x100] sm:$0xff]
    %v4996 = vld [vmem:[#allocation8 + $0x108] sm:$0xff]
    %v4997 = vld [vmem:[#allocation8 + $0x110] sm:$0xff]
    %v4998 = vld [vmem:[#allocation8 + $0x118] sm:$0xff]
    %v4999 = vld [vmem:[#allocation8 + $0x120] sm:$0xff]
    %v5000 = vld [vmem:[#allocation8 + $0x128] sm:$0xff]
    %v5001 = vld [vmem:[#allocation8 + $0x130] sm:$0xff]
    %v5002 = vld [vmem:[#allocation8 + $0x138] sm:$0xff]
    %v5003 = vld [vmem:[#allocation8 + $0x140] sm:$0xff]
    %v5004 = vld [vmem:[#allocation8 + $0x148] sm:$0xff]
    %v5005 = vld [vmem:[#allocation8 + $0x150] sm:$0xff]
    %v5006 = vld [vmem:[#allocation8 + $0x158] sm:$0xff]
    %v5007 = vld [vmem:[#allocation8 + $0x160] sm:$0xff]
    %v5008 = vld [vmem:[#allocation8 + $0x168] sm:$0xff]
    %v5009 = vld [vmem:[#allocation8 + $0x170] sm:$0xff]
    %v5010 = vld [vmem:[#allocation8 + $0x178] sm:$0xff]
    %v5011 = vld [vmem:[#allocation8 + $0x180] sm:$0xff]
    %v5012 = vld [vmem:[#allocation8 + $0x188] sm:$0xff]
    %v5013 = vld [vmem:[#allocation8 + $0x190] sm:$0xff]
    %v5014 = vld [vmem:[#allocation8 + $0x198] sm:$0xff]
    %v5015 = vld [vmem:[#allocation8 + $0x1a0] sm:$0xff]
    %v5016 = vld [vmem:[#allocation8 + $0x1a8] sm:$0xff]
    %v5017 = vld [vmem:[#allocation8 + $0x1b0] sm:$0xff]
    %v5018 = vld [vmem:[#allocation8 + $0x1b8] sm:$0xff]
    %v5019 = vld [vmem:[#allocation8 + $0x1c0] sm:$0xff]
    %v5020 = vld [vmem:[#allocation8 + $0x1c8] sm:$0xff]
    %v5021 = vld [vmem:[#allocation8 + $0x1d0] sm:$0xff]
    %v5022 = vld [vmem:[#allocation8 + $0x1d8] sm:$0xff]
    %v5023 = vld [vmem:[#allocation8 + $0x1e0] sm:$0xff]
    %v5024 = vld [vmem:[#allocation8 + $0x1e8] sm:$0xff]
    %v5025 = vld [vmem:[#allocation8 + $0x1f0] sm:$0xff]
    %v5026 = vld [vmem:[#allocation8 + $0x1f8] sm:$0xff]
    %v5027 = vld [vmem:[#allocation8 + $0x200] sm:$0xff]
    %v5028 = vld [vmem:[#allocation8 + $0x208] sm:$0xff]
    %v5029 = vld [vmem:[#allocation8 + $0x210] sm:$0xff]
    %v5030 = vld [vmem:[#allocation8 + $0x218] sm:$0xff]
    %v5031 = vld [vmem:[#allocation8 + $0x220] sm:$0xff]
    %v5032 = vld [vmem:[#allocation8 + $0x228] sm:$0xff]
    %v5033 = vld [vmem:[#allocation8 + $0x230] sm:$0xff]
    %v5034 = vld [vmem:[#allocation8 + $0x238] sm:$0xff]
    %v5035 = vld [vmem:[#allocation8 + $0x240] sm:$0xff]
    %v5036 = vld [vmem:[#allocation8 + $0x248] sm:$0xff]
    %v5037 = vld [vmem:[#allocation8 + $0x250] sm:$0xff]
    %v5038 = vld [vmem:[#allocation8 + $0x258] sm:$0xff]
    %v5039 = vld [vmem:[#allocation8 + $0x260] sm:$0xff]
    %v5040 = vld [vmem:[#allocation8 + $0x268] sm:$0xff]
    %v5041 = vld [vmem:[#allocation8 + $0x270] sm:$0xff]
    %v5042 = vld [vmem:[#allocation8 + $0x278] sm:$0xff]
    %v5043 = vld [vmem:[#allocation8 + $0x280] sm:$0xff]
    %v5044 = vld [vmem:[#allocation8 + $0x288] sm:$0xff]
    %v5045 = vld [vmem:[#allocation8 + $0x290] sm:$0xff]
    %v5046 = vld [vmem:[#allocation8 + $0x298] sm:$0xff]
    %v5047 = vld [vmem:[#allocation8 + $0x2a0] sm:$0xff]
    %v5048 = vld [vmem:[#allocation8 + $0x2a8] sm:$0xff]
    %v5049 = vld [vmem:[#allocation8 + $0x2b0] sm:$0xff]
    %v5050 = vld [vmem:[#allocation8 + $0x2b8] sm:$0xff]
    %v5051 = vld [vmem:[#allocation8 + $0x2c0] sm:$0xff]
    %v5052 = vld [vmem:[#allocation8 + $0x2c8] sm:$0xff]
    %v5053 = vld [vmem:[#allocation8 + $0x2d0] sm:$0xff]
    %v5054 = vld [vmem:[#allocation8 + $0x2d8] sm:$0xff]
    %v5055 = vld [vmem:[#allocation8 + $0x2e0] sm:$0xff]
    %v5056 = vld [vmem:[#allocation8 + $0x2e8] sm:$0xff]
    %v5057 = vld [vmem:[#allocation8 + $0x2f0] sm:$0xff]
    %v5058 = vld [vmem:[#allocation8 + $0x2f8] sm:$0xff]
    %v5059 = vld [vmem:[#allocation8 + $0x300] sm:$0xff]
    %v5060 = vld [vmem:[#allocation8 + $0x308] sm:$0xff]
    %v5061 = vld [vmem:[#allocation8 + $0x310] sm:$0xff]
    %v5062 = vld [vmem:[#allocation8 + $0x318] sm:$0xff]
    %v5063 = vld [vmem:[#allocation8 + $0x320] sm:$0xff]
    %v5064 = vld [vmem:[#allocation8 + $0x328] sm:$0xff]
    %v5065 = vld [vmem:[#allocation8 + $0x330] sm:$0xff]
    %v5066 = vld [vmem:[#allocation8 + $0x338] sm:$0xff]
    %v5067 = vld [vmem:[#allocation8 + $0x340] sm:$0xff]
    %v5068 = vld [vmem:[#allocation8 + $0x348] sm:$0xff]
    %v5069 = vld [vmem:[#allocation8 + $0x350] sm:$0xff]
    %v5070 = vld [vmem:[#allocation8 + $0x358] sm:$0xff]
    %v5071 = vld [vmem:[#allocation8 + $0x360] sm:$0xff]
    %v5072 = vld [vmem:[#allocation8 + $0x368] sm:$0xff]
    %v5073 = vld [vmem:[#allocation8 + $0x370] sm:$0xff]
    %v5074 = vld [vmem:[#allocation8 + $0x378] sm:$0xff]
    %v5075 = vld [vmem:[#allocation8 + $0x380] sm:$0xff]
    %v5076 = vld [vmem:[#allocation8 + $0x388] sm:$0xff]
    %v5077 = vld [vmem:[#allocation8 + $0x390] sm:$0xff]
    %v5078 = vld [vmem:[#allocation8 + $0x398] sm:$0xff]
    %v5079 = vld [vmem:[#allocation8 + $0x3a0] sm:$0xff]
    %v5080 = vld [vmem:[#allocation8 + $0x3a8] sm:$0xff]
    %v5081 = vld [vmem:[#allocation8 + $0x3b0] sm:$0xff]
    %v5082 = vld [vmem:[#allocation8 + $0x3b8] sm:$0xff]
    %v5083 = vld [vmem:[#allocation8 + $0x3c0] sm:$0xff]
    %v5084 = vld [vmem:[#allocation8 + $0x3c8] sm:$0xff]
    %v5085 = vld [vmem:[#allocation8 + $0x3d0] sm:$0xff]
    %v5086 = vld [vmem:[#allocation8 + $0x3d8] sm:$0xff]
    %v5087 = vld [vmem:[#allocation8 + $0x3e0] sm:$0xff]
    %v5088 = vld [vmem:[#allocation8 + $0x3e8] sm:$0xff]
    %v5089 = vld [vmem:[#allocation8 + $0x3f0] sm:$0xff]
    %v5090 = vld [vmem:[#allocation8 + $0x3f8] sm:$0xff]
    %v5091 = vld [vmem:[#allocation8 + $0x400] sm:$0xff]
    %v5092 = vld [vmem:[#allocation8 + $0x408] sm:$0xff]
    %v5093 = vld [vmem:[#allocation8 + $0x410] sm:$0xff]
    %v5094 = vld [vmem:[#allocation8 + $0x418] sm:$0xff]
    %v5095 = vld [vmem:[#allocation8 + $0x420] sm:$0xff]
    %v5096 = vld [vmem:[#allocation8 + $0x428] sm:$0xff]
    %v5097 = vld [vmem:[#allocation8 + $0x430] sm:$0xff]
    %v5098 = vld [vmem:[#allocation8 + $0x438] sm:$0xff]
    %v5099 = vld [vmem:[#allocation8 + $0x440] sm:$0xff]
    %v5100 = vld [vmem:[#allocation8 + $0x448] sm:$0xff]
    %v5101 = vld [vmem:[#allocation8 + $0x450] sm:$0xff]
    %v5102 = vld [vmem:[#allocation8 + $0x458] sm:$0xff]
    %v5103 = vld [vmem:[#allocation8 + $0x460] sm:$0xff]
    %v5104 = vld [vmem:[#allocation8 + $0x468] sm:$0xff]
    %v5105 = vld [vmem:[#allocation8 + $0x470] sm:$0xff]
    %v5106 = vld [vmem:[#allocation8 + $0x478] sm:$0xff]
    %v5107 = vld [vmem:[#allocation8 + $0x480] sm:$0xff]
    %v5108 = vld [vmem:[#allocation8 + $0x488] sm:$0xff]
    %v5109 = vld [vmem:[#allocation8 + $0x490] sm:$0xff]
    %v5110 = vld [vmem:[#allocation8 + $0x498] sm:$0xff]
    %v5111 = vld [vmem:[#allocation8 + $0x4a0] sm:$0xff]
    %v5112 = vld [vmem:[#allocation8 + $0x4a8] sm:$0xff]
    %v5113 = vld [vmem:[#allocation8 + $0x4b0] sm:$0xff]
    %v5114 = vld [vmem:[#allocation8 + $0x4b8] sm:$0xff]
    %v5115 = vld [vmem:[#allocation8 + $0x4c0] sm:$0xff]
    %v5116 = vld [vmem:[#allocation8 + $0x4c8] sm:$0xff]
    %v5117 = vld [vmem:[#allocation8 + $0x4d0] sm:$0xff]
    %v5118 = vld [vmem:[#allocation8 + $0x4d8] sm:$0xff]
    %v5119 = vld [vmem:[#allocation8 + $0x4e0] sm:$0xff]
    %v5120 = vld [vmem:[#allocation8 + $0x4e8] sm:$0xff]
    %v5121 = vld [vmem:[#allocation8 + $0x4f0] sm:$0xff]
    %v5122 = vld [vmem:[#allocation8 + $0x4f8] sm:$0xff]
    %v5123 = vld [vmem:[#allocation8 + $0x500] sm:$0xff]
    %v5124 = vld [vmem:[#allocation8 + $0x508] sm:$0xff]
    %v5125 = vld [vmem:[#allocation8 + $0x510] sm:$0xff]
    %v5126 = vld [vmem:[#allocation8 + $0x518] sm:$0xff]
    %v5127 = vld [vmem:[#allocation8 + $0x520] sm:$0xff]
    %v5128 = vld [vmem:[#allocation8 + $0x528] sm:$0xff]
    %v5129 = vld [vmem:[#allocation8 + $0x530] sm:$0xff]
    %v5130 = vld [vmem:[#allocation8 + $0x538] sm:$0xff]
    %v5131 = vld [vmem:[#allocation8 + $0x540] sm:$0xff]
    %v5132 = vld [vmem:[#allocation8 + $0x548] sm:$0xff]
    %v5133 = vld [vmem:[#allocation8 + $0x550] sm:$0xff]
    %v5134 = vld [vmem:[#allocation8 + $0x558] sm:$0xff]
    %v5135 = vld [vmem:[#allocation8 + $0x560] sm:$0xff]
    %v5136 = vld [vmem:[#allocation8 + $0x568] sm:$0xff]
    %v5137 = vld [vmem:[#allocation8 + $0x570] sm:$0xff]
    %v5138 = vld [vmem:[#allocation8 + $0x578] sm:$0xff]
    %v5139 = vld [vmem:[#allocation8 + $0x580] sm:$0xff]
    %v5140 = vld [vmem:[#allocation8 + $0x588] sm:$0xff]
    %v5141 = vld [vmem:[#allocation8 + $0x590] sm:$0xff]
    %v5142 = vld [vmem:[#allocation8 + $0x598] sm:$0xff]
    %v5143 = vld [vmem:[#allocation8 + $0x5a0] sm:$0xff]
    %v5144 = vld [vmem:[#allocation8 + $0x5a8] sm:$0xff]
    %v5145 = vld [vmem:[#allocation8 + $0x5b0] sm:$0xff]
    %v5146 = vld [vmem:[#allocation8 + $0x5b8] sm:$0xff]
    %v5147 = vld [vmem:[#allocation8 + $0x5c0] sm:$0xff]
    %v5148 = vld [vmem:[#allocation8 + $0x5c8] sm:$0xff]
    %v5149 = vld [vmem:[#allocation8 + $0x5d0] sm:$0xff]
    %v5150 = vld [vmem:[#allocation8 + $0x5d8] sm:$0xff]
    %v5151 = vld [vmem:[#allocation8 + $0x5e0] sm:$0xff]
    %v5152 = vld [vmem:[#allocation8 + $0x5e8] sm:$0xff]
    %v5153 = vld [vmem:[#allocation8 + $0x5f0] sm:$0xff]
    %v5154 = vld [vmem:[#allocation8 + $0x5f8] sm:$0xff]
    %v5155 = vld [vmem:[#allocation8 + $0x600] sm:$0xff]
    %v5156 = vld [vmem:[#allocation8 + $0x608] sm:$0xff]
    %v5157 = vld [vmem:[#allocation8 + $0x610] sm:$0xff]
    %v5158 = vld [vmem:[#allocation8 + $0x618] sm:$0xff]
    %v5159 = vld [vmem:[#allocation8 + $0x620] sm:$0xff]
    %v5160 = vld [vmem:[#allocation8 + $0x628] sm:$0xff]
    %v5161 = vld [vmem:[#allocation8 + $0x630] sm:$0xff]
    %v5162 = vld [vmem:[#allocation8 + $0x638] sm:$0xff]
    %v5163 = vld [vmem:[#allocation8 + $0x640] sm:$0xff]
    %v5164 = vld [vmem:[#allocation8 + $0x648] sm:$0xff]
    %v5165 = vld [vmem:[#allocation8 + $0x650] sm:$0xff]
    %v5166 = vld [vmem:[#allocation8 + $0x658] sm:$0xff]
    %v5167 = vld [vmem:[#allocation8 + $0x660] sm:$0xff]
    %v5168 = vld [vmem:[#allocation8 + $0x668] sm:$0xff]
    %v5169 = vld [vmem:[#allocation8 + $0x670] sm:$0xff]
    %v5170 = vld [vmem:[#allocation8 + $0x678] sm:$0xff]
    %v5171 = vld [vmem:[#allocation8 + $0x680] sm:$0xff]
    %v5172 = vld [vmem:[#allocation8 + $0x688] sm:$0xff]
    %v5173 = vld [vmem:[#allocation8 + $0x690] sm:$0xff]
    %v5174 = vld [vmem:[#allocation8 + $0x698] sm:$0xff]
    %v5175 = vld [vmem:[#allocation8 + $0x6a0] sm:$0xff]
    %v5176 = vld [vmem:[#allocation8 + $0x6a8] sm:$0xff]
    %v5177 = vld [vmem:[#allocation8 + $0x6b0] sm:$0xff]
    %v5178 = vld [vmem:[#allocation8 + $0x6b8] sm:$0xff]
    %v5179 = vld [vmem:[#allocation8 + $0x6c0] sm:$0xff]
    %v5180 = vld [vmem:[#allocation8 + $0x6c8] sm:$0xff]
    %v5181 = vld [vmem:[#allocation8 + $0x6d0] sm:$0xff]
    %v5182 = vld [vmem:[#allocation8 + $0x6d8] sm:$0xff]
    %v5183 = vld [vmem:[#allocation8 + $0x6e0] sm:$0xff]
    %v5184 = vld [vmem:[#allocation8 + $0x6e8] sm:$0xff]
    %v5185 = vld [vmem:[#allocation8 + $0x6f0] sm:$0xff]
    %v5186 = vld [vmem:[#allocation8 + $0x6f8] sm:$0xff]
    %v5187 = vld [vmem:[#allocation8 + $0x700] sm:$0xff]
    %v5188 = vld [vmem:[#allocation8 + $0x708] sm:$0xff]
    %v5189 = vld [vmem:[#allocation8 + $0x710] sm:$0xff]
    %v5190 = vld [vmem:[#allocation8 + $0x718] sm:$0xff]
    %v5191 = vld [vmem:[#allocation8 + $0x720] sm:$0xff]
    %v5192 = vld [vmem:[#allocation8 + $0x728] sm:$0xff]
    %v5193 = vld [vmem:[#allocation8 + $0x730] sm:$0xff]
    %v5194 = vld [vmem:[#allocation8 + $0x738] sm:$0xff]
    %v5195 = vld [vmem:[#allocation8 + $0x740] sm:$0xff]
    %v5196 = vld [vmem:[#allocation8 + $0x748] sm:$0xff]
    %v5197 = vld [vmem:[#allocation8 + $0x750] sm:$0xff]
    %v5198 = vld [vmem:[#allocation8 + $0x758] sm:$0xff]
    %v5199 = vld [vmem:[#allocation8 + $0x760] sm:$0xff]
    %v5200 = vld [vmem:[#allocation8 + $0x768] sm:$0xff]
    %v5201 = vld [vmem:[#allocation8 + $0x770] sm:$0xff]
    %v5202 = vld [vmem:[#allocation8 + $0x778] sm:$0xff]
    %v5203 = vld [vmem:[#allocation8 + $0x780] sm:$0xff]
    %v5204 = vld [vmem:[#allocation8 + $0x788] sm:$0xff]
    %v5205 = vld [vmem:[#allocation8 + $0x790] sm:$0xff]
    %v5206 = vld [vmem:[#allocation8 + $0x798] sm:$0xff]
    %v5207 = vld [vmem:[#allocation8 + $0x7a0] sm:$0xff]
    %v5208 = vld [vmem:[#allocation8 + $0x7a8] sm:$0xff]
    %v5209 = vld [vmem:[#allocation8 + $0x7b0] sm:$0xff]
    %v5210 = vld [vmem:[#allocation8 + $0x7b8] sm:$0xff]
    %v5211 = vld [vmem:[#allocation8 + $0x7c0] sm:$0xff]
    %v5212 = vld [vmem:[#allocation8 + $0x7c8] sm:$0xff]
    %v5213 = vld [vmem:[#allocation8 + $0x7d0] sm:$0xff]
    %v5214 = vld [vmem:[#allocation8 + $0x7d8] sm:$0xff]
    %v5215 = vld [vmem:[#allocation8 + $0x7e0] sm:$0xff]
    %v5216 = vld [vmem:[#allocation8 + $0x7e8] sm:$0xff]
    %v5217 = vld [vmem:[#allocation8 + $0x7f0] sm:$0xff]
    %v5218 = vld [vmem:[#allocation8 + $0x7f8] sm:$0xff]
    %v5219 = vld [vmem:[#allocation8 + $0x800] sm:$0xff]
    %v5220 = vld [vmem:[#allocation8 + $0x808] sm:$0xff]
    %v5221 = vld [vmem:[#allocation8 + $0x810] sm:$0xff]
    %v5222 = vld [vmem:[#allocation8 + $0x818] sm:$0xff]
    %v5223 = vld [vmem:[#allocation8 + $0x820] sm:$0xff]
    %v5224 = vld [vmem:[#allocation8 + $0x828] sm:$0xff]
    %v5225 = vld [vmem:[#allocation8 + $0x830] sm:$0xff]
    %v5226 = vld [vmem:[#allocation8 + $0x838] sm:$0xff]
    %v5227 = vld [vmem:[#allocation8 + $0x840] sm:$0xff]
    %v5228 = vld [vmem:[#allocation8 + $0x848] sm:$0xff]
    %v5229 = vld [vmem:[#allocation8 + $0x850] sm:$0xff]
    %v5230 = vld [vmem:[#allocation8 + $0x858] sm:$0xff]
    %v5231 = vld [vmem:[#allocation8 + $0x860] sm:$0xff]
    %v5232 = vld [vmem:[#allocation8 + $0x868] sm:$0xff]
    %v5233 = vld [vmem:[#allocation8 + $0x870] sm:$0xff]
    %v5234 = vld [vmem:[#allocation8 + $0x878] sm:$0xff]
    %v5235 = vld [vmem:[#allocation8 + $0x880] sm:$0xff]
    %v5236 = vld [vmem:[#allocation8 + $0x888] sm:$0xff]
    %v5237 = vld [vmem:[#allocation8 + $0x890] sm:$0xff]
    %v5238 = vld [vmem:[#allocation8 + $0x898] sm:$0xff]
    %v5239 = vld [vmem:[#allocation8 + $0x8a0] sm:$0xff]
    %v5240 = vld [vmem:[#allocation8 + $0x8a8] sm:$0xff]
    %v5241 = vld [vmem:[#allocation8 + $0x8b0] sm:$0xff]
    %v5242 = vld [vmem:[#allocation8 + $0x8b8] sm:$0xff]
    %v5243 = vld [vmem:[#allocation8 + $0x8c0] sm:$0xff]
    %v5244 = vld [vmem:[#allocation8 + $0x8c8] sm:$0xff]
    %v5245 = vld [vmem:[#allocation8 + $0x8d0] sm:$0xff]
    %v5246 = vld [vmem:[#allocation8 + $0x8d8] sm:$0xff]
    %v5247 = vld [vmem:[#allocation8 + $0x8e0] sm:$0xff]
    %v5248 = vld [vmem:[#allocation8 + $0x8e8] sm:$0xff]
    %v5249 = vld [vmem:[#allocation8 + $0x8f0] sm:$0xff]
    %v5250 = vld [vmem:[#allocation8 + $0x8f8] sm:$0xff]
    %v5251 = vld [vmem:[#allocation8 + $0x900] sm:$0xff]
    %v5252 = vld [vmem:[#allocation8 + $0x908] sm:$0xff]
    %v5253 = vld [vmem:[#allocation8 + $0x910] sm:$0xff]
    %v5254 = vld [vmem:[#allocation8 + $0x918] sm:$0xff]
    %v5255 = vld [vmem:[#allocation8 + $0x920] sm:$0xff]
    %v5256 = vld [vmem:[#allocation8 + $0x928] sm:$0xff]
    %v5257 = vld [vmem:[#allocation8 + $0x930] sm:$0xff]
    %v5258 = vld [vmem:[#allocation8 + $0x938] sm:$0xff]
    %v5259 = vld [vmem:[#allocation8 + $0x940] sm:$0xff]
    %v5260 = vld [vmem:[#allocation8 + $0x948] sm:$0xff]
    %v5261 = vld [vmem:[#allocation8 + $0x950] sm:$0xff]
    %v5262 = vld [vmem:[#allocation8 + $0x958] sm:$0xff]
    %v5263 = vld [vmem:[#allocation8 + $0x960] sm:$0xff]
    %v5264 = vld [vmem:[#allocation8 + $0x968] sm:$0xff]
    %v5265 = vld [vmem:[#allocation8 + $0x970] sm:$0xff]
    %v5266 = vld [vmem:[#allocation8 + $0x978] sm:$0xff]
    %v5267 = vld [vmem:[#allocation8 + $0x980] sm:$0xff]
    %v5268 = vld [vmem:[#allocation8 + $0x988] sm:$0xff]
    %v5269 = vld [vmem:[#allocation8 + $0x990] sm:$0xff]
    %v5270 = vld [vmem:[#allocation8 + $0x998] sm:$0xff]
    %v5271 = vld [vmem:[#allocation8 + $0x9a0] sm:$0xff]
    %v5272 = vld [vmem:[#allocation8 + $0x9a8] sm:$0xff]
    %v5273 = vld [vmem:[#allocation8 + $0x9b0] sm:$0xff]
    %v5274 = vld [vmem:[#allocation8 + $0x9b8] sm:$0xff]
    %v5275 = vld [vmem:[#allocation8 + $0x9c0] sm:$0xff]
    %v5276 = vld [vmem:[#allocation8 + $0x9c8] sm:$0xff]
    %v5277 = vld [vmem:[#allocation8 + $0x9d0] sm:$0xff]
    %v5278 = vld [vmem:[#allocation8 + $0x9d8] sm:$0xff]
    %v5279 = vld [vmem:[#allocation8 + $0x9e0] sm:$0xff]
    %v5280 = vld [vmem:[#allocation8 + $0x9e8] sm:$0xff]
    %v5281 = vld [vmem:[#allocation8 + $0x9f0] sm:$0xff]
    %v5282 = vld [vmem:[#allocation8 + $0x9f8] sm:$0xff]
    %v5283 = vld [vmem:[#allocation8 + $0xa00] sm:$0xff]
    %v5284 = vld [vmem:[#allocation8 + $0xa08] sm:$0xff]
    %v5285 = vld [vmem:[#allocation8 + $0xa10] sm:$0xff]
    %v5286 = vld [vmem:[#allocation8 + $0xa18] sm:$0xff]
    %v5287 = vld [vmem:[#allocation8 + $0xa20] sm:$0xff]
    %v5288 = vld [vmem:[#allocation8 + $0xa28] sm:$0xff]
    %v5289 = vld [vmem:[#allocation8 + $0xa30] sm:$0xff]
    %v5290 = vld [vmem:[#allocation8 + $0xa38] sm:$0xff]
    %v5291 = vld [vmem:[#allocation8 + $0xa40] sm:$0xff]
    %v5292 = vld [vmem:[#allocation8 + $0xa48] sm:$0xff]
    %v5293 = vld [vmem:[#allocation8 + $0xa50] sm:$0xff]
    %v5294 = vld [vmem:[#allocation8 + $0xa58] sm:$0xff]
    %v5295 = vld [vmem:[#allocation8 + $0xa60] sm:$0xff]
    %v5296 = vld [vmem:[#allocation8 + $0xa68] sm:$0xff]
    %v5297 = vld [vmem:[#allocation8 + $0xa70] sm:$0xff]
    %v5298 = vld [vmem:[#allocation8 + $0xa78] sm:$0xff]
    %v5299 = vld [vmem:[#allocation8 + $0xa80] sm:$0xff]
    %v5300 = vld [vmem:[#allocation8 + $0xa88] sm:$0xff]
    %v5301 = vld [vmem:[#allocation8 + $0xa90] sm:$0xff]
    %v5302 = vld [vmem:[#allocation8 + $0xa98] sm:$0xff]
    %v5303 = vld [vmem:[#allocation8 + $0xaa0] sm:$0xff]
    %v5304 = vld [vmem:[#allocation8 + $0xaa8] sm:$0xff]
    %v5305 = vld [vmem:[#allocation8 + $0xab0] sm:$0xff]
    %v5306 = vld [vmem:[#allocation8 + $0xab8] sm:$0xff]
    %v5307 = vld [vmem:[#allocation8 + $0xac0] sm:$0xff]
    %v5308 = vld [vmem:[#allocation8 + $0xac8] sm:$0xff]
    %v5309 = vld [vmem:[#allocation8 + $0xad0] sm:$0xff]
    %v5310 = vld [vmem:[#allocation8 + $0xad8] sm:$0xff]
    %v5311 = vld [vmem:[#allocation8 + $0xae0] sm:$0xff]
    %v5312 = vld [vmem:[#allocation8 + $0xae8] sm:$0xff]
    %v5313 = vld [vmem:[#allocation8 + $0xaf0] sm:$0xff]
    %v5314 = vld [vmem:[#allocation8 + $0xaf8] sm:$0xff]
    %v5315 = vld [vmem:[#allocation8 + $0xb00] sm:$0xff]
    %v5316 = vld [vmem:[#allocation8 + $0xb08] sm:$0xff]
    %v5317 = vld [vmem:[#allocation8 + $0xb10] sm:$0xff]
    %v5318 = vld [vmem:[#allocation8 + $0xb18] sm:$0xff]
    %v5319 = vld [vmem:[#allocation8 + $0xb20] sm:$0xff]
    %v5320 = vld [vmem:[#allocation8 + $0xb28] sm:$0xff]
    %v5321 = vld [vmem:[#allocation8 + $0xb30] sm:$0xff]
    %v5322 = vld [vmem:[#allocation8 + $0xb38] sm:$0xff]
    %v5323 = vld [vmem:[#allocation8 + $0xb40] sm:$0xff]
    %v5324 = vld [vmem:[#allocation8 + $0xb48] sm:$0xff]
    %v5325 = vld [vmem:[#allocation8 + $0xb50] sm:$0xff]
    %v5326 = vld [vmem:[#allocation8 + $0xb58] sm:$0xff]
    %v5327 = vld [vmem:[#allocation8 + $0xb60] sm:$0xff]
    %v5328 = vld [vmem:[#allocation8 + $0xb68] sm:$0xff]
    %v5329 = vld [vmem:[#allocation8 + $0xb70] sm:$0xff]
    %v5330 = vld [vmem:[#allocation8 + $0xb78] sm:$0xff]
    %v5331 = vld [vmem:[#allocation8 + $0xb80] sm:$0xff]
    %v5332 = vld [vmem:[#allocation8 + $0xb88] sm:$0xff]
    %v5333 = vld [vmem:[#allocation8 + $0xb90] sm:$0xff]
    %v5334 = vld [vmem:[#allocation8 + $0xb98] sm:$0xff]
    %v5335 = vld [vmem:[#allocation8 + $0xba0] sm:$0xff]
    %v5336 = vld [vmem:[#allocation8 + $0xba8] sm:$0xff]
    %v5337 = vld [vmem:[#allocation8 + $0xbb0] sm:$0xff]
    %v5338 = vld [vmem:[#allocation8 + $0xbb8] sm:$0xff]
    %v5339 = vld [vmem:[#allocation8 + $0xbc0] sm:$0xff]
    %v5340 = vld [vmem:[#allocation8 + $0xbc8] sm:$0xff]
    %v5341 = vld [vmem:[#allocation8 + $0xbd0] sm:$0xff]
    %v5342 = vld [vmem:[#allocation8 + $0xbd8] sm:$0xff]
    %v5343 = vld [vmem:[#allocation8 + $0xbe0] sm:$0xff]
    %v5344 = vld [vmem:[#allocation8 + $0xbe8] sm:$0xff]
    %v5345 = vld [vmem:[#allocation8 + $0xbf0] sm:$0xff]
    %v5346 = vld [vmem:[#allocation8 + $0xbf8] sm:$0xff]
    %v5347 = vld [vmem:[#allocation8 + $0xc00] sm:$0xff]
    %v5348 = vld [vmem:[#allocation8 + $0xc08] sm:$0xff]
    %v5349 = vld [vmem:[#allocation8 + $0xc10] sm:$0xff]
    %v5350 = vld [vmem:[#allocation8 + $0xc18] sm:$0xff]
    %v5351 = vld [vmem:[#allocation8 + $0xc20] sm:$0xff]
    %v5352 = vld [vmem:[#allocation8 + $0xc28] sm:$0xff]
    %v5353 = vld [vmem:[#allocation8 + $0xc30] sm:$0xff]
    %v5354 = vld [vmem:[#allocation8 + $0xc38] sm:$0xff]
    %v5355 = vld [vmem:[#allocation8 + $0xc40] sm:$0xff]
    %v5356 = vld [vmem:[#allocation8 + $0xc48] sm:$0xff]
    %v5357 = vld [vmem:[#allocation8 + $0xc50] sm:$0xff]
    %v5358 = vld [vmem:[#allocation8 + $0xc58] sm:$0xff]
    %v5359 = vld [vmem:[#allocation8 + $0xc60] sm:$0xff]
    %v5360 = vld [vmem:[#allocation8 + $0xc68] sm:$0xff]
    %v5361 = vld [vmem:[#allocation8 + $0xc70] sm:$0xff]
    %v5362 = vld [vmem:[#allocation8 + $0xc78] sm:$0xff]
    %v5363 = vld [vmem:[#allocation8 + $0xc80] sm:$0xff]
    %v5364 = vld [vmem:[#allocation8 + $0xc88] sm:$0xff]
    %v5365 = vld [vmem:[#allocation8 + $0xc90] sm:$0xff]
    %v5366 = vld [vmem:[#allocation8 + $0xc98] sm:$0xff]
    %v5367 = vld [vmem:[#allocation8 + $0xca0] sm:$0xff]
    %v5368 = vld [vmem:[#allocation8 + $0xca8] sm:$0xff]
    %v5369 = vld [vmem:[#allocation8 + $0xcb0] sm:$0xff]
    %v5370 = vld [vmem:[#allocation8 + $0xcb8] sm:$0xff]
    %v5371 = vld [vmem:[#allocation8 + $0xcc0] sm:$0xff]
    %v5372 = vld [vmem:[#allocation8 + $0xcc8] sm:$0xff]
    %v5373 = vld [vmem:[#allocation8 + $0xcd0] sm:$0xff]
    %v5374 = vld [vmem:[#allocation8 + $0xcd8] sm:$0xff]
    %v5375 = vld [vmem:[#allocation8 + $0xce0] sm:$0xff]
    %v5376 = vld [vmem:[#allocation8 + $0xce8] sm:$0xff]
    %v5377 = vld [vmem:[#allocation8 + $0xcf0] sm:$0xff]
    %v5378 = vld [vmem:[#allocation8 + $0xcf8] sm:$0xff]
    %v5379 = vld [vmem:[#allocation8 + $0xd00] sm:$0xff]
    %v5380 = vld [vmem:[#allocation8 + $0xd08] sm:$0xff]
    %v5381 = vld [vmem:[#allocation8 + $0xd10] sm:$0xff]
    %v5382 = vld [vmem:[#allocation8 + $0xd18] sm:$0xff]
    %v5383 = vld [vmem:[#allocation8 + $0xd20] sm:$0xff]
    %v5384 = vld [vmem:[#allocation8 + $0xd28] sm:$0xff]
    %v5385 = vld [vmem:[#allocation8 + $0xd30] sm:$0xff]
    %v5386 = vld [vmem:[#allocation8 + $0xd38] sm:$0xff]
    %v5387 = vld [vmem:[#allocation8 + $0xd40] sm:$0xff]
    %v5388 = vld [vmem:[#allocation8 + $0xd48] sm:$0xff]
    %v5389 = vld [vmem:[#allocation8 + $0xd50] sm:$0xff]
    %v5390 = vld [vmem:[#allocation8 + $0xd58] sm:$0xff]
    %v5391 = vld [vmem:[#allocation8 + $0xd60] sm:$0xff]
    %v5392 = vld [vmem:[#allocation8 + $0xd68] sm:$0xff]
    %v5393 = vld [vmem:[#allocation8 + $0xd70] sm:$0xff]
    %v5394 = vld [vmem:[#allocation8 + $0xd78] sm:$0xff]
    %v5395 = vld [vmem:[#allocation8 + $0xd80] sm:$0xff]
    %v5396 = vld [vmem:[#allocation8 + $0xd88] sm:$0xff]
    %v5397 = vld [vmem:[#allocation8 + $0xd90] sm:$0xff]
    %v5398 = vld [vmem:[#allocation8 + $0xd98] sm:$0xff]
    %v5399 = vld [vmem:[#allocation8 + $0xda0] sm:$0xff]
    %v5400 = vld [vmem:[#allocation8 + $0xda8] sm:$0xff]
    %v5401 = vld [vmem:[#allocation8 + $0xdb0] sm:$0xff]
    %v5402 = vld [vmem:[#allocation8 + $0xdb8] sm:$0xff]
    %v5403 = vld [vmem:[#allocation8 + $0xdc0] sm:$0xff]
    %v5404 = vld [vmem:[#allocation8 + $0xdc8] sm:$0xff]
    %v5405 = vld [vmem:[#allocation8 + $0xdd0] sm:$0xff]
    %v5406 = vld [vmem:[#allocation8 + $0xdd8] sm:$0xff]
    %v5407 = vld [vmem:[#allocation8 + $0xde0] sm:$0xff]
    %v5408 = vld [vmem:[#allocation8 + $0xde8] sm:$0xff]
    %v5409 = vld [vmem:[#allocation8 + $0xdf0] sm:$0xff]
    %v5410 = vld [vmem:[#allocation8 + $0xdf8] sm:$0xff]
    %v5411 = vld [vmem:[#allocation8 + $0xe00] sm:$0xff]
    %v5412 = vld [vmem:[#allocation8 + $0xe08] sm:$0xff]
    %v5413 = vld [vmem:[#allocation8 + $0xe10] sm:$0xff]
    %v5414 = vld [vmem:[#allocation8 + $0xe18] sm:$0xff]
    %v5415 = vld [vmem:[#allocation8 + $0xe20] sm:$0xff]
    %v5416 = vld [vmem:[#allocation8 + $0xe28] sm:$0xff]
    %v5417 = vld [vmem:[#allocation8 + $0xe30] sm:$0xff]
    %v5418 = vld [vmem:[#allocation8 + $0xe38] sm:$0xff]
    %v5419 = vld [vmem:[#allocation8 + $0xe40] sm:$0xff]
    %v5420 = vld [vmem:[#allocation8 + $0xe48] sm:$0xff]
    %v5421 = vld [vmem:[#allocation8 + $0xe50] sm:$0xff]
    %v5422 = vld [vmem:[#allocation8 + $0xe58] sm:$0xff]
    %v5423 = vld [vmem:[#allocation8 + $0xe60] sm:$0xff]
    %v5424 = vld [vmem:[#allocation8 + $0xe68] sm:$0xff]
    %v5425 = vld [vmem:[#allocation8 + $0xe70] sm:$0xff]
    %v5426 = vld [vmem:[#allocation8 + $0xe78] sm:$0xff]
    %v5427 = vld [vmem:[#allocation8 + $0xe80] sm:$0xff]
    %v5428 = vld [vmem:[#allocation8 + $0xe88] sm:$0xff]
    %v5429 = vld [vmem:[#allocation8 + $0xe90] sm:$0xff]
    %v5430 = vld [vmem:[#allocation8 + $0xe98] sm:$0xff]
    %v5431 = vld [vmem:[#allocation8 + $0xea0] sm:$0xff]
    %v5432 = vld [vmem:[#allocation8 + $0xea8] sm:$0xff]
    %v5433 = vld [vmem:[#allocation8 + $0xeb0] sm:$0xff]
    %v5434 = vld [vmem:[#allocation8 + $0xeb8] sm:$0xff]
    %v5435 = vld [vmem:[#allocation8 + $0xec0] sm:$0xff]
    %v5436 = vld [vmem:[#allocation8 + $0xec8] sm:$0xff]
    %v5437 = vld [vmem:[#allocation8 + $0xed0] sm:$0xff]
    %v5438 = vld [vmem:[#allocation8 + $0xed8] sm:$0xff]
    %v5439 = vld [vmem:[#allocation8 + $0xee0] sm:$0xff]
    %v5440 = vld [vmem:[#allocation8 + $0xee8] sm:$0xff]
    %v5441 = vld [vmem:[#allocation8 + $0xef0] sm:$0xff]
    %v5442 = vld [vmem:[#allocation8 + $0xef8] sm:$0xff]
    %v5443 = vld [vmem:[#allocation8 + $0xf00] sm:$0xff]
    %v5444 = vld [vmem:[#allocation8 + $0xf08] sm:$0xff]
    %v5445 = vld [vmem:[#allocation8 + $0xf10] sm:$0xff]
    %v5446 = vld [vmem:[#allocation8 + $0xf18] sm:$0xff]
    %v5447 = vld [vmem:[#allocation8 + $0xf20] sm:$0xff]
    %v5448 = vld [vmem:[#allocation8 + $0xf28] sm:$0xff]
    %v5449 = vld [vmem:[#allocation8 + $0xf30] sm:$0xff]
    %v5450 = vld [vmem:[#allocation8 + $0xf38] sm:$0xff]
    %v5451 = vld [vmem:[#allocation8 + $0xf40] sm:$0xff]
    %v5452 = vld [vmem:[#allocation8 + $0xf48] sm:$0xff]
    %v5453 = vld [vmem:[#allocation8 + $0xf50] sm:$0xff]
    %v5454 = vld [vmem:[#allocation8 + $0xf58] sm:$0xff]
    %v5455 = vld [vmem:[#allocation8 + $0xf60] sm:$0xff]
    %v5456 = vld [vmem:[#allocation8 + $0xf68] sm:$0xff]
    %v5457 = vld [vmem:[#allocation8 + $0xf70] sm:$0xff]
    %v5458 = vld [vmem:[#allocation8 + $0xf78] sm:$0xff]
    %v5459 = vld [vmem:[#allocation8 + $0xf80] sm:$0xff]
    %v5460 = vld [vmem:[#allocation8 + $0xf88] sm:$0xff]
    %v5461 = vld [vmem:[#allocation8 + $0xf90] sm:$0xff]
    %v5462 = vld [vmem:[#allocation8 + $0xf98] sm:$0xff]
    %v5463 = vld [vmem:[#allocation8 + $0xfa0] sm:$0xff]
    %v5464 = vld [vmem:[#allocation8 + $0xfa8] sm:$0xff]
    %v5465 = vld [vmem:[#allocation8 + $0xfb0] sm:$0xff]
    %v5466 = vld [vmem:[#allocation8 + $0xfb8] sm:$0xff]
    %v5467 = vld [vmem:[#allocation8 + $0xfc0] sm:$0xff]
    %v5468 = vld [vmem:[#allocation8 + $0xfc8] sm:$0xff]
    %v5469 = vld [vmem:[#allocation8 + $0xfd0] sm:$0xff]
    %v5470 = vld [vmem:[#allocation8 + $0xfd8] sm:$0xff]
    %v5471 = vld [vmem:[#allocation8 + $0xfe0] sm:$0xff]
    %v5472 = vld [vmem:[#allocation8 + $0xfe8] sm:$0xff]
    %v5473 = vld [vmem:[#allocation8 + $0xff0] sm:$0xff]
    %v5474 = vld [vmem:[#allocation8 + $0xff8] sm:$0xff]
    %v5476 = vlaneseq
    %v5477 = vshrl.u32 %v5476, 7
    %v5478 = vsub.s32 0, %v5477
    %v5479 = vrot.slane %v4954, %v5478
    %v5480 = vlaneseq
    %v5481 = vshrl.u32 %v5480, 7
    %v5482 = vsub.s32 1, %v5481
    %v5483 = vrot.slane %v4954, %v5482
    %v5484 = vlaneseq
    %v5485 = vshrl.u32 %v5484, 7
    %v5486 = vsub.s32 2, %v5485
    %v5487 = vrot.slane %v4954, %v5486
    %v5488 = vlaneseq
    %v5489 = vshrl.u32 %v5488, 7
    %v5490 = vsub.s32 3, %v5489
    %v5491 = vrot.slane %v4954, %v5490
    %v5492 = vlaneseq
    %v5493 = vshrl.u32 %v5492, 7
    %v5494 = vsub.s32 4, %v5493
    %v5495 = vrot.slane %v4954, %v5494
    %v5496 = vlaneseq
    %v5497 = vshrl.u32 %v5496, 7
    %v5498 = vsub.s32 5, %v5497
    %v5499 = vrot.slane %v4954, %v5498
    %v5500 = vlaneseq
    %v5501 = vshrl.u32 %v5500, 7
    %v5502 = vsub.s32 6, %v5501
    %v5503 = vrot.slane %v4954, %v5502
    %v5504 = vlaneseq
    %v5505 = vshrl.u32 %v5504, 7
    %v5506 = vsub.s32 7, %v5505
    %v5507 = vrot.slane %v4954, %v5506
    %v6028 = vunpack.c.l.b16 %v4963
    %v6029 = vunpack.c.h.b16 %v4963
    %v6030 = vunpack.c.l.b16 %v4964
    %v6031 = vunpack.c.h.b16 %v4964
    %v6032 = vunpack.c.l.b16 %v4965
    %v6033 = vunpack.c.h.b16 %v4965
    %v6034 = vunpack.c.l.b16 %v4966
    %v6035 = vunpack.c.h.b16 %v4966
    %v6036 = vunpack.c.l.b16 %v4967
    %v6037 = vunpack.c.h.b16 %v4967
    %v6038 = vunpack.c.l.b16 %v4968
    %v6039 = vunpack.c.h.b16 %v4968
    %v6040 = vunpack.c.l.b16 %v4969
    %v6041 = vunpack.c.h.b16 %v4969
    %v6042 = vunpack.c.l.b16 %v4970
    %v6043 = vunpack.c.h.b16 %v4970
    %v6044 = vunpack.c.l.b16 %v4971
    %v6045 = vunpack.c.h.b16 %v4971
    %v6046 = vunpack.c.l.b16 %v4972
    %v6047 = vunpack.c.h.b16 %v4972
    %v6048 = vunpack.c.l.b16 %v4973
    %v6049 = vunpack.c.h.b16 %v4973
    %v6050 = vunpack.c.l.b16 %v4974
    %v6051 = vunpack.c.h.b16 %v4974
    %v6052 = vunpack.c.l.b16 %v4975
    %v6053 = vunpack.c.h.b16 %v4975
    %v6054 = vunpack.c.l.b16 %v4976
    %v6055 = vunpack.c.h.b16 %v4976
    %v6056 = vunpack.c.l.b16 %v4977
    %v6057 = vunpack.c.h.b16 %v4977
    %v6058 = vunpack.c.l.b16 %v4978
    %v6059 = vunpack.c.h.b16 %v4978
    %v6060 = vunpack.c.l.b16 %v4979
    %v6061 = vunpack.c.h.b16 %v4979
    %v6062 = vunpack.c.l.b16 %v4980
    %v6063 = vunpack.c.h.b16 %v4980
    %v6064 = vunpack.c.l.b16 %v4981
    %v6065 = vunpack.c.h.b16 %v4981
    %v6066 = vunpack.c.l.b16 %v4982
    %v6067 = vunpack.c.h.b16 %v4982
    %v6068 = vunpack.c.l.b16 %v4983
    %v6069 = vunpack.c.h.b16 %v4983
    %v6070 = vunpack.c.l.b16 %v4984
    %v6071 = vunpack.c.h.b16 %v4984
    %v6072 = vunpack.c.l.b16 %v4985
    %v6073 = vunpack.c.h.b16 %v4985
    %v6074 = vunpack.c.l.b16 %v4986
    %v6075 = vunpack.c.h.b16 %v4986
    %v6076 = vunpack.c.l.b16 %v4987
    %v6077 = vunpack.c.h.b16 %v4987
    %v6078 = vunpack.c.l.b16 %v4988
    %v6079 = vunpack.c.h.b16 %v4988
    %v6080 = vunpack.c.l.b16 %v4989
    %v6081 = vunpack.c.h.b16 %v4989
    %v6082 = vunpack.c.l.b16 %v4990
    %v6083 = vunpack.c.h.b16 %v4990
    %v6084 = vunpack.c.l.b16 %v4991
    %v6085 = vunpack.c.h.b16 %v4991
    %v6086 = vunpack.c.l.b16 %v4992
    %v6087 = vunpack.c.h.b16 %v4992
    %v6088 = vunpack.c.l.b16 %v4993
    %v6089 = vunpack.c.h.b16 %v4993
    %v6090 = vunpack.c.l.b16 %v4994
    %v6091 = vunpack.c.h.b16 %v4994
    %v6092 = vunpack.c.l.b16 %v4995
    %v6093 = vunpack.c.h.b16 %v4995
    %v6094 = vunpack.c.l.b16 %v4996
    %v6095 = vunpack.c.h.b16 %v4996
    %v6096 = vunpack.c.l.b16 %v4997
    %v6097 = vunpack.c.h.b16 %v4997
    %v6098 = vunpack.c.l.b16 %v4998
    %v6099 = vunpack.c.h.b16 %v4998
    %v6100 = vunpack.c.l.b16 %v4999
    %v6101 = vunpack.c.h.b16 %v4999
    %v6102 = vunpack.c.l.b16 %v5000
    %v6103 = vunpack.c.h.b16 %v5000
    %v6104 = vunpack.c.l.b16 %v5001
    %v6105 = vunpack.c.h.b16 %v5001
    %v6106 = vunpack.c.l.b16 %v5002
    %v6107 = vunpack.c.h.b16 %v5002
    %v6108 = vunpack.c.l.b16 %v5003
    %v6109 = vunpack.c.h.b16 %v5003
    %v6110 = vunpack.c.l.b16 %v5004
    %v6111 = vunpack.c.h.b16 %v5004
    %v6112 = vunpack.c.l.b16 %v5005
    %v6113 = vunpack.c.h.b16 %v5005
    %v6114 = vunpack.c.l.b16 %v5006
    %v6115 = vunpack.c.h.b16 %v5006
    %v6116 = vunpack.c.l.b16 %v5007
    %v6117 = vunpack.c.h.b16 %v5007
    %v6118 = vunpack.c.l.b16 %v5008
    %v6119 = vunpack.c.h.b16 %v5008
    %v6120 = vunpack.c.l.b16 %v5009
    %v6121 = vunpack.c.h.b16 %v5009
    %v6122 = vunpack.c.l.b16 %v5010
    %v6123 = vunpack.c.h.b16 %v5010
    %v6124 = vunpack.c.l.b16 %v5011
    %v6125 = vunpack.c.h.b16 %v5011
    %v6126 = vunpack.c.l.b16 %v5012
    %v6127 = vunpack.c.h.b16 %v5012
    %v6128 = vunpack.c.l.b16 %v5013
    %v6129 = vunpack.c.h.b16 %v5013
    %v6130 = vunpack.c.l.b16 %v5014
    %v6131 = vunpack.c.h.b16 %v5014
    %v6132 = vunpack.c.l.b16 %v5015
    %v6133 = vunpack.c.h.b16 %v5015
    %v6134 = vunpack.c.l.b16 %v5016
    %v6135 = vunpack.c.h.b16 %v5016
    %v6136 = vunpack.c.l.b16 %v5017
    %v6137 = vunpack.c.h.b16 %v5017
    %v6138 = vunpack.c.l.b16 %v5018
    %v6139 = vunpack.c.h.b16 %v5018
    %v6140 = vunpack.c.l.b16 %v5019
    %v6141 = vunpack.c.h.b16 %v5019
    %v6142 = vunpack.c.l.b16 %v5020
    %v6143 = vunpack.c.h.b16 %v5020
    %v6144 = vunpack.c.l.b16 %v5021
    %v6145 = vunpack.c.h.b16 %v5021
    %v6146 = vunpack.c.l.b16 %v5022
    %v6147 = vunpack.c.h.b16 %v5022
    %v6148 = vunpack.c.l.b16 %v5023
    %v6149 = vunpack.c.h.b16 %v5023
    %v6150 = vunpack.c.l.b16 %v5024
    %v6151 = vunpack.c.h.b16 %v5024
    %v6152 = vunpack.c.l.b16 %v5025
    %v6153 = vunpack.c.h.b16 %v5025
    %v6154 = vunpack.c.l.b16 %v5026
    %v6155 = vunpack.c.h.b16 %v5026
    %v6156 = vunpack.c.l.b16 %v5027
    %v6157 = vunpack.c.h.b16 %v5027
    %v6158 = vunpack.c.l.b16 %v5028
    %v6159 = vunpack.c.h.b16 %v5028
    %v6160 = vunpack.c.l.b16 %v5029
    %v6161 = vunpack.c.h.b16 %v5029
    %v6162 = vunpack.c.l.b16 %v5030
    %v6163 = vunpack.c.h.b16 %v5030
    %v6164 = vunpack.c.l.b16 %v5031
    %v6165 = vunpack.c.h.b16 %v5031
    %v6166 = vunpack.c.l.b16 %v5032
    %v6167 = vunpack.c.h.b16 %v5032
    %v6168 = vunpack.c.l.b16 %v5033
    %v6169 = vunpack.c.h.b16 %v5033
    %v6170 = vunpack.c.l.b16 %v5034
    %v6171 = vunpack.c.h.b16 %v5034
    %v6172 = vunpack.c.l.b16 %v5035
    %v6173 = vunpack.c.h.b16 %v5035
    %v6174 = vunpack.c.l.b16 %v5036
    %v6175 = vunpack.c.h.b16 %v5036
    %v6176 = vunpack.c.l.b16 %v5037
    %v6177 = vunpack.c.h.b16 %v5037
    %v6178 = vunpack.c.l.b16 %v5038
    %v6179 = vunpack.c.h.b16 %v5038
    %v6180 = vunpack.c.l.b16 %v5039
    %v6181 = vunpack.c.h.b16 %v5039
    %v6182 = vunpack.c.l.b16 %v5040
    %v6183 = vunpack.c.h.b16 %v5040
    %v6184 = vunpack.c.l.b16 %v5041
    %v6185 = vunpack.c.h.b16 %v5041
    %v6186 = vunpack.c.l.b16 %v5042
    %v6187 = vunpack.c.h.b16 %v5042
    %v6188 = vunpack.c.l.b16 %v5043
    %v6189 = vunpack.c.h.b16 %v5043
    %v6190 = vunpack.c.l.b16 %v5044
    %v6191 = vunpack.c.h.b16 %v5044
    %v6192 = vunpack.c.l.b16 %v5045
    %v6193 = vunpack.c.h.b16 %v5045
    %v6194 = vunpack.c.l.b16 %v5046
    %v6195 = vunpack.c.h.b16 %v5046
    %v6196 = vunpack.c.l.b16 %v5047
    %v6197 = vunpack.c.h.b16 %v5047
    %v6198 = vunpack.c.l.b16 %v5048
    %v6199 = vunpack.c.h.b16 %v5048
    %v6200 = vunpack.c.l.b16 %v5049
    %v6201 = vunpack.c.h.b16 %v5049
    %v6202 = vunpack.c.l.b16 %v5050
    %v6203 = vunpack.c.h.b16 %v5050
    %v6204 = vunpack.c.l.b16 %v5051
    %v6205 = vunpack.c.h.b16 %v5051
    %v6206 = vunpack.c.l.b16 %v5052
    %v6207 = vunpack.c.h.b16 %v5052
    %v6208 = vunpack.c.l.b16 %v5053
    %v6209 = vunpack.c.h.b16 %v5053
    %v6210 = vunpack.c.l.b16 %v5054
    %v6211 = vunpack.c.h.b16 %v5054
    %v6212 = vunpack.c.l.b16 %v5055
    %v6213 = vunpack.c.h.b16 %v5055
    %v6214 = vunpack.c.l.b16 %v5056
    %v6215 = vunpack.c.h.b16 %v5056
    %v6216 = vunpack.c.l.b16 %v5057
    %v6217 = vunpack.c.h.b16 %v5057
    %v6218 = vunpack.c.l.b16 %v5058
    %v6219 = vunpack.c.h.b16 %v5058
    %v6220 = vunpack.c.l.b16 %v5059
    %v6221 = vunpack.c.h.b16 %v5059
    %v6222 = vunpack.c.l.b16 %v5060
    %v6223 = vunpack.c.h.b16 %v5060
    %v6224 = vunpack.c.l.b16 %v5061
    %v6225 = vunpack.c.h.b16 %v5061
    %v6226 = vunpack.c.l.b16 %v5062
    %v6227 = vunpack.c.h.b16 %v5062
    %v6228 = vunpack.c.l.b16 %v5063
    %v6229 = vunpack.c.h.b16 %v5063
    %v6230 = vunpack.c.l.b16 %v5064
    %v6231 = vunpack.c.h.b16 %v5064
    %v6232 = vunpack.c.l.b16 %v5065
    %v6233 = vunpack.c.h.b16 %v5065
    %v6234 = vunpack.c.l.b16 %v5066
    %v6235 = vunpack.c.h.b16 %v5066
    %v6236 = vunpack.c.l.b16 %v5067
    %v6237 = vunpack.c.h.b16 %v5067
    %v6238 = vunpack.c.l.b16 %v5068
    %v6239 = vunpack.c.h.b16 %v5068
    %v6240 = vunpack.c.l.b16 %v5069
    %v6241 = vunpack.c.h.b16 %v5069
    %v6242 = vunpack.c.l.b16 %v5070
    %v6243 = vunpack.c.h.b16 %v5070
    %v6244 = vunpack.c.l.b16 %v5071
    %v6245 = vunpack.c.h.b16 %v5071
    %v6246 = vunpack.c.l.b16 %v5072
    %v6247 = vunpack.c.h.b16 %v5072
    %v6248 = vunpack.c.l.b16 %v5073
    %v6249 = vunpack.c.h.b16 %v5073
    %v6250 = vunpack.c.l.b16 %v5074
    %v6251 = vunpack.c.h.b16 %v5074
    %v6252 = vunpack.c.l.b16 %v5075
    %v6253 = vunpack.c.h.b16 %v5075
    %v6254 = vunpack.c.l.b16 %v5076
    %v6255 = vunpack.c.h.b16 %v5076
    %v6256 = vunpack.c.l.b16 %v5077
    %v6257 = vunpack.c.h.b16 %v5077
    %v6258 = vunpack.c.l.b16 %v5078
    %v6259 = vunpack.c.h.b16 %v5078
    %v6260 = vunpack.c.l.b16 %v5079
    %v6261 = vunpack.c.h.b16 %v5079
    %v6262 = vunpack.c.l.b16 %v5080
    %v6263 = vunpack.c.h.b16 %v5080
    %v6264 = vunpack.c.l.b16 %v5081
    %v6265 = vunpack.c.h.b16 %v5081
    %v6266 = vunpack.c.l.b16 %v5082
    %v6267 = vunpack.c.h.b16 %v5082
    %v6268 = vunpack.c.l.b16 %v5083
    %v6269 = vunpack.c.h.b16 %v5083
    %v6270 = vunpack.c.l.b16 %v5084
    %v6271 = vunpack.c.h.b16 %v5084
    %v6272 = vunpack.c.l.b16 %v5085
    %v6273 = vunpack.c.h.b16 %v5085
    %v6274 = vunpack.c.l.b16 %v5086
    %v6275 = vunpack.c.h.b16 %v5086
    %v6276 = vunpack.c.l.b16 %v5087
    %v6277 = vunpack.c.h.b16 %v5087
    %v6278 = vunpack.c.l.b16 %v5088
    %v6279 = vunpack.c.h.b16 %v5088
    %v6280 = vunpack.c.l.b16 %v5089
    %v6281 = vunpack.c.h.b16 %v5089
    %v6282 = vunpack.c.l.b16 %v5090
    %v6283 = vunpack.c.h.b16 %v5090
    %v6284 = vunpack.c.l.b16 %v5091
    %v6285 = vunpack.c.h.b16 %v5091
    %v6286 = vunpack.c.l.b16 %v5092
    %v6287 = vunpack.c.h.b16 %v5092
    %v6288 = vunpack.c.l.b16 %v5093
    %v6289 = vunpack.c.h.b16 %v5093
    %v6290 = vunpack.c.l.b16 %v5094
    %v6291 = vunpack.c.h.b16 %v5094
    %v6292 = vunpack.c.l.b16 %v5095
    %v6293 = vunpack.c.h.b16 %v5095
    %v6294 = vunpack.c.l.b16 %v5096
    %v6295 = vunpack.c.h.b16 %v5096
    %v6296 = vunpack.c.l.b16 %v5097
    %v6297 = vunpack.c.h.b16 %v5097
    %v6298 = vunpack.c.l.b16 %v5098
    %v6299 = vunpack.c.h.b16 %v5098
    %v6300 = vunpack.c.l.b16 %v5099
    %v6301 = vunpack.c.h.b16 %v5099
    %v6302 = vunpack.c.l.b16 %v5100
    %v6303 = vunpack.c.h.b16 %v5100
    %v6304 = vunpack.c.l.b16 %v5101
    %v6305 = vunpack.c.h.b16 %v5101
    %v6306 = vunpack.c.l.b16 %v5102
    %v6307 = vunpack.c.h.b16 %v5102
    %v6308 = vunpack.c.l.b16 %v5103
    %v6309 = vunpack.c.h.b16 %v5103
    %v6310 = vunpack.c.l.b16 %v5104
    %v6311 = vunpack.c.h.b16 %v5104
    %v6312 = vunpack.c.l.b16 %v5105
    %v6313 = vunpack.c.h.b16 %v5105
    %v6314 = vunpack.c.l.b16 %v5106
    %v6315 = vunpack.c.h.b16 %v5106
    %v6316 = vunpack.c.l.b16 %v5107
    %v6317 = vunpack.c.h.b16 %v5107
    %v6318 = vunpack.c.l.b16 %v5108
    %v6319 = vunpack.c.h.b16 %v5108
    %v6320 = vunpack.c.l.b16 %v5109
    %v6321 = vunpack.c.h.b16 %v5109
    %v6322 = vunpack.c.l.b16 %v5110
    %v6323 = vunpack.c.h.b16 %v5110
    %v6324 = vunpack.c.l.b16 %v5111
    %v6325 = vunpack.c.h.b16 %v5111
    %v6326 = vunpack.c.l.b16 %v5112
    %v6327 = vunpack.c.h.b16 %v5112
    %v6328 = vunpack.c.l.b16 %v5113
    %v6329 = vunpack.c.h.b16 %v5113
    %v6330 = vunpack.c.l.b16 %v5114
    %v6331 = vunpack.c.h.b16 %v5114
    %v6332 = vunpack.c.l.b16 %v5115
    %v6333 = vunpack.c.h.b16 %v5115
    %v6334 = vunpack.c.l.b16 %v5116
    %v6335 = vunpack.c.h.b16 %v5116
    %v6336 = vunpack.c.l.b16 %v5117
    %v6337 = vunpack.c.h.b16 %v5117
    %v6338 = vunpack.c.l.b16 %v5118
    %v6339 = vunpack.c.h.b16 %v5118
    %v6340 = vunpack.c.l.b16 %v5119
    %v6341 = vunpack.c.h.b16 %v5119
    %v6342 = vunpack.c.l.b16 %v5120
    %v6343 = vunpack.c.h.b16 %v5120
    %v6344 = vunpack.c.l.b16 %v5121
    %v6345 = vunpack.c.h.b16 %v5121
    %v6346 = vunpack.c.l.b16 %v5122
    %v6347 = vunpack.c.h.b16 %v5122
    %v6348 = vunpack.c.l.b16 %v5123
    %v6349 = vunpack.c.h.b16 %v5123
    %v6350 = vunpack.c.l.b16 %v5124
    %v6351 = vunpack.c.h.b16 %v5124
    %v6352 = vunpack.c.l.b16 %v5125
    %v6353 = vunpack.c.h.b16 %v5125
    %v6354 = vunpack.c.l.b16 %v5126
    %v6355 = vunpack.c.h.b16 %v5126
    %v6356 = vunpack.c.l.b16 %v5127
    %v6357 = vunpack.c.h.b16 %v5127
    %v6358 = vunpack.c.l.b16 %v5128
    %v6359 = vunpack.c.h.b16 %v5128
    %v6360 = vunpack.c.l.b16 %v5129
    %v6361 = vunpack.c.h.b16 %v5129
    %v6362 = vunpack.c.l.b16 %v5130
    %v6363 = vunpack.c.h.b16 %v5130
    %v6364 = vunpack.c.l.b16 %v5131
    %v6365 = vunpack.c.h.b16 %v5131
    %v6366 = vunpack.c.l.b16 %v5132
    %v6367 = vunpack.c.h.b16 %v5132
    %v6368 = vunpack.c.l.b16 %v5133
    %v6369 = vunpack.c.h.b16 %v5133
    %v6370 = vunpack.c.l.b16 %v5134
    %v6371 = vunpack.c.h.b16 %v5134
    %v6372 = vunpack.c.l.b16 %v5135
    %v6373 = vunpack.c.h.b16 %v5135
    %v6374 = vunpack.c.l.b16 %v5136
    %v6375 = vunpack.c.h.b16 %v5136
    %v6376 = vunpack.c.l.b16 %v5137
    %v6377 = vunpack.c.h.b16 %v5137
    %v6378 = vunpack.c.l.b16 %v5138
    %v6379 = vunpack.c.h.b16 %v5138
    %v6380 = vunpack.c.l.b16 %v5139
    %v6381 = vunpack.c.h.b16 %v5139
    %v6382 = vunpack.c.l.b16 %v5140
    %v6383 = vunpack.c.h.b16 %v5140
    %v6384 = vunpack.c.l.b16 %v5141
    %v6385 = vunpack.c.h.b16 %v5141
    %v6386 = vunpack.c.l.b16 %v5142
    %v6387 = vunpack.c.h.b16 %v5142
    %v6388 = vunpack.c.l.b16 %v5143
    %v6389 = vunpack.c.h.b16 %v5143
    %v6390 = vunpack.c.l.b16 %v5144
    %v6391 = vunpack.c.h.b16 %v5144
    %v6392 = vunpack.c.l.b16 %v5145
    %v6393 = vunpack.c.h.b16 %v5145
    %v6394 = vunpack.c.l.b16 %v5146
    %v6395 = vunpack.c.h.b16 %v5146
    %v6396 = vunpack.c.l.b16 %v5147
    %v6397 = vunpack.c.h.b16 %v5147
    %v6398 = vunpack.c.l.b16 %v5148
    %v6399 = vunpack.c.h.b16 %v5148
    %v6400 = vunpack.c.l.b16 %v5149
    %v6401 = vunpack.c.h.b16 %v5149
    %v6402 = vunpack.c.l.b16 %v5150
    %v6403 = vunpack.c.h.b16 %v5150
    %v6404 = vunpack.c.l.b16 %v5151
    %v6405 = vunpack.c.h.b16 %v5151
    %v6406 = vunpack.c.l.b16 %v5152
    %v6407 = vunpack.c.h.b16 %v5152
    %v6408 = vunpack.c.l.b16 %v5153
    %v6409 = vunpack.c.h.b16 %v5153
    %v6410 = vunpack.c.l.b16 %v5154
    %v6411 = vunpack.c.h.b16 %v5154
    %v6412 = vunpack.c.l.b16 %v5155
    %v6413 = vunpack.c.h.b16 %v5155
    %v6414 = vunpack.c.l.b16 %v5156
    %v6415 = vunpack.c.h.b16 %v5156
    %v6416 = vunpack.c.l.b16 %v5157
    %v6417 = vunpack.c.h.b16 %v5157
    %v6418 = vunpack.c.l.b16 %v5158
    %v6419 = vunpack.c.h.b16 %v5158
    %v6420 = vunpack.c.l.b16 %v5159
    %v6421 = vunpack.c.h.b16 %v5159
    %v6422 = vunpack.c.l.b16 %v5160
    %v6423 = vunpack.c.h.b16 %v5160
    %v6424 = vunpack.c.l.b16 %v5161
    %v6425 = vunpack.c.h.b16 %v5161
    %v6426 = vunpack.c.l.b16 %v5162
    %v6427 = vunpack.c.h.b16 %v5162
    %v6428 = vunpack.c.l.b16 %v5163
    %v6429 = vunpack.c.h.b16 %v5163
    %v6430 = vunpack.c.l.b16 %v5164
    %v6431 = vunpack.c.h.b16 %v5164
    %v6432 = vunpack.c.l.b16 %v5165
    %v6433 = vunpack.c.h.b16 %v5165
    %v6434 = vunpack.c.l.b16 %v5166
    %v6435 = vunpack.c.h.b16 %v5166
    %v6436 = vunpack.c.l.b16 %v5167
    %v6437 = vunpack.c.h.b16 %v5167
    %v6438 = vunpack.c.l.b16 %v5168
    %v6439 = vunpack.c.h.b16 %v5168
    %v6440 = vunpack.c.l.b16 %v5169
    %v6441 = vunpack.c.h.b16 %v5169
    %v6442 = vunpack.c.l.b16 %v5170
    %v6443 = vunpack.c.h.b16 %v5170
    %v6444 = vunpack.c.l.b16 %v5171
    %v6445 = vunpack.c.h.b16 %v5171
    %v6446 = vunpack.c.l.b16 %v5172
    %v6447 = vunpack.c.h.b16 %v5172
    %v6448 = vunpack.c.l.b16 %v5173
    %v6449 = vunpack.c.h.b16 %v5173
    %v6450 = vunpack.c.l.b16 %v5174
    %v6451 = vunpack.c.h.b16 %v5174
    %v6452 = vunpack.c.l.b16 %v5175
    %v6453 = vunpack.c.h.b16 %v5175
    %v6454 = vunpack.c.l.b16 %v5176
    %v6455 = vunpack.c.h.b16 %v5176
    %v6456 = vunpack.c.l.b16 %v5177
    %v6457 = vunpack.c.h.b16 %v5177
    %v6458 = vunpack.c.l.b16 %v5178
    %v6459 = vunpack.c.h.b16 %v5178
    %v6460 = vunpack.c.l.b16 %v5179
    %v6461 = vunpack.c.h.b16 %v5179
    %v6462 = vunpack.c.l.b16 %v5180
    %v6463 = vunpack.c.h.b16 %v5180
    %v6464 = vunpack.c.l.b16 %v5181
    %v6465 = vunpack.c.h.b16 %v5181
    %v6466 = vunpack.c.l.b16 %v5182
    %v6467 = vunpack.c.h.b16 %v5182
    %v6468 = vunpack.c.l.b16 %v5183
    %v6469 = vunpack.c.h.b16 %v5183
    %v6470 = vunpack.c.l.b16 %v5184
    %v6471 = vunpack.c.h.b16 %v5184
    %v6472 = vunpack.c.l.b16 %v5185
    %v6473 = vunpack.c.h.b16 %v5185
    %v6474 = vunpack.c.l.b16 %v5186
    %v6475 = vunpack.c.h.b16 %v5186
    %v6476 = vunpack.c.l.b16 %v5187
    %v6477 = vunpack.c.h.b16 %v5187
    %v6478 = vunpack.c.l.b16 %v5188
    %v6479 = vunpack.c.h.b16 %v5188
    %v6480 = vunpack.c.l.b16 %v5189
    %v6481 = vunpack.c.h.b16 %v5189
    %v6482 = vunpack.c.l.b16 %v5190
    %v6483 = vunpack.c.h.b16 %v5190
    %v6484 = vunpack.c.l.b16 %v5191
    %v6485 = vunpack.c.h.b16 %v5191
    %v6486 = vunpack.c.l.b16 %v5192
    %v6487 = vunpack.c.h.b16 %v5192
    %v6488 = vunpack.c.l.b16 %v5193
    %v6489 = vunpack.c.h.b16 %v5193
    %v6490 = vunpack.c.l.b16 %v5194
    %v6491 = vunpack.c.h.b16 %v5194
    %v6492 = vunpack.c.l.b16 %v5195
    %v6493 = vunpack.c.h.b16 %v5195
    %v6494 = vunpack.c.l.b16 %v5196
    %v6495 = vunpack.c.h.b16 %v5196
    %v6496 = vunpack.c.l.b16 %v5197
    %v6497 = vunpack.c.h.b16 %v5197
    %v6498 = vunpack.c.l.b16 %v5198
    %v6499 = vunpack.c.h.b16 %v5198
    %v6500 = vunpack.c.l.b16 %v5199
    %v6501 = vunpack.c.h.b16 %v5199
    %v6502 = vunpack.c.l.b16 %v5200
    %v6503 = vunpack.c.h.b16 %v5200
    %v6504 = vunpack.c.l.b16 %v5201
    %v6505 = vunpack.c.h.b16 %v5201
    %v6506 = vunpack.c.l.b16 %v5202
    %v6507 = vunpack.c.h.b16 %v5202
    %v6508 = vunpack.c.l.b16 %v5203
    %v6509 = vunpack.c.h.b16 %v5203
    %v6510 = vunpack.c.l.b16 %v5204
    %v6511 = vunpack.c.h.b16 %v5204
    %v6512 = vunpack.c.l.b16 %v5205
    %v6513 = vunpack.c.h.b16 %v5205
    %v6514 = vunpack.c.l.b16 %v5206
    %v6515 = vunpack.c.h.b16 %v5206
    %v6516 = vunpack.c.l.b16 %v5207
    %v6517 = vunpack.c.h.b16 %v5207
    %v6518 = vunpack.c.l.b16 %v5208
    %v6519 = vunpack.c.h.b16 %v5208
    %v6520 = vunpack.c.l.b16 %v5209
    %v6521 = vunpack.c.h.b16 %v5209
    %v6522 = vunpack.c.l.b16 %v5210
    %v6523 = vunpack.c.h.b16 %v5210
    %v6524 = vunpack.c.l.b16 %v5211
    %v6525 = vunpack.c.h.b16 %v5211
    %v6526 = vunpack.c.l.b16 %v5212
    %v6527 = vunpack.c.h.b16 %v5212
    %v6528 = vunpack.c.l.b16 %v5213
    %v6529 = vunpack.c.h.b16 %v5213
    %v6530 = vunpack.c.l.b16 %v5214
    %v6531 = vunpack.c.h.b16 %v5214
    %v6532 = vunpack.c.l.b16 %v5215
    %v6533 = vunpack.c.h.b16 %v5215
    %v6534 = vunpack.c.l.b16 %v5216
    %v6535 = vunpack.c.h.b16 %v5216
    %v6536 = vunpack.c.l.b16 %v5217
    %v6537 = vunpack.c.h.b16 %v5217
    %v6538 = vunpack.c.l.b16 %v5218
    %v6539 = vunpack.c.h.b16 %v5218
    %v6540 = vunpack.c.l.b16 %v5219
    %v6541 = vunpack.c.h.b16 %v5219
    %v6542 = vunpack.c.l.b16 %v5220
    %v6543 = vunpack.c.h.b16 %v5220
    %v6544 = vunpack.c.l.b16 %v5221
    %v6545 = vunpack.c.h.b16 %v5221
    %v6546 = vunpack.c.l.b16 %v5222
    %v6547 = vunpack.c.h.b16 %v5222
    %v6548 = vunpack.c.l.b16 %v5223
    %v6549 = vunpack.c.h.b16 %v5223
    %v6550 = vunpack.c.l.b16 %v5224
    %v6551 = vunpack.c.h.b16 %v5224
    %v6552 = vunpack.c.l.b16 %v5225
    %v6553 = vunpack.c.h.b16 %v5225
    %v6554 = vunpack.c.l.b16 %v5226
    %v6555 = vunpack.c.h.b16 %v5226
    %v6556 = vunpack.c.l.b16 %v5227
    %v6557 = vunpack.c.h.b16 %v5227
    %v6558 = vunpack.c.l.b16 %v5228
    %v6559 = vunpack.c.h.b16 %v5228
    %v6560 = vunpack.c.l.b16 %v5229
    %v6561 = vunpack.c.h.b16 %v5229
    %v6562 = vunpack.c.l.b16 %v5230
    %v6563 = vunpack.c.h.b16 %v5230
    %v6564 = vunpack.c.l.b16 %v5231
    %v6565 = vunpack.c.h.b16 %v5231
    %v6566 = vunpack.c.l.b16 %v5232
    %v6567 = vunpack.c.h.b16 %v5232
    %v6568 = vunpack.c.l.b16 %v5233
    %v6569 = vunpack.c.h.b16 %v5233
    %v6570 = vunpack.c.l.b16 %v5234
    %v6571 = vunpack.c.h.b16 %v5234
    %v6572 = vunpack.c.l.b16 %v5235
    %v6573 = vunpack.c.h.b16 %v5235
    %v6574 = vunpack.c.l.b16 %v5236
    %v6575 = vunpack.c.h.b16 %v5236
    %v6576 = vunpack.c.l.b16 %v5237
    %v6577 = vunpack.c.h.b16 %v5237
    %v6578 = vunpack.c.l.b16 %v5238
    %v6579 = vunpack.c.h.b16 %v5238
    %v6580 = vunpack.c.l.b16 %v5239
    %v6581 = vunpack.c.h.b16 %v5239
    %v6582 = vunpack.c.l.b16 %v5240
    %v6583 = vunpack.c.h.b16 %v5240
    %v6584 = vunpack.c.l.b16 %v5241
    %v6585 = vunpack.c.h.b16 %v5241
    %v6586 = vunpack.c.l.b16 %v5242
    %v6587 = vunpack.c.h.b16 %v5242
    %v6588 = vunpack.c.l.b16 %v5243
    %v6589 = vunpack.c.h.b16 %v5243
    %v6590 = vunpack.c.l.b16 %v5244
    %v6591 = vunpack.c.h.b16 %v5244
    %v6592 = vunpack.c.l.b16 %v5245
    %v6593 = vunpack.c.h.b16 %v5245
    %v6594 = vunpack.c.l.b16 %v5246
    %v6595 = vunpack.c.h.b16 %v5246
    %v6596 = vunpack.c.l.b16 %v5247
    %v6597 = vunpack.c.h.b16 %v5247
    %v6598 = vunpack.c.l.b16 %v5248
    %v6599 = vunpack.c.h.b16 %v5248
    %v6600 = vunpack.c.l.b16 %v5249
    %v6601 = vunpack.c.h.b16 %v5249
    %v6602 = vunpack.c.l.b16 %v5250
    %v6603 = vunpack.c.h.b16 %v5250
    %v6604 = vunpack.c.l.b16 %v5251
    %v6605 = vunpack.c.h.b16 %v5251
    %v6606 = vunpack.c.l.b16 %v5252
    %v6607 = vunpack.c.h.b16 %v5252
    %v6608 = vunpack.c.l.b16 %v5253
    %v6609 = vunpack.c.h.b16 %v5253
    %v6610 = vunpack.c.l.b16 %v5254
    %v6611 = vunpack.c.h.b16 %v5254
    %v6612 = vunpack.c.l.b16 %v5255
    %v6613 = vunpack.c.h.b16 %v5255
    %v6614 = vunpack.c.l.b16 %v5256
    %v6615 = vunpack.c.h.b16 %v5256
    %v6616 = vunpack.c.l.b16 %v5257
    %v6617 = vunpack.c.h.b16 %v5257
    %v6618 = vunpack.c.l.b16 %v5258
    %v6619 = vunpack.c.h.b16 %v5258
    %v6620 = vunpack.c.l.b16 %v5259
    %v6621 = vunpack.c.h.b16 %v5259
    %v6622 = vunpack.c.l.b16 %v5260
    %v6623 = vunpack.c.h.b16 %v5260
    %v6624 = vunpack.c.l.b16 %v5261
    %v6625 = vunpack.c.h.b16 %v5261
    %v6626 = vunpack.c.l.b16 %v5262
    %v6627 = vunpack.c.h.b16 %v5262
    %v6628 = vunpack.c.l.b16 %v5263
    %v6629 = vunpack.c.h.b16 %v5263
    %v6630 = vunpack.c.l.b16 %v5264
    %v6631 = vunpack.c.h.b16 %v5264
    %v6632 = vunpack.c.l.b16 %v5265
    %v6633 = vunpack.c.h.b16 %v5265
    %v6634 = vunpack.c.l.b16 %v5266
    %v6635 = vunpack.c.h.b16 %v5266
    %v6636 = vunpack.c.l.b16 %v5267
    %v6637 = vunpack.c.h.b16 %v5267
    %v6638 = vunpack.c.l.b16 %v5268
    %v6639 = vunpack.c.h.b16 %v5268
    %v6640 = vunpack.c.l.b16 %v5269
    %v6641 = vunpack.c.h.b16 %v5269
    %v6642 = vunpack.c.l.b16 %v5270
    %v6643 = vunpack.c.h.b16 %v5270
    %v6644 = vunpack.c.l.b16 %v5271
    %v6645 = vunpack.c.h.b16 %v5271
    %v6646 = vunpack.c.l.b16 %v5272
    %v6647 = vunpack.c.h.b16 %v5272
    %v6648 = vunpack.c.l.b16 %v5273
    %v6649 = vunpack.c.h.b16 %v5273
    %v6650 = vunpack.c.l.b16 %v5274
    %v6651 = vunpack.c.h.b16 %v5274
    %v6652 = vunpack.c.l.b16 %v5275
    %v6653 = vunpack.c.h.b16 %v5275
    %v6654 = vunpack.c.l.b16 %v5276
    %v6655 = vunpack.c.h.b16 %v5276
    %v6656 = vunpack.c.l.b16 %v5277
    %v6657 = vunpack.c.h.b16 %v5277
    %v6658 = vunpack.c.l.b16 %v5278
    %v6659 = vunpack.c.h.b16 %v5278
    %v6660 = vunpack.c.l.b16 %v5279
    %v6661 = vunpack.c.h.b16 %v5279
    %v6662 = vunpack.c.l.b16 %v5280
    %v6663 = vunpack.c.h.b16 %v5280
    %v6664 = vunpack.c.l.b16 %v5281
    %v6665 = vunpack.c.h.b16 %v5281
    %v6666 = vunpack.c.l.b16 %v5282
    %v6667 = vunpack.c.h.b16 %v5282
    %v6668 = vunpack.c.l.b16 %v5283
    %v6669 = vunpack.c.h.b16 %v5283
    %v6670 = vunpack.c.l.b16 %v5284
    %v6671 = vunpack.c.h.b16 %v5284
    %v6672 = vunpack.c.l.b16 %v5285
    %v6673 = vunpack.c.h.b16 %v5285
    %v6674 = vunpack.c.l.b16 %v5286
    %v6675 = vunpack.c.h.b16 %v5286
    %v6676 = vunpack.c.l.b16 %v5287
    %v6677 = vunpack.c.h.b16 %v5287
    %v6678 = vunpack.c.l.b16 %v5288
    %v6679 = vunpack.c.h.b16 %v5288
    %v6680 = vunpack.c.l.b16 %v5289
    %v6681 = vunpack.c.h.b16 %v5289
    %v6682 = vunpack.c.l.b16 %v5290
    %v6683 = vunpack.c.h.b16 %v5290
    %v6684 = vunpack.c.l.b16 %v5291
    %v6685 = vunpack.c.h.b16 %v5291
    %v6686 = vunpack.c.l.b16 %v5292
    %v6687 = vunpack.c.h.b16 %v5292
    %v6688 = vunpack.c.l.b16 %v5293
    %v6689 = vunpack.c.h.b16 %v5293
    %v6690 = vunpack.c.l.b16 %v5294
    %v6691 = vunpack.c.h.b16 %v5294
    %v6692 = vunpack.c.l.b16 %v5295
    %v6693 = vunpack.c.h.b16 %v5295
    %v6694 = vunpack.c.l.b16 %v5296
    %v6695 = vunpack.c.h.b16 %v5296
    %v6696 = vunpack.c.l.b16 %v5297
    %v6697 = vunpack.c.h.b16 %v5297
    %v6698 = vunpack.c.l.b16 %v5298
    %v6699 = vunpack.c.h.b16 %v5298
    %v6700 = vunpack.c.l.b16 %v5299
    %v6701 = vunpack.c.h.b16 %v5299
    %v6702 = vunpack.c.l.b16 %v5300
    %v6703 = vunpack.c.h.b16 %v5300
    %v6704 = vunpack.c.l.b16 %v5301
    %v6705 = vunpack.c.h.b16 %v5301
    %v6706 = vunpack.c.l.b16 %v5302
    %v6707 = vunpack.c.h.b16 %v5302
    %v6708 = vunpack.c.l.b16 %v5303
    %v6709 = vunpack.c.h.b16 %v5303
    %v6710 = vunpack.c.l.b16 %v5304
    %v6711 = vunpack.c.h.b16 %v5304
    %v6712 = vunpack.c.l.b16 %v5305
    %v6713 = vunpack.c.h.b16 %v5305
    %v6714 = vunpack.c.l.b16 %v5306
    %v6715 = vunpack.c.h.b16 %v5306
    %v6716 = vunpack.c.l.b16 %v5307
    %v6717 = vunpack.c.h.b16 %v5307
    %v6718 = vunpack.c.l.b16 %v5308
    %v6719 = vunpack.c.h.b16 %v5308
    %v6720 = vunpack.c.l.b16 %v5309
    %v6721 = vunpack.c.h.b16 %v5309
    %v6722 = vunpack.c.l.b16 %v5310
    %v6723 = vunpack.c.h.b16 %v5310
    %v6724 = vunpack.c.l.b16 %v5311
    %v6725 = vunpack.c.h.b16 %v5311
    %v6726 = vunpack.c.l.b16 %v5312
    %v6727 = vunpack.c.h.b16 %v5312
    %v6728 = vunpack.c.l.b16 %v5313
    %v6729 = vunpack.c.h.b16 %v5313
    %v6730 = vunpack.c.l.b16 %v5314
    %v6731 = vunpack.c.h.b16 %v5314
    %v6732 = vunpack.c.l.b16 %v5315
    %v6733 = vunpack.c.h.b16 %v5315
    %v6734 = vunpack.c.l.b16 %v5316
    %v6735 = vunpack.c.h.b16 %v5316
    %v6736 = vunpack.c.l.b16 %v5317
    %v6737 = vunpack.c.h.b16 %v5317
    %v6738 = vunpack.c.l.b16 %v5318
    %v6739 = vunpack.c.h.b16 %v5318
    %v6740 = vunpack.c.l.b16 %v5319
    %v6741 = vunpack.c.h.b16 %v5319
    %v6742 = vunpack.c.l.b16 %v5320
    %v6743 = vunpack.c.h.b16 %v5320
    %v6744 = vunpack.c.l.b16 %v5321
    %v6745 = vunpack.c.h.b16 %v5321
    %v6746 = vunpack.c.l.b16 %v5322
    %v6747 = vunpack.c.h.b16 %v5322
    %v6748 = vunpack.c.l.b16 %v5323
    %v6749 = vunpack.c.h.b16 %v5323
    %v6750 = vunpack.c.l.b16 %v5324
    %v6751 = vunpack.c.h.b16 %v5324
    %v6752 = vunpack.c.l.b16 %v5325
    %v6753 = vunpack.c.h.b16 %v5325
    %v6754 = vunpack.c.l.b16 %v5326
    %v6755 = vunpack.c.h.b16 %v5326
    %v6756 = vunpack.c.l.b16 %v5327
    %v6757 = vunpack.c.h.b16 %v5327
    %v6758 = vunpack.c.l.b16 %v5328
    %v6759 = vunpack.c.h.b16 %v5328
    %v6760 = vunpack.c.l.b16 %v5329
    %v6761 = vunpack.c.h.b16 %v5329
    %v6762 = vunpack.c.l.b16 %v5330
    %v6763 = vunpack.c.h.b16 %v5330
    %v6764 = vunpack.c.l.b16 %v5331
    %v6765 = vunpack.c.h.b16 %v5331
    %v6766 = vunpack.c.l.b16 %v5332
    %v6767 = vunpack.c.h.b16 %v5332
    %v6768 = vunpack.c.l.b16 %v5333
    %v6769 = vunpack.c.h.b16 %v5333
    %v6770 = vunpack.c.l.b16 %v5334
    %v6771 = vunpack.c.h.b16 %v5334
    %v6772 = vunpack.c.l.b16 %v5335
    %v6773 = vunpack.c.h.b16 %v5335
    %v6774 = vunpack.c.l.b16 %v5336
    %v6775 = vunpack.c.h.b16 %v5336
    %v6776 = vunpack.c.l.b16 %v5337
    %v6777 = vunpack.c.h.b16 %v5337
    %v6778 = vunpack.c.l.b16 %v5338
    %v6779 = vunpack.c.h.b16 %v5338
    %v6780 = vunpack.c.l.b16 %v5339
    %v6781 = vunpack.c.h.b16 %v5339
    %v6782 = vunpack.c.l.b16 %v5340
    %v6783 = vunpack.c.h.b16 %v5340
    %v6784 = vunpack.c.l.b16 %v5341
    %v6785 = vunpack.c.h.b16 %v5341
    %v6786 = vunpack.c.l.b16 %v5342
    %v6787 = vunpack.c.h.b16 %v5342
    %v6788 = vunpack.c.l.b16 %v5343
    %v6789 = vunpack.c.h.b16 %v5343
    %v6790 = vunpack.c.l.b16 %v5344
    %v6791 = vunpack.c.h.b16 %v5344
    %v6792 = vunpack.c.l.b16 %v5345
    %v6793 = vunpack.c.h.b16 %v5345
    %v6794 = vunpack.c.l.b16 %v5346
    %v6795 = vunpack.c.h.b16 %v5346
    %v6796 = vunpack.c.l.b16 %v5347
    %v6797 = vunpack.c.h.b16 %v5347
    %v6798 = vunpack.c.l.b16 %v5348
    %v6799 = vunpack.c.h.b16 %v5348
    %v6800 = vunpack.c.l.b16 %v5349
    %v6801 = vunpack.c.h.b16 %v5349
    %v6802 = vunpack.c.l.b16 %v5350
    %v6803 = vunpack.c.h.b16 %v5350
    %v6804 = vunpack.c.l.b16 %v5351
    %v6805 = vunpack.c.h.b16 %v5351
    %v6806 = vunpack.c.l.b16 %v5352
    %v6807 = vunpack.c.h.b16 %v5352
    %v6808 = vunpack.c.l.b16 %v5353
    %v6809 = vunpack.c.h.b16 %v5353
    %v6810 = vunpack.c.l.b16 %v5354
    %v6811 = vunpack.c.h.b16 %v5354
    %v6812 = vunpack.c.l.b16 %v5355
    %v6813 = vunpack.c.h.b16 %v5355
    %v6814 = vunpack.c.l.b16 %v5356
    %v6815 = vunpack.c.h.b16 %v5356
    %v6816 = vunpack.c.l.b16 %v5357
    %v6817 = vunpack.c.h.b16 %v5357
    %v6818 = vunpack.c.l.b16 %v5358
    %v6819 = vunpack.c.h.b16 %v5358
    %v6820 = vunpack.c.l.b16 %v5359
    %v6821 = vunpack.c.h.b16 %v5359
    %v6822 = vunpack.c.l.b16 %v5360
    %v6823 = vunpack.c.h.b16 %v5360
    %v6824 = vunpack.c.l.b16 %v5361
    %v6825 = vunpack.c.h.b16 %v5361
    %v6826 = vunpack.c.l.b16 %v5362
    %v6827 = vunpack.c.h.b16 %v5362
    %v6828 = vunpack.c.l.b16 %v5363
    %v6829 = vunpack.c.h.b16 %v5363
    %v6830 = vunpack.c.l.b16 %v5364
    %v6831 = vunpack.c.h.b16 %v5364
    %v6832 = vunpack.c.l.b16 %v5365
    %v6833 = vunpack.c.h.b16 %v5365
    %v6834 = vunpack.c.l.b16 %v5366
    %v6835 = vunpack.c.h.b16 %v5366
    %v6836 = vunpack.c.l.b16 %v5367
    %v6837 = vunpack.c.h.b16 %v5367
    %v6838 = vunpack.c.l.b16 %v5368
    %v6839 = vunpack.c.h.b16 %v5368
    %v6840 = vunpack.c.l.b16 %v5369
    %v6841 = vunpack.c.h.b16 %v5369
    %v6842 = vunpack.c.l.b16 %v5370
    %v6843 = vunpack.c.h.b16 %v5370
    %v6844 = vunpack.c.l.b16 %v5371
    %v6845 = vunpack.c.h.b16 %v5371
    %v6846 = vunpack.c.l.b16 %v5372
    %v6847 = vunpack.c.h.b16 %v5372
    %v6848 = vunpack.c.l.b16 %v5373
    %v6849 = vunpack.c.h.b16 %v5373
    %v6850 = vunpack.c.l.b16 %v5374
    %v6851 = vunpack.c.h.b16 %v5374
    %v6852 = vunpack.c.l.b16 %v5375
    %v6853 = vunpack.c.h.b16 %v5375
    %v6854 = vunpack.c.l.b16 %v5376
    %v6855 = vunpack.c.h.b16 %v5376
    %v6856 = vunpack.c.l.b16 %v5377
    %v6857 = vunpack.c.h.b16 %v5377
    %v6858 = vunpack.c.l.b16 %v5378
    %v6859 = vunpack.c.h.b16 %v5378
    %v6860 = vunpack.c.l.b16 %v5379
    %v6861 = vunpack.c.h.b16 %v5379
    %v6862 = vunpack.c.l.b16 %v5380
    %v6863 = vunpack.c.h.b16 %v5380
    %v6864 = vunpack.c.l.b16 %v5381
    %v6865 = vunpack.c.h.b16 %v5381
    %v6866 = vunpack.c.l.b16 %v5382
    %v6867 = vunpack.c.h.b16 %v5382
    %v6868 = vunpack.c.l.b16 %v5383
    %v6869 = vunpack.c.h.b16 %v5383
    %v6870 = vunpack.c.l.b16 %v5384
    %v6871 = vunpack.c.h.b16 %v5384
    %v6872 = vunpack.c.l.b16 %v5385
    %v6873 = vunpack.c.h.b16 %v5385
    %v6874 = vunpack.c.l.b16 %v5386
    %v6875 = vunpack.c.h.b16 %v5386
    %v6876 = vunpack.c.l.b16 %v5387
    %v6877 = vunpack.c.h.b16 %v5387
    %v6878 = vunpack.c.l.b16 %v5388
    %v6879 = vunpack.c.h.b16 %v5388
    %v6880 = vunpack.c.l.b16 %v5389
    %v6881 = vunpack.c.h.b16 %v5389
    %v6882 = vunpack.c.l.b16 %v5390
    %v6883 = vunpack.c.h.b16 %v5390
    %v6884 = vunpack.c.l.b16 %v5391
    %v6885 = vunpack.c.h.b16 %v5391
    %v6886 = vunpack.c.l.b16 %v5392
    %v6887 = vunpack.c.h.b16 %v5392
    %v6888 = vunpack.c.l.b16 %v5393
    %v6889 = vunpack.c.h.b16 %v5393
    %v6890 = vunpack.c.l.b16 %v5394
    %v6891 = vunpack.c.h.b16 %v5394
    %v6892 = vunpack.c.l.b16 %v5395
    %v6893 = vunpack.c.h.b16 %v5395
    %v6894 = vunpack.c.l.b16 %v5396
    %v6895 = vunpack.c.h.b16 %v5396
    %v6896 = vunpack.c.l.b16 %v5397
    %v6897 = vunpack.c.h.b16 %v5397
    %v6898 = vunpack.c.l.b16 %v5398
    %v6899 = vunpack.c.h.b16 %v5398
    %v6900 = vunpack.c.l.b16 %v5399
    %v6901 = vunpack.c.h.b16 %v5399
    %v6902 = vunpack.c.l.b16 %v5400
    %v6903 = vunpack.c.h.b16 %v5400
    %v6904 = vunpack.c.l.b16 %v5401
    %v6905 = vunpack.c.h.b16 %v5401
    %v6906 = vunpack.c.l.b16 %v5402
    %v6907 = vunpack.c.h.b16 %v5402
    %v6908 = vunpack.c.l.b16 %v5403
    %v6909 = vunpack.c.h.b16 %v5403
    %v6910 = vunpack.c.l.b16 %v5404
    %v6911 = vunpack.c.h.b16 %v5404
    %v6912 = vunpack.c.l.b16 %v5405
    %v6913 = vunpack.c.h.b16 %v5405
    %v6914 = vunpack.c.l.b16 %v5406
    %v6915 = vunpack.c.h.b16 %v5406
    %v6916 = vunpack.c.l.b16 %v5407
    %v6917 = vunpack.c.h.b16 %v5407
    %v6918 = vunpack.c.l.b16 %v5408
    %v6919 = vunpack.c.h.b16 %v5408
    %v6920 = vunpack.c.l.b16 %v5409
    %v6921 = vunpack.c.h.b16 %v5409
    %v6922 = vunpack.c.l.b16 %v5410
    %v6923 = vunpack.c.h.b16 %v5410
    %v6924 = vunpack.c.l.b16 %v5411
    %v6925 = vunpack.c.h.b16 %v5411
    %v6926 = vunpack.c.l.b16 %v5412
    %v6927 = vunpack.c.h.b16 %v5412
    %v6928 = vunpack.c.l.b16 %v5413
    %v6929 = vunpack.c.h.b16 %v5413
    %v6930 = vunpack.c.l.b16 %v5414
    %v6931 = vunpack.c.h.b16 %v5414
    %v6932 = vunpack.c.l.b16 %v5415
    %v6933 = vunpack.c.h.b16 %v5415
    %v6934 = vunpack.c.l.b16 %v5416
    %v6935 = vunpack.c.h.b16 %v5416
    %v6936 = vunpack.c.l.b16 %v5417
    %v6937 = vunpack.c.h.b16 %v5417
    %v6938 = vunpack.c.l.b16 %v5418
    %v6939 = vunpack.c.h.b16 %v5418
    %v6940 = vunpack.c.l.b16 %v5419
    %v6941 = vunpack.c.h.b16 %v5419
    %v6942 = vunpack.c.l.b16 %v5420
    %v6943 = vunpack.c.h.b16 %v5420
    %v6944 = vunpack.c.l.b16 %v5421
    %v6945 = vunpack.c.h.b16 %v5421
    %v6946 = vunpack.c.l.b16 %v5422
    %v6947 = vunpack.c.h.b16 %v5422
    %v6948 = vunpack.c.l.b16 %v5423
    %v6949 = vunpack.c.h.b16 %v5423
    %v6950 = vunpack.c.l.b16 %v5424
    %v6951 = vunpack.c.h.b16 %v5424
    %v6952 = vunpack.c.l.b16 %v5425
    %v6953 = vunpack.c.h.b16 %v5425
    %v6954 = vunpack.c.l.b16 %v5426
    %v6955 = vunpack.c.h.b16 %v5426
    %v6956 = vunpack.c.l.b16 %v5427
    %v6957 = vunpack.c.h.b16 %v5427
    %v6958 = vunpack.c.l.b16 %v5428
    %v6959 = vunpack.c.h.b16 %v5428
    %v6960 = vunpack.c.l.b16 %v5429
    %v6961 = vunpack.c.h.b16 %v5429
    %v6962 = vunpack.c.l.b16 %v5430
    %v6963 = vunpack.c.h.b16 %v5430
    %v6964 = vunpack.c.l.b16 %v5431
    %v6965 = vunpack.c.h.b16 %v5431
    %v6966 = vunpack.c.l.b16 %v5432
    %v6967 = vunpack.c.h.b16 %v5432
    %v6968 = vunpack.c.l.b16 %v5433
    %v6969 = vunpack.c.h.b16 %v5433
    %v6970 = vunpack.c.l.b16 %v5434
    %v6971 = vunpack.c.h.b16 %v5434
    %v6972 = vunpack.c.l.b16 %v5435
    %v6973 = vunpack.c.h.b16 %v5435
    %v6974 = vunpack.c.l.b16 %v5436
    %v6975 = vunpack.c.h.b16 %v5436
    %v6976 = vunpack.c.l.b16 %v5437
    %v6977 = vunpack.c.h.b16 %v5437
    %v6978 = vunpack.c.l.b16 %v5438
    %v6979 = vunpack.c.h.b16 %v5438
    %v6980 = vunpack.c.l.b16 %v5439
    %v6981 = vunpack.c.h.b16 %v5439
    %v6982 = vunpack.c.l.b16 %v5440
    %v6983 = vunpack.c.h.b16 %v5440
    %v6984 = vunpack.c.l.b16 %v5441
    %v6985 = vunpack.c.h.b16 %v5441
    %v6986 = vunpack.c.l.b16 %v5442
    %v6987 = vunpack.c.h.b16 %v5442
    %v6988 = vunpack.c.l.b16 %v5443
    %v6989 = vunpack.c.h.b16 %v5443
    %v6990 = vunpack.c.l.b16 %v5444
    %v6991 = vunpack.c.h.b16 %v5444
    %v6992 = vunpack.c.l.b16 %v5445
    %v6993 = vunpack.c.h.b16 %v5445
    %v6994 = vunpack.c.l.b16 %v5446
    %v6995 = vunpack.c.h.b16 %v5446
    %v6996 = vunpack.c.l.b16 %v5447
    %v6997 = vunpack.c.h.b16 %v5447
    %v6998 = vunpack.c.l.b16 %v5448
    %v6999 = vunpack.c.h.b16 %v5448
    %v7000 = vunpack.c.l.b16 %v5449
    %v7001 = vunpack.c.h.b16 %v5449
    %v7002 = vunpack.c.l.b16 %v5450
    %v7003 = vunpack.c.h.b16 %v5450
    %v7004 = vunpack.c.l.b16 %v5451
    %v7005 = vunpack.c.h.b16 %v5451
    %v7006 = vunpack.c.l.b16 %v5452
    %v7007 = vunpack.c.h.b16 %v5452
    %v7008 = vunpack.c.l.b16 %v5453
    %v7009 = vunpack.c.h.b16 %v5453
    %v7010 = vunpack.c.l.b16 %v5454
    %v7011 = vunpack.c.h.b16 %v5454
    %v7012 = vunpack.c.l.b16 %v5455
    %v7013 = vunpack.c.h.b16 %v5455
    %v7014 = vunpack.c.l.b16 %v5456
    %v7015 = vunpack.c.h.b16 %v5456
    %v7016 = vunpack.c.l.b16 %v5457
    %v7017 = vunpack.c.h.b16 %v5457
    %v7018 = vunpack.c.l.b16 %v5458
    %v7019 = vunpack.c.h.b16 %v5458
    %v7020 = vunpack.c.l.b16 %v5459
    %v7021 = vunpack.c.h.b16 %v5459
    %v7022 = vunpack.c.l.b16 %v5460
    %v7023 = vunpack.c.h.b16 %v5460
    %v7024 = vunpack.c.l.b16 %v5461
    %v7025 = vunpack.c.h.b16 %v5461
    %v7026 = vunpack.c.l.b16 %v5462
    %v7027 = vunpack.c.h.b16 %v5462
    %v7028 = vunpack.c.l.b16 %v5463
    %v7029 = vunpack.c.h.b16 %v5463
    %v7030 = vunpack.c.l.b16 %v5464
    %v7031 = vunpack.c.h.b16 %v5464
    %v7032 = vunpack.c.l.b16 %v5465
    %v7033 = vunpack.c.h.b16 %v5465
    %v7034 = vunpack.c.l.b16 %v5466
    %v7035 = vunpack.c.h.b16 %v5466
    %v7036 = vunpack.c.l.b16 %v5467
    %v7037 = vunpack.c.h.b16 %v5467
    %v7038 = vunpack.c.l.b16 %v5468
    %v7039 = vunpack.c.h.b16 %v5468
    %v7040 = vunpack.c.l.b16 %v5469
    %v7041 = vunpack.c.h.b16 %v5469
    %v7042 = vunpack.c.l.b16 %v5470
    %v7043 = vunpack.c.h.b16 %v5470
    %v7044 = vunpack.c.l.b16 %v5471
    %v7045 = vunpack.c.h.b16 %v5471
    %v7046 = vunpack.c.l.b16 %v5472
    %v7047 = vunpack.c.h.b16 %v5472
    %v7048 = vunpack.c.l.b16 %v5473
    %v7049 = vunpack.c.h.b16 %v5473
    %v7050 = vunpack.c.l.b16 %v5474
    %v7051 = vunpack.c.h.b16 %v5474
    %v7052 = vpack.c.b16 %v6036, %v6028
    %v7053 = vpack.c.b16 %v6037, %v6029
    %v7054 = vpack.c.b16 %v6038, %v6030
    %v7055 = vpack.c.b16 %v6039, %v6031
    %v7056 = vpack.c.b16 %v6040, %v6032
    %v7057 = vpack.c.b16 %v6041, %v6033
    %v7058 = vpack.c.b16 %v6042, %v6034
    %v7059 = vpack.c.b16 %v6043, %v6035
    %v7060 = vpack.c.b16 %v6052, %v6044
    %v7061 = vpack.c.b16 %v6053, %v6045
    %v7062 = vpack.c.b16 %v6054, %v6046
    %v7063 = vpack.c.b16 %v6055, %v6047
    %v7064 = vpack.c.b16 %v6056, %v6048
    %v7065 = vpack.c.b16 %v6057, %v6049
    %v7066 = vpack.c.b16 %v6058, %v6050
    %v7067 = vpack.c.b16 %v6059, %v6051
    %v7068 = vpack.c.b16 %v6068, %v6060
    %v7069 = vpack.c.b16 %v6069, %v6061
    %v7070 = vpack.c.b16 %v6070, %v6062
    %v7071 = vpack.c.b16 %v6071, %v6063
    %v7072 = vpack.c.b16 %v6072, %v6064
    %v7073 = vpack.c.b16 %v6073, %v6065
    %v7074 = vpack.c.b16 %v6074, %v6066
    %v7075 = vpack.c.b16 %v6075, %v6067
    %v7076 = vpack.c.b16 %v6084, %v6076
    %v7077 = vpack.c.b16 %v6085, %v6077
    %v7078 = vpack.c.b16 %v6086, %v6078
    %v7079 = vpack.c.b16 %v6087, %v6079
    %v7080 = vpack.c.b16 %v6088, %v6080
    %v7081 = vpack.c.b16 %v6089, %v6081
    %v7082 = vpack.c.b16 %v6090, %v6082
    %v7083 = vpack.c.b16 %v6091, %v6083
    %v7084 = vpack.c.b16 %v6100, %v6092
    %v7085 = vpack.c.b16 %v6101, %v6093
    %v7086 = vpack.c.b16 %v6102, %v6094
    %v7087 = vpack.c.b16 %v6103, %v6095
    %v7088 = vpack.c.b16 %v6104, %v6096
    %v7089 = vpack.c.b16 %v6105, %v6097
    %v7090 = vpack.c.b16 %v6106, %v6098
    %v7091 = vpack.c.b16 %v6107, %v6099
    %v7092 = vpack.c.b16 %v6116, %v6108
    %v7093 = vpack.c.b16 %v6117, %v6109
    %v7094 = vpack.c.b16 %v6118, %v6110
    %v7095 = vpack.c.b16 %v6119, %v6111
    %v7096 = vpack.c.b16 %v6120, %v6112
    %v7097 = vpack.c.b16 %v6121, %v6113
    %v7098 = vpack.c.b16 %v6122, %v6114
    %v7099 = vpack.c.b16 %v6123, %v6115
    %v7100 = vpack.c.b16 %v6132, %v6124
    %v7101 = vpack.c.b16 %v6133, %v6125
    %v7102 = vpack.c.b16 %v6134, %v6126
    %v7103 = vpack.c.b16 %v6135, %v6127
    %v7104 = vpack.c.b16 %v6136, %v6128
    %v7105 = vpack.c.b16 %v6137, %v6129
    %v7106 = vpack.c.b16 %v6138, %v6130
    %v7107 = vpack.c.b16 %v6139, %v6131
    %v7108 = vpack.c.b16 %v6148, %v6140
    %v7109 = vpack.c.b16 %v6149, %v6141
    %v7110 = vpack.c.b16 %v6150, %v6142
    %v7111 = vpack.c.b16 %v6151, %v6143
    %v7112 = vpack.c.b16 %v6152, %v6144
    %v7113 = vpack.c.b16 %v6153, %v6145
    %v7114 = vpack.c.b16 %v6154, %v6146
    %v7115 = vpack.c.b16 %v6155, %v6147
    %v7116 = vpack.c.b16 %v6164, %v6156
    %v7117 = vpack.c.b16 %v6165, %v6157
    %v7118 = vpack.c.b16 %v6166, %v6158
    %v7119 = vpack.c.b16 %v6167, %v6159
    %v7120 = vpack.c.b16 %v6168, %v6160
    %v7121 = vpack.c.b16 %v6169, %v6161
    %v7122 = vpack.c.b16 %v6170, %v6162
    %v7123 = vpack.c.b16 %v6171, %v6163
    %v7124 = vpack.c.b16 %v6180, %v6172
    %v7125 = vpack.c.b16 %v6181, %v6173
    %v7126 = vpack.c.b16 %v6182, %v6174
    %v7127 = vpack.c.b16 %v6183, %v6175
    %v7128 = vpack.c.b16 %v6184, %v6176
    %v7129 = vpack.c.b16 %v6185, %v6177
    %v7130 = vpack.c.b16 %v6186, %v6178
    %v7131 = vpack.c.b16 %v6187, %v6179
    %v7132 = vpack.c.b16 %v6196, %v6188
    %v7133 = vpack.c.b16 %v6197, %v6189
    %v7134 = vpack.c.b16 %v6198, %v6190
    %v7135 = vpack.c.b16 %v6199, %v6191
    %v7136 = vpack.c.b16 %v6200, %v6192
    %v7137 = vpack.c.b16 %v6201, %v6193
    %v7138 = vpack.c.b16 %v6202, %v6194
    %v7139 = vpack.c.b16 %v6203, %v6195
    %v7140 = vpack.c.b16 %v6212, %v6204
    %v7141 = vpack.c.b16 %v6213, %v6205
    %v7142 = vpack.c.b16 %v6214, %v6206
    %v7143 = vpack.c.b16 %v6215, %v6207
    %v7144 = vpack.c.b16 %v6216, %v6208
    %v7145 = vpack.c.b16 %v6217, %v6209
    %v7146 = vpack.c.b16 %v6218, %v6210
    %v7147 = vpack.c.b16 %v6219, %v6211
    %v7148 = vpack.c.b16 %v6228, %v6220
    %v7149 = vpack.c.b16 %v6229, %v6221
    %v7150 = vpack.c.b16 %v6230, %v6222
    %v7151 = vpack.c.b16 %v6231, %v6223
    %v7152 = vpack.c.b16 %v6232, %v6224
    %v7153 = vpack.c.b16 %v6233, %v6225
    %v7154 = vpack.c.b16 %v6234, %v6226
    %v7155 = vpack.c.b16 %v6235, %v6227
    %v7156 = vpack.c.b16 %v6244, %v6236
    %v7157 = vpack.c.b16 %v6245, %v6237
    %v7158 = vpack.c.b16 %v6246, %v6238
    %v7159 = vpack.c.b16 %v6247, %v6239
    %v7160 = vpack.c.b16 %v6248, %v6240
    %v7161 = vpack.c.b16 %v6249, %v6241
    %v7162 = vpack.c.b16 %v6250, %v6242
    %v7163 = vpack.c.b16 %v6251, %v6243
    %v7164 = vpack.c.b16 %v6260, %v6252
    %v7165 = vpack.c.b16 %v6261, %v6253
    %v7166 = vpack.c.b16 %v6262, %v6254
    %v7167 = vpack.c.b16 %v6263, %v6255
    %v7168 = vpack.c.b16 %v6264, %v6256
    %v7169 = vpack.c.b16 %v6265, %v6257
    %v7170 = vpack.c.b16 %v6266, %v6258
    %v7171 = vpack.c.b16 %v6267, %v6259
    %v7172 = vpack.c.b16 %v6276, %v6268
    %v7173 = vpack.c.b16 %v6277, %v6269
    %v7174 = vpack.c.b16 %v6278, %v6270
    %v7175 = vpack.c.b16 %v6279, %v6271
    %v7176 = vpack.c.b16 %v6280, %v6272
    %v7177 = vpack.c.b16 %v6281, %v6273
    %v7178 = vpack.c.b16 %v6282, %v6274
    %v7179 = vpack.c.b16 %v6283, %v6275
    %v7180 = vpack.c.b16 %v6292, %v6284
    %v7181 = vpack.c.b16 %v6293, %v6285
    %v7182 = vpack.c.b16 %v6294, %v6286
    %v7183 = vpack.c.b16 %v6295, %v6287
    %v7184 = vpack.c.b16 %v6296, %v6288
    %v7185 = vpack.c.b16 %v6297, %v6289
    %v7186 = vpack.c.b16 %v6298, %v6290
    %v7187 = vpack.c.b16 %v6299, %v6291
    %v7188 = vpack.c.b16 %v6308, %v6300
    %v7189 = vpack.c.b16 %v6309, %v6301
    %v7190 = vpack.c.b16 %v6310, %v6302
    %v7191 = vpack.c.b16 %v6311, %v6303
    %v7192 = vpack.c.b16 %v6312, %v6304
    %v7193 = vpack.c.b16 %v6313, %v6305
    %v7194 = vpack.c.b16 %v6314, %v6306
    %v7195 = vpack.c.b16 %v6315, %v6307
    %v7196 = vpack.c.b16 %v6324, %v6316
    %v7197 = vpack.c.b16 %v6325, %v6317
    %v7198 = vpack.c.b16 %v6326, %v6318
    %v7199 = vpack.c.b16 %v6327, %v6319
    %v7200 = vpack.c.b16 %v6328, %v6320
    %v7201 = vpack.c.b16 %v6329, %v6321
    %v7202 = vpack.c.b16 %v6330, %v6322
    %v7203 = vpack.c.b16 %v6331, %v6323
    %v7204 = vpack.c.b16 %v6340, %v6332
    %v7205 = vpack.c.b16 %v6341, %v6333
    %v7206 = vpack.c.b16 %v6342, %v6334
    %v7207 = vpack.c.b16 %v6343, %v6335
    %v7208 = vpack.c.b16 %v6344, %v6336
    %v7209 = vpack.c.b16 %v6345, %v6337
    %v7210 = vpack.c.b16 %v6346, %v6338
    %v7211 = vpack.c.b16 %v6347, %v6339
    %v7212 = vpack.c.b16 %v6356, %v6348
    %v7213 = vpack.c.b16 %v6357, %v6349
    %v7214 = vpack.c.b16 %v6358, %v6350
    %v7215 = vpack.c.b16 %v6359, %v6351
    %v7216 = vpack.c.b16 %v6360, %v6352
    %v7217 = vpack.c.b16 %v6361, %v6353
    %v7218 = vpack.c.b16 %v6362, %v6354
    %v7219 = vpack.c.b16 %v6363, %v6355
    %v7220 = vpack.c.b16 %v6372, %v6364
    %v7221 = vpack.c.b16 %v6373, %v6365
    %v7222 = vpack.c.b16 %v6374, %v6366
    %v7223 = vpack.c.b16 %v6375, %v6367
    %v7224 = vpack.c.b16 %v6376, %v6368
    %v7225 = vpack.c.b16 %v6377, %v6369
    %v7226 = vpack.c.b16 %v6378, %v6370
    %v7227 = vpack.c.b16 %v6379, %v6371
    %v7228 = vpack.c.b16 %v6388, %v6380
    %v7229 = vpack.c.b16 %v6389, %v6381
    %v7230 = vpack.c.b16 %v6390, %v6382
    %v7231 = vpack.c.b16 %v6391, %v6383
    %v7232 = vpack.c.b16 %v6392, %v6384
    %v7233 = vpack.c.b16 %v6393, %v6385
    %v7234 = vpack.c.b16 %v6394, %v6386
    %v7235 = vpack.c.b16 %v6395, %v6387
    %v7236 = vpack.c.b16 %v6404, %v6396
    %v7237 = vpack.c.b16 %v6405, %v6397
    %v7238 = vpack.c.b16 %v6406, %v6398
    %v7239 = vpack.c.b16 %v6407, %v6399
    %v7240 = vpack.c.b16 %v6408, %v6400
    %v7241 = vpack.c.b16 %v6409, %v6401
    %v7242 = vpack.c.b16 %v6410, %v6402
    %v7243 = vpack.c.b16 %v6411, %v6403
    %v7244 = vpack.c.b16 %v6420, %v6412
    %v7245 = vpack.c.b16 %v6421, %v6413
    %v7246 = vpack.c.b16 %v6422, %v6414
    %v7247 = vpack.c.b16 %v6423, %v6415
    %v7248 = vpack.c.b16 %v6424, %v6416
    %v7249 = vpack.c.b16 %v6425, %v6417
    %v7250 = vpack.c.b16 %v6426, %v6418
    %v7251 = vpack.c.b16 %v6427, %v6419
    %v7252 = vpack.c.b16 %v6436, %v6428
    %v7253 = vpack.c.b16 %v6437, %v6429
    %v7254 = vpack.c.b16 %v6438, %v6430
    %v7255 = vpack.c.b16 %v6439, %v6431
    %v7256 = vpack.c.b16 %v6440, %v6432
    %v7257 = vpack.c.b16 %v6441, %v6433
    %v7258 = vpack.c.b16 %v6442, %v6434
    %v7259 = vpack.c.b16 %v6443, %v6435
    %v7260 = vpack.c.b16 %v6452, %v6444
    %v7261 = vpack.c.b16 %v6453, %v6445
    %v7262 = vpack.c.b16 %v6454, %v6446
    %v7263 = vpack.c.b16 %v6455, %v6447
    %v7264 = vpack.c.b16 %v6456, %v6448
    %v7265 = vpack.c.b16 %v6457, %v6449
    %v7266 = vpack.c.b16 %v6458, %v6450
    %v7267 = vpack.c.b16 %v6459, %v6451
    %v7268 = vpack.c.b16 %v6468, %v6460
    %v7269 = vpack.c.b16 %v6469, %v6461
    %v7270 = vpack.c.b16 %v6470, %v6462
    %v7271 = vpack.c.b16 %v6471, %v6463
    %v7272 = vpack.c.b16 %v6472, %v6464
    %v7273 = vpack.c.b16 %v6473, %v6465
    %v7274 = vpack.c.b16 %v6474, %v6466
    %v7275 = vpack.c.b16 %v6475, %v6467
    %v7276 = vpack.c.b16 %v6484, %v6476
    %v7277 = vpack.c.b16 %v6485, %v6477
    %v7278 = vpack.c.b16 %v6486, %v6478
    %v7279 = vpack.c.b16 %v6487, %v6479
    %v7280 = vpack.c.b16 %v6488, %v6480
    %v7281 = vpack.c.b16 %v6489, %v6481
    %v7282 = vpack.c.b16 %v6490, %v6482
    %v7283 = vpack.c.b16 %v6491, %v6483
    %v7284 = vpack.c.b16 %v6500, %v6492
    %v7285 = vpack.c.b16 %v6501, %v6493
    %v7286 = vpack.c.b16 %v6502, %v6494
    %v7287 = vpack.c.b16 %v6503, %v6495
    %v7288 = vpack.c.b16 %v6504, %v6496
    %v7289 = vpack.c.b16 %v6505, %v6497
    %v7290 = vpack.c.b16 %v6506, %v6498
    %v7291 = vpack.c.b16 %v6507, %v6499
    %v7292 = vpack.c.b16 %v6516, %v6508
    %v7293 = vpack.c.b16 %v6517, %v6509
    %v7294 = vpack.c.b16 %v6518, %v6510
    %v7295 = vpack.c.b16 %v6519, %v6511
    %v7296 = vpack.c.b16 %v6520, %v6512
    %v7297 = vpack.c.b16 %v6521, %v6513
    %v7298 = vpack.c.b16 %v6522, %v6514
    %v7299 = vpack.c.b16 %v6523, %v6515
    %v7300 = vpack.c.b16 %v6532, %v6524
    %v7301 = vpack.c.b16 %v6533, %v6525
    %v7302 = vpack.c.b16 %v6534, %v6526
    %v7303 = vpack.c.b16 %v6535, %v6527
    %v7304 = vpack.c.b16 %v6536, %v6528
    %v7305 = vpack.c.b16 %v6537, %v6529
    %v7306 = vpack.c.b16 %v6538, %v6530
    %v7307 = vpack.c.b16 %v6539, %v6531
    %v7308 = vpack.c.b16 %v6548, %v6540
    %v7309 = vpack.c.b16 %v6549, %v6541
    %v7310 = vpack.c.b16 %v6550, %v6542
    %v7311 = vpack.c.b16 %v6551, %v6543
    %v7312 = vpack.c.b16 %v6552, %v6544
    %v7313 = vpack.c.b16 %v6553, %v6545
    %v7314 = vpack.c.b16 %v6554, %v6546
    %v7315 = vpack.c.b16 %v6555, %v6547
    %v7316 = vpack.c.b16 %v6564, %v6556
    %v7317 = vpack.c.b16 %v6565, %v6557
    %v7318 = vpack.c.b16 %v6566, %v6558
    %v7319 = vpack.c.b16 %v6567, %v6559
    %v7320 = vpack.c.b16 %v6568, %v6560
    %v7321 = vpack.c.b16 %v6569, %v6561
    %v7322 = vpack.c.b16 %v6570, %v6562
    %v7323 = vpack.c.b16 %v6571, %v6563
    %v7324 = vpack.c.b16 %v6580, %v6572
    %v7325 = vpack.c.b16 %v6581, %v6573
    %v7326 = vpack.c.b16 %v6582, %v6574
    %v7327 = vpack.c.b16 %v6583, %v6575
    %v7328 = vpack.c.b16 %v6584, %v6576
    %v7329 = vpack.c.b16 %v6585, %v6577
    %v7330 = vpack.c.b16 %v6586, %v6578
    %v7331 = vpack.c.b16 %v6587, %v6579
    %v7332 = vpack.c.b16 %v6596, %v6588
    %v7333 = vpack.c.b16 %v6597, %v6589
    %v7334 = vpack.c.b16 %v6598, %v6590
    %v7335 = vpack.c.b16 %v6599, %v6591
    %v7336 = vpack.c.b16 %v6600, %v6592
    %v7337 = vpack.c.b16 %v6601, %v6593
    %v7338 = vpack.c.b16 %v6602, %v6594
    %v7339 = vpack.c.b16 %v6603, %v6595
    %v7340 = vpack.c.b16 %v6612, %v6604
    %v7341 = vpack.c.b16 %v6613, %v6605
    %v7342 = vpack.c.b16 %v6614, %v6606
    %v7343 = vpack.c.b16 %v6615, %v6607
    %v7344 = vpack.c.b16 %v6616, %v6608
    %v7345 = vpack.c.b16 %v6617, %v6609
    %v7346 = vpack.c.b16 %v6618, %v6610
    %v7347 = vpack.c.b16 %v6619, %v6611
    %v7348 = vpack.c.b16 %v6628, %v6620
    %v7349 = vpack.c.b16 %v6629, %v6621
    %v7350 = vpack.c.b16 %v6630, %v6622
    %v7351 = vpack.c.b16 %v6631, %v6623
    %v7352 = vpack.c.b16 %v6632, %v6624
    %v7353 = vpack.c.b16 %v6633, %v6625
    %v7354 = vpack.c.b16 %v6634, %v6626
    %v7355 = vpack.c.b16 %v6635, %v6627
    %v7356 = vpack.c.b16 %v6644, %v6636
    %v7357 = vpack.c.b16 %v6645, %v6637
    %v7358 = vpack.c.b16 %v6646, %v6638
    %v7359 = vpack.c.b16 %v6647, %v6639
    %v7360 = vpack.c.b16 %v6648, %v6640
    %v7361 = vpack.c.b16 %v6649, %v6641
    %v7362 = vpack.c.b16 %v6650, %v6642
    %v7363 = vpack.c.b16 %v6651, %v6643
    %v7364 = vpack.c.b16 %v6660, %v6652
    %v7365 = vpack.c.b16 %v6661, %v6653
    %v7366 = vpack.c.b16 %v6662, %v6654
    %v7367 = vpack.c.b16 %v6663, %v6655
    %v7368 = vpack.c.b16 %v6664, %v6656
    %v7369 = vpack.c.b16 %v6665, %v6657
    %v7370 = vpack.c.b16 %v6666, %v6658
    %v7371 = vpack.c.b16 %v6667, %v6659
    %v7372 = vpack.c.b16 %v6676, %v6668
    %v7373 = vpack.c.b16 %v6677, %v6669
    %v7374 = vpack.c.b16 %v6678, %v6670
    %v7375 = vpack.c.b16 %v6679, %v6671
    %v7376 = vpack.c.b16 %v6680, %v6672
    %v7377 = vpack.c.b16 %v6681, %v6673
    %v7378 = vpack.c.b16 %v6682, %v6674
    %v7379 = vpack.c.b16 %v6683, %v6675
    %v7380 = vpack.c.b16 %v6692, %v6684
    %v7381 = vpack.c.b16 %v6693, %v6685
    %v7382 = vpack.c.b16 %v6694, %v6686
    %v7383 = vpack.c.b16 %v6695, %v6687
    %v7384 = vpack.c.b16 %v6696, %v6688
    %v7385 = vpack.c.b16 %v6697, %v6689
    %v7386 = vpack.c.b16 %v6698, %v6690
    %v7387 = vpack.c.b16 %v6699, %v6691
    %v7388 = vpack.c.b16 %v6708, %v6700
    %v7389 = vpack.c.b16 %v6709, %v6701
    %v7390 = vpack.c.b16 %v6710, %v6702
    %v7391 = vpack.c.b16 %v6711, %v6703
    %v7392 = vpack.c.b16 %v6712, %v6704
    %v7393 = vpack.c.b16 %v6713, %v6705
    %v7394 = vpack.c.b16 %v6714, %v6706
    %v7395 = vpack.c.b16 %v6715, %v6707
    %v7396 = vpack.c.b16 %v6724, %v6716
    %v7397 = vpack.c.b16 %v6725, %v6717
    %v7398 = vpack.c.b16 %v6726, %v6718
    %v7399 = vpack.c.b16 %v6727, %v6719
    %v7400 = vpack.c.b16 %v6728, %v6720
    %v7401 = vpack.c.b16 %v6729, %v6721
    %v7402 = vpack.c.b16 %v6730, %v6722
    %v7403 = vpack.c.b16 %v6731, %v6723
    %v7404 = vpack.c.b16 %v6740, %v6732
    %v7405 = vpack.c.b16 %v6741, %v6733
    %v7406 = vpack.c.b16 %v6742, %v6734
    %v7407 = vpack.c.b16 %v6743, %v6735
    %v7408 = vpack.c.b16 %v6744, %v6736
    %v7409 = vpack.c.b16 %v6745, %v6737
    %v7410 = vpack.c.b16 %v6746, %v6738
    %v7411 = vpack.c.b16 %v6747, %v6739
    %v7412 = vpack.c.b16 %v6756, %v6748
    %v7413 = vpack.c.b16 %v6757, %v6749
    %v7414 = vpack.c.b16 %v6758, %v6750
    %v7415 = vpack.c.b16 %v6759, %v6751
    %v7416 = vpack.c.b16 %v6760, %v6752
    %v7417 = vpack.c.b16 %v6761, %v6753
    %v7418 = vpack.c.b16 %v6762, %v6754
    %v7419 = vpack.c.b16 %v6763, %v6755
    %v7420 = vpack.c.b16 %v6772, %v6764
    %v7421 = vpack.c.b16 %v6773, %v6765
    %v7422 = vpack.c.b16 %v6774, %v6766
    %v7423 = vpack.c.b16 %v6775, %v6767
    %v7424 = vpack.c.b16 %v6776, %v6768
    %v7425 = vpack.c.b16 %v6777, %v6769
    %v7426 = vpack.c.b16 %v6778, %v6770
    %v7427 = vpack.c.b16 %v6779, %v6771
    %v7428 = vpack.c.b16 %v6788, %v6780
    %v7429 = vpack.c.b16 %v6789, %v6781
    %v7430 = vpack.c.b16 %v6790, %v6782
    %v7431 = vpack.c.b16 %v6791, %v6783
    %v7432 = vpack.c.b16 %v6792, %v6784
    %v7433 = vpack.c.b16 %v6793, %v6785
    %v7434 = vpack.c.b16 %v6794, %v6786
    %v7435 = vpack.c.b16 %v6795, %v6787
    %v7436 = vpack.c.b16 %v6804, %v6796
    %v7437 = vpack.c.b16 %v6805, %v6797
    %v7438 = vpack.c.b16 %v6806, %v6798
    %v7439 = vpack.c.b16 %v6807, %v6799
    %v7440 = vpack.c.b16 %v6808, %v6800
    %v7441 = vpack.c.b16 %v6809, %v6801
    %v7442 = vpack.c.b16 %v6810, %v6802
    %v7443 = vpack.c.b16 %v6811, %v6803
    %v7444 = vpack.c.b16 %v6820, %v6812
    %v7445 = vpack.c.b16 %v6821, %v6813
    %v7446 = vpack.c.b16 %v6822, %v6814
    %v7447 = vpack.c.b16 %v6823, %v6815
    %v7448 = vpack.c.b16 %v6824, %v6816
    %v7449 = vpack.c.b16 %v6825, %v6817
    %v7450 = vpack.c.b16 %v6826, %v6818
    %v7451 = vpack.c.b16 %v6827, %v6819
    %v7452 = vpack.c.b16 %v6836, %v6828
    %v7453 = vpack.c.b16 %v6837, %v6829
    %v7454 = vpack.c.b16 %v6838, %v6830
    %v7455 = vpack.c.b16 %v6839, %v6831
    %v7456 = vpack.c.b16 %v6840, %v6832
    %v7457 = vpack.c.b16 %v6841, %v6833
    %v7458 = vpack.c.b16 %v6842, %v6834
    %v7459 = vpack.c.b16 %v6843, %v6835
    %v7460 = vpack.c.b16 %v6852, %v6844
    %v7461 = vpack.c.b16 %v6853, %v6845
    %v7462 = vpack.c.b16 %v6854, %v6846
    %v7463 = vpack.c.b16 %v6855, %v6847
    %v7464 = vpack.c.b16 %v6856, %v6848
    %v7465 = vpack.c.b16 %v6857, %v6849
    %v7466 = vpack.c.b16 %v6858, %v6850
    %v7467 = vpack.c.b16 %v6859, %v6851
    %v7468 = vpack.c.b16 %v6868, %v6860
    %v7469 = vpack.c.b16 %v6869, %v6861
    %v7470 = vpack.c.b16 %v6870, %v6862
    %v7471 = vpack.c.b16 %v6871, %v6863
    %v7472 = vpack.c.b16 %v6872, %v6864
    %v7473 = vpack.c.b16 %v6873, %v6865
    %v7474 = vpack.c.b16 %v6874, %v6866
    %v7475 = vpack.c.b16 %v6875, %v6867
    %v7476 = vpack.c.b16 %v6884, %v6876
    %v7477 = vpack.c.b16 %v6885, %v6877
    %v7478 = vpack.c.b16 %v6886, %v6878
    %v7479 = vpack.c.b16 %v6887, %v6879
    %v7480 = vpack.c.b16 %v6888, %v6880
    %v7481 = vpack.c.b16 %v6889, %v6881
    %v7482 = vpack.c.b16 %v6890, %v6882
    %v7483 = vpack.c.b16 %v6891, %v6883
    %v7484 = vpack.c.b16 %v6900, %v6892
    %v7485 = vpack.c.b16 %v6901, %v6893
    %v7486 = vpack.c.b16 %v6902, %v6894
    %v7487 = vpack.c.b16 %v6903, %v6895
    %v7488 = vpack.c.b16 %v6904, %v6896
    %v7489 = vpack.c.b16 %v6905, %v6897
    %v7490 = vpack.c.b16 %v6906, %v6898
    %v7491 = vpack.c.b16 %v6907, %v6899
    %v7492 = vpack.c.b16 %v6916, %v6908
    %v7493 = vpack.c.b16 %v6917, %v6909
    %v7494 = vpack.c.b16 %v6918, %v6910
    %v7495 = vpack.c.b16 %v6919, %v6911
    %v7496 = vpack.c.b16 %v6920, %v6912
    %v7497 = vpack.c.b16 %v6921, %v6913
    %v7498 = vpack.c.b16 %v6922, %v6914
    %v7499 = vpack.c.b16 %v6923, %v6915
    %v7500 = vpack.c.b16 %v6932, %v6924
    %v7501 = vpack.c.b16 %v6933, %v6925
    %v7502 = vpack.c.b16 %v6934, %v6926
    %v7503 = vpack.c.b16 %v6935, %v6927
    %v7504 = vpack.c.b16 %v6936, %v6928
    %v7505 = vpack.c.b16 %v6937, %v6929
    %v7506 = vpack.c.b16 %v6938, %v6930
    %v7507 = vpack.c.b16 %v6939, %v6931
    %v7508 = vpack.c.b16 %v6948, %v6940
    %v7509 = vpack.c.b16 %v6949, %v6941
    %v7510 = vpack.c.b16 %v6950, %v6942
    %v7511 = vpack.c.b16 %v6951, %v6943
    %v7512 = vpack.c.b16 %v6952, %v6944
    %v7513 = vpack.c.b16 %v6953, %v6945
    %v7514 = vpack.c.b16 %v6954, %v6946
    %v7515 = vpack.c.b16 %v6955, %v6947
    %v7516 = vpack.c.b16 %v6964, %v6956
    %v7517 = vpack.c.b16 %v6965, %v6957
    %v7518 = vpack.c.b16 %v6966, %v6958
    %v7519 = vpack.c.b16 %v6967, %v6959
    %v7520 = vpack.c.b16 %v6968, %v6960
    %v7521 = vpack.c.b16 %v6969, %v6961
    %v7522 = vpack.c.b16 %v6970, %v6962
    %v7523 = vpack.c.b16 %v6971, %v6963
    %v7524 = vpack.c.b16 %v6980, %v6972
    %v7525 = vpack.c.b16 %v6981, %v6973
    %v7526 = vpack.c.b16 %v6982, %v6974
    %v7527 = vpack.c.b16 %v6983, %v6975
    %v7528 = vpack.c.b16 %v6984, %v6976
    %v7529 = vpack.c.b16 %v6985, %v6977
    %v7530 = vpack.c.b16 %v6986, %v6978
    %v7531 = vpack.c.b16 %v6987, %v6979
    %v7532 = vpack.c.b16 %v6996, %v6988
    %v7533 = vpack.c.b16 %v6997, %v6989
    %v7534 = vpack.c.b16 %v6998, %v6990
    %v7535 = vpack.c.b16 %v6999, %v6991
    %v7536 = vpack.c.b16 %v7000, %v6992
    %v7537 = vpack.c.b16 %v7001, %v6993
    %v7538 = vpack.c.b16 %v7002, %v6994
    %v7539 = vpack.c.b16 %v7003, %v6995
    %v7540 = vpack.c.b16 %v7012, %v7004
    %v7541 = vpack.c.b16 %v7013, %v7005
    %v7542 = vpack.c.b16 %v7014, %v7006
    %v7543 = vpack.c.b16 %v7015, %v7007
    %v7544 = vpack.c.b16 %v7016, %v7008
    %v7545 = vpack.c.b16 %v7017, %v7009
    %v7546 = vpack.c.b16 %v7018, %v7010
    %v7547 = vpack.c.b16 %v7019, %v7011
    %v7548 = vpack.c.b16 %v7028, %v7020
    %v7549 = vpack.c.b16 %v7029, %v7021
    %v7550 = vpack.c.b16 %v7030, %v7022
    %v7551 = vpack.c.b16 %v7031, %v7023
    %v7552 = vpack.c.b16 %v7032, %v7024
    %v7553 = vpack.c.b16 %v7033, %v7025
    %v7554 = vpack.c.b16 %v7034, %v7026
    %v7555 = vpack.c.b16 %v7035, %v7027
    %v7556 = vpack.c.b16 %v7044, %v7036
    %v7557 = vpack.c.b16 %v7045, %v7037
    %v7558 = vpack.c.b16 %v7046, %v7038
    %v7559 = vpack.c.b16 %v7047, %v7039
    %v7560 = vpack.c.b16 %v7048, %v7040
    %v7561 = vpack.c.b16 %v7049, %v7041
    %v7562 = vpack.c.b16 %v7050, %v7042
    %v7563 = vpack.c.b16 %v7051, %v7043
    %8076 = vmatprep.subr.bf16.mxu0 %v7053
    %8077 = vmatpush1.bf16.msra.mxu0 %v7052
    %8078 = vmatprep.subr.bf16.mxu0 %v7061
    %8079 = vmatpush1.bf16.msra.mxu0 %v7060
    %8080 = vmatprep.subr.bf16.mxu0 %v7069
    %8081 = vmatpush1.bf16.msra.mxu0 %v7068
    %8082 = vmatprep.subr.bf16.mxu0 %v7077
    %8083 = vmatpush1.bf16.msra.mxu0 %v7076
    %8084 = vmatprep.subr.bf16.mxu0 %v7085
    %8085 = vmatpush1.bf16.msra.mxu0 %v7084
    %8086 = vmatprep.subr.bf16.mxu0 %v7093
    %8087 = vmatpush1.bf16.msra.mxu0 %v7092
    %8088 = vmatprep.subr.bf16.mxu0 %v7101
    %8089 = vmatpush1.bf16.msra.mxu0 %v7100
    %8090 = vmatprep.subr.bf16.mxu0 %v7109
    %8091 = vmatpush1.bf16.msra.mxu0 %v7108
    %8092 = vmatprep.subr.bf16.mxu0 %v7117
    %8093 = vmatpush1.bf16.msra.mxu0 %v7116
    %8094 = vmatprep.subr.bf16.mxu0 %v7125
    %8095 = vmatpush1.bf16.msra.mxu0 %v7124
    %8096 = vmatprep.subr.bf16.mxu0 %v7133
    %8097 = vmatpush1.bf16.msra.mxu0 %v7132
    %8098 = vmatprep.subr.bf16.mxu0 %v7141
    %8099 = vmatpush1.bf16.msra.mxu0 %v7140
    %8100 = vmatprep.subr.bf16.mxu0 %v7149
    %8101 = vmatpush1.bf16.msra.mxu0 %v7148
    %8102 = vmatprep.subr.bf16.mxu0 %v7157
    %8103 = vmatpush1.bf16.msra.mxu0 %v7156
    %8104 = vmatprep.subr.bf16.mxu0 %v7165
    %8105 = vmatpush1.bf16.msra.mxu0 %v7164
    %8106 = vmatprep.subr.bf16.mxu0 %v7173
    %8107 = vmatpush1.bf16.msra.mxu0 %v7172
    %8108 = vmatprep.mubr.bf16.mxu0 %v4956
    %8109 = vmatmul.mubr.bf16.gmra.mrb[0].mxu0 %v4955
    %v8110 = vpop.f32.mrb[0].mxu0
    %v8111 = vadd.f32 %v5479, %v8110
    %v8112 = vpop.f32.mrb[0].mxu0
    %v8113 = vadd.f32 %v5483, %v8112
    %v8114 = vpop.f32.mrb[0].mxu0
    %v8115 = vpop.f32.mrb[0].mxu0
    %8116 = vdwg.mxu0
    %8117 = vmatprep.subr.bf16.mxu0 %v7181
    %8118 = vmatpush1.bf16.msra.mxu0 %v7180
    %8119 = vmatprep.subr.bf16.mxu0 %v7189
    %8120 = vmatpush1.bf16.msra.mxu0 %v7188
    %8121 = vmatprep.subr.bf16.mxu0 %v7197
    %8122 = vmatpush1.bf16.msra.mxu0 %v7196
    %8123 = vmatprep.subr.bf16.mxu0 %v7205
    %8124 = vmatpush1.bf16.msra.mxu0 %v7204
    %8125 = vmatprep.subr.bf16.mxu0 %v7213
    %8126 = vmatpush1.bf16.msra.mxu0 %v7212
    %8127 = vmatprep.subr.bf16.mxu0 %v7221
    %8128 = vmatpush1.bf16.msra.mxu0 %v7220
    %8129 = vmatprep.subr.bf16.mxu0 %v7229
    %8130 = vmatpush1.bf16.msra.mxu0 %v7228
    %8131 = vmatprep.subr.bf16.mxu0 %v7237
    %8132 = vmatpush1.bf16.msra.mxu0 %v7236
    %8133 = vmatprep.subr.bf16.mxu0 %v7245
    %8134 = vmatpush1.bf16.msra.mxu0 %v7244
    %8135 = vmatprep.subr.bf16.mxu0 %v7253
    %8136 = vmatpush1.bf16.msra.mxu0 %v7252
    %8137 = vmatprep.subr.bf16.mxu0 %v7261
    %8138 = vmatpush1.bf16.msra.mxu0 %v7260
    %8139 = vmatprep.subr.bf16.mxu0 %v7269
    %8140 = vmatpush1.bf16.msra.mxu0 %v7268
    %8141 = vmatprep.subr.bf16.mxu0 %v7277
    %8142 = vmatpush1.bf16.msra.mxu0 %v7276
    %8143 = vmatprep.subr.bf16.mxu0 %v7285
    %8144 = vmatpush1.bf16.msra.mxu0 %v7284
    %8145 = vmatprep.subr.bf16.mxu0 %v7293
    %8146 = vmatpush1.bf16.msra.mxu0 %v7292
    %8147 = vmatprep.subr.bf16.mxu0 %v7301
    %8148 = vmatpush1.bf16.msra.mxu0 %v7300
    %8149 = vmatprep.mubr.bf16.mxu0 %v4958
    %8150 = vmatmul.mubr.bf16.gmra.mrb[0].mxu0 %v4957
    %v8151 = vpop.f32.mrb[0].mxu0
    %v8152 = vadd.f32 %v8111, %v8151
    %v8153 = vpop.f32.mrb[0].mxu0
    %v8154 = vadd.f32 %v8113, %v8153
    %v8155 = vpop.f32.mrb[0].mxu0
    %v8156 = vpop.f32.mrb[0].mxu0
    %8157 = vdwg.mxu0
    %8158 = vmatprep.subr.bf16.mxu0 %v7309
    %8159 = vmatpush1.bf16.msra.mxu0 %v7308
    %8160 = vmatprep.subr.bf16.mxu0 %v7317
    %8161 = vmatpush1.bf16.msra.mxu0 %v7316
    %8162 = vmatprep.subr.bf16.mxu0 %v7325
    %8163 = vmatpush1.bf16.msra.mxu0 %v7324
    %8164 = vmatprep.subr.bf16.mxu0 %v7333
    %8165 = vmatpush1.bf16.msra.mxu0 %v7332
    %8166 = vmatprep.subr.bf16.mxu0 %v7341
    %8167 = vmatpush1.bf16.msra.mxu0 %v7340
    %8168 = vmatprep.subr.bf16.mxu0 %v7349
    %8169 = vmatpush1.bf16.msra.mxu0 %v7348
    %8170 = vmatprep.subr.bf16.mxu0 %v7357
    %8171 = vmatpush1.bf16.msra.mxu0 %v7356
    %8172 = vmatprep.subr.bf16.mxu0 %v7365
    %8173 = vmatpush1.bf16.msra.mxu0 %v7364
    %8174 = vmatprep.subr.bf16.mxu0 %v7373
    %8175 = vmatpush1.bf16.msra.mxu0 %v7372
    %8176 = vmatprep.subr.bf16.mxu0 %v7381
    %8177 = vmatpush1.bf16.msra.mxu0 %v7380
    %8178 = vmatprep.subr.bf16.mxu0 %v7389
    %8179 = vmatpush1.bf16.msra.mxu0 %v7388
    %8180 = vmatprep.subr.bf16.mxu0 %v7397
    %8181 = vmatpush1.bf16.msra.mxu0 %v7396
    %8182 = vmatprep.subr.bf16.mxu0 %v7405
    %8183 = vmatpush1.bf16.msra.mxu0 %v7404
    %8184 = vmatprep.subr.bf16.mxu0 %v7413
    %8185 = vmatpush1.bf16.msra.mxu0 %v7412
    %8186 = vmatprep.subr.bf16.mxu0 %v7421
    %8187 = vmatpush1.bf16.msra.mxu0 %v7420
    %8188 = vmatprep.subr.bf16.mxu0 %v7429
    %8189 = vmatpush1.bf16.msra.mxu0 %v7428
    %8190 = vmatprep.mubr.bf16.mxu0 %v4960
    %8191 = vmatmul.mubr.bf16.gmra.mrb[0].mxu0 %v4959
    %v8192 = vpop.f32.mrb[0].mxu0
    %v8193 = vadd.f32 %v8152, %v8192
    %v8194 = vpop.f32.mrb[0].mxu0
    %v8195 = vadd.f32 %v8154, %v8194
    %v8196 = vpop.f32.mrb[0].mxu0
    %v8197 = vpop.f32.mrb[0].mxu0
    %8198 = vdwg.mxu0
    %8199 = vmatprep.subr.bf16.mxu0 %v7437
    %8200 = vmatpush1.bf16.msra.mxu0 %v7436
    %8201 = vmatprep.subr.bf16.mxu0 %v7445
    %8202 = vmatpush1.bf16.msra.mxu0 %v7444
    %8203 = vmatprep.subr.bf16.mxu0 %v7453
    %8204 = vmatpush1.bf16.msra.mxu0 %v7452
    %8205 = vmatprep.subr.bf16.mxu0 %v7461
    %8206 = vmatpush1.bf16.msra.mxu0 %v7460
    %8207 = vmatprep.subr.bf16.mxu0 %v7469
    %8208 = vmatpush1.bf16.msra.mxu0 %v7468
    %8209 = vmatprep.subr.bf16.mxu0 %v7477
    %8210 = vmatpush1.bf16.msra.mxu0 %v7476
    %8211 = vmatprep.subr.bf16.mxu0 %v7485
    %8212 = vmatpush1.bf16.msra.mxu0 %v7484
    %8213 = vmatprep.subr.bf16.mxu0 %v7493
    %8214 = vmatpush1.bf16.msra.mxu0 %v7492
    %8215 = vmatprep.subr.bf16.mxu0 %v7501
    %8216 = vmatpush1.bf16.msra.mxu0 %v7500
    %8217 = vmatprep.subr.bf16.mxu0 %v7509
    %8218 = vmatpush1.bf16.msra.mxu0 %v7508
    %8219 = vmatprep.subr.bf16.mxu0 %v7517
    %8220 = vmatpush1.bf16.msra.mxu0 %v7516
    %8221 = vmatprep.subr.bf16.mxu0 %v7525
    %8222 = vmatpush1.bf16.msra.mxu0 %v7524
    %8223 = vmatprep.subr.bf16.mxu0 %v7533
    %8224 = vmatpush1.bf16.msra.mxu0 %v7532
    %8225 = vmatprep.subr.bf16.mxu0 %v7541
    %8226 = vmatpush1.bf16.msra.mxu0 %v7540
    %8227 = vmatprep.subr.bf16.mxu0 %v7549
    %8228 = vmatpush1.bf16.msra.mxu0 %v7548
    %8229 = vmatprep.subr.bf16.mxu0 %v7557
    %8230 = vmatpush1.bf16.msra.mxu0 %v7556
    %8231 = vmatprep.mubr.bf16.mxu0 %v4962
    %8232 = vmatmul.mubr.bf16.gmra.mrb[0].mxu0 %v4961
    %v8233 = vpop.f32.mrb[0].mxu0
    %v8234 = vadd.f32 %v8193, %v8233
    %v8235 = vpop.f32.mrb[0].mxu0
    %v8236 = vadd.f32 %v8195, %v8235
    %v8237 = vpop.f32.mrb[0].mxu0
    %v8238 = vpop.f32.mrb[0].mxu0
    %8239 = vdwg.mxu0
    %8240 = vmatprep.subr.bf16.mxu0 %v7055
    %8241 = vmatpush1.bf16.msra.mxu0 %v7054
    %8242 = vmatprep.subr.bf16.mxu0 %v7063
    %8243 = vmatpush1.bf16.msra.mxu0 %v7062
    %8244 = vmatprep.subr.bf16.mxu0 %v7071
    %8245 = vmatpush1.bf16.msra.mxu0 %v7070
    %8246 = vmatprep.subr.bf16.mxu0 %v7079
    %8247 = vmatpush1.bf16.msra.mxu0 %v7078
    %8248 = vmatprep.subr.bf16.mxu0 %v7087
    %8249 = vmatpush1.bf16.msra.mxu0 %v7086
    %8250 = vmatprep.subr.bf16.mxu0 %v7095
    %8251 = vmatpush1.bf16.msra.mxu0 %v7094
    %8252 = vmatprep.subr.bf16.mxu0 %v7103
    %8253 = vmatpush1.bf16.msra.mxu0 %v7102
    %8254 = vmatprep.subr.bf16.mxu0 %v7111
    %8255 = vmatpush1.bf16.msra.mxu0 %v7110
    %8256 = vmatprep.subr.bf16.mxu0 %v7119
    %8257 = vmatpush1.bf16.msra.mxu0 %v7118
    %8258 = vmatprep.subr.bf16.mxu0 %v7127
    %8259 = vmatpush1.bf16.msra.mxu0 %v7126
    %8260 = vmatprep.subr.bf16.mxu0 %v7135
    %8261 = vmatpush1.bf16.msra.mxu0 %v7134
    %8262 = vmatprep.subr.bf16.mxu0 %v7143
    %8263 = vmatpush1.bf16.msra.mxu0 %v7142
    %8264 = vmatprep.subr.bf16.mxu0 %v7151
    %8265 = vmatpush1.bf16.msra.mxu0 %v7150
    %8266 = vmatprep.subr.bf16.mxu0 %v7159
    %8267 = vmatpush1.bf16.msra.mxu0 %v7158
    %8268 = vmatprep.subr.bf16.mxu0 %v7167
    %8269 = vmatpush1.bf16.msra.mxu0 %v7166
    %8270 = vmatprep.subr.bf16.mxu0 %v7175
    %8271 = vmatpush1.bf16.msra.mxu0 %v7174
    %8272 = vmatprep.mubr.bf16.mxu0 %v4956
    %8273 = vmatmul.mubr.bf16.gmra.mrb[0].mxu0 %v4955
    %v8274 = vpop.f32.mrb[0].mxu0
    %v8275 = vadd.f32 %v5487, %v8274
    %v8276 = vpop.f32.mrb[0].mxu0
    %v8277 = vadd.f32 %v5491, %v8276
    %v8278 = vpop.f32.mrb[0].mxu0
    %v8279 = vpop.f32.mrb[0].mxu0
    %8280 = vdwg.mxu0
    %8281 = vmatprep.subr.bf16.mxu0 %v7183
    %8282 = vmatpush1.bf16.msra.mxu0 %v7182
    %8283 = vmatprep.subr.bf16.mxu0 %v7191
    %8284 = vmatpush1.bf16.msra.mxu0 %v7190
    %8285 = vmatprep.subr.bf16.mxu0 %v7199
    %8286 = vmatpush1.bf16.msra.mxu0 %v7198
    %8287 = vmatprep.subr.bf16.mxu0 %v7207
    %8288 = vmatpush1.bf16.msra.mxu0 %v7206
    %8289 = vmatprep.subr.bf16.mxu0 %v7215
    %8290 = vmatpush1.bf16.msra.mxu0 %v7214
    %8291 = vmatprep.subr.bf16.mxu0 %v7223
    %8292 = vmatpush1.bf16.msra.mxu0 %v7222
    %8293 = vmatprep.subr.bf16.mxu0 %v7231
    %8294 = vmatpush1.bf16.msra.mxu0 %v7230
    %8295 = vmatprep.subr.bf16.mxu0 %v7239
    %8296 = vmatpush1.bf16.msra.mxu0 %v7238
    %8297 = vmatprep.subr.bf16.mxu0 %v7247
    %8298 = vmatpush1.bf16.msra.mxu0 %v7246
    %8299 = vmatprep.subr.bf16.mxu0 %v7255
    %8300 = vmatpush1.bf16.msra.mxu0 %v7254
    %8301 = vmatprep.subr.bf16.mxu0 %v7263
    %8302 = vmatpush1.bf16.msra.mxu0 %v7262
    %8303 = vmatprep.subr.bf16.mxu0 %v7271
    %8304 = vmatpush1.bf16.msra.mxu0 %v7270
    %8305 = vmatprep.subr.bf16.mxu0 %v7279
    %8306 = vmatpush1.bf16.msra.mxu0 %v7278
    %8307 = vmatprep.subr.bf16.mxu0 %v7287
    %8308 = vmatpush1.bf16.msra.mxu0 %v7286
    %8309 = vmatprep.subr.bf16.mxu0 %v7295
    %8310 = vmatpush1.bf16.msra.mxu0 %v7294
    %8311 = vmatprep.subr.bf16.mxu0 %v7303
    %8312 = vmatpush1.bf16.msra.mxu0 %v7302
    %8313 = vmatprep.mubr.bf16.mxu0 %v4958
    %8314 = vmatmul.mubr.bf16.gmra.mrb[0].mxu0 %v4957
    %v8315 = vpop.f32.mrb[0].mxu0
    %v8316 = vadd.f32 %v8275, %v8315
    %v8317 = vpop.f32.mrb[0].mxu0
    %v8318 = vadd.f32 %v8277, %v8317
    %v8319 = vpop.f32.mrb[0].mxu0
    %v8320 = vpop.f32.mrb[0].mxu0
    %8321 = vdwg.mxu0
    %8322 = vmatprep.subr.bf16.mxu0 %v7311
    %8323 = vmatpush1.bf16.msra.mxu0 %v7310
    %8324 = vmatprep.subr.bf16.mxu0 %v7319
    %8325 = vmatpush1.bf16.msra.mxu0 %v7318
    %8326 = vmatprep.subr.bf16.mxu0 %v7327
    %8327 = vmatpush1.bf16.msra.mxu0 %v7326
    %8328 = vmatprep.subr.bf16.mxu0 %v7335
    %8329 = vmatpush1.bf16.msra.mxu0 %v7334
    %8330 = vmatprep.subr.bf16.mxu0 %v7343
    %8331 = vmatpush1.bf16.msra.mxu0 %v7342
    %8332 = vmatprep.subr.bf16.mxu0 %v7351
    %8333 = vmatpush1.bf16.msra.mxu0 %v7350
    %8334 = vmatprep.subr.bf16.mxu0 %v7359
    %8335 = vmatpush1.bf16.msra.mxu0 %v7358
    %8336 = vmatprep.subr.bf16.mxu0 %v7367
    %8337 = vmatpush1.bf16.msra.mxu0 %v7366
    %8338 = vmatprep.subr.bf16.mxu0 %v7375
    %8339 = vmatpush1.bf16.msra.mxu0 %v7374
    %8340 = vmatprep.subr.bf16.mxu0 %v7383
    %8341 = vmatpush1.bf16.msra.mxu0 %v7382
    %8342 = vmatprep.subr.bf16.mxu0 %v7391
    %8343 = vmatpush1.bf16.msra.mxu0 %v7390
    %8344 = vmatprep.subr.bf16.mxu0 %v7399
    %8345 = vmatpush1.bf16.msra.mxu0 %v7398
    %8346 = vmatprep.subr.bf16.mxu0 %v7407
    %8347 = vmatpush1.bf16.msra.mxu0 %v7406
    %8348 = vmatprep.subr.bf16.mxu0 %v7415
    %8349 = vmatpush1.bf16.msra.mxu0 %v7414
    %8350 = vmatprep.subr.bf16.mxu0 %v7423
    %8351 = vmatpush1.bf16.msra.mxu0 %v7422
    %8352 = vmatprep.subr.bf16.mxu0 %v7431
    %8353 = vmatpush1.bf16.msra.mxu0 %v7430
    %8354 = vmatprep.mubr.bf16.mxu0 %v4960
    %8355 = vmatmul.mubr.bf16.gmra.mrb[0].mxu0 %v4959
    %v8356 = vpop.f32.mrb[0].mxu0
    %v8357 = vadd.f32 %v8316, %v8356
    %v8358 = vpop.f32.mrb[0].mxu0
    %v8359 = vadd.f32 %v8318, %v8358
    %v8360 = vpop.f32.mrb[0].mxu0
    %v8361 = vpop.f32.mrb[0].mxu0
    %8362 = vdwg.mxu0
    %8363 = vmatprep.subr.bf16.mxu0 %v7439
    %8364 = vmatpush1.bf16.msra.mxu0 %v7438
    %8365 = vmatprep.subr.bf16.mxu0 %v7447
    %8366 = vmatpush1.bf16.msra.mxu0 %v7446
    %8367 = vmatprep.subr.bf16.mxu0 %v7455
    %8368 = vmatpush1.bf16.msra.mxu0 %v7454
    %8369 = vmatprep.subr.bf16.mxu0 %v7463
    %8370 = vmatpush1.bf16.msra.mxu0 %v7462
    %8371 = vmatprep.subr.bf16.mxu0 %v7471
    %8372 = vmatpush1.bf16.msra.mxu0 %v7470
    %8373 = vmatprep.subr.bf16.mxu0 %v7479
    %8374 = vmatpush1.bf16.msra.mxu0 %v7478
    %8375 = vmatprep.subr.bf16.mxu0 %v7487
    %8376 = vmatpush1.bf16.msra.mxu0 %v7486
    %8377 = vmatprep.subr.bf16.mxu0 %v7495
    %8378 = vmatpush1.bf16.msra.mxu0 %v7494
    %8379 = vmatprep.subr.bf16.mxu0 %v7503
    %8380 = vmatpush1.bf16.msra.mxu0 %v7502
    %8381 = vmatprep.subr.bf16.mxu0 %v7511
    %8382 = vmatpush1.bf16.msra.mxu0 %v7510
    %8383 = vmatprep.subr.bf16.mxu0 %v7519
    %8384 = vmatpush1.bf16.msra.mxu0 %v7518
    %8385 = vmatprep.subr.bf16.mxu0 %v7527
    %8386 = vmatpush1.bf16.msra.mxu0 %v7526
    %8387 = vmatprep.subr.bf16.mxu0 %v7535
    %8388 = vmatpush1.bf16.msra.mxu0 %v7534
    %8389 = vmatprep.subr.bf16.mxu0 %v7543
    %8390 = vmatpush1.bf16.msra.mxu0 %v7542
    %8391 = vmatprep.subr.bf16.mxu0 %v7551
    %8392 = vmatpush1.bf16.msra.mxu0 %v7550
    %8393 = vmatprep.subr.bf16.mxu0 %v7559
    %8394 = vmatpush1.bf16.msra.mxu0 %v7558
    %8395 = vmatprep.mubr.bf16.mxu0 %v4962
    %8396 = vmatmul.mubr.bf16.gmra.mrb[0].mxu0 %v4961
    %v8397 = vpop.f32.mrb[0].mxu0
    %v8398 = vadd.f32 %v8357, %v8397
    %v8399 = vpop.f32.mrb[0].mxu0
    %v8400 = vadd.f32 %v8359, %v8399
    %v8401 = vpop.f32.mrb[0].mxu0
    %v8402 = vpop.f32.mrb[0].mxu0
    %8403 = vdwg.mxu0
    %8404 = vmatprep.subr.bf16.mxu0 %v7057
    %8405 = vmatpush1.bf16.msra.mxu0 %v7056
    %8406 = vmatprep.subr.bf16.mxu0 %v7065
    %8407 = vmatpush1.bf16.msra.mxu0 %v7064
    %8408 = vmatprep.subr.bf16.mxu0 %v7073
    %8409 = vmatpush1.bf16.msra.mxu0 %v7072
    %8410 = vmatprep.subr.bf16.mxu0 %v7081
    %8411 = vmatpush1.bf16.msra.mxu0 %v7080
    %8412 = vmatprep.subr.bf16.mxu0 %v7089
    %8413 = vmatpush1.bf16.msra.mxu0 %v7088
    %8414 = vmatprep.subr.bf16.mxu0 %v7097
    %8415 = vmatpush1.bf16.msra.mxu0 %v7096
    %8416 = vmatprep.subr.bf16.mxu0 %v7105
    %8417 = vmatpush1.bf16.msra.mxu0 %v7104
    %8418 = vmatprep.subr.bf16.mxu0 %v7113
    %8419 = vmatpush1.bf16.msra.mxu0 %v7112
    %8420 = vmatprep.subr.bf16.mxu0 %v7121
    %8421 = vmatpush1.bf16.msra.mxu0 %v7120
    %8422 = vmatprep.subr.bf16.mxu0 %v7129
    %8423 = vmatpush1.bf16.msra.mxu0 %v7128
    %8424 = vmatprep.subr.bf16.mxu0 %v7137
    %8425 = vmatpush1.bf16.msra.mxu0 %v7136
    %8426 = vmatprep.subr.bf16.mxu0 %v7145
    %8427 = vmatpush1.bf16.msra.mxu0 %v7144
    %8428 = vmatprep.subr.bf16.mxu0 %v7153
    %8429 = vmatpush1.bf16.msra.mxu0 %v7152
    %8430 = vmatprep.subr.bf16.mxu0 %v7161
    %8431 = vmatpush1.bf16.msra.mxu0 %v7160
    %8432 = vmatprep.subr.bf16.mxu0 %v7169
    %8433 = vmatpush1.bf16.msra.mxu0 %v7168
    %8434 = vmatprep.subr.bf16.mxu0 %v7177
    %8435 = vmatpush1.bf16.msra.mxu0 %v7176
    %8436 = vmatprep.mubr.bf16.mxu0 %v4956
    %8437 = vmatmul.mubr.bf16.gmra.mrb[0].mxu0 %v4955
    %v8438 = vpop.f32.mrb[0].mxu0
    %v8439 = vadd.f32 %v5495, %v8438
    %v8440 = vpop.f32.mrb[0].mxu0
    %v8441 = vadd.f32 %v5499, %v8440
    %v8442 = vpop.f32.mrb[0].mxu0
    %v8443 = vpop.f32.mrb[0].mxu0
    %8444 = vdwg.mxu0
    %8445 = vmatprep.subr.bf16.mxu0 %v7185
    %8446 = vmatpush1.bf16.msra.mxu0 %v7184
    %8447 = vmatprep.subr.bf16.mxu0 %v7193
    %8448 = vmatpush1.bf16.msra.mxu0 %v7192
    %8449 = vmatprep.subr.bf16.mxu0 %v7201
    %8450 = vmatpush1.bf16.msra.mxu0 %v7200
    %8451 = vmatprep.subr.bf16.mxu0 %v7209
    %8452 = vmatpush1.bf16.msra.mxu0 %v7208
    %8453 = vmatprep.subr.bf16.mxu0 %v7217
    %8454 = vmatpush1.bf16.msra.mxu0 %v7216
    %8455 = vmatprep.subr.bf16.mxu0 %v7225
    %8456 = vmatpush1.bf16.msra.mxu0 %v7224
    %8457 = vmatprep.subr.bf16.mxu0 %v7233
    %8458 = vmatpush1.bf16.msra.mxu0 %v7232
    %8459 = vmatprep.subr.bf16.mxu0 %v7241
    %8460 = vmatpush1.bf16.msra.mxu0 %v7240
    %8461 = vmatprep.subr.bf16.mxu0 %v7249
    %8462 = vmatpush1.bf16.msra.mxu0 %v7248
    %8463 = vmatprep.subr.bf16.mxu0 %v7257
    %8464 = vmatpush1.bf16.msra.mxu0 %v7256
    %8465 = vmatprep.subr.bf16.mxu0 %v7265
    %8466 = vmatpush1.bf16.msra.mxu0 %v7264
    %8467 = vmatprep.subr.bf16.mxu0 %v7273
    %8468 = vmatpush1.bf16.msra.mxu0 %v7272
    %8469 = vmatprep.subr.bf16.mxu0 %v7281
    %8470 = vmatpush1.bf16.msra.mxu0 %v7280
    %8471 = vmatprep.subr.bf16.mxu0 %v7289
    %8472 = vmatpush1.bf16.msra.mxu0 %v7288
    %8473 = vmatprep.subr.bf16.mxu0 %v7297
    %8474 = vmatpush1.bf16.msra.mxu0 %v7296
    %8475 = vmatprep.subr.bf16.mxu0 %v7305
    %8476 = vmatpush1.bf16.msra.mxu0 %v7304
    %8477 = vmatprep.mubr.bf16.mxu0 %v4958
    %8478 = vmatmul.mubr.bf16.gmra.mrb[0].mxu0 %v4957
    %v8479 = vpop.f32.mrb[0].mxu0
    %v8480 = vadd.f32 %v8439, %v8479
    %v8481 = vpop.f32.mrb[0].mxu0
    %v8482 = vadd.f32 %v8441, %v8481
    %v8483 = vpop.f32.mrb[0].mxu0
    %v8484 = vpop.f32.mrb[0].mxu0
    %8485 = vdwg.mxu0
    %8486 = vmatprep.subr.bf16.mxu0 %v7313
    %8487 = vmatpush1.bf16.msra.mxu0 %v7312
    %8488 = vmatprep.subr.bf16.mxu0 %v7321
    %8489 = vmatpush1.bf16.msra.mxu0 %v7320
    %8490 = vmatprep.subr.bf16.mxu0 %v7329
    %8491 = vmatpush1.bf16.msra.mxu0 %v7328
    %8492 = vmatprep.subr.bf16.mxu0 %v7337
    %8493 = vmatpush1.bf16.msra.mxu0 %v7336
    %8494 = vmatprep.subr.bf16.mxu0 %v7345
    %8495 = vmatpush1.bf16.msra.mxu0 %v7344
    %8496 = vmatprep.subr.bf16.mxu0 %v7353
    %8497 = vmatpush1.bf16.msra.mxu0 %v7352
    %8498 = vmatprep.subr.bf16.mxu0 %v7361
    %8499 = vmatpush1.bf16.msra.mxu0 %v7360
    %8500 = vmatprep.subr.bf16.mxu0 %v7369
    %8501 = vmatpush1.bf16.msra.mxu0 %v7368
    %8502 = vmatprep.subr.bf16.mxu0 %v7377
    %8503 = vmatpush1.bf16.msra.mxu0 %v7376
    %8504 = vmatprep.subr.bf16.mxu0 %v7385
    %8505 = vmatpush1.bf16.msra.mxu0 %v7384
    %8506 = vmatprep.subr.bf16.mxu0 %v7393
    %8507 = vmatpush1.bf16.msra.mxu0 %v7392
    %8508 = vmatprep.subr.bf16.mxu0 %v7401
    %8509 = vmatpush1.bf16.msra.mxu0 %v7400
    %8510 = vmatprep.subr.bf16.mxu0 %v7409
    %8511 = vmatpush1.bf16.msra.mxu0 %v7408
    %8512 = vmatprep.subr.bf16.mxu0 %v7417
    %8513 = vmatpush1.bf16.msra.mxu0 %v7416
    %8514 = vmatprep.subr.bf16.mxu0 %v7425
    %8515 = vmatpush1.bf16.msra.mxu0 %v7424
    %8516 = vmatprep.subr.bf16.mxu0 %v7433
    %8517 = vmatpush1.bf16.msra.mxu0 %v7432
    %8518 = vmatprep.mubr.bf16.mxu0 %v4960
    %8519 = vmatmul.mubr.bf16.gmra.mrb[0].mxu0 %v4959
    %v8520 = vpop.f32.mrb[0].mxu0
    %v8521 = vadd.f32 %v8480, %v8520
    %v8522 = vpop.f32.mrb[0].mxu0
    %v8523 = vadd.f32 %v8482, %v8522
    %v8524 = vpop.f32.mrb[0].mxu0
    %v8525 = vpop.f32.mrb[0].mxu0
    %8526 = vdwg.mxu0
    %8527 = vmatprep.subr.bf16.mxu0 %v7441
    %8528 = vmatpush1.bf16.msra.mxu0 %v7440
    %8529 = vmatprep.subr.bf16.mxu0 %v7449
    %8530 = vmatpush1.bf16.msra.mxu0 %v7448
    %8531 = vmatprep.subr.bf16.mxu0 %v7457
    %8532 = vmatpush1.bf16.msra.mxu0 %v7456
    %8533 = vmatprep.subr.bf16.mxu0 %v7465
    %8534 = vmatpush1.bf16.msra.mxu0 %v7464
    %8535 = vmatprep.subr.bf16.mxu0 %v7473
    %8536 = vmatpush1.bf16.msra.mxu0 %v7472
    %8537 = vmatprep.subr.bf16.mxu0 %v7481
    %8538 = vmatpush1.bf16.msra.mxu0 %v7480
    %8539 = vmatprep.subr.bf16.mxu0 %v7489
    %8540 = vmatpush1.bf16.msra.mxu0 %v7488
    %8541 = vmatprep.subr.bf16.mxu0 %v7497
    %8542 = vmatpush1.bf16.msra.mxu0 %v7496
    %8543 = vmatprep.subr.bf16.mxu0 %v7505
    %8544 = vmatpush1.bf16.msra.mxu0 %v7504
    %8545 = vmatprep.subr.bf16.mxu0 %v7513
    %8546 = vmatpush1.bf16.msra.mxu0 %v7512
    %8547 = vmatprep.subr.bf16.mxu0 %v7521
    %8548 = vmatpush1.bf16.msra.mxu0 %v7520
    %8549 = vmatprep.subr.bf16.mxu0 %v7529
    %8550 = vmatpush1.bf16.msra.mxu0 %v7528
    %8551 = vmatprep.subr.bf16.mxu0 %v7537
    %8552 = vmatpush1.bf16.msra.mxu0 %v7536
    %8553 = vmatprep.subr.bf16.mxu0 %v7545
    %8554 = vmatpush1.bf16.msra.mxu0 %v7544
    %8555 = vmatprep.subr.bf16.mxu0 %v7553
    %8556 = vmatpush1.bf16.msra.mxu0 %v7552
    %8557 = vmatprep.subr.bf16.mxu0 %v7561
    %8558 = vmatpush1.bf16.msra.mxu0 %v7560
    %8559 = vmatprep.mubr.bf16.mxu0 %v4962
    %8560 = vmatmul.mubr.bf16.gmra.mrb[0].mxu0 %v4961
    %v8561 = vpop.f32.mrb[0].mxu0
    %v8562 = vadd.f32 %v8521, %v8561
    %v8563 = vpop.f32.mrb[0].mxu0
    %v8564 = vadd.f32 %v8523, %v8563
    %v8565 = vpop.f32.mrb[0].mxu0
    %v8566 = vpop.f32.mrb[0].mxu0
    %8567 = vdwg.mxu0
    %8568 = vmatprep.subr.bf16.mxu0 %v7059
    %8569 = vmatpush1.bf16.msra.mxu0 %v7058
    %8570 = vmatprep.subr.bf16.mxu0 %v7067
    %8571 = vmatpush1.bf16.msra.mxu0 %v7066
    %8572 = vmatprep.subr.bf16.mxu0 %v7075
    %8573 = vmatpush1.bf16.msra.mxu0 %v7074
    %8574 = vmatprep.subr.bf16.mxu0 %v7083
    %8575 = vmatpush1.bf16.msra.mxu0 %v7082
    %8576 = vmatprep.subr.bf16.mxu0 %v7091
    %8577 = vmatpush1.bf16.msra.mxu0 %v7090
    %8578 = vmatprep.subr.bf16.mxu0 %v7099
    %8579 = vmatpush1.bf16.msra.mxu0 %v7098
    %8580 = vmatprep.subr.bf16.mxu0 %v7107
    %8581 = vmatpush1.bf16.msra.mxu0 %v7106
    %8582 = vmatprep.subr.bf16.mxu0 %v7115
    %8583 = vmatpush1.bf16.msra.mxu0 %v7114
    %8584 = vmatprep.subr.bf16.mxu0 %v7123
    %8585 = vmatpush1.bf16.msra.mxu0 %v7122
    %8586 = vmatprep.subr.bf16.mxu0 %v7131
    %8587 = vmatpush1.bf16.msra.mxu0 %v7130
    %8588 = vmatprep.subr.bf16.mxu0 %v7139
    %8589 = vmatpush1.bf16.msra.mxu0 %v7138
    %8590 = vmatprep.subr.bf16.mxu0 %v7147
    %8591 = vmatpush1.bf16.msra.mxu0 %v7146
    %8592 = vmatprep.subr.bf16.mxu0 %v7155
    %8593 = vmatpush1.bf16.msra.mxu0 %v7154
    %8594 = vmatprep.subr.bf16.mxu0 %v7163
    %8595 = vmatpush1.bf16.msra.mxu0 %v7162
    %8596 = vmatprep.subr.bf16.mxu0 %v7171
    %8597 = vmatpush1.bf16.msra.mxu0 %v7170
    %8598 = vmatprep.subr.bf16.mxu0 %v7179
    %8599 = vmatpush1.bf16.msra.mxu0 %v7178
    %8600 = vmatprep.mubr.bf16.mxu0 %v4956
    %8601 = vmatmul.mubr.bf16.gmra.mrb[0].mxu0 %v4955
    %v8602 = vpop.f32.mrb[0].mxu0
    %v8603 = vadd.f32 %v5503, %v8602
    %v8604 = vpop.f32.mrb[0].mxu0
    %v8605 = vadd.f32 %v5507, %v8604
    %v8606 = vpop.f32.mrb[0].mxu0
    %v8607 = vpop.f32.mrb[0].mxu0
    %8608 = vdwg.mxu0
    %8609 = vmatprep.subr.bf16.mxu0 %v7187
    %8610 = vmatpush1.bf16.msra.mxu0 %v7186
    %8611 = vmatprep.subr.bf16.mxu0 %v7195
    %8612 = vmatpush1.bf16.msra.mxu0 %v7194
    %8613 = vmatprep.subr.bf16.mxu0 %v7203
    %8614 = vmatpush1.bf16.msra.mxu0 %v7202
    %8615 = vmatprep.subr.bf16.mxu0 %v7211
    %8616 = vmatpush1.bf16.msra.mxu0 %v7210
    %8617 = vmatprep.subr.bf16.mxu0 %v7219
    %8618 = vmatpush1.bf16.msra.mxu0 %v7218
    %8619 = vmatprep.subr.bf16.mxu0 %v7227
    %8620 = vmatpush1.bf16.msra.mxu0 %v7226
    %8621 = vmatprep.subr.bf16.mxu0 %v7235
    %8622 = vmatpush1.bf16.msra.mxu0 %v7234
    %8623 = vmatprep.subr.bf16.mxu0 %v7243
    %8624 = vmatpush1.bf16.msra.mxu0 %v7242
    %8625 = vmatprep.subr.bf16.mxu0 %v7251
    %8626 = vmatpush1.bf16.msra.mxu0 %v7250
    %8627 = vmatprep.subr.bf16.mxu0 %v7259
    %8628 = vmatpush1.bf16.msra.mxu0 %v7258
    %8629 = vmatprep.subr.bf16.mxu0 %v7267
    %8630 = vmatpush1.bf16.msra.mxu0 %v7266
    %8631 = vmatprep.subr.bf16.mxu0 %v7275
    %8632 = vmatpush1.bf16.msra.mxu0 %v7274
    %8633 = vmatprep.subr.bf16.mxu0 %v7283
    %8634 = vmatpush1.bf16.msra.mxu0 %v7282
    %8635 = vmatprep.subr.bf16.mxu0 %v7291
    %8636 = vmatpush1.bf16.msra.mxu0 %v7290
    %8637 = vmatprep.subr.bf16.mxu0 %v7299
    %8638 = vmatpush1.bf16.msra.mxu0 %v7298
    %8639 = vmatprep.subr.bf16.mxu0 %v7307
    %8640 = vmatpush1.bf16.msra.mxu0 %v7306
    %8641 = vmatprep.mubr.bf16.mxu0 %v4958
    %8642 = vmatmul.mubr.bf16.gmra.mrb[0].mxu0 %v4957
    %v8643 = vpop.f32.mrb[0].mxu0
    %v8644 = vadd.f32 %v8603, %v8643
    %v8645 = vpop.f32.mrb[0].mxu0
    %v8646 = vadd.f32 %v8605, %v8645
    %v8647 = vpop.f32.mrb[0].mxu0
    %v8648 = vpop.f32.mrb[0].mxu0
    %8649 = vdwg.mxu0
    %8650 = vmatprep.subr.bf16.mxu0 %v7315
    %8651 = vmatpush1.bf16.msra.mxu0 %v7314
    %8652 = vmatprep.subr.bf16.mxu0 %v7323
    %8653 = vmatpush1.bf16.msra.mxu0 %v7322
    %8654 = vmatprep.subr.bf16.mxu0 %v7331
    %8655 = vmatpush1.bf16.msra.mxu0 %v7330
    %8656 = vmatprep.subr.bf16.mxu0 %v7339
    %8657 = vmatpush1.bf16.msra.mxu0 %v7338
    %8658 = vmatprep.subr.bf16.mxu0 %v7347
    %8659 = vmatpush1.bf16.msra.mxu0 %v7346
    %8660 = vmatprep.subr.bf16.mxu0 %v7355
    %8661 = vmatpush1.bf16.msra.mxu0 %v7354
    %8662 = vmatprep.subr.bf16.mxu0 %v7363
    %8663 = vmatpush1.bf16.msra.mxu0 %v7362
    %8664 = vmatprep.subr.bf16.mxu0 %v7371
    %8665 = vmatpush1.bf16.msra.mxu0 %v7370
    %8666 = vmatprep.subr.bf16.mxu0 %v7379
    %8667 = vmatpush1.bf16.msra.mxu0 %v7378
    %8668 = vmatprep.subr.bf16.mxu0 %v7387
    %8669 = vmatpush1.bf16.msra.mxu0 %v7386
    %8670 = vmatprep.subr.bf16.mxu0 %v7395
    %8671 = vmatpush1.bf16.msra.mxu0 %v7394
    %8672 = vmatprep.subr.bf16.mxu0 %v7403
    %8673 = vmatpush1.bf16.msra.mxu0 %v7402
    %8674 = vmatprep.subr.bf16.mxu0 %v7411
    %8675 = vmatpush1.bf16.msra.mxu0 %v7410
    %8676 = vmatprep.subr.bf16.mxu0 %v7419
    %8677 = vmatpush1.bf16.msra.mxu0 %v7418
    %8678 = vmatprep.subr.bf16.mxu0 %v7427
    %8679 = vmatpush1.bf16.msra.mxu0 %v7426
    %8680 = vmatprep.subr.bf16.mxu0 %v7435
    %8681 = vmatpush1.bf16.msra.mxu0 %v7434
    %8682 = vmatprep.mubr.bf16.mxu0 %v4960
    %8683 = vmatmul.mubr.bf16.gmra.mrb[0].mxu0 %v4959
    %v8684 = vpop.f32.mrb[0].mxu0
    %v8685 = vadd.f32 %v8644, %v8684
    %v8686 = vpop.f32.mrb[0].mxu0
    %v8687 = vadd.f32 %v8646, %v8686
    %v8688 = vpop.f32.mrb[0].mxu0
    %v8689 = vpop.f32.mrb[0].mxu0
    %8690 = vdwg.mxu0
    %8691 = vmatprep.subr.bf16.mxu0 %v7443
    %8692 = vmatpush1.bf16.msra.mxu0 %v7442
    %8693 = vmatprep.subr.bf16.mxu0 %v7451
    %8694 = vmatpush1.bf16.msra.mxu0 %v7450
    %8695 = vmatprep.subr.bf16.mxu0 %v7459
    %8696 = vmatpush1.bf16.msra.mxu0 %v7458
    %8697 = vmatprep.subr.bf16.mxu0 %v7467
    %8698 = vmatpush1.bf16.msra.mxu0 %v7466
    %8699 = vmatprep.subr.bf16.mxu0 %v7475
    %8700 = vmatpush1.bf16.msra.mxu0 %v7474
    %8701 = vmatprep.subr.bf16.mxu0 %v7483
    %8702 = vmatpush1.bf16.msra.mxu0 %v7482
    %8703 = vmatprep.subr.bf16.mxu0 %v7491
    %8704 = vmatpush1.bf16.msra.mxu0 %v7490
    %8705 = vmatprep.subr.bf16.mxu0 %v7499
    %8706 = vmatpush1.bf16.msra.mxu0 %v7498
    %8707 = vmatprep.subr.bf16.mxu0 %v7507
    %8708 = vmatpush1.bf16.msra.mxu0 %v7506
    %8709 = vmatprep.subr.bf16.mxu0 %v7515
    %8710 = vmatpush1.bf16.msra.mxu0 %v7514
    %8711 = vmatprep.subr.bf16.mxu0 %v7523
    %8712 = vmatpush1.bf16.msra.mxu0 %v7522
    %8713 = vmatprep.subr.bf16.mxu0 %v7531
    %8714 = vmatpush1.bf16.msra.mxu0 %v7530
    %8715 = vmatprep.subr.bf16.mxu0 %v7539
    %8716 = vmatpush1.bf16.msra.mxu0 %v7538
    %8717 = vmatprep.subr.bf16.mxu0 %v7547
    %8718 = vmatpush1.bf16.msra.mxu0 %v7546
    %8719 = vmatprep.subr.bf16.mxu0 %v7555
    %8720 = vmatpush1.bf16.msra.mxu0 %v7554
    %8721 = vmatprep.subr.bf16.mxu0 %v7563
    %8722 = vmatpush1.bf16.msra.mxu0 %v7562
    %8723 = vmatprep.mubr.bf16.mxu0 %v4962
    %8724 = vmatmul.mubr.bf16.gmra.mrb[0].mxu0 %v4961
    %v8725 = vpop.f32.mrb[0].mxu0
    %v8726 = vadd.f32 %v8685, %v8725
    %v8727 = vpop.f32.mrb[0].mxu0
    %v8728 = vadd.f32 %v8687, %v8727
    %v8729 = vpop.f32.mrb[0].mxu0
    %v8730 = vpop.f32.mrb[0].mxu0
    %8731 = vdwg.mxu0
    %s8732 = scalar_lea.vmem [#allocation16], 7
    %v8733 = vld [vmem:[%s8732] ss:$8 sm:$0xf]
    %v8734 = vld [vmem:[%s8732] ss:$8 sm:$0xf0]
    %v8735 = vor.u32 %v8733, %v8734
    %s8736 = scalar_lea.vmem [#allocation16], 64
    %v8737 = vld [vmem:[%s8736] ss:$8 sm:$0xf]
    %v8738 = vld [vmem:[%s8736] ss:$8 sm:$0xf0]
    %v8739 = vor.u32 %v8737, %v8738
    %v8740 = vadd.f32 %v8234, %v8236
    %v8741 = vadd.f32 %v8740, %v8398
    %v8742 = vadd.f32 %v8741, %v8400
    %v8743 = vadd.f32 %v8742, %v8562
    %v8744 = vadd.f32 %v8743, %v8564
    %v8745 = vadd.f32 %v8744, %v8726
    %v8746 = vadd.f32 %v8745, %v8728
    %8747 = vadd.xlane.f32.xlu0 %v8746
    %v8748 = vpop.xlane.xlu0 %8747
    %v8749 = vmul.f32 %v8748, %v796
    %v8750 = vmul.f32 %v8234, %v8234
    %v8751 = vmul.f32 %v8236, %v8236
    %v8752 = vmul.f32 %v8398, %v8398
    %v8753 = vmul.f32 %v8400, %v8400
    %v8754 = vmul.f32 %v8562, %v8562
    %v8755 = vmul.f32 %v8564, %v8564
    %v8756 = vmul.f32 %v8726, %v8726
    %v8757 = vmul.f32 %v8728, %v8728
    %v8758 = vadd.f32 %v8750, %v8751
    %v8759 = vadd.f32 %v8758, %v8752
    %v8760 = vadd.f32 %v8759, %v8753
    %v8761 = vadd.f32 %v8760, %v8754
    %v8762 = vadd.f32 %v8761, %v8755
    %v8763 = vadd.f32 %v8762, %v8756
    %v8764 = vadd.f32 %v8763, %v8757
    %8765 = vadd.xlane.f32.xlu0 %v8764
    %v8766 = vpop.xlane.xlu0 %8765
    %v8767 = vmul.f32 %v8766, %v796
    %v8768 = vmul.f32 %v8749, %v8749
    %v8769 = vsub.f32 %v8767, %v8768
    %v8770 = vmax.f32 %v8769, 0.0
    %v8771 = vadd.f32 %v8770, 1e-05
    %v8772 = vrsqrt.pop %v8771
    %v8773 = vsub.f32 %v8234, %v8749
    %v8774 = vsub.f32 %v8236, %v8749
    %v8775 = vsub.f32 %v8398, %v8749
    %v8776 = vsub.f32 %v8400, %v8749
    %v8777 = vsub.f32 %v8562, %v8749
    %v8778 = vsub.f32 %v8564, %v8749
    %v8779 = vsub.f32 %v8726, %v8749
    %v8780 = vsub.f32 %v8728, %v8749
    %v8781 = vmul.f32 %v8773, %v8772
    %v8782 = vmul.f32 %v8774, %v8772
    %v8783 = vmul.f32 %v8775, %v8772
    %v8784 = vmul.f32 %v8776, %v8772
    %v8785 = vmul.f32 %v8777, %v8772
    %v8786 = vmul.f32 %v8778, %v8772
    %v8787 = vmul.f32 %v8779, %v8772
    %v8788 = vmul.f32 %v8780, %v8772
    %v8790 = vlaneseq
    %v8791 = vshrl.u32 %v8790, 7
    %v8792 = vsub.s32 0, %v8791
    %v8793 = vrot.slane %v8735, %v8792
    %v8794 = vlaneseq
    %v8795 = vshrl.u32 %v8794, 7
    %v8796 = vsub.s32 1, %v8795
    %v8797 = vrot.slane %v8735, %v8796
    %v8798 = vlaneseq
    %v8799 = vshrl.u32 %v8798, 7
    %v8800 = vsub.s32 2, %v8799
    %v8801 = vrot.slane %v8735, %v8800
    %v8802 = vlaneseq
    %v8803 = vshrl.u32 %v8802, 7
    %v8804 = vsub.s32 3, %v8803
    %v8805 = vrot.slane %v8735, %v8804
    %v8806 = vlaneseq
    %v8807 = vshrl.u32 %v8806, 7
    %v8808 = vsub.s32 4, %v8807
    %v8809 = vrot.slane %v8735, %v8808
    %v8810 = vlaneseq
    %v8811 = vshrl.u32 %v8810, 7
    %v8812 = vsub.s32 5, %v8811
    %v8813 = vrot.slane %v8735, %v8812
    %v8814 = vlaneseq
    %v8815 = vshrl.u32 %v8814, 7
    %v8816 = vsub.s32 6, %v8815
    %v8817 = vrot.slane %v8735, %v8816
    %v8818 = vlaneseq
    %v8819 = vshrl.u32 %v8818, 7
    %v8820 = vsub.s32 7, %v8819
    %v8821 = vrot.slane %v8735, %v8820
    %v8830 = vmul.f32 %v8781, %v8793
    %v8831 = vmul.f32 %v8782, %v8797
    %v8832 = vmul.f32 %v8783, %v8801
    %v8833 = vmul.f32 %v8784, %v8805
    %v8834 = vmul.f32 %v8785, %v8809
    %v8835 = vmul.f32 %v8786, %v8813
    %v8836 = vmul.f32 %v8787, %v8817
    %v8837 = vmul.f32 %v8788, %v8821
    %v8839 = vlaneseq
    %v8840 = vshrl.u32 %v8839, 7
    %v8841 = vsub.s32 0, %v8840
    %v8842 = vrot.slane %v8739, %v8841
    %v8843 = vlaneseq
    %v8844 = vshrl.u32 %v8843, 7
    %v8845 = vsub.s32 1, %v8844
    %v8846 = vrot.slane %v8739, %v8845
    %v8847 = vlaneseq
    %v8848 = vshrl.u32 %v8847, 7
    %v8849 = vsub.s32 2, %v8848
    %v8850 = vrot.slane %v8739, %v8849
    %v8851 = vlaneseq
    %v8852 = vshrl.u32 %v8851, 7
    %v8853 = vsub.s32 3, %v8852
    %v8854 = vrot.slane %v8739, %v8853
    %v8855 = vlaneseq
    %v8856 = vshrl.u32 %v8855, 7
    %v8857 = vsub.s32 4, %v8856
    %v8858 = vrot.slane %v8739, %v8857
    %v8859 = vlaneseq
    %v8860 = vshrl.u32 %v8859, 7
    %v8861 = vsub.s32 5, %v8860
    %v8862 = vrot.slane %v8739, %v8861
    %v8863 = vlaneseq
    %v8864 = vshrl.u32 %v8863, 7
    %v8865 = vsub.s32 6, %v8864
    %v8866 = vrot.slane %v8739, %v8865
    %v8867 = vlaneseq
    %v8868 = vshrl.u32 %v8867, 7
    %v8869 = vsub.s32 7, %v8868
    %v8870 = vrot.slane %v8739, %v8869
    %v8879 = vadd.f32 %v8830, %v8842
    %v8880 = vadd.f32 %v8831, %v8846
    %v8881 = vadd.f32 %v8832, %v8850
    %v8882 = vadd.f32 %v8833, %v8854
    %v8883 = vadd.f32 %v8834, %v8858
    %v8884 = vadd.f32 %v8835, %v8862
    %v8885 = vadd.f32 %v8836, %v8866
    %v8886 = vadd.f32 %v8837, %v8870
    %v8887 = vadd.f32 %v967, %v8879
    %v8888 = vadd.f32 %v968, %v8880
    %v8889 = vadd.f32 %v969, %v8881
    %v8890 = vadd.f32 %v970, %v8882
    %v8891 = vadd.f32 %v971, %v8883
    %v8892 = vadd.f32 %v972, %v8884
    %v8893 = vadd.f32 %v973, %v8885
    %v8894 = vadd.f32 %v974, %v8886
    %v8895 = vld [vmem:[#allocation17] ss:$8 sm:$0xf]
    %v8896 = vpack.c.bf16 %v8887, %v8887
    %v8897 = vpack.c.bf16 %v8888, %v8888
    %v8898 = vpack.c.bf16 %v8889, %v8889
    %v8899 = vpack.c.bf16 %v8890, %v8890
    %v8900 = vpack.c.bf16 %v8891, %v8891
    %v8901 = vpack.c.bf16 %v8892, %v8892
    %v8902 = vpack.c.bf16 %v8893, %v8893
    %v8903 = vpack.c.bf16 %v8894, %v8894
    %v8904 = vld [vmem:[#allocation10] sm:$0xff]
    %v8905 = vld [vmem:[#allocation10 + $0x8] sm:$0xff]
    %v8906 = vld [vmem:[#allocation10 + $0x10] sm:$0xff]
    %v8907 = vld [vmem:[#allocation10 + $0x18] sm:$0xff]
    %v8908 = vld [vmem:[#allocation10 + $0x20] sm:$0xff]
    %v8909 = vld [vmem:[#allocation10 + $0x28] sm:$0xff]
    %v8910 = vld [vmem:[#allocation10 + $0x30] sm:$0xff]
    %v8911 = vld [vmem:[#allocation10 + $0x38] sm:$0xff]
    %v8912 = vld [vmem:[#allocation10 + $0x40] sm:$0xff]
    %v8913 = vld [vmem:[#allocation10 + $0x48] sm:$0xff]
    %v8914 = vld [vmem:[#allocation10 + $0x50] sm:$0xff]
    %v8915 = vld [vmem:[#allocation10 + $0x58] sm:$0xff]
    %v8916 = vld [vmem:[#allocation10 + $0x60] sm:$0xff]
    %v8917 = vld [vmem:[#allocation10 + $0x68] sm:$0xff]
    %v8918 = vld [vmem:[#allocation10 + $0x70] sm:$0xff]
    %v8919 = vld [vmem:[#allocation10 + $0x78] sm:$0xff]
    %v8920 = vld [vmem:[#allocation10 + $0x80] sm:$0xff]
    %v8921 = vld [vmem:[#allocation10 + $0x88] sm:$0xff]
    %v8922 = vld [vmem:[#allocation10 + $0x90] sm:$0xff]
    %v8923 = vld [vmem:[#allocation10 + $0x98] sm:$0xff]
    %v8924 = vld [vmem:[#allocation10 + $0xa0] sm:$0xff]
    %v8925 = vld [vmem:[#allocation10 + $0xa8] sm:$0xff]
    %v8926 = vld [vmem:[#allocation10 + $0xb0] sm:$0xff]
    %v8927 = vld [vmem:[#allocation10 + $0xb8] sm:$0xff]
    %v8928 = vld [vmem:[#allocation10 + $0xc0] sm:$0xff]
    %v8929 = vld [vmem:[#allocation10 + $0xc8] sm:$0xff]
    %v8930 = vld [vmem:[#allocation10 + $0xd0] sm:$0xff]
    %v8931 = vld [vmem:[#allocation10 + $0xd8] sm:$0xff]
    %v8932 = vld [vmem:[#allocation10 + $0xe0] sm:$0xff]
    %v8933 = vld [vmem:[#allocation10 + $0xe8] sm:$0xff]
    %v8934 = vld [vmem:[#allocation10 + $0xf0] sm:$0xff]
    %v8935 = vld [vmem:[#allocation10 + $0xf8] sm:$0xff]
    %v8936 = vld [vmem:[#allocation10 + $0x100] sm:$0xff]
    %v8937 = vld [vmem:[#allocation10 + $0x108] sm:$0xff]
    %v8938 = vld [vmem:[#allocation10 + $0x110] sm:$0xff]
    %v8939 = vld [vmem:[#allocation10 + $0x118] sm:$0xff]
    %v8940 = vld [vmem:[#allocation10 + $0x120] sm:$0xff]
    %v8941 = vld [vmem:[#allocation10 + $0x128] sm:$0xff]
    %v8942 = vld [vmem:[#allocation10 + $0x130] sm:$0xff]
    %v8943 = vld [vmem:[#allocation10 + $0x138] sm:$0xff]
    %v8944 = vld [vmem:[#allocation10 + $0x140] sm:$0xff]
    %v8945 = vld [vmem:[#allocation10 + $0x148] sm:$0xff]
    %v8946 = vld [vmem:[#allocation10 + $0x150] sm:$0xff]
    %v8947 = vld [vmem:[#allocation10 + $0x158] sm:$0xff]
    %v8948 = vld [vmem:[#allocation10 + $0x160] sm:$0xff]
    %v8949 = vld [vmem:[#allocation10 + $0x168] sm:$0xff]
    %v8950 = vld [vmem:[#allocation10 + $0x170] sm:$0xff]
    %v8951 = vld [vmem:[#allocation10 + $0x178] sm:$0xff]
    %v8952 = vld [vmem:[#allocation10 + $0x180] sm:$0xff]
    %v8953 = vld [vmem:[#allocation10 + $0x188] sm:$0xff]
    %v8954 = vld [vmem:[#allocation10 + $0x190] sm:$0xff]
    %v8955 = vld [vmem:[#allocation10 + $0x198] sm:$0xff]
    %v8956 = vld [vmem:[#allocation10 + $0x1a0] sm:$0xff]
    %v8957 = vld [vmem:[#allocation10 + $0x1a8] sm:$0xff]
    %v8958 = vld [vmem:[#allocation10 + $0x1b0] sm:$0xff]
    %v8959 = vld [vmem:[#allocation10 + $0x1b8] sm:$0xff]
    %v8960 = vld [vmem:[#allocation10 + $0x1c0] sm:$0xff]
    %v8961 = vld [vmem:[#allocation10 + $0x1c8] sm:$0xff]
    %v8962 = vld [vmem:[#allocation10 + $0x1d0] sm:$0xff]
    %v8963 = vld [vmem:[#allocation10 + $0x1d8] sm:$0xff]
    %v8964 = vld [vmem:[#allocation10 + $0x1e0] sm:$0xff]
    %v8965 = vld [vmem:[#allocation10 + $0x1e8] sm:$0xff]
    %v8966 = vld [vmem:[#allocation10 + $0x1f0] sm:$0xff]
    %v8967 = vld [vmem:[#allocation10 + $0x1f8] sm:$0xff]
    %v8968 = vld [vmem:[#allocation10 + $0x200] sm:$0xff]
    %v8969 = vld [vmem:[#allocation10 + $0x208] sm:$0xff]
    %v8970 = vld [vmem:[#allocation10 + $0x210] sm:$0xff]
    %v8971 = vld [vmem:[#allocation10 + $0x218] sm:$0xff]
    %v8972 = vld [vmem:[#allocation10 + $0x220] sm:$0xff]
    %v8973 = vld [vmem:[#allocation10 + $0x228] sm:$0xff]
    %v8974 = vld [vmem:[#allocation10 + $0x230] sm:$0xff]
    %v8975 = vld [vmem:[#allocation10 + $0x238] sm:$0xff]
    %v8976 = vld [vmem:[#allocation10 + $0x240] sm:$0xff]
    %v8977 = vld [vmem:[#allocation10 + $0x248] sm:$0xff]
    %v8978 = vld [vmem:[#allocation10 + $0x250] sm:$0xff]
    %v8979 = vld [vmem:[#allocation10 + $0x258] sm:$0xff]
    %v8980 = vld [vmem:[#allocation10 + $0x260] sm:$0xff]
    %v8981 = vld [vmem:[#allocation10 + $0x268] sm:$0xff]
    %v8982 = vld [vmem:[#allocation10 + $0x270] sm:$0xff]
    %v8983 = vld [vmem:[#allocation10 + $0x278] sm:$0xff]
    %v8984 = vld [vmem:[#allocation10 + $0x280] sm:$0xff]
    %v8985 = vld [vmem:[#allocation10 + $0x288] sm:$0xff]
    %v8986 = vld [vmem:[#allocation10 + $0x290] sm:$0xff]
    %v8987 = vld [vmem:[#allocation10 + $0x298] sm:$0xff]
    %v8988 = vld [vmem:[#allocation10 + $0x2a0] sm:$0xff]
    %v8989 = vld [vmem:[#allocation10 + $0x2a8] sm:$0xff]
    %v8990 = vld [vmem:[#allocation10 + $0x2b0] sm:$0xff]
    %v8991 = vld [vmem:[#allocation10 + $0x2b8] sm:$0xff]
    %v8992 = vld [vmem:[#allocation10 + $0x2c0] sm:$0xff]
    %v8993 = vld [vmem:[#allocation10 + $0x2c8] sm:$0xff]
    %v8994 = vld [vmem:[#allocation10 + $0x2d0] sm:$0xff]
    %v8995 = vld [vmem:[#allocation10 + $0x2d8] sm:$0xff]
    %v8996 = vld [vmem:[#allocation10 + $0x2e0] sm:$0xff]
    %v8997 = vld [vmem:[#allocation10 + $0x2e8] sm:$0xff]
    %v8998 = vld [vmem:[#allocation10 + $0x2f0] sm:$0xff]
    %v8999 = vld [vmem:[#allocation10 + $0x2f8] sm:$0xff]
    %v9000 = vld [vmem:[#allocation10 + $0x300] sm:$0xff]
    %v9001 = vld [vmem:[#allocation10 + $0x308] sm:$0xff]
    %v9002 = vld [vmem:[#allocation10 + $0x310] sm:$0xff]
    %v9003 = vld [vmem:[#allocation10 + $0x318] sm:$0xff]
    %v9004 = vld [vmem:[#allocation10 + $0x320] sm:$0xff]
    %v9005 = vld [vmem:[#allocation10 + $0x328] sm:$0xff]
    %v9006 = vld [vmem:[#allocation10 + $0x330] sm:$0xff]
    %v9007 = vld [vmem:[#allocation10 + $0x338] sm:$0xff]
    %v9008 = vld [vmem:[#allocation10 + $0x340] sm:$0xff]
    %v9009 = vld [vmem:[#allocation10 + $0x348] sm:$0xff]
    %v9010 = vld [vmem:[#allocation10 + $0x350] sm:$0xff]
    %v9011 = vld [vmem:[#allocation10 + $0x358] sm:$0xff]
    %v9012 = vld [vmem:[#allocation10 + $0x360] sm:$0xff]
    %v9013 = vld [vmem:[#allocation10 + $0x368] sm:$0xff]
    %v9014 = vld [vmem:[#allocation10 + $0x370] sm:$0xff]
    %v9015 = vld [vmem:[#allocation10 + $0x378] sm:$0xff]
    %v9016 = vld [vmem:[#allocation10 + $0x380] sm:$0xff]
    %v9017 = vld [vmem:[#allocation10 + $0x388] sm:$0xff]
    %v9018 = vld [vmem:[#allocation10 + $0x390] sm:$0xff]
    %v9019 = vld [vmem:[#allocation10 + $0x398] sm:$0xff]
    %v9020 = vld [vmem:[#allocation10 + $0x3a0] sm:$0xff]
    %v9021 = vld [vmem:[#allocation10 + $0x3a8] sm:$0xff]
    %v9022 = vld [vmem:[#allocation10 + $0x3b0] sm:$0xff]
    %v9023 = vld [vmem:[#allocation10 + $0x3b8] sm:$0xff]
    %v9024 = vld [vmem:[#allocation10 + $0x3c0] sm:$0xff]
    %v9025 = vld [vmem:[#allocation10 + $0x3c8] sm:$0xff]
    %v9026 = vld [vmem:[#allocation10 + $0x3d0] sm:$0xff]
    %v9027 = vld [vmem:[#allocation10 + $0x3d8] sm:$0xff]
    %v9028 = vld [vmem:[#allocation10 + $0x3e0] sm:$0xff]
    %v9029 = vld [vmem:[#allocation10 + $0x3e8] sm:$0xff]
    %v9030 = vld [vmem:[#allocation10 + $0x3f0] sm:$0xff]
    %v9031 = vld [vmem:[#allocation10 + $0x3f8] sm:$0xff]
    %v9032 = vld [vmem:[#allocation10 + $0x400] sm:$0xff]
    %v9033 = vld [vmem:[#allocation10 + $0x408] sm:$0xff]
    %v9034 = vld [vmem:[#allocation10 + $0x410] sm:$0xff]
    %v9035 = vld [vmem:[#allocation10 + $0x418] sm:$0xff]
    %v9036 = vld [vmem:[#allocation10 + $0x420] sm:$0xff]
    %v9037 = vld [vmem:[#allocation10 + $0x428] sm:$0xff]
    %v9038 = vld [vmem:[#allocation10 + $0x430] sm:$0xff]
    %v9039 = vld [vmem:[#allocation10 + $0x438] sm:$0xff]
    %v9040 = vld [vmem:[#allocation10 + $0x440] sm:$0xff]
    %v9041 = vld [vmem:[#allocation10 + $0x448] sm:$0xff]
    %v9042 = vld [vmem:[#allocation10 + $0x450] sm:$0xff]
    %v9043 = vld [vmem:[#allocation10 + $0x458] sm:$0xff]
    %v9044 = vld [vmem:[#allocation10 + $0x460] sm:$0xff]
    %v9045 = vld [vmem:[#allocation10 + $0x468] sm:$0xff]
    %v9046 = vld [vmem:[#allocation10 + $0x470] sm:$0xff]
    %v9047 = vld [vmem:[#allocation10 + $0x478] sm:$0xff]
    %v9048 = vld [vmem:[#allocation10 + $0x480] sm:$0xff]
    %v9049 = vld [vmem:[#allocation10 + $0x488] sm:$0xff]
    %v9050 = vld [vmem:[#allocation10 + $0x490] sm:$0xff]
    %v9051 = vld [vmem:[#allocation10 + $0x498] sm:$0xff]
    %v9052 = vld [vmem:[#allocation10 + $0x4a0] sm:$0xff]
    %v9053 = vld [vmem:[#allocation10 + $0x4a8] sm:$0xff]
    %v9054 = vld [vmem:[#allocation10 + $0x4b0] sm:$0xff]
    %v9055 = vld [vmem:[#allocation10 + $0x4b8] sm:$0xff]
    %v9056 = vld [vmem:[#allocation10 + $0x4c0] sm:$0xff]
    %v9057 = vld [vmem:[#allocation10 + $0x4c8] sm:$0xff]
    %v9058 = vld [vmem:[#allocation10 + $0x4d0] sm:$0xff]
    %v9059 = vld [vmem:[#allocation10 + $0x4d8] sm:$0xff]
    %v9060 = vld [vmem:[#allocation10 + $0x4e0] sm:$0xff]
    %v9061 = vld [vmem:[#allocation10 + $0x4e8] sm:$0xff]
    %v9062 = vld [vmem:[#allocation10 + $0x4f0] sm:$0xff]
    %v9063 = vld [vmem:[#allocation10 + $0x4f8] sm:$0xff]
    %v9064 = vld [vmem:[#allocation10 + $0x500] sm:$0xff]
    %v9065 = vld [vmem:[#allocation10 + $0x508] sm:$0xff]
    %v9066 = vld [vmem:[#allocation10 + $0x510] sm:$0xff]
    %v9067 = vld [vmem:[#allocation10 + $0x518] sm:$0xff]
    %v9068 = vld [vmem:[#allocation10 + $0x520] sm:$0xff]
    %v9069 = vld [vmem:[#allocation10 + $0x528] sm:$0xff]
    %v9070 = vld [vmem:[#allocation10 + $0x530] sm:$0xff]
    %v9071 = vld [vmem:[#allocation10 + $0x538] sm:$0xff]
    %v9072 = vld [vmem:[#allocation10 + $0x540] sm:$0xff]
    %v9073 = vld [vmem:[#allocation10 + $0x548] sm:$0xff]
    %v9074 = vld [vmem:[#allocation10 + $0x550] sm:$0xff]
    %v9075 = vld [vmem:[#allocation10 + $0x558] sm:$0xff]
    %v9076 = vld [vmem:[#allocation10 + $0x560] sm:$0xff]
    %v9077 = vld [vmem:[#allocation10 + $0x568] sm:$0xff]
    %v9078 = vld [vmem:[#allocation10 + $0x570] sm:$0xff]
    %v9079 = vld [vmem:[#allocation10 + $0x578] sm:$0xff]
    %v9080 = vld [vmem:[#allocation10 + $0x580] sm:$0xff]
    %v9081 = vld [vmem:[#allocation10 + $0x588] sm:$0xff]
    %v9082 = vld [vmem:[#allocation10 + $0x590] sm:$0xff]
    %v9083 = vld [vmem:[#allocation10 + $0x598] sm:$0xff]
    %v9084 = vld [vmem:[#allocation10 + $0x5a0] sm:$0xff]
    %v9085 = vld [vmem:[#allocation10 + $0x5a8] sm:$0xff]
    %v9086 = vld [vmem:[#allocation10 + $0x5b0] sm:$0xff]
    %v9087 = vld [vmem:[#allocation10 + $0x5b8] sm:$0xff]
    %v9088 = vld [vmem:[#allocation10 + $0x5c0] sm:$0xff]
    %v9089 = vld [vmem:[#allocation10 + $0x5c8] sm:$0xff]
    %v9090 = vld [vmem:[#allocation10 + $0x5d0] sm:$0xff]
    %v9091 = vld [vmem:[#allocation10 + $0x5d8] sm:$0xff]
    %v9092 = vld [vmem:[#allocation10 + $0x5e0] sm:$0xff]
    %v9093 = vld [vmem:[#allocation10 + $0x5e8] sm:$0xff]
    %v9094 = vld [vmem:[#allocation10 + $0x5f0] sm:$0xff]
    %v9095 = vld [vmem:[#allocation10 + $0x5f8] sm:$0xff]
    %v9096 = vld [vmem:[#allocation10 + $0x600] sm:$0xff]
    %v9097 = vld [vmem:[#allocation10 + $0x608] sm:$0xff]
    %v9098 = vld [vmem:[#allocation10 + $0x610] sm:$0xff]
    %v9099 = vld [vmem:[#allocation10 + $0x618] sm:$0xff]
    %v9100 = vld [vmem:[#allocation10 + $0x620] sm:$0xff]
    %v9101 = vld [vmem:[#allocation10 + $0x628] sm:$0xff]
    %v9102 = vld [vmem:[#allocation10 + $0x630] sm:$0xff]
    %v9103 = vld [vmem:[#allocation10 + $0x638] sm:$0xff]
    %v9104 = vld [vmem:[#allocation10 + $0x640] sm:$0xff]
    %v9105 = vld [vmem:[#allocation10 + $0x648] sm:$0xff]
    %v9106 = vld [vmem:[#allocation10 + $0x650] sm:$0xff]
    %v9107 = vld [vmem:[#allocation10 + $0x658] sm:$0xff]
    %v9108 = vld [vmem:[#allocation10 + $0x660] sm:$0xff]
    %v9109 = vld [vmem:[#allocation10 + $0x668] sm:$0xff]
    %v9110 = vld [vmem:[#allocation10 + $0x670] sm:$0xff]
    %v9111 = vld [vmem:[#allocation10 + $0x678] sm:$0xff]
    %v9112 = vld [vmem:[#allocation10 + $0x680] sm:$0xff]
    %v9113 = vld [vmem:[#allocation10 + $0x688] sm:$0xff]
    %v9114 = vld [vmem:[#allocation10 + $0x690] sm:$0xff]
    %v9115 = vld [vmem:[#allocation10 + $0x698] sm:$0xff]
    %v9116 = vld [vmem:[#allocation10 + $0x6a0] sm:$0xff]
    %v9117 = vld [vmem:[#allocation10 + $0x6a8] sm:$0xff]
    %v9118 = vld [vmem:[#allocation10 + $0x6b0] sm:$0xff]
    %v9119 = vld [vmem:[#allocation10 + $0x6b8] sm:$0xff]
    %v9120 = vld [vmem:[#allocation10 + $0x6c0] sm:$0xff]
    %v9121 = vld [vmem:[#allocation10 + $0x6c8] sm:$0xff]
    %v9122 = vld [vmem:[#allocation10 + $0x6d0] sm:$0xff]
    %v9123 = vld [vmem:[#allocation10 + $0x6d8] sm:$0xff]
    %v9124 = vld [vmem:[#allocation10 + $0x6e0] sm:$0xff]
    %v9125 = vld [vmem:[#allocation10 + $0x6e8] sm:$0xff]
    %v9126 = vld [vmem:[#allocation10 + $0x6f0] sm:$0xff]
    %v9127 = vld [vmem:[#allocation10 + $0x6f8] sm:$0xff]
    %v9128 = vld [vmem:[#allocation10 + $0x700] sm:$0xff]
    %v9129 = vld [vmem:[#allocation10 + $0x708] sm:$0xff]
    %v9130 = vld [vmem:[#allocation10 + $0x710] sm:$0xff]
    %v9131 = vld [vmem:[#allocation10 + $0x718] sm:$0xff]
    %v9132 = vld [vmem:[#allocation10 + $0x720] sm:$0xff]
    %v9133 = vld [vmem:[#allocation10 + $0x728] sm:$0xff]
    %v9134 = vld [vmem:[#allocation10 + $0x730] sm:$0xff]
    %v9135 = vld [vmem:[#allocation10 + $0x738] sm:$0xff]
    %v9136 = vld [vmem:[#allocation10 + $0x740] sm:$0xff]
    %v9137 = vld [vmem:[#allocation10 + $0x748] sm:$0xff]
    %v9138 = vld [vmem:[#allocation10 + $0x750] sm:$0xff]
    %v9139 = vld [vmem:[#allocation10 + $0x758] sm:$0xff]
    %v9140 = vld [vmem:[#allocation10 + $0x760] sm:$0xff]
    %v9141 = vld [vmem:[#allocation10 + $0x768] sm:$0xff]
    %v9142 = vld [vmem:[#allocation10 + $0x770] sm:$0xff]
    %v9143 = vld [vmem:[#allocation10 + $0x778] sm:$0xff]
    %v9144 = vld [vmem:[#allocation10 + $0x780] sm:$0xff]
    %v9145 = vld [vmem:[#allocation10 + $0x788] sm:$0xff]
    %v9146 = vld [vmem:[#allocation10 + $0x790] sm:$0xff]
    %v9147 = vld [vmem:[#allocation10 + $0x798] sm:$0xff]
    %v9148 = vld [vmem:[#allocation10 + $0x7a0] sm:$0xff]
    %v9149 = vld [vmem:[#allocation10 + $0x7a8] sm:$0xff]
    %v9150 = vld [vmem:[#allocation10 + $0x7b0] sm:$0xff]
    %v9151 = vld [vmem:[#allocation10 + $0x7b8] sm:$0xff]
    %v9152 = vld [vmem:[#allocation10 + $0x7c0] sm:$0xff]
    %v9153 = vld [vmem:[#allocation10 + $0x7c8] sm:$0xff]
    %v9154 = vld [vmem:[#allocation10 + $0x7d0] sm:$0xff]
    %v9155 = vld [vmem:[#allocation10 + $0x7d8] sm:$0xff]
    %v9156 = vld [vmem:[#allocation10 + $0x7e0] sm:$0xff]
    %v9157 = vld [vmem:[#allocation10 + $0x7e8] sm:$0xff]
    %v9158 = vld [vmem:[#allocation10 + $0x7f0] sm:$0xff]
    %v9159 = vld [vmem:[#allocation10 + $0x7f8] sm:$0xff]
    %v9161 = vlaneseq
    %v9162 = vshrl.u32 %v9161, 7
    %v9163 = vsub.s32 0, %v9162
    %v9164 = vrot.slane %v8895, %v9163
    %v9165 = vlaneseq
    %v9166 = vshrl.u32 %v9165, 7
    %v9167 = vsub.s32 1, %v9166
    %v9168 = vrot.slane %v8895, %v9167
    %v9169 = vlaneseq
    %v9170 = vshrl.u32 %v9169, 7
    %v9171 = vsub.s32 2, %v9170
    %v9172 = vrot.slane %v8895, %v9171
    %v9173 = vlaneseq
    %v9174 = vshrl.u32 %v9173, 7
    %v9175 = vsub.s32 3, %v9174
    %v9176 = vrot.slane %v8895, %v9175
    %v9437 = vunpack.c.l.b16 %v8904
    %v9438 = vunpack.c.h.b16 %v8904
    %v9439 = vunpack.c.l.b16 %v8905
    %v9440 = vunpack.c.h.b16 %v8905
    %v9441 = vunpack.c.l.b16 %v8906
    %v9442 = vunpack.c.h.b16 %v8906
    %v9443 = vunpack.c.l.b16 %v8907
    %v9444 = vunpack.c.h.b16 %v8907
    %v9445 = vunpack.c.l.b16 %v8908
    %v9446 = vunpack.c.h.b16 %v8908
    %v9447 = vunpack.c.l.b16 %v8909
    %v9448 = vunpack.c.h.b16 %v8909
    %v9449 = vunpack.c.l.b16 %v8910
    %v9450 = vunpack.c.h.b16 %v8910
    %v9451 = vunpack.c.l.b16 %v8911
    %v9452 = vunpack.c.h.b16 %v8911
    %v9453 = vunpack.c.l.b16 %v8912
    %v9454 = vunpack.c.h.b16 %v8912
    %v9455 = vunpack.c.l.b16 %v8913
    %v9456 = vunpack.c.h.b16 %v8913
    %v9457 = vunpack.c.l.b16 %v8914
    %v9458 = vunpack.c.h.b16 %v8914
    %v9459 = vunpack.c.l.b16 %v8915
    %v9460 = vunpack.c.h.b16 %v8915
    %v9461 = vunpack.c.l.b16 %v8916
    %v9462 = vunpack.c.h.b16 %v8916
    %v9463 = vunpack.c.l.b16 %v8917
    %v9464 = vunpack.c.h.b16 %v8917
    %v9465 = vunpack.c.l.b16 %v8918
    %v9466 = vunpack.c.h.b16 %v8918
    %v9467 = vunpack.c.l.b16 %v8919
    %v9468 = vunpack.c.h.b16 %v8919
    %v9469 = vunpack.c.l.b16 %v8920
    %v9470 = vunpack.c.h.b16 %v8920
    %v9471 = vunpack.c.l.b16 %v8921
    %v9472 = vunpack.c.h.b16 %v8921
    %v9473 = vunpack.c.l.b16 %v8922
    %v9474 = vunpack.c.h.b16 %v8922
    %v9475 = vunpack.c.l.b16 %v8923
    %v9476 = vunpack.c.h.b16 %v8923
    %v9477 = vunpack.c.l.b16 %v8924
    %v9478 = vunpack.c.h.b16 %v8924
    %v9479 = vunpack.c.l.b16 %v8925
    %v9480 = vunpack.c.h.b16 %v8925
    %v9481 = vunpack.c.l.b16 %v8926
    %v9482 = vunpack.c.h.b16 %v8926
    %v9483 = vunpack.c.l.b16 %v8927
    %v9484 = vunpack.c.h.b16 %v8927
    %v9485 = vunpack.c.l.b16 %v8928
    %v9486 = vunpack.c.h.b16 %v8928
    %v9487 = vunpack.c.l.b16 %v8929
    %v9488 = vunpack.c.h.b16 %v8929
    %v9489 = vunpack.c.l.b16 %v8930
    %v9490 = vunpack.c.h.b16 %v8930
    %v9491 = vunpack.c.l.b16 %v8931
    %v9492 = vunpack.c.h.b16 %v8931
    %v9493 = vunpack.c.l.b16 %v8932
    %v9494 = vunpack.c.h.b16 %v8932
    %v9495 = vunpack.c.l.b16 %v8933
    %v9496 = vunpack.c.h.b16 %v8933
    %v9497 = vunpack.c.l.b16 %v8934
    %v9498 = vunpack.c.h.b16 %v8934
    %v9499 = vunpack.c.l.b16 %v8935
    %v9500 = vunpack.c.h.b16 %v8935
    %v9501 = vunpack.c.l.b16 %v8936
    %v9502 = vunpack.c.h.b16 %v8936
    %v9503 = vunpack.c.l.b16 %v8937
    %v9504 = vunpack.c.h.b16 %v8937
    %v9505 = vunpack.c.l.b16 %v8938
    %v9506 = vunpack.c.h.b16 %v8938
    %v9507 = vunpack.c.l.b16 %v8939
    %v9508 = vunpack.c.h.b16 %v8939
    %v9509 = vunpack.c.l.b16 %v8940
    %v9510 = vunpack.c.h.b16 %v8940
    %v9511 = vunpack.c.l.b16 %v8941
    %v9512 = vunpack.c.h.b16 %v8941
    %v9513 = vunpack.c.l.b16 %v8942
    %v9514 = vunpack.c.h.b16 %v8942
    %v9515 = vunpack.c.l.b16 %v8943
    %v9516 = vunpack.c.h.b16 %v8943
    %v9517 = vunpack.c.l.b16 %v8944
    %v9518 = vunpack.c.h.b16 %v8944
    %v9519 = vunpack.c.l.b16 %v8945
    %v9520 = vunpack.c.h.b16 %v8945
    %v9521 = vunpack.c.l.b16 %v8946
    %v9522 = vunpack.c.h.b16 %v8946
    %v9523 = vunpack.c.l.b16 %v8947
    %v9524 = vunpack.c.h.b16 %v8947
    %v9525 = vunpack.c.l.b16 %v8948
    %v9526 = vunpack.c.h.b16 %v8948
    %v9527 = vunpack.c.l.b16 %v8949
    %v9528 = vunpack.c.h.b16 %v8949
    %v9529 = vunpack.c.l.b16 %v8950
    %v9530 = vunpack.c.h.b16 %v8950
    %v9531 = vunpack.c.l.b16 %v8951
    %v9532 = vunpack.c.h.b16 %v8951
    %v9533 = vunpack.c.l.b16 %v8952
    %v9534 = vunpack.c.h.b16 %v8952
    %v9535 = vunpack.c.l.b16 %v8953
    %v9536 = vunpack.c.h.b16 %v8953
    %v9537 = vunpack.c.l.b16 %v8954
    %v9538 = vunpack.c.h.b16 %v8954
    %v9539 = vunpack.c.l.b16 %v8955
    %v9540 = vunpack.c.h.b16 %v8955
    %v9541 = vunpack.c.l.b16 %v8956
    %v9542 = vunpack.c.h.b16 %v8956
    %v9543 = vunpack.c.l.b16 %v8957
    %v9544 = vunpack.c.h.b16 %v8957
    %v9545 = vunpack.c.l.b16 %v8958
    %v9546 = vunpack.c.h.b16 %v8958
    %v9547 = vunpack.c.l.b16 %v8959
    %v9548 = vunpack.c.h.b16 %v8959
    %v9549 = vunpack.c.l.b16 %v8960
    %v9550 = vunpack.c.h.b16 %v8960
    %v9551 = vunpack.c.l.b16 %v8961
    %v9552 = vunpack.c.h.b16 %v8961
    %v9553 = vunpack.c.l.b16 %v8962
    %v9554 = vunpack.c.h.b16 %v8962
    %v9555 = vunpack.c.l.b16 %v8963
    %v9556 = vunpack.c.h.b16 %v8963
    %v9557 = vunpack.c.l.b16 %v8964
    %v9558 = vunpack.c.h.b16 %v8964
    %v9559 = vunpack.c.l.b16 %v8965
    %v9560 = vunpack.c.h.b16 %v8965
    %v9561 = vunpack.c.l.b16 %v8966
    %v9562 = vunpack.c.h.b16 %v8966
    %v9563 = vunpack.c.l.b16 %v8967
    %v9564 = vunpack.c.h.b16 %v8967
    %v9565 = vunpack.c.l.b16 %v8968
    %v9566 = vunpack.c.h.b16 %v8968
    %v9567 = vunpack.c.l.b16 %v8969
    %v9568 = vunpack.c.h.b16 %v8969
    %v9569 = vunpack.c.l.b16 %v8970
    %v9570 = vunpack.c.h.b16 %v8970
    %v9571 = vunpack.c.l.b16 %v8971
    %v9572 = vunpack.c.h.b16 %v8971
    %v9573 = vunpack.c.l.b16 %v8972
    %v9574 = vunpack.c.h.b16 %v8972
    %v9575 = vunpack.c.l.b16 %v8973
    %v9576 = vunpack.c.h.b16 %v8973
    %v9577 = vunpack.c.l.b16 %v8974
    %v9578 = vunpack.c.h.b16 %v8974
    %v9579 = vunpack.c.l.b16 %v8975
    %v9580 = vunpack.c.h.b16 %v8975
    %v9581 = vunpack.c.l.b16 %v8976
    %v9582 = vunpack.c.h.b16 %v8976
    %v9583 = vunpack.c.l.b16 %v8977
    %v9584 = vunpack.c.h.b16 %v8977
    %v9585 = vunpack.c.l.b16 %v8978
    %v9586 = vunpack.c.h.b16 %v8978
    %v9587 = vunpack.c.l.b16 %v8979
    %v9588 = vunpack.c.h.b16 %v8979
    %v9589 = vunpack.c.l.b16 %v8980
    %v9590 = vunpack.c.h.b16 %v8980
    %v9591 = vunpack.c.l.b16 %v8981
    %v9592 = vunpack.c.h.b16 %v8981
    %v9593 = vunpack.c.l.b16 %v8982
    %v9594 = vunpack.c.h.b16 %v8982
    %v9595 = vunpack.c.l.b16 %v8983
    %v9596 = vunpack.c.h.b16 %v8983
    %v9597 = vunpack.c.l.b16 %v8984
    %v9598 = vunpack.c.h.b16 %v8984
    %v9599 = vunpack.c.l.b16 %v8985
    %v9600 = vunpack.c.h.b16 %v8985
    %v9601 = vunpack.c.l.b16 %v8986
    %v9602 = vunpack.c.h.b16 %v8986
    %v9603 = vunpack.c.l.b16 %v8987
    %v9604 = vunpack.c.h.b16 %v8987
    %v9605 = vunpack.c.l.b16 %v8988
    %v9606 = vunpack.c.h.b16 %v8988
    %v9607 = vunpack.c.l.b16 %v8989
    %v9608 = vunpack.c.h.b16 %v8989
    %v9609 = vunpack.c.l.b16 %v8990
    %v9610 = vunpack.c.h.b16 %v8990
    %v9611 = vunpack.c.l.b16 %v8991
    %v9612 = vunpack.c.h.b16 %v8991
    %v9613 = vunpack.c.l.b16 %v8992
    %v9614 = vunpack.c.h.b16 %v8992
    %v9615 = vunpack.c.l.b16 %v8993
    %v9616 = vunpack.c.h.b16 %v8993
    %v9617 = vunpack.c.l.b16 %v8994
    %v9618 = vunpack.c.h.b16 %v8994
    %v9619 = vunpack.c.l.b16 %v8995
    %v9620 = vunpack.c.h.b16 %v8995
    %v9621 = vunpack.c.l.b16 %v8996
    %v9622 = vunpack.c.h.b16 %v8996
    %v9623 = vunpack.c.l.b16 %v8997
    %v9624 = vunpack.c.h.b16 %v8997
    %v9625 = vunpack.c.l.b16 %v8998
    %v9626 = vunpack.c.h.b16 %v8998
    %v9627 = vunpack.c.l.b16 %v8999
    %v9628 = vunpack.c.h.b16 %v8999
    %v9629 = vunpack.c.l.b16 %v9000
    %v9630 = vunpack.c.h.b16 %v9000
    %v9631 = vunpack.c.l.b16 %v9001
    %v9632 = vunpack.c.h.b16 %v9001
    %v9633 = vunpack.c.l.b16 %v9002
    %v9634 = vunpack.c.h.b16 %v9002
    %v9635 = vunpack.c.l.b16 %v9003
    %v9636 = vunpack.c.h.b16 %v9003
    %v9637 = vunpack.c.l.b16 %v9004
    %v9638 = vunpack.c.h.b16 %v9004
    %v9639 = vunpack.c.l.b16 %v9005
    %v9640 = vunpack.c.h.b16 %v9005
    %v9641 = vunpack.c.l.b16 %v9006
    %v9642 = vunpack.c.h.b16 %v9006
    %v9643 = vunpack.c.l.b16 %v9007
    %v9644 = vunpack.c.h.b16 %v9007
    %v9645 = vunpack.c.l.b16 %v9008
    %v9646 = vunpack.c.h.b16 %v9008
    %v9647 = vunpack.c.l.b16 %v9009
    %v9648 = vunpack.c.h.b16 %v9009
    %v9649 = vunpack.c.l.b16 %v9010
    %v9650 = vunpack.c.h.b16 %v9010
    %v9651 = vunpack.c.l.b16 %v9011
    %v9652 = vunpack.c.h.b16 %v9011
    %v9653 = vunpack.c.l.b16 %v9012
    %v9654 = vunpack.c.h.b16 %v9012
    %v9655 = vunpack.c.l.b16 %v9013
    %v9656 = vunpack.c.h.b16 %v9013
    %v9657 = vunpack.c.l.b16 %v9014
    %v9658 = vunpack.c.h.b16 %v9014
    %v9659 = vunpack.c.l.b16 %v9015
    %v9660 = vunpack.c.h.b16 %v9015
    %v9661 = vunpack.c.l.b16 %v9016
    %v9662 = vunpack.c.h.b16 %v9016
    %v9663 = vunpack.c.l.b16 %v9017
    %v9664 = vunpack.c.h.b16 %v9017
    %v9665 = vunpack.c.l.b16 %v9018
    %v9666 = vunpack.c.h.b16 %v9018
    %v9667 = vunpack.c.l.b16 %v9019
    %v9668 = vunpack.c.h.b16 %v9019
    %v9669 = vunpack.c.l.b16 %v9020
    %v9670 = vunpack.c.h.b16 %v9020
    %v9671 = vunpack.c.l.b16 %v9021
    %v9672 = vunpack.c.h.b16 %v9021
    %v9673 = vunpack.c.l.b16 %v9022
    %v9674 = vunpack.c.h.b16 %v9022
    %v9675 = vunpack.c.l.b16 %v9023
    %v9676 = vunpack.c.h.b16 %v9023
    %v9677 = vunpack.c.l.b16 %v9024
    %v9678 = vunpack.c.h.b16 %v9024
    %v9679 = vunpack.c.l.b16 %v9025
    %v9680 = vunpack.c.h.b16 %v9025
    %v9681 = vunpack.c.l.b16 %v9026
    %v9682 = vunpack.c.h.b16 %v9026
    %v9683 = vunpack.c.l.b16 %v9027
    %v9684 = vunpack.c.h.b16 %v9027
    %v9685 = vunpack.c.l.b16 %v9028
    %v9686 = vunpack.c.h.b16 %v9028
    %v9687 = vunpack.c.l.b16 %v9029
    %v9688 = vunpack.c.h.b16 %v9029
    %v9689 = vunpack.c.l.b16 %v9030
    %v9690 = vunpack.c.h.b16 %v9030
    %v9691 = vunpack.c.l.b16 %v9031
    %v9692 = vunpack.c.h.b16 %v9031
    %v9693 = vunpack.c.l.b16 %v9032
    %v9694 = vunpack.c.h.b16 %v9032
    %v9695 = vunpack.c.l.b16 %v9033
    %v9696 = vunpack.c.h.b16 %v9033
    %v9697 = vunpack.c.l.b16 %v9034
    %v9698 = vunpack.c.h.b16 %v9034
    %v9699 = vunpack.c.l.b16 %v9035
    %v9700 = vunpack.c.h.b16 %v9035
    %v9701 = vunpack.c.l.b16 %v9036
    %v9702 = vunpack.c.h.b16 %v9036
    %v9703 = vunpack.c.l.b16 %v9037
    %v9704 = vunpack.c.h.b16 %v9037
    %v9705 = vunpack.c.l.b16 %v9038
    %v9706 = vunpack.c.h.b16 %v9038
    %v9707 = vunpack.c.l.b16 %v9039
    %v9708 = vunpack.c.h.b16 %v9039
    %v9709 = vunpack.c.l.b16 %v9040
    %v9710 = vunpack.c.h.b16 %v9040
    %v9711 = vunpack.c.l.b16 %v9041
    %v9712 = vunpack.c.h.b16 %v9041
    %v9713 = vunpack.c.l.b16 %v9042
    %v9714 = vunpack.c.h.b16 %v9042
    %v9715 = vunpack.c.l.b16 %v9043
    %v9716 = vunpack.c.h.b16 %v9043
    %v9717 = vunpack.c.l.b16 %v9044
    %v9718 = vunpack.c.h.b16 %v9044
    %v9719 = vunpack.c.l.b16 %v9045
    %v9720 = vunpack.c.h.b16 %v9045
    %v9721 = vunpack.c.l.b16 %v9046
    %v9722 = vunpack.c.h.b16 %v9046
    %v9723 = vunpack.c.l.b16 %v9047
    %v9724 = vunpack.c.h.b16 %v9047
    %v9725 = vunpack.c.l.b16 %v9048
    %v9726 = vunpack.c.h.b16 %v9048
    %v9727 = vunpack.c.l.b16 %v9049
    %v9728 = vunpack.c.h.b16 %v9049
    %v9729 = vunpack.c.l.b16 %v9050
    %v9730 = vunpack.c.h.b16 %v9050
    %v9731 = vunpack.c.l.b16 %v9051
    %v9732 = vunpack.c.h.b16 %v9051
    %v9733 = vunpack.c.l.b16 %v9052
    %v9734 = vunpack.c.h.b16 %v9052
    %v9735 = vunpack.c.l.b16 %v9053
    %v9736 = vunpack.c.h.b16 %v9053
    %v9737 = vunpack.c.l.b16 %v9054
    %v9738 = vunpack.c.h.b16 %v9054
    %v9739 = vunpack.c.l.b16 %v9055
    %v9740 = vunpack.c.h.b16 %v9055
    %v9741 = vunpack.c.l.b16 %v9056
    %v9742 = vunpack.c.h.b16 %v9056
    %v9743 = vunpack.c.l.b16 %v9057
    %v9744 = vunpack.c.h.b16 %v9057
    %v9745 = vunpack.c.l.b16 %v9058
    %v9746 = vunpack.c.h.b16 %v9058
    %v9747 = vunpack.c.l.b16 %v9059
    %v9748 = vunpack.c.h.b16 %v9059
    %v9749 = vunpack.c.l.b16 %v9060
    %v9750 = vunpack.c.h.b16 %v9060
    %v9751 = vunpack.c.l.b16 %v9061
    %v9752 = vunpack.c.h.b16 %v9061
    %v9753 = vunpack.c.l.b16 %v9062
    %v9754 = vunpack.c.h.b16 %v9062
    %v9755 = vunpack.c.l.b16 %v9063
    %v9756 = vunpack.c.h.b16 %v9063
    %v9757 = vunpack.c.l.b16 %v9064
    %v9758 = vunpack.c.h.b16 %v9064
    %v9759 = vunpack.c.l.b16 %v9065
    %v9760 = vunpack.c.h.b16 %v9065
    %v9761 = vunpack.c.l.b16 %v9066
    %v9762 = vunpack.c.h.b16 %v9066
    %v9763 = vunpack.c.l.b16 %v9067
    %v9764 = vunpack.c.h.b16 %v9067
    %v9765 = vunpack.c.l.b16 %v9068
    %v9766 = vunpack.c.h.b16 %v9068
    %v9767 = vunpack.c.l.b16 %v9069
    %v9768 = vunpack.c.h.b16 %v9069
    %v9769 = vunpack.c.l.b16 %v9070
    %v9770 = vunpack.c.h.b16 %v9070
    %v9771 = vunpack.c.l.b16 %v9071
    %v9772 = vunpack.c.h.b16 %v9071
    %v9773 = vunpack.c.l.b16 %v9072
    %v9774 = vunpack.c.h.b16 %v9072
    %v9775 = vunpack.c.l.b16 %v9073
    %v9776 = vunpack.c.h.b16 %v9073
    %v9777 = vunpack.c.l.b16 %v9074
    %v9778 = vunpack.c.h.b16 %v9074
    %v9779 = vunpack.c.l.b16 %v9075
    %v9780 = vunpack.c.h.b16 %v9075
    %v9781 = vunpack.c.l.b16 %v9076
    %v9782 = vunpack.c.h.b16 %v9076
    %v9783 = vunpack.c.l.b16 %v9077
    %v9784 = vunpack.c.h.b16 %v9077
    %v9785 = vunpack.c.l.b16 %v9078
    %v9786 = vunpack.c.h.b16 %v9078
    %v9787 = vunpack.c.l.b16 %v9079
    %v9788 = vunpack.c.h.b16 %v9079
    %v9789 = vunpack.c.l.b16 %v9080
    %v9790 = vunpack.c.h.b16 %v9080
    %v9791 = vunpack.c.l.b16 %v9081
    %v9792 = vunpack.c.h.b16 %v9081
    %v9793 = vunpack.c.l.b16 %v9082
    %v9794 = vunpack.c.h.b16 %v9082
    %v9795 = vunpack.c.l.b16 %v9083
    %v9796 = vunpack.c.h.b16 %v9083
    %v9797 = vunpack.c.l.b16 %v9084
    %v9798 = vunpack.c.h.b16 %v9084
    %v9799 = vunpack.c.l.b16 %v9085
    %v9800 = vunpack.c.h.b16 %v9085
    %v9801 = vunpack.c.l.b16 %v9086
    %v9802 = vunpack.c.h.b16 %v9086
    %v9803 = vunpack.c.l.b16 %v9087
    %v9804 = vunpack.c.h.b16 %v9087
    %v9805 = vunpack.c.l.b16 %v9088
    %v9806 = vunpack.c.h.b16 %v9088
    %v9807 = vunpack.c.l.b16 %v9089
    %v9808 = vunpack.c.h.b16 %v9089
    %v9809 = vunpack.c.l.b16 %v9090
    %v9810 = vunpack.c.h.b16 %v9090
    %v9811 = vunpack.c.l.b16 %v9091
    %v9812 = vunpack.c.h.b16 %v9091
    %v9813 = vunpack.c.l.b16 %v9092
    %v9814 = vunpack.c.h.b16 %v9092
    %v9815 = vunpack.c.l.b16 %v9093
    %v9816 = vunpack.c.h.b16 %v9093
    %v9817 = vunpack.c.l.b16 %v9094
    %v9818 = vunpack.c.h.b16 %v9094
    %v9819 = vunpack.c.l.b16 %v9095
    %v9820 = vunpack.c.h.b16 %v9095
    %v9821 = vunpack.c.l.b16 %v9096
    %v9822 = vunpack.c.h.b16 %v9096
    %v9823 = vunpack.c.l.b16 %v9097
    %v9824 = vunpack.c.h.b16 %v9097
    %v9825 = vunpack.c.l.b16 %v9098
    %v9826 = vunpack.c.h.b16 %v9098
    %v9827 = vunpack.c.l.b16 %v9099
    %v9828 = vunpack.c.h.b16 %v9099
    %v9829 = vunpack.c.l.b16 %v9100
    %v9830 = vunpack.c.h.b16 %v9100
    %v9831 = vunpack.c.l.b16 %v9101
    %v9832 = vunpack.c.h.b16 %v9101
    %v9833 = vunpack.c.l.b16 %v9102
    %v9834 = vunpack.c.h.b16 %v9102
    %v9835 = vunpack.c.l.b16 %v9103
    %v9836 = vunpack.c.h.b16 %v9103
    %v9837 = vunpack.c.l.b16 %v9104
    %v9838 = vunpack.c.h.b16 %v9104
    %v9839 = vunpack.c.l.b16 %v9105
    %v9840 = vunpack.c.h.b16 %v9105
    %v9841 = vunpack.c.l.b16 %v9106
    %v9842 = vunpack.c.h.b16 %v9106
    %v9843 = vunpack.c.l.b16 %v9107
    %v9844 = vunpack.c.h.b16 %v9107
    %v9845 = vunpack.c.l.b16 %v9108
    %v9846 = vunpack.c.h.b16 %v9108
    %v9847 = vunpack.c.l.b16 %v9109
    %v9848 = vunpack.c.h.b16 %v9109
    %v9849 = vunpack.c.l.b16 %v9110
    %v9850 = vunpack.c.h.b16 %v9110
    %v9851 = vunpack.c.l.b16 %v9111
    %v9852 = vunpack.c.h.b16 %v9111
    %v9853 = vunpack.c.l.b16 %v9112
    %v9854 = vunpack.c.h.b16 %v9112
    %v9855 = vunpack.c.l.b16 %v9113
    %v9856 = vunpack.c.h.b16 %v9113
    %v9857 = vunpack.c.l.b16 %v9114
    %v9858 = vunpack.c.h.b16 %v9114
    %v9859 = vunpack.c.l.b16 %v9115
    %v9860 = vunpack.c.h.b16 %v9115
    %v9861 = vunpack.c.l.b16 %v9116
    %v9862 = vunpack.c.h.b16 %v9116
    %v9863 = vunpack.c.l.b16 %v9117
    %v9864 = vunpack.c.h.b16 %v9117
    %v9865 = vunpack.c.l.b16 %v9118
    %v9866 = vunpack.c.h.b16 %v9118
    %v9867 = vunpack.c.l.b16 %v9119
    %v9868 = vunpack.c.h.b16 %v9119
    %v9869 = vunpack.c.l.b16 %v9120
    %v9870 = vunpack.c.h.b16 %v9120
    %v9871 = vunpack.c.l.b16 %v9121
    %v9872 = vunpack.c.h.b16 %v9121
    %v9873 = vunpack.c.l.b16 %v9122
    %v9874 = vunpack.c.h.b16 %v9122
    %v9875 = vunpack.c.l.b16 %v9123
    %v9876 = vunpack.c.h.b16 %v9123
    %v9877 = vunpack.c.l.b16 %v9124
    %v9878 = vunpack.c.h.b16 %v9124
    %v9879 = vunpack.c.l.b16 %v9125
    %v9880 = vunpack.c.h.b16 %v9125
    %v9881 = vunpack.c.l.b16 %v9126
    %v9882 = vunpack.c.h.b16 %v9126
    %v9883 = vunpack.c.l.b16 %v9127
    %v9884 = vunpack.c.h.b16 %v9127
    %v9885 = vunpack.c.l.b16 %v9128
    %v9886 = vunpack.c.h.b16 %v9128
    %v9887 = vunpack.c.l.b16 %v9129
    %v9888 = vunpack.c.h.b16 %v9129
    %v9889 = vunpack.c.l.b16 %v9130
    %v9890 = vunpack.c.h.b16 %v9130
    %v9891 = vunpack.c.l.b16 %v9131
    %v9892 = vunpack.c.h.b16 %v9131
    %v9893 = vunpack.c.l.b16 %v9132
    %v9894 = vunpack.c.h.b16 %v9132
    %v9895 = vunpack.c.l.b16 %v9133
    %v9896 = vunpack.c.h.b16 %v9133
    %v9897 = vunpack.c.l.b16 %v9134
    %v9898 = vunpack.c.h.b16 %v9134
    %v9899 = vunpack.c.l.b16 %v9135
    %v9900 = vunpack.c.h.b16 %v9135
    %v9901 = vunpack.c.l.b16 %v9136
    %v9902 = vunpack.c.h.b16 %v9136
    %v9903 = vunpack.c.l.b16 %v9137
    %v9904 = vunpack.c.h.b16 %v9137
    %v9905 = vunpack.c.l.b16 %v9138
    %v9906 = vunpack.c.h.b16 %v9138
    %v9907 = vunpack.c.l.b16 %v9139
    %v9908 = vunpack.c.h.b16 %v9139
    %v9909 = vunpack.c.l.b16 %v9140
    %v9910 = vunpack.c.h.b16 %v9140
    %v9911 = vunpack.c.l.b16 %v9141
    %v9912 = vunpack.c.h.b16 %v9141
    %v9913 = vunpack.c.l.b16 %v9142
    %v9914 = vunpack.c.h.b16 %v9142
    %v9915 = vunpack.c.l.b16 %v9143
    %v9916 = vunpack.c.h.b16 %v9143
    %v9917 = vunpack.c.l.b16 %v9144
    %v9918 = vunpack.c.h.b16 %v9144
    %v9919 = vunpack.c.l.b16 %v9145
    %v9920 = vunpack.c.h.b16 %v9145
    %v9921 = vunpack.c.l.b16 %v9146
    %v9922 = vunpack.c.h.b16 %v9146
    %v9923 = vunpack.c.l.b16 %v9147
    %v9924 = vunpack.c.h.b16 %v9147
    %v9925 = vunpack.c.l.b16 %v9148
    %v9926 = vunpack.c.h.b16 %v9148
    %v9927 = vunpack.c.l.b16 %v9149
    %v9928 = vunpack.c.h.b16 %v9149
    %v9929 = vunpack.c.l.b16 %v9150
    %v9930 = vunpack.c.h.b16 %v9150
    %v9931 = vunpack.c.l.b16 %v9151
    %v9932 = vunpack.c.h.b16 %v9151
    %v9933 = vunpack.c.l.b16 %v9152
    %v9934 = vunpack.c.h.b16 %v9152
    %v9935 = vunpack.c.l.b16 %v9153
    %v9936 = vunpack.c.h.b16 %v9153
    %v9937 = vunpack.c.l.b16 %v9154
    %v9938 = vunpack.c.h.b16 %v9154
    %v9939 = vunpack.c.l.b16 %v9155
    %v9940 = vunpack.c.h.b16 %v9155
    %v9941 = vunpack.c.l.b16 %v9156
    %v9942 = vunpack.c.h.b16 %v9156
    %v9943 = vunpack.c.l.b16 %v9157
    %v9944 = vunpack.c.h.b16 %v9157
    %v9945 = vunpack.c.l.b16 %v9158
    %v9946 = vunpack.c.h.b16 %v9158
    %v9947 = vunpack.c.l.b16 %v9159
    %v9948 = vunpack.c.h.b16 %v9159
    %v9949 = vpack.c.b16 %v9441, %v9437
    %v9950 = vpack.c.b16 %v9442, %v9438
    %v9951 = vpack.c.b16 %v9443, %v9439
    %v9952 = vpack.c.b16 %v9444, %v9440
    %v9953 = vpack.c.b16 %v9449, %v9445
    %v9954 = vpack.c.b16 %v9450, %v9446
    %v9955 = vpack.c.b16 %v9451, %v9447
    %v9956 = vpack.c.b16 %v9452, %v9448
    %v9957 = vpack.c.b16 %v9457, %v9453
    %v9958 = vpack.c.b16 %v9458, %v9454
    %v9959 = vpack.c.b16 %v9459, %v9455
    %v9960 = vpack.c.b16 %v9460, %v9456
    %v9961 = vpack.c.b16 %v9465, %v9461
    %v9962 = vpack.c.b16 %v9466, %v9462
    %v9963 = vpack.c.b16 %v9467, %v9463
    %v9964 = vpack.c.b16 %v9468, %v9464
    %v9965 = vpack.c.b16 %v9473, %v9469
    %v9966 = vpack.c.b16 %v9474, %v9470
    %v9967 = vpack.c.b16 %v9475, %v9471
    %v9968 = vpack.c.b16 %v9476, %v9472
    %v9969 = vpack.c.b16 %v9481, %v9477
    %v9970 = vpack.c.b16 %v9482, %v9478
    %v9971 = vpack.c.b16 %v9483, %v9479
    %v9972 = vpack.c.b16 %v9484, %v9480
    %v9973 = vpack.c.b16 %v9489, %v9485
    %v9974 = vpack.c.b16 %v9490, %v9486
    %v9975 = vpack.c.b16 %v9491, %v9487
    %v9976 = vpack.c.b16 %v9492, %v9488
    %v9977 = vpack.c.b16 %v9497, %v9493
    %v9978 = vpack.c.b16 %v9498, %v9494
    %v9979 = vpack.c.b16 %v9499, %v9495
    %v9980 = vpack.c.b16 %v9500, %v9496
    %v9981 = vpack.c.b16 %v9505, %v9501
    %v9982 = vpack.c.b16 %v9506, %v9502
    %v9983 = vpack.c.b16 %v9507, %v9503
    %v9984 = vpack.c.b16 %v9508, %v9504
    %v9985 = vpack.c.b16 %v9513, %v9509
    %v9986 = vpack.c.b16 %v9514, %v9510
    %v9987 = vpack.c.b16 %v9515, %v9511
    %v9988 = vpack.c.b16 %v9516, %v9512
    %v9989 = vpack.c.b16 %v9521, %v9517
    %v9990 = vpack.c.b16 %v9522, %v9518
    %v9991 = vpack.c.b16 %v9523, %v9519
    %v9992 = vpack.c.b16 %v9524, %v9520
    %v9993 = vpack.c.b16 %v9529, %v9525
    %v9994 = vpack.c.b16 %v9530, %v9526
    %v9995 = vpack.c.b16 %v9531, %v9527
    %v9996 = vpack.c.b16 %v9532, %v9528
    %v9997 = vpack.c.b16 %v9537, %v9533
    %v9998 = vpack.c.b16 %v9538, %v9534
    %v9999 = vpack.c.b16 %v9539, %v9535
    %v10000 = vpack.c.b16 %v9540, %v9536
    %v10001 = vpack.c.b16 %v9545, %v9541
    %v10002 = vpack.c.b16 %v9546, %v9542
    %v10003 = vpack.c.b16 %v9547, %v9543
    %v10004 = vpack.c.b16 %v9548, %v9544
    %v10005 = vpack.c.b16 %v9553, %v9549
    %v10006 = vpack.c.b16 %v9554, %v9550
    %v10007 = vpack.c.b16 %v9555, %v9551
    %v10008 = vpack.c.b16 %v9556, %v9552
    %v10009 = vpack.c.b16 %v9561, %v9557
    %v10010 = vpack.c.b16 %v9562, %v9558
    %v10011 = vpack.c.b16 %v9563, %v9559
    %v10012 = vpack.c.b16 %v9564, %v9560
    %v10013 = vpack.c.b16 %v9569, %v9565
    %v10014 = vpack.c.b16 %v9570, %v9566
    %v10015 = vpack.c.b16 %v9571, %v9567
    %v10016 = vpack.c.b16 %v9572, %v9568
    %v10017 = vpack.c.b16 %v9577, %v9573
    %v10018 = vpack.c.b16 %v9578, %v9574
    %v10019 = vpack.c.b16 %v9579, %v9575
    %v10020 = vpack.c.b16 %v9580, %v9576
    %v10021 = vpack.c.b16 %v9585, %v9581
    %v10022 = vpack.c.b16 %v9586, %v9582
    %v10023 = vpack.c.b16 %v9587, %v9583
    %v10024 = vpack.c.b16 %v9588, %v9584
    %v10025 = vpack.c.b16 %v9593, %v9589
    %v10026 = vpack.c.b16 %v9594, %v9590
    %v10027 = vpack.c.b16 %v9595, %v9591
    %v10028 = vpack.c.b16 %v9596, %v9592
    %v10029 = vpack.c.b16 %v9601, %v9597
    %v10030 = vpack.c.b16 %v9602, %v9598
    %v10031 = vpack.c.b16 %v9603, %v9599
    %v10032 = vpack.c.b16 %v9604, %v9600
    %v10033 = vpack.c.b16 %v9609, %v9605
    %v10034 = vpack.c.b16 %v9610, %v9606
    %v10035 = vpack.c.b16 %v9611, %v9607
    %v10036 = vpack.c.b16 %v9612, %v9608
    %v10037 = vpack.c.b16 %v9617, %v9613
    %v10038 = vpack.c.b16 %v9618, %v9614
    %v10039 = vpack.c.b16 %v9619, %v9615
    %v10040 = vpack.c.b16 %v9620, %v9616
    %v10041 = vpack.c.b16 %v9625, %v9621
    %v10042 = vpack.c.b16 %v9626, %v9622
    %v10043 = vpack.c.b16 %v9627, %v9623
    %v10044 = vpack.c.b16 %v9628, %v9624
    %v10045 = vpack.c.b16 %v9633, %v9629
    %v10046 = vpack.c.b16 %v9634, %v9630
    %v10047 = vpack.c.b16 %v9635, %v9631
    %v10048 = vpack.c.b16 %v9636, %v9632
    %v10049 = vpack.c.b16 %v9641, %v9637
    %v10050 = vpack.c.b16 %v9642, %v9638
    %v10051 = vpack.c.b16 %v9643, %v9639
    %v10052 = vpack.c.b16 %v9644, %v9640
    %v10053 = vpack.c.b16 %v9649, %v9645
    %v10054 = vpack.c.b16 %v9650, %v9646
    %v10055 = vpack.c.b16 %v9651, %v9647
    %v10056 = vpack.c.b16 %v9652, %v9648
    %v10057 = vpack.c.b16 %v9657, %v9653
    %v10058 = vpack.c.b16 %v9658, %v9654
    %v10059 = vpack.c.b16 %v9659, %v9655
    %v10060 = vpack.c.b16 %v9660, %v9656
    %v10061 = vpack.c.b16 %v9665, %v9661
    %v10062 = vpack.c.b16 %v9666, %v9662
    %v10063 = vpack.c.b16 %v9667, %v9663
    %v10064 = vpack.c.b16 %v9668, %v9664
    %v10065 = vpack.c.b16 %v9673, %v9669
    %v10066 = vpack.c.b16 %v9674, %v9670
    %v10067 = vpack.c.b16 %v9675, %v9671
    %v10068 = vpack.c.b16 %v9676, %v9672
    %v10069 = vpack.c.b16 %v9681, %v9677
    %v10070 = vpack.c.b16 %v9682, %v9678
    %v10071 = vpack.c.b16 %v9683, %v9679
    %v10072 = vpack.c.b16 %v9684, %v9680
    %v10073 = vpack.c.b16 %v9689, %v9685
    %v10074 = vpack.c.b16 %v9690, %v9686
    %v10075 = vpack.c.b16 %v9691, %v9687
    %v10076 = vpack.c.b16 %v9692, %v9688
    %v10077 = vpack.c.b16 %v9697, %v9693
    %v10078 = vpack.c.b16 %v9698, %v9694
    %v10079 = vpack.c.b16 %v9699, %v9695
    %v10080 = vpack.c.b16 %v9700, %v9696
    %v10081 = vpack.c.b16 %v9705, %v9701
    %v10082 = vpack.c.b16 %v9706, %v9702
    %v10083 = vpack.c.b16 %v9707, %v9703
    %v10084 = vpack.c.b16 %v9708, %v9704
    %v10085 = vpack.c.b16 %v9713, %v9709
    %v10086 = vpack.c.b16 %v9714, %v9710
    %v10087 = vpack.c.b16 %v9715, %v9711
    %v10088 = vpack.c.b16 %v9716, %v9712
    %v10089 = vpack.c.b16 %v9721, %v9717
    %v10090 = vpack.c.b16 %v9722, %v9718
    %v10091 = vpack.c.b16 %v9723, %v9719
    %v10092 = vpack.c.b16 %v9724, %v9720
    %v10093 = vpack.c.b16 %v9729, %v9725
    %v10094 = vpack.c.b16 %v9730, %v9726
    %v10095 = vpack.c.b16 %v9731, %v9727
    %v10096 = vpack.c.b16 %v9732, %v9728
    %v10097 = vpack.c.b16 %v9737, %v9733
    %v10098 = vpack.c.b16 %v9738, %v9734
    %v10099 = vpack.c.b16 %v9739, %v9735
    %v10100 = vpack.c.b16 %v9740, %v9736
    %v10101 = vpack.c.b16 %v9745, %v9741
    %v10102 = vpack.c.b16 %v9746, %v9742
    %v10103 = vpack.c.b16 %v9747, %v9743
    %v10104 = vpack.c.b16 %v9748, %v9744
    %v10105 = vpack.c.b16 %v9753, %v9749
    %v10106 = vpack.c.b16 %v9754, %v9750
    %v10107 = vpack.c.b16 %v9755, %v9751
    %v10108 = vpack.c.b16 %v9756, %v9752
    %v10109 = vpack.c.b16 %v9761, %v9757
    %v10110 = vpack.c.b16 %v9762, %v9758
    %v10111 = vpack.c.b16 %v9763, %v9759
    %v10112 = vpack.c.b16 %v9764, %v9760
    %v10113 = vpack.c.b16 %v9769, %v9765
    %v10114 = vpack.c.b16 %v9770, %v9766
    %v10115 = vpack.c.b16 %v9771, %v9767
    %v10116 = vpack.c.b16 %v9772, %v9768
    %v10117 = vpack.c.b16 %v9777, %v9773
    %v10118 = vpack.c.b16 %v9778, %v9774
    %v10119 = vpack.c.b16 %v9779, %v9775
    %v10120 = vpack.c.b16 %v9780, %v9776
    %v10121 = vpack.c.b16 %v9785, %v9781
    %v10122 = vpack.c.b16 %v9786, %v9782
    %v10123 = vpack.c.b16 %v9787, %v9783
    %v10124 = vpack.c.b16 %v9788, %v9784
    %v10125 = vpack.c.b16 %v9793, %v9789
    %v10126 = vpack.c.b16 %v9794, %v9790
    %v10127 = vpack.c.b16 %v9795, %v9791
    %v10128 = vpack.c.b16 %v9796, %v9792
    %v10129 = vpack.c.b16 %v9801, %v9797
    %v10130 = vpack.c.b16 %v9802, %v9798
    %v10131 = vpack.c.b16 %v9803, %v9799
    %v10132 = vpack.c.b16 %v9804, %v9800
    %v10133 = vpack.c.b16 %v9809, %v9805
    %v10134 = vpack.c.b16 %v9810, %v9806
    %v10135 = vpack.c.b16 %v9811, %v9807
    %v10136 = vpack.c.b16 %v9812, %v9808
    %v10137 = vpack.c.b16 %v9817, %v9813
    %v10138 = vpack.c.b16 %v9818, %v9814
    %v10139 = vpack.c.b16 %v9819, %v9815
    %v10140 = vpack.c.b16 %v9820, %v9816
    %v10141 = vpack.c.b16 %v9825, %v9821
    %v10142 = vpack.c.b16 %v9826, %v9822
    %v10143 = vpack.c.b16 %v9827, %v9823
    %v10144 = vpack.c.b16 %v9828, %v9824
    %v10145 = vpack.c.b16 %v9833, %v9829
    %v10146 = vpack.c.b16 %v9834, %v9830
    %v10147 = vpack.c.b16 %v9835, %v9831
    %v10148 = vpack.c.b16 %v9836, %v9832
    %v10149 = vpack.c.b16 %v9841, %v9837
    %v10150 = vpack.c.b16 %v9842, %v9838
    %v10151 = vpack.c.b16 %v9843, %v9839
    %v10152 = vpack.c.b16 %v9844, %v9840
    %v10153 = vpack.c.b16 %v9849, %v9845
    %v10154 = vpack.c.b16 %v9850, %v9846
    %v10155 = vpack.c.b16 %v9851, %v9847
    %v10156 = vpack.c.b16 %v9852, %v9848
    %v10157 = vpack.c.b16 %v9857, %v9853
    %v10158 = vpack.c.b16 %v9858, %v9854
    %v10159 = vpack.c.b16 %v9859, %v9855
    %v10160 = vpack.c.b16 %v9860, %v9856
    %v10161 = vpack.c.b16 %v9865, %v9861
    %v10162 = vpack.c.b16 %v9866, %v9862
    %v10163 = vpack.c.b16 %v9867, %v9863
    %v10164 = vpack.c.b16 %v9868, %v9864
    %v10165 = vpack.c.b16 %v9873, %v9869
    %v10166 = vpack.c.b16 %v9874, %v9870
    %v10167 = vpack.c.b16 %v9875, %v9871
    %v10168 = vpack.c.b16 %v9876, %v9872
    %v10169 = vpack.c.b16 %v9881, %v9877
    %v10170 = vpack.c.b16 %v9882, %v9878
    %v10171 = vpack.c.b16 %v9883, %v9879
    %v10172 = vpack.c.b16 %v9884, %v9880
    %v10173 = vpack.c.b16 %v9889, %v9885
    %v10174 = vpack.c.b16 %v9890, %v9886
    %v10175 = vpack.c.b16 %v9891, %v9887
    %v10176 = vpack.c.b16 %v9892, %v9888
    %v10177 = vpack.c.b16 %v9897, %v9893
    %v10178 = vpack.c.b16 %v9898, %v9894
    %v10179 = vpack.c.b16 %v9899, %v9895
    %v10180 = vpack.c.b16 %v9900, %v9896
    %v10181 = vpack.c.b16 %v9905, %v9901
    %v10182 = vpack.c.b16 %v9906, %v9902
    %v10183 = vpack.c.b16 %v9907, %v9903
    %v10184 = vpack.c.b16 %v9908, %v9904
    %v10185 = vpack.c.b16 %v9913, %v9909
    %v10186 = vpack.c.b16 %v9914, %v9910
    %v10187 = vpack.c.b16 %v9915, %v9911
    %v10188 = vpack.c.b16 %v9916, %v9912
    %v10189 = vpack.c.b16 %v9921, %v9917
    %v10190 = vpack.c.b16 %v9922, %v9918
    %v10191 = vpack.c.b16 %v9923, %v9919
    %v10192 = vpack.c.b16 %v9924, %v9920
    %v10193 = vpack.c.b16 %v9929, %v9925
    %v10194 = vpack.c.b16 %v9930, %v9926
    %v10195 = vpack.c.b16 %v9931, %v9927
    %v10196 = vpack.c.b16 %v9932, %v9928
    %v10197 = vpack.c.b16 %v9937, %v9933
    %v10198 = vpack.c.b16 %v9938, %v9934
    %v10199 = vpack.c.b16 %v9939, %v9935
    %v10200 = vpack.c.b16 %v9940, %v9936
    %v10201 = vpack.c.b16 %v9945, %v9941
    %v10202 = vpack.c.b16 %v9946, %v9942
    %v10203 = vpack.c.b16 %v9947, %v9943
    %v10204 = vpack.c.b16 %v9948, %v9944
    %10461 = vmatprep.subr.bf16.mxu0 %v9950
    %10462 = vmatpush1.bf16.msra.mxu0 %v9949
    %10463 = vmatprep.subr.bf16.mxu0 %v9954
    %10464 = vmatpush1.bf16.msra.mxu0 %v9953
    %10465 = vmatprep.subr.bf16.mxu0 %v9958
    %10466 = vmatpush1.bf16.msra.mxu0 %v9957
    %10467 = vmatprep.subr.bf16.mxu0 %v9962
    %10468 = vmatpush1.bf16.msra.mxu0 %v9961
    %10469 = vmatprep.subr.bf16.mxu0 %v9966
    %10470 = vmatpush1.bf16.msra.mxu0 %v9965
    %10471 = vmatprep.subr.bf16.mxu0 %v9970
    %10472 = vmatpush1.bf16.msra.mxu0 %v9969
    %10473 = vmatprep.subr.bf16.mxu0 %v9974
    %10474 = vmatpush1.bf16.msra.mxu0 %v9973
    %10475 = vmatprep.subr.bf16.mxu0 %v9978
    %10476 = vmatpush1.bf16.msra.mxu0 %v9977
    %10477 = vmatprep.subr.bf16.mxu0 %v9982
    %10478 = vmatpush1.bf16.msra.mxu0 %v9981
    %10479 = vmatprep.subr.bf16.mxu0 %v9986
    %10480 = vmatpush1.bf16.msra.mxu0 %v9985
    %10481 = vmatprep.subr.bf16.mxu0 %v9990
    %10482 = vmatpush1.bf16.msra.mxu0 %v9989
    %10483 = vmatprep.subr.bf16.mxu0 %v9994
    %10484 = vmatpush1.bf16.msra.mxu0 %v9993
    %10485 = vmatprep.subr.bf16.mxu0 %v9998
    %10486 = vmatpush1.bf16.msra.mxu0 %v9997
    %10487 = vmatprep.subr.bf16.mxu0 %v10002
    %10488 = vmatpush1.bf16.msra.mxu0 %v10001
    %10489 = vmatprep.subr.bf16.mxu0 %v10006
    %10490 = vmatpush1.bf16.msra.mxu0 %v10005
    %10491 = vmatprep.subr.bf16.mxu0 %v10010
    %10492 = vmatpush1.bf16.msra.mxu0 %v10009
    %10493 = vmatprep.mubr.bf16.mxu0 %v8897
    %10494 = vmatmul.mubr.bf16.gmra.mrb[0].mxu0 %v8896
    %v10495 = vpop.f32.mrb[0].mxu0
    %v10496 = vadd.f32 %v9164, %v10495
    %v10497 = vpop.f32.mrb[0].mxu0
    %v10498 = vadd.f32 %v9168, %v10497
    %v10499 = vpop.f32.mrb[0].mxu0
    %v10500 = vpop.f32.mrb[0].mxu0
    %10501 = vdwg.mxu0
    %10502 = vmatprep.subr.bf16.mxu0 %v10014
    %10503 = vmatpush1.bf16.msra.mxu0 %v10013
    %10504 = vmatprep.subr.bf16.mxu0 %v10018
    %10505 = vmatpush1.bf16.msra.mxu0 %v10017
    %10506 = vmatprep.subr.bf16.mxu0 %v10022
    %10507 = vmatpush1.bf16.msra.mxu0 %v10021
    %10508 = vmatprep.subr.bf16.mxu0 %v10026
    %10509 = vmatpush1.bf16.msra.mxu0 %v10025
    %10510 = vmatprep.subr.bf16.mxu0 %v10030
    %10511 = vmatpush1.bf16.msra.mxu0 %v10029
    %10512 = vmatprep.subr.bf16.mxu0 %v10034
    %10513 = vmatpush1.bf16.msra.mxu0 %v10033
    %10514 = vmatprep.subr.bf16.mxu0 %v10038
    %10515 = vmatpush1.bf16.msra.mxu0 %v10037
    %10516 = vmatprep.subr.bf16.mxu0 %v10042
    %10517 = vmatpush1.bf16.msra.mxu0 %v10041
    %10518 = vmatprep.subr.bf16.mxu0 %v10046
    %10519 = vmatpush1.bf16.msra.mxu0 %v10045
    %10520 = vmatprep.subr.bf16.mxu0 %v10050
    %10521 = vmatpush1.bf16.msra.mxu0 %v10049
    %10522 = vmatprep.subr.bf16.mxu0 %v10054
    %10523 = vmatpush1.bf16.msra.mxu0 %v10053
    %10524 = vmatprep.subr.bf16.mxu0 %v10058
    %10525 = vmatpush1.bf16.msra.mxu0 %v10057
    %10526 = vmatprep.subr.bf16.mxu0 %v10062
    %10527 = vmatpush1.bf16.msra.mxu0 %v10061
    %10528 = vmatprep.subr.bf16.mxu0 %v10066
    %10529 = vmatpush1.bf16.msra.mxu0 %v10065
    %10530 = vmatprep.subr.bf16.mxu0 %v10070
    %10531 = vmatpush1.bf16.msra.mxu0 %v10069
    %10532 = vmatprep.subr.bf16.mxu0 %v10074
    %10533 = vmatpush1.bf16.msra.mxu0 %v10073
    %10534 = vmatprep.mubr.bf16.mxu0 %v8899
    %10535 = vmatmul.mubr.bf16.gmra.mrb[0].mxu0 %v8898
    %v10536 = vpop.f32.mrb[0].mxu0
    %v10537 = vadd.f32 %v10496, %v10536
    %v10538 = vpop.f32.mrb[0].mxu0
    %v10539 = vadd.f32 %v10498, %v10538
    %v10540 = vpop.f32.mrb[0].mxu0
    %v10541 = vpop.f32.mrb[0].mxu0
    %10542 = vdwg.mxu0
    %10543 = vmatprep.subr.bf16.mxu0 %v10078
    %10544 = vmatpush1.bf16.msra.mxu0 %v10077
    %10545 = vmatprep.subr.bf16.mxu0 %v10082
    %10546 = vmatpush1.bf16.msra.mxu0 %v10081
    %10547 = vmatprep.subr.bf16.mxu0 %v10086
    %10548 = vmatpush1.bf16.msra.mxu0 %v10085
    %10549 = vmatprep.subr.bf16.mxu0 %v10090
    %10550 = vmatpush1.bf16.msra.mxu0 %v10089
    %10551 = vmatprep.subr.bf16.mxu0 %v10094
    %10552 = vmatpush1.bf16.msra.mxu0 %v10093
    %10553 = vmatprep.subr.bf16.mxu0 %v10098
    %10554 = vmatpush1.bf16.msra.mxu0 %v10097
    %10555 = vmatprep.subr.bf16.mxu0 %v10102
    %10556 = vmatpush1.bf16.msra.mxu0 %v10101
    %10557 = vmatprep.subr.bf16.mxu0 %v10106
    %10558 = vmatpush1.bf16.msra.mxu0 %v10105
    %10559 = vmatprep.subr.bf16.mxu0 %v10110
    %10560 = vmatpush1.bf16.msra.mxu0 %v10109
    %10561 = vmatprep.subr.bf16.mxu0 %v10114
    %10562 = vmatpush1.bf16.msra.mxu0 %v10113
    %10563 = vmatprep.subr.bf16.mxu0 %v10118
    %10564 = vmatpush1.bf16.msra.mxu0 %v10117
    %10565 = vmatprep.subr.bf16.mxu0 %v10122
    %10566 = vmatpush1.bf16.msra.mxu0 %v10121
    %10567 = vmatprep.subr.bf16.mxu0 %v10126
    %10568 = vmatpush1.bf16.msra.mxu0 %v10125
    %10569 = vmatprep.subr.bf16.mxu0 %v10130
    %10570 = vmatpush1.bf16.msra.mxu0 %v10129
    %10571 = vmatprep.subr.bf16.mxu0 %v10134
    %10572 = vmatpush1.bf16.msra.mxu0 %v10133
    %10573 = vmatprep.subr.bf16.mxu0 %v10138
    %10574 = vmatpush1.bf16.msra.mxu0 %v10137
    %10575 = vmatprep.mubr.bf16.mxu0 %v8901
    %10576 = vmatmul.mubr.bf16.gmra.mrb[0].mxu0 %v8900
    %v10577 = vpop.f32.mrb[0].mxu0
    %v10578 = vadd.f32 %v10537, %v10577
    %v10579 = vpop.f32.mrb[0].mxu0
    %v10580 = vadd.f32 %v10539, %v10579
    %v10581 = vpop.f32.mrb[0].mxu0
    %v10582 = vpop.f32.mrb[0].mxu0
    %10583 = vdwg.mxu0
    %10584 = vmatprep.subr.bf16.mxu0 %v10142
    %10585 = vmatpush1.bf16.msra.mxu0 %v10141
    %10586 = vmatprep.subr.bf16.mxu0 %v10146
    %10587 = vmatpush1.bf16.msra.mxu0 %v10145
    %10588 = vmatprep.subr.bf16.mxu0 %v10150
    %10589 = vmatpush1.bf16.msra.mxu0 %v10149
    %10590 = vmatprep.subr.bf16.mxu0 %v10154
    %10591 = vmatpush1.bf16.msra.mxu0 %v10153
    %10592 = vmatprep.subr.bf16.mxu0 %v10158
    %10593 = vmatpush1.bf16.msra.mxu0 %v10157
    %10594 = vmatprep.subr.bf16.mxu0 %v10162
    %10595 = vmatpush1.bf16.msra.mxu0 %v10161
    %10596 = vmatprep.subr.bf16.mxu0 %v10166
    %10597 = vmatpush1.bf16.msra.mxu0 %v10165
    %10598 = vmatprep.subr.bf16.mxu0 %v10170
    %10599 = vmatpush1.bf16.msra.mxu0 %v10169
    %10600 = vmatprep.subr.bf16.mxu0 %v10174
    %10601 = vmatpush1.bf16.msra.mxu0 %v10173
    %10602 = vmatprep.subr.bf16.mxu0 %v10178
    %10603 = vmatpush1.bf16.msra.mxu0 %v10177
    %10604 = vmatprep.subr.bf16.mxu0 %v10182
    %10605 = vmatpush1.bf16.msra.mxu0 %v10181
    %10606 = vmatprep.subr.bf16.mxu0 %v10186
    %10607 = vmatpush1.bf16.msra.mxu0 %v10185
    %10608 = vmatprep.subr.bf16.mxu0 %v10190
    %10609 = vmatpush1.bf16.msra.mxu0 %v10189
    %10610 = vmatprep.subr.bf16.mxu0 %v10194
    %10611 = vmatpush1.bf16.msra.mxu0 %v10193
    %10612 = vmatprep.subr.bf16.mxu0 %v10198
    %10613 = vmatpush1.bf16.msra.mxu0 %v10197
    %10614 = vmatprep.subr.bf16.mxu0 %v10202
    %10615 = vmatpush1.bf16.msra.mxu0 %v10201
    %10616 = vmatprep.mubr.bf16.mxu0 %v8903
    %10617 = vmatmul.mubr.bf16.gmra.mrb[0].mxu0 %v8902
    %v10618 = vpop.f32.mrb[0].mxu0
    %v10619 = vadd.f32 %v10578, %v10618
    %v10620 = vpop.f32.mrb[0].mxu0
    %v10621 = vadd.f32 %v10580, %v10620
    %v10622 = vpop.f32.mrb[0].mxu0
    %v10623 = vpop.f32.mrb[0].mxu0
    %10624 = vdwg.mxu0
    %10625 = vmatprep.subr.bf16.mxu0 %v9952
    %10626 = vmatpush1.bf16.msra.mxu0 %v9951
    %10627 = vmatprep.subr.bf16.mxu0 %v9956
    %10628 = vmatpush1.bf16.msra.mxu0 %v9955
    %10629 = vmatprep.subr.bf16.mxu0 %v9960
    %10630 = vmatpush1.bf16.msra.mxu0 %v9959
    %10631 = vmatprep.subr.bf16.mxu0 %v9964
    %10632 = vmatpush1.bf16.msra.mxu0 %v9963
    %10633 = vmatprep.subr.bf16.mxu0 %v9968
    %10634 = vmatpush1.bf16.msra.mxu0 %v9967
    %10635 = vmatprep.subr.bf16.mxu0 %v9972
    %10636 = vmatpush1.bf16.msra.mxu0 %v9971
    %10637 = vmatprep.subr.bf16.mxu0 %v9976
    %10638 = vmatpush1.bf16.msra.mxu0 %v9975
    %10639 = vmatprep.subr.bf16.mxu0 %v9980
    %10640 = vmatpush1.bf16.msra.mxu0 %v9979
    %10641 = vmatprep.subr.bf16.mxu0 %v9984
    %10642 = vmatpush1.bf16.msra.mxu0 %v9983
    %10643 = vmatprep.subr.bf16.mxu0 %v9988
    %10644 = vmatpush1.bf16.msra.mxu0 %v9987
    %10645 = vmatprep.subr.bf16.mxu0 %v9992
    %10646 = vmatpush1.bf16.msra.mxu0 %v9991
    %10647 = vmatprep.subr.bf16.mxu0 %v9996
    %10648 = vmatpush1.bf16.msra.mxu0 %v9995
    %10649 = vmatprep.subr.bf16.mxu0 %v10000
    %10650 = vmatpush1.bf16.msra.mxu0 %v9999
    %10651 = vmatprep.subr.bf16.mxu0 %v10004
    %10652 = vmatpush1.bf16.msra.mxu0 %v10003
    %10653 = vmatprep.subr.bf16.mxu0 %v10008
    %10654 = vmatpush1.bf16.msra.mxu0 %v10007
    %10655 = vmatprep.subr.bf16.mxu0 %v10012
    %10656 = vmatpush1.bf16.msra.mxu0 %v10011
    %10657 = vmatprep.mubr.bf16.mxu0 %v8897
    %10658 = vmatmul.mubr.bf16.gmra.mrb[0].mxu0 %v8896
    %v10659 = vpop.f32.mrb[0].mxu0
    %v10660 = vadd.f32 %v9172, %v10659
    %v10661 = vpop.f32.mrb[0].mxu0
    %v10662 = vadd.f32 %v9176, %v10661
    %v10663 = vpop.f32.mrb[0].mxu0
    %v10664 = vpop.f32.mrb[0].mxu0
    %10665 = vdwg.mxu0
    %10666 = vmatprep.subr.bf16.mxu0 %v10016
    %10667 = vmatpush1.bf16.msra.mxu0 %v10015
    %10668 = vmatprep.subr.bf16.mxu0 %v10020
    %10669 = vmatpush1.bf16.msra.mxu0 %v10019
    %10670 = vmatprep.subr.bf16.mxu0 %v10024
    %10671 = vmatpush1.bf16.msra.mxu0 %v10023
    %10672 = vmatprep.subr.bf16.mxu0 %v10028
    %10673 = vmatpush1.bf16.msra.mxu0 %v10027
    %10674 = vmatprep.subr.bf16.mxu0 %v10032
    %10675 = vmatpush1.bf16.msra.mxu0 %v10031
    %10676 = vmatprep.subr.bf16.mxu0 %v10036
    %10677 = vmatpush1.bf16.msra.mxu0 %v10035
    %10678 = vmatprep.subr.bf16.mxu0 %v10040
    %10679 = vmatpush1.bf16.msra.mxu0 %v10039
    %10680 = vmatprep.subr.bf16.mxu0 %v10044
    %10681 = vmatpush1.bf16.msra.mxu0 %v10043
    %10682 = vmatprep.subr.bf16.mxu0 %v10048
    %10683 = vmatpush1.bf16.msra.mxu0 %v10047
    %10684 = vmatprep.subr.bf16.mxu0 %v10052
    %10685 = vmatpush1.bf16.msra.mxu0 %v10051
    %10686 = vmatprep.subr.bf16.mxu0 %v10056
    %10687 = vmatpush1.bf16.msra.mxu0 %v10055
    %10688 = vmatprep.subr.bf16.mxu0 %v10060
    %10689 = vmatpush1.bf16.msra.mxu0 %v10059
    %10690 = vmatprep.subr.bf16.mxu0 %v10064
    %10691 = vmatpush1.bf16.msra.mxu0 %v10063
    %10692 = vmatprep.subr.bf16.mxu0 %v10068
    %10693 = vmatpush1.bf16.msra.mxu0 %v10067
    %10694 = vmatprep.subr.bf16.mxu0 %v10072
    %10695 = vmatpush1.bf16.msra.mxu0 %v10071
    %10696 = vmatprep.subr.bf16.mxu0 %v10076
    %10697 = vmatpush1.bf16.msra.mxu0 %v10075
    %10698 = vmatprep.mubr.bf16.mxu0 %v8899
    %10699 = vmatmul.mubr.bf16.gmra.mrb[0].mxu0 %v8898
    %v10700 = vpop.f32.mrb[0].mxu0
    %v10701 = vadd.f32 %v10660, %v10700
    %v10702 = vpop.f32.mrb[0].mxu0
    %v10703 = vadd.f32 %v10662, %v10702
    %v10704 = vpop.f32.mrb[0].mxu0
    %v10705 = vpop.f32.mrb[0].mxu0
    %10706 = vdwg.mxu0
    %10707 = vmatprep.subr.bf16.mxu0 %v10080
    %10708 = vmatpush1.bf16.msra.mxu0 %v10079
    %10709 = vmatprep.subr.bf16.mxu0 %v10084
    %10710 = vmatpush1.bf16.msra.mxu0 %v10083
    %10711 = vmatprep.subr.bf16.mxu0 %v10088
    %10712 = vmatpush1.bf16.msra.mxu0 %v10087
    %10713 = vmatprep.subr.bf16.mxu0 %v10092
    %10714 = vmatpush1.bf16.msra.mxu0 %v10091
    %10715 = vmatprep.subr.bf16.mxu0 %v10096
    %10716 = vmatpush1.bf16.msra.mxu0 %v10095
    %10717 = vmatprep.subr.bf16.mxu0 %v10100
    %10718 = vmatpush1.bf16.msra.mxu0 %v10099
    %10719 = vmatprep.subr.bf16.mxu0 %v10104
    %10720 = vmatpush1.bf16.msra.mxu0 %v10103
    %10721 = vmatprep.subr.bf16.mxu0 %v10108
    %10722 = vmatpush1.bf16.msra.mxu0 %v10107
    %10723 = vmatprep.subr.bf16.mxu0 %v10112
    %10724 = vmatpush1.bf16.msra.mxu0 %v10111
    %10725 = vmatprep.subr.bf16.mxu0 %v10116
    %10726 = vmatpush1.bf16.msra.mxu0 %v10115
    %10727 = vmatprep.subr.bf16.mxu0 %v10120
    %10728 = vmatpush1.bf16.msra.mxu0 %v10119
    %10729 = vmatprep.subr.bf16.mxu0 %v10124
    %10730 = vmatpush1.bf16.msra.mxu0 %v10123
    %10731 = vmatprep.subr.bf16.mxu0 %v10128
    %10732 = vmatpush1.bf16.msra.mxu0 %v10127
    %10733 = vmatprep.subr.bf16.mxu0 %v10132
    %10734 = vmatpush1.bf16.msra.mxu0 %v10131
    %10735 = vmatprep.subr.bf16.mxu0 %v10136
    %10736 = vmatpush1.bf16.msra.mxu0 %v10135
    %10737 = vmatprep.subr.bf16.mxu0 %v10140
    %10738 = vmatpush1.bf16.msra.mxu0 %v10139
    %10739 = vmatprep.mubr.bf16.mxu0 %v8901
    %10740 = vmatmul.mubr.bf16.gmra.mrb[0].mxu0 %v8900
    %v10741 = vpop.f32.mrb[0].mxu0
    %v10742 = vadd.f32 %v10701, %v10741
    %v10743 = vpop.f32.mrb[0].mxu0
    %v10744 = vadd.f32 %v10703, %v10743
    %v10745 = vpop.f32.mrb[0].mxu0
    %v10746 = vpop.f32.mrb[0].mxu0
    %10747 = vdwg.mxu0
    %10748 = vmatprep.subr.bf16.mxu0 %v10144
    %10749 = vmatpush1.bf16.msra.mxu0 %v10143
    %10750 = vmatprep.subr.bf16.mxu0 %v10148
    %10751 = vmatpush1.bf16.msra.mxu0 %v10147
    %10752 = vmatprep.subr.bf16.mxu0 %v10152
    %10753 = vmatpush1.bf16.msra.mxu0 %v10151
    %10754 = vmatprep.subr.bf16.mxu0 %v10156
    %10755 = vmatpush1.bf16.msra.mxu0 %v10155
    %10756 = vmatprep.subr.bf16.mxu0 %v10160
    %10757 = vmatpush1.bf16.msra.mxu0 %v10159
    %10758 = vmatprep.subr.bf16.mxu0 %v10164
    %10759 = vmatpush1.bf16.msra.mxu0 %v10163
    %10760 = vmatprep.subr.bf16.mxu0 %v10168
    %10761 = vmatpush1.bf16.msra.mxu0 %v10167
    %10762 = vmatprep.subr.bf16.mxu0 %v10172
    %10763 = vmatpush1.bf16.msra.mxu0 %v10171
    %10764 = vmatprep.subr.bf16.mxu0 %v10176
    %10765 = vmatpush1.bf16.msra.mxu0 %v10175
    %10766 = vmatprep.subr.bf16.mxu0 %v10180
    %10767 = vmatpush1.bf16.msra.mxu0 %v10179
    %10768 = vmatprep.subr.bf16.mxu0 %v10184
    %10769 = vmatpush1.bf16.msra.mxu0 %v10183
    %10770 = vmatprep.subr.bf16.mxu0 %v10188
    %10771 = vmatpush1.bf16.msra.mxu0 %v10187
    %10772 = vmatprep.subr.bf16.mxu0 %v10192
    %10773 = vmatpush1.bf16.msra.mxu0 %v10191
    %10774 = vmatprep.subr.bf16.mxu0 %v10196
    %10775 = vmatpush1.bf16.msra.mxu0 %v10195
    %10776 = vmatprep.subr.bf16.mxu0 %v10200
    %10777 = vmatpush1.bf16.msra.mxu0 %v10199
    %10778 = vmatprep.subr.bf16.mxu0 %v10204
    %10779 = vmatpush1.bf16.msra.mxu0 %v10203
    %10780 = vmatprep.mubr.bf16.mxu0 %v8903
    %10781 = vmatmul.mubr.bf16.gmra.mrb[0].mxu0 %v8902
    %v10782 = vpop.f32.mrb[0].mxu0
    %v10783 = vadd.f32 %v10742, %v10782
    %v10784 = vpop.f32.mrb[0].mxu0
    %v10785 = vadd.f32 %v10744, %v10784
    %v10786 = vpop.f32.mrb[0].mxu0
    %v10787 = vpop.f32.mrb[0].mxu0
    %10788 = vdwg.mxu0
    %s10789 = scalar_lea.vmem [#allocation17], 1
    %v10790 = vld [vmem:[%s10789] ss:$8 sm:$0xf]
    %s10791 = scalar_lea.vmem [#allocation17], 2
    %v10792 = vld [vmem:[%s10791] ss:$8 sm:$0xf]
    %v10793 = vadd.f32 %v10619, %v10621
    %v10794 = vadd.f32 %v10793, %v10783
    %v10795 = vadd.f32 %v10794, %v10785
    %10796 = vadd.xlane.f32.xlu0 %v10795
    %v10797 = vpop.xlane.xlu0 %10796
    %v10798 = vrcp.pop 512.0
    %v10799 = vmul.f32 %v10797, %v10798
    %v10800 = vmul.f32 %v10619, %v10619
    %v10801 = vmul.f32 %v10621, %v10621
    %v10802 = vmul.f32 %v10783, %v10783
    %v10803 = vmul.f32 %v10785, %v10785
    %v10804 = vadd.f32 %v10800, %v10801
    %v10805 = vadd.f32 %v10804, %v10802
    %v10806 = vadd.f32 %v10805, %v10803
    %10807 = vadd.xlane.f32.xlu0 %v10806
    %v10808 = vpop.xlane.xlu0 %10807
    %v10809 = vmul.f32 %v10808, %v10798
    %v10810 = vmul.f32 %v10799, %v10799
    %v10811 = vsub.f32 %v10809, %v10810
    %v10812 = vmax.f32 %v10811, 0.0
    %v10813 = vadd.f32 %v10812, 1e-05
    %v10814 = vrsqrt.pop %v10813
    %v10815 = vsub.f32 %v10619, %v10799
    %v10816 = vsub.f32 %v10621, %v10799
    %v10817 = vsub.f32 %v10783, %v10799
    %v10818 = vsub.f32 %v10785, %v10799
    %v10819 = vmul.f32 %v10815, %v10814
    %v10820 = vmul.f32 %v10816, %v10814
    %v10821 = vmul.f32 %v10817, %v10814
    %v10822 = vmul.f32 %v10818, %v10814
    %v10824 = vlaneseq
    %v10825 = vshrl.u32 %v10824, 7
    %v10826 = vsub.s32 0, %v10825
    %v10827 = vrot.slane %v10790, %v10826
    %v10828 = vlaneseq
    %v10829 = vshrl.u32 %v10828, 7
    %v10830 = vsub.s32 1, %v10829
    %v10831 = vrot.slane %v10790, %v10830
    %v10832 = vlaneseq
    %v10833 = vshrl.u32 %v10832, 7
    %v10834 = vsub.s32 2, %v10833
    %v10835 = vrot.slane %v10790, %v10834
    %v10836 = vlaneseq
    %v10837 = vshrl.u32 %v10836, 7
    %v10838 = vsub.s32 3, %v10837
    %v10839 = vrot.slane %v10790, %v10838
    %v10844 = vmul.f32 %v10819, %v10827
    %v10845 = vmul.f32 %v10820, %v10831
    %v10846 = vmul.f32 %v10821, %v10835
    %v10847 = vmul.f32 %v10822, %v10839
    %v10849 = vlaneseq
    %v10850 = vshrl.u32 %v10849, 7
    %v10851 = vsub.s32 0, %v10850
    %v10852 = vrot.slane %v10792, %v10851
    %v10853 = vlaneseq
    %v10854 = vshrl.u32 %v10853, 7
    %v10855 = vsub.s32 1, %v10854
    %v10856 = vrot.slane %v10792, %v10855
    %v10857 = vlaneseq
    %v10858 = vshrl.u32 %v10857, 7
    %v10859 = vsub.s32 2, %v10858
    %v10860 = vrot.slane %v10792, %v10859
    %v10861 = vlaneseq
    %v10862 = vshrl.u32 %v10861, 7
    %v10863 = vsub.s32 3, %v10862
    %v10864 = vrot.slane %v10792, %v10863
    %v10869 = vadd.f32 %v10844, %v10852
    %v10870 = vadd.f32 %v10845, %v10856
    %v10871 = vadd.f32 %v10846, %v10860
    %v10872 = vadd.f32 %v10847, %v10864
    %v10873 = vmul.f32 %v10869, 0.5
    %v10874 = vmul.f32 %v10870, 0.5
    %v10875 = vmul.f32 %v10871, 0.5
    %v10876 = vmul.f32 %v10872, 0.5
    %v10877 = vmul.f32 %v10869, 0.70710677
    %v10878 = vmul.f32 %v10870, 0.70710677
    %v10879 = vmul.f32 %v10871, 0.70710677
    %v10880 = vmul.f32 %v10872, 0.70710677
    %v10881 = verf.f32.pop %v10877
    %v10882 = verf.f32.pop %v10878
    %v10883 = verf.f32.pop %v10879
    %v10884 = verf.f32.pop %v10880
    %v10885 = vadd.f32 %v10881, 1.0
    %v10886 = vadd.f32 %v10882, 1.0
    %v10887 = vadd.f32 %v10883, 1.0
    %v10888 = vadd.f32 %v10884, 1.0
    %v10889 = vmul.f32 %v10873, %v10885
    %v10890 = vmul.f32 %v10874, %v10886
    %v10891 = vmul.f32 %v10875, %v10887
    %v10892 = vmul.f32 %v10876, %v10888
    %s10893 = scalar_lea.vmem [#allocation17], 3
    %v10894 = vld [vmem:[%s10893] ss:$8 sm:$0xf]
    %v10895 = vpack.c.bf16 %v10889, %v10889
    %v10896 = vpack.c.bf16 %v10890, %v10890
    %v10897 = vpack.c.bf16 %v10891, %v10891
    %v10898 = vpack.c.bf16 %v10892, %v10892
    %v10899 = vld [vmem:[#allocation11] sm:$0xff]
    %v10900 = vld [vmem:[#allocation11 + $0x8] sm:$0xff]
    %v10901 = vld [vmem:[#allocation11 + $0x10] sm:$0xff]
    %v10902 = vld [vmem:[#allocation11 + $0x18] sm:$0xff]
    %v10903 = vld [vmem:[#allocation11 + $0x20] sm:$0xff]
    %v10904 = vld [vmem:[#allocation11 + $0x28] sm:$0xff]
    %v10905 = vld [vmem:[#allocation11 + $0x30] sm:$0xff]
    %v10906 = vld [vmem:[#allocation11 + $0x38] sm:$0xff]
    %v10907 = vld [vmem:[#allocation11 + $0x40] sm:$0xff]
    %v10908 = vld [vmem:[#allocation11 + $0x48] sm:$0xff]
    %v10909 = vld [vmem:[#allocation11 + $0x50] sm:$0xff]
    %v10910 = vld [vmem:[#allocation11 + $0x58] sm:$0xff]
    %v10911 = vld [vmem:[#allocation11 + $0x60] sm:$0xff]
    %v10912 = vld [vmem:[#allocation11 + $0x68] sm:$0xff]
    %v10913 = vld [vmem:[#allocation11 + $0x70] sm:$0xff]
    %v10914 = vld [vmem:[#allocation11 + $0x78] sm:$0xff]
    %v10915 = vld [vmem:[#allocation11 + $0x80] sm:$0xff]
    %v10916 = vld [vmem:[#allocation11 + $0x88] sm:$0xff]
    %v10917 = vld [vmem:[#allocation11 + $0x90] sm:$0xff]
    %v10918 = vld [vmem:[#allocation11 + $0x98] sm:$0xff]
    %v10919 = vld [vmem:[#allocation11 + $0xa0] sm:$0xff]
    %v10920 = vld [vmem:[#allocation11 + $0xa8] sm:$0xff]
    %v10921 = vld [vmem:[#allocation11 + $0xb0] sm:$0xff]
    %v10922 = vld [vmem:[#allocation11 + $0xb8] sm:$0xff]
    %v10923 = vld [vmem:[#allocation11 + $0xc0] sm:$0xff]
    %v10924 = vld [vmem:[#allocation11 + $0xc8] sm:$0xff]
    %v10925 = vld [vmem:[#allocation11 + $0xd0] sm:$0xff]
    %v10926 = vld [vmem:[#allocation11 + $0xd8] sm:$0xff]
    %v10927 = vld [vmem:[#allocation11 + $0xe0] sm:$0xff]
    %v10928 = vld [vmem:[#allocation11 + $0xe8] sm:$0xff]
    %v10929 = vld [vmem:[#allocation11 + $0xf0] sm:$0xff]
    %v10930 = vld [vmem:[#allocation11 + $0xf8] sm:$0xff]
    %v10931 = vld [vmem:[#allocation11 + $0x100] sm:$0xff]
    %v10932 = vld [vmem:[#allocation11 + $0x108] sm:$0xff]
    %v10933 = vld [vmem:[#allocation11 + $0x110] sm:$0xff]
    %v10934 = vld [vmem:[#allocation11 + $0x118] sm:$0xff]
    %v10935 = vld [vmem:[#allocation11 + $0x120] sm:$0xff]
    %v10936 = vld [vmem:[#allocation11 + $0x128] sm:$0xff]
    %v10937 = vld [vmem:[#allocation11 + $0x130] sm:$0xff]
    %v10938 = vld [vmem:[#allocation11 + $0x138] sm:$0xff]
    %v10939 = vld [vmem:[#allocation11 + $0x140] sm:$0xff]
    %v10940 = vld [vmem:[#allocation11 + $0x148] sm:$0xff]
    %v10941 = vld [vmem:[#allocation11 + $0x150] sm:$0xff]
    %v10942 = vld [vmem:[#allocation11 + $0x158] sm:$0xff]
    %v10943 = vld [vmem:[#allocation11 + $0x160] sm:$0xff]
    %v10944 = vld [vmem:[#allocation11 + $0x168] sm:$0xff]
    %v10945 = vld [vmem:[#allocation11 + $0x170] sm:$0xff]
    %v10946 = vld [vmem:[#allocation11 + $0x178] sm:$0xff]
    %v10947 = vld [vmem:[#allocation11 + $0x180] sm:$0xff]
    %v10948 = vld [vmem:[#allocation11 + $0x188] sm:$0xff]
    %v10949 = vld [vmem:[#allocation11 + $0x190] sm:$0xff]
    %v10950 = vld [vmem:[#allocation11 + $0x198] sm:$0xff]
    %v10951 = vld [vmem:[#allocation11 + $0x1a0] sm:$0xff]
    %v10952 = vld [vmem:[#allocation11 + $0x1a8] sm:$0xff]
    %v10953 = vld [vmem:[#allocation11 + $0x1b0] sm:$0xff]
    %v10954 = vld [vmem:[#allocation11 + $0x1b8] sm:$0xff]
    %v10955 = vld [vmem:[#allocation11 + $0x1c0] sm:$0xff]
    %v10956 = vld [vmem:[#allocation11 + $0x1c8] sm:$0xff]
    %v10957 = vld [vmem:[#allocation11 + $0x1d0] sm:$0xff]
    %v10958 = vld [vmem:[#allocation11 + $0x1d8] sm:$0xff]
    %v10959 = vld [vmem:[#allocation11 + $0x1e0] sm:$0xff]
    %v10960 = vld [vmem:[#allocation11 + $0x1e8] sm:$0xff]
    %v10961 = vld [vmem:[#allocation11 + $0x1f0] sm:$0xff]
    %v10962 = vld [vmem:[#allocation11 + $0x1f8] sm:$0xff]
    %v10963 = vld [vmem:[#allocation11 + $0x200] sm:$0xff]
    %v10964 = vld [vmem:[#allocation11 + $0x208] sm:$0xff]
    %v10965 = vld [vmem:[#allocation11 + $0x210] sm:$0xff]
    %v10966 = vld [vmem:[#allocation11 + $0x218] sm:$0xff]
    %v10967 = vld [vmem:[#allocation11 + $0x220] sm:$0xff]
    %v10968 = vld [vmem:[#allocation11 + $0x228] sm:$0xff]
    %v10969 = vld [vmem:[#allocation11 + $0x230] sm:$0xff]
    %v10970 = vld [vmem:[#allocation11 + $0x238] sm:$0xff]
    %v10971 = vld [vmem:[#allocation11 + $0x240] sm:$0xff]
    %v10972 = vld [vmem:[#allocation11 + $0x248] sm:$0xff]
    %v10973 = vld [vmem:[#allocation11 + $0x250] sm:$0xff]
    %v10974 = vld [vmem:[#allocation11 + $0x258] sm:$0xff]
    %v10975 = vld [vmem:[#allocation11 + $0x260] sm:$0xff]
    %v10976 = vld [vmem:[#allocation11 + $0x268] sm:$0xff]
    %v10977 = vld [vmem:[#allocation11 + $0x270] sm:$0xff]
    %v10978 = vld [vmem:[#allocation11 + $0x278] sm:$0xff]
    %v10979 = vld [vmem:[#allocation11 + $0x280] sm:$0xff]
    %v10980 = vld [vmem:[#allocation11 + $0x288] sm:$0xff]
    %v10981 = vld [vmem:[#allocation11 + $0x290] sm:$0xff]
    %v10982 = vld [vmem:[#allocation11 + $0x298] sm:$0xff]
    %v10983 = vld [vmem:[#allocation11 + $0x2a0] sm:$0xff]
    %v10984 = vld [vmem:[#allocation11 + $0x2a8] sm:$0xff]
    %v10985 = vld [vmem:[#allocation11 + $0x2b0] sm:$0xff]
    %v10986 = vld [vmem:[#allocation11 + $0x2b8] sm:$0xff]
    %v10987 = vld [vmem:[#allocation11 + $0x2c0] sm:$0xff]
    %v10988 = vld [vmem:[#allocation11 + $0x2c8] sm:$0xff]
    %v10989 = vld [vmem:[#allocation11 + $0x2d0] sm:$0xff]
    %v10990 = vld [vmem:[#allocation11 + $0x2d8] sm:$0xff]
    %v10991 = vld [vmem:[#allocation11 + $0x2e0] sm:$0xff]
    %v10992 = vld [vmem:[#allocation11 + $0x2e8] sm:$0xff]
    %v10993 = vld [vmem:[#allocation11 + $0x2f0] sm:$0xff]
    %v10994 = vld [vmem:[#allocation11 + $0x2f8] sm:$0xff]
    %v10995 = vld [vmem:[#allocation11 + $0x300] sm:$0xff]
    %v10996 = vld [vmem:[#allocation11 + $0x308] sm:$0xff]
    %v10997 = vld [vmem:[#allocation11 + $0x310] sm:$0xff]
    %v10998 = vld [vmem:[#allocation11 + $0x318] sm:$0xff]
    %v10999 = vld [vmem:[#allocation11 + $0x320] sm:$0xff]
    %v11000 = vld [vmem:[#allocation11 + $0x328] sm:$0xff]
    %v11001 = vld [vmem:[#allocation11 + $0x330] sm:$0xff]
    %v11002 = vld [vmem:[#allocation11 + $0x338] sm:$0xff]
    %v11003 = vld [vmem:[#allocation11 + $0x340] sm:$0xff]
    %v11004 = vld [vmem:[#allocation11 + $0x348] sm:$0xff]
    %v11005 = vld [vmem:[#allocation11 + $0x350] sm:$0xff]
    %v11006 = vld [vmem:[#allocation11 + $0x358] sm:$0xff]
    %v11007 = vld [vmem:[#allocation11 + $0x360] sm:$0xff]
    %v11008 = vld [vmem:[#allocation11 + $0x368] sm:$0xff]
    %v11009 = vld [vmem:[#allocation11 + $0x370] sm:$0xff]
    %v11010 = vld [vmem:[#allocation11 + $0x378] sm:$0xff]
    %v11011 = vld [vmem:[#allocation11 + $0x380] sm:$0xff]
    %v11012 = vld [vmem:[#allocation11 + $0x388] sm:$0xff]
    %v11013 = vld [vmem:[#allocation11 + $0x390] sm:$0xff]
    %v11014 = vld [vmem:[#allocation11 + $0x398] sm:$0xff]
    %v11015 = vld [vmem:[#allocation11 + $0x3a0] sm:$0xff]
    %v11016 = vld [vmem:[#allocation11 + $0x3a8] sm:$0xff]
    %v11017 = vld [vmem:[#allocation11 + $0x3b0] sm:$0xff]
    %v11018 = vld [vmem:[#allocation11 + $0x3b8] sm:$0xff]
    %v11019 = vld [vmem:[#allocation11 + $0x3c0] sm:$0xff]
    %v11020 = vld [vmem:[#allocation11 + $0x3c8] sm:$0xff]
    %v11021 = vld [vmem:[#allocation11 + $0x3d0] sm:$0xff]
    %v11022 = vld [vmem:[#allocation11 + $0x3d8] sm:$0xff]
    %v11023 = vld [vmem:[#allocation11 + $0x3e0] sm:$0xff]
    %v11024 = vld [vmem:[#allocation11 + $0x3e8] sm:$0xff]
    %v11025 = vld [vmem:[#allocation11 + $0x3f0] sm:$0xff]
    %v11026 = vld [vmem:[#allocation11 + $0x3f8] sm:$0xff]
    %v11028 = vlaneseq
    %v11029 = vshrl.u32 %v11028, 7
    %v11030 = vsub.s32 0, %v11029
    %v11031 = vrot.slane %v10894, %v11030
    %v11032 = vlaneseq
    %v11033 = vshrl.u32 %v11032, 7
    %v11034 = vsub.s32 1, %v11033
    %v11035 = vrot.slane %v10894, %v11034
    %v11036 = vlaneseq
    %v11037 = vshrl.u32 %v11036, 7
    %v11038 = vsub.s32 2, %v11037
    %v11039 = vrot.slane %v10894, %v11038
    %v11040 = vlaneseq
    %v11041 = vshrl.u32 %v11040, 7
    %v11042 = vsub.s32 3, %v11041
    %v11043 = vrot.slane %v10894, %v11042
    %v11176 = vunpack.c.l.b16 %v10899
    %v11177 = vunpack.c.h.b16 %v10899
    %v11178 = vunpack.c.l.b16 %v10900
    %v11179 = vunpack.c.h.b16 %v10900
    %v11180 = vunpack.c.l.b16 %v10901
    %v11181 = vunpack.c.h.b16 %v10901
    %v11182 = vunpack.c.l.b16 %v10902
    %v11183 = vunpack.c.h.b16 %v10902
    %v11184 = vunpack.c.l.b16 %v10903
    %v11185 = vunpack.c.h.b16 %v10903
    %v11186 = vunpack.c.l.b16 %v10904
    %v11187 = vunpack.c.h.b16 %v10904
    %v11188 = vunpack.c.l.b16 %v10905
    %v11189 = vunpack.c.h.b16 %v10905
    %v11190 = vunpack.c.l.b16 %v10906
    %v11191 = vunpack.c.h.b16 %v10906
    %v11192 = vunpack.c.l.b16 %v10907
    %v11193 = vunpack.c.h.b16 %v10907
    %v11194 = vunpack.c.l.b16 %v10908
    %v11195 = vunpack.c.h.b16 %v10908
    %v11196 = vunpack.c.l.b16 %v10909
    %v11197 = vunpack.c.h.b16 %v10909
    %v11198 = vunpack.c.l.b16 %v10910
    %v11199 = vunpack.c.h.b16 %v10910
    %v11200 = vunpack.c.l.b16 %v10911
    %v11201 = vunpack.c.h.b16 %v10911
    %v11202 = vunpack.c.l.b16 %v10912
    %v11203 = vunpack.c.h.b16 %v10912
    %v11204 = vunpack.c.l.b16 %v10913
    %v11205 = vunpack.c.h.b16 %v10913
    %v11206 = vunpack.c.l.b16 %v10914
    %v11207 = vunpack.c.h.b16 %v10914
    %v11208 = vunpack.c.l.b16 %v10915
    %v11209 = vunpack.c.h.b16 %v10915
    %v11210 = vunpack.c.l.b16 %v10916
    %v11211 = vunpack.c.h.b16 %v10916
    %v11212 = vunpack.c.l.b16 %v10917
    %v11213 = vunpack.c.h.b16 %v10917
    %v11214 = vunpack.c.l.b16 %v10918
    %v11215 = vunpack.c.h.b16 %v10918
    %v11216 = vunpack.c.l.b16 %v10919
    %v11217 = vunpack.c.h.b16 %v10919
    %v11218 = vunpack.c.l.b16 %v10920
    %v11219 = vunpack.c.h.b16 %v10920
    %v11220 = vunpack.c.l.b16 %v10921
    %v11221 = vunpack.c.h.b16 %v10921
    %v11222 = vunpack.c.l.b16 %v10922
    %v11223 = vunpack.c.h.b16 %v10922
    %v11224 = vunpack.c.l.b16 %v10923
    %v11225 = vunpack.c.h.b16 %v10923
    %v11226 = vunpack.c.l.b16 %v10924
    %v11227 = vunpack.c.h.b16 %v10924
    %v11228 = vunpack.c.l.b16 %v10925
    %v11229 = vunpack.c.h.b16 %v10925
    %v11230 = vunpack.c.l.b16 %v10926
    %v11231 = vunpack.c.h.b16 %v10926
    %v11232 = vunpack.c.l.b16 %v10927
    %v11233 = vunpack.c.h.b16 %v10927
    %v11234 = vunpack.c.l.b16 %v10928
    %v11235 = vunpack.c.h.b16 %v10928
    %v11236 = vunpack.c.l.b16 %v10929
    %v11237 = vunpack.c.h.b16 %v10929
    %v11238 = vunpack.c.l.b16 %v10930
    %v11239 = vunpack.c.h.b16 %v10930
    %v11240 = vunpack.c.l.b16 %v10931
    %v11241 = vunpack.c.h.b16 %v10931
    %v11242 = vunpack.c.l.b16 %v10932
    %v11243 = vunpack.c.h.b16 %v10932
    %v11244 = vunpack.c.l.b16 %v10933
    %v11245 = vunpack.c.h.b16 %v10933
    %v11246 = vunpack.c.l.b16 %v10934
    %v11247 = vunpack.c.h.b16 %v10934
    %v11248 = vunpack.c.l.b16 %v10935
    %v11249 = vunpack.c.h.b16 %v10935
    %v11250 = vunpack.c.l.b16 %v10936
    %v11251 = vunpack.c.h.b16 %v10936
    %v11252 = vunpack.c.l.b16 %v10937
    %v11253 = vunpack.c.h.b16 %v10937
    %v11254 = vunpack.c.l.b16 %v10938
    %v11255 = vunpack.c.h.b16 %v10938
    %v11256 = vunpack.c.l.b16 %v10939
    %v11257 = vunpack.c.h.b16 %v10939
    %v11258 = vunpack.c.l.b16 %v10940
    %v11259 = vunpack.c.h.b16 %v10940
    %v11260 = vunpack.c.l.b16 %v10941
    %v11261 = vunpack.c.h.b16 %v10941
    %v11262 = vunpack.c.l.b16 %v10942
    %v11263 = vunpack.c.h.b16 %v10942
    %v11264 = vunpack.c.l.b16 %v10943
    %v11265 = vunpack.c.h.b16 %v10943
    %v11266 = vunpack.c.l.b16 %v10944
    %v11267 = vunpack.c.h.b16 %v10944
    %v11268 = vunpack.c.l.b16 %v10945
    %v11269 = vunpack.c.h.b16 %v10945
    %v11270 = vunpack.c.l.b16 %v10946
    %v11271 = vunpack.c.h.b16 %v10946
    %v11272 = vunpack.c.l.b16 %v10947
    %v11273 = vunpack.c.h.b16 %v10947
    %v11274 = vunpack.c.l.b16 %v10948
    %v11275 = vunpack.c.h.b16 %v10948
    %v11276 = vunpack.c.l.b16 %v10949
    %v11277 = vunpack.c.h.b16 %v10949
    %v11278 = vunpack.c.l.b16 %v10950
    %v11279 = vunpack.c.h.b16 %v10950
    %v11280 = vunpack.c.l.b16 %v10951
    %v11281 = vunpack.c.h.b16 %v10951
    %v11282 = vunpack.c.l.b16 %v10952
    %v11283 = vunpack.c.h.b16 %v10952
    %v11284 = vunpack.c.l.b16 %v10953
    %v11285 = vunpack.c.h.b16 %v10953
    %v11286 = vunpack.c.l.b16 %v10954
    %v11287 = vunpack.c.h.b16 %v10954
    %v11288 = vunpack.c.l.b16 %v10955
    %v11289 = vunpack.c.h.b16 %v10955
    %v11290 = vunpack.c.l.b16 %v10956
    %v11291 = vunpack.c.h.b16 %v10956
    %v11292 = vunpack.c.l.b16 %v10957
    %v11293 = vunpack.c.h.b16 %v10957
    %v11294 = vunpack.c.l.b16 %v10958
    %v11295 = vunpack.c.h.b16 %v10958
    %v11296 = vunpack.c.l.b16 %v10959
    %v11297 = vunpack.c.h.b16 %v10959
    %v11298 = vunpack.c.l.b16 %v10960
    %v11299 = vunpack.c.h.b16 %v10960
    %v11300 = vunpack.c.l.b16 %v10961
    %v11301 = vunpack.c.h.b16 %v10961
    %v11302 = vunpack.c.l.b16 %v10962
    %v11303 = vunpack.c.h.b16 %v10962
    %v11304 = vunpack.c.l.b16 %v10963
    %v11305 = vunpack.c.h.b16 %v10963
    %v11306 = vunpack.c.l.b16 %v10964
    %v11307 = vunpack.c.h.b16 %v10964
    %v11308 = vunpack.c.l.b16 %v10965
    %v11309 = vunpack.c.h.b16 %v10965
    %v11310 = vunpack.c.l.b16 %v10966
    %v11311 = vunpack.c.h.b16 %v10966
    %v11312 = vunpack.c.l.b16 %v10967
    %v11313 = vunpack.c.h.b16 %v10967
    %v11314 = vunpack.c.l.b16 %v10968
    %v11315 = vunpack.c.h.b16 %v10968
    %v11316 = vunpack.c.l.b16 %v10969
    %v11317 = vunpack.c.h.b16 %v10969
    %v11318 = vunpack.c.l.b16 %v10970
    %v11319 = vunpack.c.h.b16 %v10970
    %v11320 = vunpack.c.l.b16 %v10971
    %v11321 = vunpack.c.h.b16 %v10971
    %v11322 = vunpack.c.l.b16 %v10972
    %v11323 = vunpack.c.h.b16 %v10972
    %v11324 = vunpack.c.l.b16 %v10973
    %v11325 = vunpack.c.h.b16 %v10973
    %v11326 = vunpack.c.l.b16 %v10974
    %v11327 = vunpack.c.h.b16 %v10974
    %v11328 = vunpack.c.l.b16 %v10975
    %v11329 = vunpack.c.h.b16 %v10975
    %v11330 = vunpack.c.l.b16 %v10976
    %v11331 = vunpack.c.h.b16 %v10976
    %v11332 = vunpack.c.l.b16 %v10977
    %v11333 = vunpack.c.h.b16 %v10977
    %v11334 = vunpack.c.l.b16 %v10978
    %v11335 = vunpack.c.h.b16 %v10978
    %v11336 = vunpack.c.l.b16 %v10979
    %v11337 = vunpack.c.h.b16 %v10979
    %v11338 = vunpack.c.l.b16 %v10980
    %v11339 = vunpack.c.h.b16 %v10980
    %v11340 = vunpack.c.l.b16 %v10981
    %v11341 = vunpack.c.h.b16 %v10981
    %v11342 = vunpack.c.l.b16 %v10982
    %v11343 = vunpack.c.h.b16 %v10982
    %v11344 = vunpack.c.l.b16 %v10983
    %v11345 = vunpack.c.h.b16 %v10983
    %v11346 = vunpack.c.l.b16 %v10984
    %v11347 = vunpack.c.h.b16 %v10984
    %v11348 = vunpack.c.l.b16 %v10985
    %v11349 = vunpack.c.h.b16 %v10985
    %v11350 = vunpack.c.l.b16 %v10986
    %v11351 = vunpack.c.h.b16 %v10986
    %v11352 = vunpack.c.l.b16 %v10987
    %v11353 = vunpack.c.h.b16 %v10987
    %v11354 = vunpack.c.l.b16 %v10988
    %v11355 = vunpack.c.h.b16 %v10988
    %v11356 = vunpack.c.l.b16 %v10989
    %v11357 = vunpack.c.h.b16 %v10989
    %v11358 = vunpack.c.l.b16 %v10990
    %v11359 = vunpack.c.h.b16 %v10990
    %v11360 = vunpack.c.l.b16 %v10991
    %v11361 = vunpack.c.h.b16 %v10991
    %v11362 = vunpack.c.l.b16 %v10992
    %v11363 = vunpack.c.h.b16 %v10992
    %v11364 = vunpack.c.l.b16 %v10993
    %v11365 = vunpack.c.h.b16 %v10993
    %v11366 = vunpack.c.l.b16 %v10994
    %v11367 = vunpack.c.h.b16 %v10994
    %v11368 = vunpack.c.l.b16 %v10995
    %v11369 = vunpack.c.h.b16 %v10995
    %v11370 = vunpack.c.l.b16 %v10996
    %v11371 = vunpack.c.h.b16 %v10996
    %v11372 = vunpack.c.l.b16 %v10997
    %v11373 = vunpack.c.h.b16 %v10997
    %v11374 = vunpack.c.l.b16 %v10998
    %v11375 = vunpack.c.h.b16 %v10998
    %v11376 = vunpack.c.l.b16 %v10999
    %v11377 = vunpack.c.h.b16 %v10999
    %v11378 = vunpack.c.l.b16 %v11000
    %v11379 = vunpack.c.h.b16 %v11000
    %v11380 = vunpack.c.l.b16 %v11001
    %v11381 = vunpack.c.h.b16 %v11001
    %v11382 = vunpack.c.l.b16 %v11002
    %v11383 = vunpack.c.h.b16 %v11002
    %v11384 = vunpack.c.l.b16 %v11003
    %v11385 = vunpack.c.h.b16 %v11003
    %v11386 = vunpack.c.l.b16 %v11004
    %v11387 = vunpack.c.h.b16 %v11004
    %v11388 = vunpack.c.l.b16 %v11005
    %v11389 = vunpack.c.h.b16 %v11005
    %v11390 = vunpack.c.l.b16 %v11006
    %v11391 = vunpack.c.h.b16 %v11006
    %v11392 = vunpack.c.l.b16 %v11007
    %v11393 = vunpack.c.h.b16 %v11007
    %v11394 = vunpack.c.l.b16 %v11008
    %v11395 = vunpack.c.h.b16 %v11008
    %v11396 = vunpack.c.l.b16 %v11009
    %v11397 = vunpack.c.h.b16 %v11009
    %v11398 = vunpack.c.l.b16 %v11010
    %v11399 = vunpack.c.h.b16 %v11010
    %v11400 = vunpack.c.l.b16 %v11011
    %v11401 = vunpack.c.h.b16 %v11011
    %v11402 = vunpack.c.l.b16 %v11012
    %v11403 = vunpack.c.h.b16 %v11012
    %v11404 = vunpack.c.l.b16 %v11013
    %v11405 = vunpack.c.h.b16 %v11013
    %v11406 = vunpack.c.l.b16 %v11014
    %v11407 = vunpack.c.h.b16 %v11014
    %v11408 = vunpack.c.l.b16 %v11015
    %v11409 = vunpack.c.h.b16 %v11015
    %v11410 = vunpack.c.l.b16 %v11016
    %v11411 = vunpack.c.h.b16 %v11016
    %v11412 = vunpack.c.l.b16 %v11017
    %v11413 = vunpack.c.h.b16 %v11017
    %v11414 = vunpack.c.l.b16 %v11018
    %v11415 = vunpack.c.h.b16 %v11018
    %v11416 = vunpack.c.l.b16 %v11019
    %v11417 = vunpack.c.h.b16 %v11019
    %v11418 = vunpack.c.l.b16 %v11020
    %v11419 = vunpack.c.h.b16 %v11020
    %v11420 = vunpack.c.l.b16 %v11021
    %v11421 = vunpack.c.h.b16 %v11021
    %v11422 = vunpack.c.l.b16 %v11022
    %v11423 = vunpack.c.h.b16 %v11022
    %v11424 = vunpack.c.l.b16 %v11023
    %v11425 = vunpack.c.h.b16 %v11023
    %v11426 = vunpack.c.l.b16 %v11024
    %v11427 = vunpack.c.h.b16 %v11024
    %v11428 = vunpack.c.l.b16 %v11025
    %v11429 = vunpack.c.h.b16 %v11025
    %v11430 = vunpack.c.l.b16 %v11026
    %v11431 = vunpack.c.h.b16 %v11026
    %v11432 = vpack.c.b16 %v11180, %v11176
    %v11433 = vpack.c.b16 %v11181, %v11177
    %v11434 = vpack.c.b16 %v11182, %v11178
    %v11435 = vpack.c.b16 %v11183, %v11179
    %v11436 = vpack.c.b16 %v11188, %v11184
    %v11437 = vpack.c.b16 %v11189, %v11185
    %v11438 = vpack.c.b16 %v11190, %v11186
    %v11439 = vpack.c.b16 %v11191, %v11187
    %v11440 = vpack.c.b16 %v11196, %v11192
    %v11441 = vpack.c.b16 %v11197, %v11193
    %v11442 = vpack.c.b16 %v11198, %v11194
    %v11443 = vpack.c.b16 %v11199, %v11195
    %v11444 = vpack.c.b16 %v11204, %v11200
    %v11445 = vpack.c.b16 %v11205, %v11201
    %v11446 = vpack.c.b16 %v11206, %v11202
    %v11447 = vpack.c.b16 %v11207, %v11203
    %v11448 = vpack.c.b16 %v11212, %v11208
    %v11449 = vpack.c.b16 %v11213, %v11209
    %v11450 = vpack.c.b16 %v11214, %v11210
    %v11451 = vpack.c.b16 %v11215, %v11211
    %v11452 = vpack.c.b16 %v11220, %v11216
    %v11453 = vpack.c.b16 %v11221, %v11217
    %v11454 = vpack.c.b16 %v11222, %v11218
    %v11455 = vpack.c.b16 %v11223, %v11219
    %v11456 = vpack.c.b16 %v11228, %v11224
    %v11457 = vpack.c.b16 %v11229, %v11225
    %v11458 = vpack.c.b16 %v11230, %v11226
    %v11459 = vpack.c.b16 %v11231, %v11227
    %v11460 = vpack.c.b16 %v11236, %v11232
    %v11461 = vpack.c.b16 %v11237, %v11233
    %v11462 = vpack.c.b16 %v11238, %v11234
    %v11463 = vpack.c.b16 %v11239, %v11235
    %v11464 = vpack.c.b16 %v11244, %v11240
    %v11465 = vpack.c.b16 %v11245, %v11241
    %v11466 = vpack.c.b16 %v11246, %v11242
    %v11467 = vpack.c.b16 %v11247, %v11243
    %v11468 = vpack.c.b16 %v11252, %v11248
    %v11469 = vpack.c.b16 %v11253, %v11249
    %v11470 = vpack.c.b16 %v11254, %v11250
    %v11471 = vpack.c.b16 %v11255, %v11251
    %v11472 = vpack.c.b16 %v11260, %v11256
    %v11473 = vpack.c.b16 %v11261, %v11257
    %v11474 = vpack.c.b16 %v11262, %v11258
    %v11475 = vpack.c.b16 %v11263, %v11259
    %v11476 = vpack.c.b16 %v11268, %v11264
    %v11477 = vpack.c.b16 %v11269, %v11265
    %v11478 = vpack.c.b16 %v11270, %v11266
    %v11479 = vpack.c.b16 %v11271, %v11267
    %v11480 = vpack.c.b16 %v11276, %v11272
    %v11481 = vpack.c.b16 %v11277, %v11273
    %v11482 = vpack.c.b16 %v11278, %v11274
    %v11483 = vpack.c.b16 %v11279, %v11275
    %v11484 = vpack.c.b16 %v11284, %v11280
    %v11485 = vpack.c.b16 %v11285, %v11281
    %v11486 = vpack.c.b16 %v11286, %v11282
    %v11487 = vpack.c.b16 %v11287, %v11283
    %v11488 = vpack.c.b16 %v11292, %v11288
    %v11489 = vpack.c.b16 %v11293, %v11289
    %v11490 = vpack.c.b16 %v11294, %v11290
    %v11491 = vpack.c.b16 %v11295, %v11291
    %v11492 = vpack.c.b16 %v11300, %v11296
    %v11493 = vpack.c.b16 %v11301, %v11297
    %v11494 = vpack.c.b16 %v11302, %v11298
    %v11495 = vpack.c.b16 %v11303, %v11299
    %v11496 = vpack.c.b16 %v11308, %v11304
    %v11497 = vpack.c.b16 %v11309, %v11305
    %v11498 = vpack.c.b16 %v11310, %v11306
    %v11499 = vpack.c.b16 %v11311, %v11307
    %v11500 = vpack.c.b16 %v11316, %v11312
    %v11501 = vpack.c.b16 %v11317, %v11313
    %v11502 = vpack.c.b16 %v11318, %v11314
    %v11503 = vpack.c.b16 %v11319, %v11315
    %v11504 = vpack.c.b16 %v11324, %v11320
    %v11505 = vpack.c.b16 %v11325, %v11321
    %v11506 = vpack.c.b16 %v11326, %v11322
    %v11507 = vpack.c.b16 %v11327, %v11323
    %v11508 = vpack.c.b16 %v11332, %v11328
    %v11509 = vpack.c.b16 %v11333, %v11329
    %v11510 = vpack.c.b16 %v11334, %v11330
    %v11511 = vpack.c.b16 %v11335, %v11331
    %v11512 = vpack.c.b16 %v11340, %v11336
    %v11513 = vpack.c.b16 %v11341, %v11337
    %v11514 = vpack.c.b16 %v11342, %v11338
    %v11515 = vpack.c.b16 %v11343, %v11339
    %v11516 = vpack.c.b16 %v11348, %v11344
    %v11517 = vpack.c.b16 %v11349, %v11345
    %v11518 = vpack.c.b16 %v11350, %v11346
    %v11519 = vpack.c.b16 %v11351, %v11347
    %v11520 = vpack.c.b16 %v11356, %v11352
    %v11521 = vpack.c.b16 %v11357, %v11353
    %v11522 = vpack.c.b16 %v11358, %v11354
    %v11523 = vpack.c.b16 %v11359, %v11355
    %v11524 = vpack.c.b16 %v11364, %v11360
    %v11525 = vpack.c.b16 %v11365, %v11361
    %v11526 = vpack.c.b16 %v11366, %v11362
    %v11527 = vpack.c.b16 %v11367, %v11363
    %v11528 = vpack.c.b16 %v11372, %v11368
    %v11529 = vpack.c.b16 %v11373, %v11369
    %v11530 = vpack.c.b16 %v11374, %v11370
    %v11531 = vpack.c.b16 %v11375, %v11371
    %v11532 = vpack.c.b16 %v11380, %v11376
    %v11533 = vpack.c.b16 %v11381, %v11377
    %v11534 = vpack.c.b16 %v11382, %v11378
    %v11535 = vpack.c.b16 %v11383, %v11379
    %v11536 = vpack.c.b16 %v11388, %v11384
    %v11537 = vpack.c.b16 %v11389, %v11385
    %v11538 = vpack.c.b16 %v11390, %v11386
    %v11539 = vpack.c.b16 %v11391, %v11387
    %v11540 = vpack.c.b16 %v11396, %v11392
    %v11541 = vpack.c.b16 %v11397, %v11393
    %v11542 = vpack.c.b16 %v11398, %v11394
    %v11543 = vpack.c.b16 %v11399, %v11395
    %v11544 = vpack.c.b16 %v11404, %v11400
    %v11545 = vpack.c.b16 %v11405, %v11401
    %v11546 = vpack.c.b16 %v11406, %v11402
    %v11547 = vpack.c.b16 %v11407, %v11403
    %v11548 = vpack.c.b16 %v11412, %v11408
    %v11549 = vpack.c.b16 %v11413, %v11409
    %v11550 = vpack.c.b16 %v11414, %v11410
    %v11551 = vpack.c.b16 %v11415, %v11411
    %v11552 = vpack.c.b16 %v11420, %v11416
    %v11553 = vpack.c.b16 %v11421, %v11417
    %v11554 = vpack.c.b16 %v11422, %v11418
    %v11555 = vpack.c.b16 %v11423, %v11419
    %v11556 = vpack.c.b16 %v11428, %v11424
    %v11557 = vpack.c.b16 %v11429, %v11425
    %v11558 = vpack.c.b16 %v11430, %v11426
    %v11559 = vpack.c.b16 %v11431, %v11427
    %11688 = vmatprep.subr.bf16.mxu0 %v11433
    %11689 = vmatpush1.bf16.msra.mxu0 %v11432
    %11690 = vmatprep.subr.bf16.mxu0 %v11437
    %11691 = vmatpush1.bf16.msra.mxu0 %v11436
    %11692 = vmatprep.subr.bf16.mxu0 %v11441
    %11693 = vmatpush1.bf16.msra.mxu0 %v11440
    %11694 = vmatprep.subr.bf16.mxu0 %v11445
    %11695 = vmatpush1.bf16.msra.mxu0 %v11444
    %11696 = vmatprep.subr.bf16.mxu0 %v11449
    %11697 = vmatpush1.bf16.msra.mxu0 %v11448
    %11698 = vmatprep.subr.bf16.mxu0 %v11453
    %11699 = vmatpush1.bf16.msra.mxu0 %v11452
    %11700 = vmatprep.subr.bf16.mxu0 %v11457
    %11701 = vmatpush1.bf16.msra.mxu0 %v11456
    %11702 = vmatprep.subr.bf16.mxu0 %v11461
    %11703 = vmatpush1.bf16.msra.mxu0 %v11460
    %11704 = vmatprep.subr.bf16.mxu0 %v11465
    %11705 = vmatpush1.bf16.msra.mxu0 %v11464
    %11706 = vmatprep.subr.bf16.mxu0 %v11469
    %11707 = vmatpush1.bf16.msra.mxu0 %v11468
    %11708 = vmatprep.subr.bf16.mxu0 %v11473
    %11709 = vmatpush1.bf16.msra.mxu0 %v11472
    %11710 = vmatprep.subr.bf16.mxu0 %v11477
    %11711 = vmatpush1.bf16.msra.mxu0 %v11476
    %11712 = vmatprep.subr.bf16.mxu0 %v11481
    %11713 = vmatpush1.bf16.msra.mxu0 %v11480
    %11714 = vmatprep.subr.bf16.mxu0 %v11485
    %11715 = vmatpush1.bf16.msra.mxu0 %v11484
    %11716 = vmatprep.subr.bf16.mxu0 %v11489
    %11717 = vmatpush1.bf16.msra.mxu0 %v11488
    %11718 = vmatprep.subr.bf16.mxu0 %v11493
    %11719 = vmatpush1.bf16.msra.mxu0 %v11492
    %11720 = vmatprep.mubr.bf16.mxu0 %v10896
    %11721 = vmatmul.mubr.bf16.gmra.mrb[0].mxu0 %v10895
    %v11722 = vpop.f32.mrb[0].mxu0
    %v11723 = vadd.f32 %v11031, %v11722
    %v11724 = vpop.f32.mrb[0].mxu0
    %v11725 = vadd.f32 %v11035, %v11724
    %v11726 = vpop.f32.mrb[0].mxu0
    %v11727 = vpop.f32.mrb[0].mxu0
    %11728 = vdwg.mxu0
    %11729 = vmatprep.subr.bf16.mxu0 %v11497
    %11730 = vmatpush1.bf16.msra.mxu0 %v11496
    %11731 = vmatprep.subr.bf16.mxu0 %v11501
    %11732 = vmatpush1.bf16.msra.mxu0 %v11500
    %11733 = vmatprep.subr.bf16.mxu0 %v11505
    %11734 = vmatpush1.bf16.msra.mxu0 %v11504
    %11735 = vmatprep.subr.bf16.mxu0 %v11509
    %11736 = vmatpush1.bf16.msra.mxu0 %v11508
    %11737 = vmatprep.subr.bf16.mxu0 %v11513
    %11738 = vmatpush1.bf16.msra.mxu0 %v11512
    %11739 = vmatprep.subr.bf16.mxu0 %v11517
    %11740 = vmatpush1.bf16.msra.mxu0 %v11516
    %11741 = vmatprep.subr.bf16.mxu0 %v11521
    %11742 = vmatpush1.bf16.msra.mxu0 %v11520
    %11743 = vmatprep.subr.bf16.mxu0 %v11525
    %11744 = vmatpush1.bf16.msra.mxu0 %v11524
    %11745 = vmatprep.subr.bf16.mxu0 %v11529
    %11746 = vmatpush1.bf16.msra.mxu0 %v11528
    %11747 = vmatprep.subr.bf16.mxu0 %v11533
    %11748 = vmatpush1.bf16.msra.mxu0 %v11532
    %11749 = vmatprep.subr.bf16.mxu0 %v11537
    %11750 = vmatpush1.bf16.msra.mxu0 %v11536
    %11751 = vmatprep.subr.bf16.mxu0 %v11541
    %11752 = vmatpush1.bf16.msra.mxu0 %v11540
    %11753 = vmatprep.subr.bf16.mxu0 %v11545
    %11754 = vmatpush1.bf16.msra.mxu0 %v11544
    %11755 = vmatprep.subr.bf16.mxu0 %v11549
    %11756 = vmatpush1.bf16.msra.mxu0 %v11548
    %11757 = vmatprep.subr.bf16.mxu0 %v11553
    %11758 = vmatpush1.bf16.msra.mxu0 %v11552
    %11759 = vmatprep.subr.bf16.mxu0 %v11557
    %11760 = vmatpush1.bf16.msra.mxu0 %v11556
    %11761 = vmatprep.mubr.bf16.mxu0 %v10898
    %11762 = vmatmul.mubr.bf16.gmra.mrb[0].mxu0 %v10897
    %v11763 = vpop.f32.mrb[0].mxu0
    %v11764 = vadd.f32 %v11723, %v11763
    %v11765 = vpop.f32.mrb[0].mxu0
    %v11766 = vadd.f32 %v11725, %v11765
    %v11767 = vpop.f32.mrb[0].mxu0
    %v11768 = vpop.f32.mrb[0].mxu0
    %11769 = vdwg.mxu0
    %11770 = vmatprep.subr.bf16.mxu0 %v11435
    %11771 = vmatpush1.bf16.msra.mxu0 %v11434
    %11772 = vmatprep.subr.bf16.mxu0 %v11439
    %11773 = vmatpush1.bf16.msra.mxu0 %v11438
    %11774 = vmatprep.subr.bf16.mxu0 %v11443
    %11775 = vmatpush1.bf16.msra.mxu0 %v11442
    %11776 = vmatprep.subr.bf16.mxu0 %v11447
    %11777 = vmatpush1.bf16.msra.mxu0 %v11446
    %11778 = vmatprep.subr.bf16.mxu0 %v11451
    %11779 = vmatpush1.bf16.msra.mxu0 %v11450
    %11780 = vmatprep.subr.bf16.mxu0 %v11455
    %11781 = vmatpush1.bf16.msra.mxu0 %v11454
    %11782 = vmatprep.subr.bf16.mxu0 %v11459
    %11783 = vmatpush1.bf16.msra.mxu0 %v11458
    %11784 = vmatprep.subr.bf16.mxu0 %v11463
    %11785 = vmatpush1.bf16.msra.mxu0 %v11462
    %11786 = vmatprep.subr.bf16.mxu0 %v11467
    %11787 = vmatpush1.bf16.msra.mxu0 %v11466
    %11788 = vmatprep.subr.bf16.mxu0 %v11471
    %11789 = vmatpush1.bf16.msra.mxu0 %v11470
    %11790 = vmatprep.subr.bf16.mxu0 %v11475
    %11791 = vmatpush1.bf16.msra.mxu0 %v11474
    %11792 = vmatprep.subr.bf16.mxu0 %v11479
    %11793 = vmatpush1.bf16.msra.mxu0 %v11478
    %11794 = vmatprep.subr.bf16.mxu0 %v11483
    %11795 = vmatpush1.bf16.msra.mxu0 %v11482
    %11796 = vmatprep.subr.bf16.mxu0 %v11487
    %11797 = vmatpush1.bf16.msra.mxu0 %v11486
    %11798 = vmatprep.subr.bf16.mxu0 %v11491
    %11799 = vmatpush1.bf16.msra.mxu0 %v11490
    %11800 = vmatprep.subr.bf16.mxu0 %v11495
    %11801 = vmatpush1.bf16.msra.mxu0 %v11494
    %11802 = vmatprep.mubr.bf16.mxu0 %v10896
    %11803 = vmatmul.mubr.bf16.gmra.mrb[0].mxu0 %v10895
    %v11804 = vpop.f32.mrb[0].mxu0
    %v11805 = vadd.f32 %v11039, %v11804
    %v11806 = vpop.f32.mrb[0].mxu0
    %v11807 = vadd.f32 %v11043, %v11806
    %v11808 = vpop.f32.mrb[0].mxu0
    %v11809 = vpop.f32.mrb[0].mxu0
    %11810 = vdwg.mxu0
    %11811 = vmatprep.subr.bf16.mxu0 %v11499
    %11812 = vmatpush1.bf16.msra.mxu0 %v11498
    %11813 = vmatprep.subr.bf16.mxu0 %v11503
    %11814 = vmatpush1.bf16.msra.mxu0 %v11502
    %11815 = vmatprep.subr.bf16.mxu0 %v11507
    %11816 = vmatpush1.bf16.msra.mxu0 %v11506
    %11817 = vmatprep.subr.bf16.mxu0 %v11511
    %11818 = vmatpush1.bf16.msra.mxu0 %v11510
    %11819 = vmatprep.subr.bf16.mxu0 %v11515
    %11820 = vmatpush1.bf16.msra.mxu0 %v11514
    %11821 = vmatprep.subr.bf16.mxu0 %v11519
    %11822 = vmatpush1.bf16.msra.mxu0 %v11518
    %11823 = vmatprep.subr.bf16.mxu0 %v11523
    %11824 = vmatpush1.bf16.msra.mxu0 %v11522
    %11825 = vmatprep.subr.bf16.mxu0 %v11527
    %11826 = vmatpush1.bf16.msra.mxu0 %v11526
    %11827 = vmatprep.subr.bf16.mxu0 %v11531
    %11828 = vmatpush1.bf16.msra.mxu0 %v11530
    %11829 = vmatprep.subr.bf16.mxu0 %v11535
    %11830 = vmatpush1.bf16.msra.mxu0 %v11534
    %11831 = vmatprep.subr.bf16.mxu0 %v11539
    %11832 = vmatpush1.bf16.msra.mxu0 %v11538
    %11833 = vmatprep.subr.bf16.mxu0 %v11543
    %11834 = vmatpush1.bf16.msra.mxu0 %v11542
    %11835 = vmatprep.subr.bf16.mxu0 %v11547
    %11836 = vmatpush1.bf16.msra.mxu0 %v11546
    %11837 = vmatprep.subr.bf16.mxu0 %v11551
    %11838 = vmatpush1.bf16.msra.mxu0 %v11550
    %11839 = vmatprep.subr.bf16.mxu0 %v11555
    %11840 = vmatpush1.bf16.msra.mxu0 %v11554
    %11841 = vmatprep.subr.bf16.mxu0 %v11559
    %11842 = vmatpush1.bf16.msra.mxu0 %v11558
    %11843 = vmatprep.mubr.bf16.mxu0 %v10898
    %11844 = vmatmul.mubr.bf16.gmra.mrb[0].mxu0 %v10897
    %v11845 = vpop.f32.mrb[0].mxu0
    %v11846 = vadd.f32 %v11805, %v11845
    %v11847 = vpop.f32.mrb[0].mxu0
    %v11848 = vadd.f32 %v11807, %v11847
    %v11849 = vpop.f32.mrb[0].mxu0
    %v11850 = vpop.f32.mrb[0].mxu0
    %11851 = vdwg.mxu0
    %s11852 = scalar_lea.vmem [#allocation17], 4
    %v11853 = vld [vmem:[%s11852] ss:$8 sm:$0xf]
    %s11854 = scalar_lea.vmem [#allocation17], 5
    %v11855 = vld [vmem:[%s11854] ss:$8 sm:$0xf]
    %v11856 = vadd.f32 %v11764, %v11766
    %v11857 = vadd.f32 %v11856, %v11846
    %v11858 = vadd.f32 %v11857, %v11848
    %11859 = vadd.xlane.f32.xlu0 %v11858
    %v11860 = vpop.xlane.xlu0 %11859
    %v11861 = vmul.f32 %v11860, %v10798
    %v11862 = vmul.f32 %v11764, %v11764
    %v11863 = vmul.f32 %v11766, %v11766
    %v11864 = vmul.f32 %v11846, %v11846
    %v11865 = vmul.f32 %v11848, %v11848
    %v11866 = vadd.f32 %v11862, %v11863
    %v11867 = vadd.f32 %v11866, %v11864
    %v11868 = vadd.f32 %v11867, %v11865
    %11869 = vadd.xlane.f32.xlu0 %v11868
    %v11870 = vpop.xlane.xlu0 %11869
    %v11871 = vmul.f32 %v11870, %v10798
    %v11872 = vmul.f32 %v11861, %v11861
    %v11873 = vsub.f32 %v11871, %v11872
    %v11874 = vmax.f32 %v11873, 0.0
    %v11875 = vadd.f32 %v11874, 1e-05
    %v11876 = vrsqrt.pop %v11875
    %v11877 = vsub.f32 %v11764, %v11861
    %v11878 = vsub.f32 %v11766, %v11861
    %v11879 = vsub.f32 %v11846, %v11861
    %v11880 = vsub.f32 %v11848, %v11861
    %v11881 = vmul.f32 %v11877, %v11876
    %v11882 = vmul.f32 %v11878, %v11876
    %v11883 = vmul.f32 %v11879, %v11876
    %v11884 = vmul.f32 %v11880, %v11876
    %v11886 = vlaneseq
    %v11887 = vshrl.u32 %v11886, 7
    %v11888 = vsub.s32 0, %v11887
    %v11889 = vrot.slane %v11853, %v11888
    %v11890 = vlaneseq
    %v11891 = vshrl.u32 %v11890, 7
    %v11892 = vsub.s32 1, %v11891
    %v11893 = vrot.slane %v11853, %v11892
    %v11894 = vlaneseq
    %v11895 = vshrl.u32 %v11894, 7
    %v11896 = vsub.s32 2, %v11895
    %v11897 = vrot.slane %v11853, %v11896
    %v11898 = vlaneseq
    %v11899 = vshrl.u32 %v11898, 7
    %v11900 = vsub.s32 3, %v11899
    %v11901 = vrot.slane %v11853, %v11900
    %v11906 = vmul.f32 %v11881, %v11889
    %v11907 = vmul.f32 %v11882, %v11893
    %v11908 = vmul.f32 %v11883, %v11897
    %v11909 = vmul.f32 %v11884, %v11901
    %v11911 = vlaneseq
    %v11912 = vshrl.u32 %v11911, 7
    %v11913 = vsub.s32 0, %v11912
    %v11914 = vrot.slane %v11855, %v11913
    %v11915 = vlaneseq
    %v11916 = vshrl.u32 %v11915, 7
    %v11917 = vsub.s32 1, %v11916
    %v11918 = vrot.slane %v11855, %v11917
    %v11919 = vlaneseq
    %v11920 = vshrl.u32 %v11919, 7
    %v11921 = vsub.s32 2, %v11920
    %v11922 = vrot.slane %v11855, %v11921
    %v11923 = vlaneseq
    %v11924 = vshrl.u32 %v11923, 7
    %v11925 = vsub.s32 3, %v11924
    %v11926 = vrot.slane %v11855, %v11925
    %v11931 = vadd.f32 %v11906, %v11914
    %v11932 = vadd.f32 %v11907, %v11918
    %v11933 = vadd.f32 %v11908, %v11922
    %v11934 = vadd.f32 %v11909, %v11926
    %v11935 = vmul.f32 %v11931, 0.5
    %v11936 = vmul.f32 %v11932, 0.5
    %v11937 = vmul.f32 %v11933, 0.5
    %v11938 = vmul.f32 %v11934, 0.5
    %v11939 = vmul.f32 %v11931, 0.70710677
    %v11940 = vmul.f32 %v11932, 0.70710677
    %v11941 = vmul.f32 %v11933, 0.70710677
    %v11942 = vmul.f32 %v11934, 0.70710677
    %v11943 = verf.f32.pop %v11939
    %v11944 = verf.f32.pop %v11940
    %v11945 = verf.f32.pop %v11941
    %v11946 = verf.f32.pop %v11942
    %v11947 = vadd.f32 %v11943, 1.0
    %v11948 = vadd.f32 %v11944, 1.0
    %v11949 = vadd.f32 %v11945, 1.0
    %v11950 = vadd.f32 %v11946, 1.0
    %v11951 = vmul.f32 %v11935, %v11947
    %v11952 = vmul.f32 %v11936, %v11948
    %v11953 = vmul.f32 %v11937, %v11949
    %v11954 = vmul.f32 %v11938, %v11950
    %s11955 = scalar_lea.vmem [#allocation17], 6
    %v11956 = vld [vmem:[%s11955] ss:$8 sm:$0xf]
    %v11957 = vpack.c.bf16 %v11951, %v11951
    %v11958 = vpack.c.bf16 %v11952, %v11952
    %v11959 = vpack.c.bf16 %v11953, %v11953
    %v11960 = vpack.c.bf16 %v11954, %v11954
    %v11961 = vld [vmem:[#allocation13] sm:$0xff]
    %v11962 = vld [vmem:[#allocation13 + $0x8] sm:$0xff]
    %v11963 = vld [vmem:[#allocation13 + $0x10] sm:$0xff]
    %v11964 = vld [vmem:[#allocation13 + $0x18] sm:$0xff]
    %v11965 = vld [vmem:[#allocation13 + $0x20] sm:$0xff]
    %v11966 = vld [vmem:[#allocation13 + $0x28] sm:$0xff]
    %v11967 = vld [vmem:[#allocation13 + $0x30] sm:$0xff]
    %v11968 = vld [vmem:[#allocation13 + $0x38] sm:$0xff]
    %v11969 = vld [vmem:[#allocation13 + $0x40] sm:$0xff]
    %v11970 = vld [vmem:[#allocation13 + $0x48] sm:$0xff]
    %v11971 = vld [vmem:[#allocation13 + $0x50] sm:$0xff]
    %v11972 = vld [vmem:[#allocation13 + $0x58] sm:$0xff]
    %v11973 = vld [vmem:[#allocation13 + $0x60] sm:$0xff]
    %v11974 = vld [vmem:[#allocation13 + $0x68] sm:$0xff]
    %v11975 = vld [vmem:[#allocation13 + $0x70] sm:$0xff]
    %v11976 = vld [vmem:[#allocation13 + $0x78] sm:$0xff]
    %v11977 = vld [vmem:[#allocation13 + $0x80] sm:$0xff]
    %v11978 = vld [vmem:[#allocation13 + $0x88] sm:$0xff]
    %v11979 = vld [vmem:[#allocation13 + $0x90] sm:$0xff]
    %v11980 = vld [vmem:[#allocation13 + $0x98] sm:$0xff]
    %v11981 = vld [vmem:[#allocation13 + $0xa0] sm:$0xff]
    %v11982 = vld [vmem:[#allocation13 + $0xa8] sm:$0xff]
    %v11983 = vld [vmem:[#allocation13 + $0xb0] sm:$0xff]
    %v11984 = vld [vmem:[#allocation13 + $0xb8] sm:$0xff]
    %v11985 = vld [vmem:[#allocation13 + $0xc0] sm:$0xff]
    %v11986 = vld [vmem:[#allocation13 + $0xc8] sm:$0xff]
    %v11987 = vld [vmem:[#allocation13 + $0xd0] sm:$0xff]
    %v11988 = vld [vmem:[#allocation13 + $0xd8] sm:$0xff]
    %v11989 = vld [vmem:[#allocation13 + $0xe0] sm:$0xff]
    %v11990 = vld [vmem:[#allocation13 + $0xe8] sm:$0xff]
    %v11991 = vld [vmem:[#allocation13 + $0xf0] sm:$0xff]
    %v11992 = vld [vmem:[#allocation13 + $0xf8] sm:$0xff]
    %v11993 = vld [vmem:[#allocation13 + $0x100] sm:$0xff]
    %v11994 = vld [vmem:[#allocation13 + $0x108] sm:$0xff]
    %v11995 = vld [vmem:[#allocation13 + $0x110] sm:$0xff]
    %v11996 = vld [vmem:[#allocation13 + $0x118] sm:$0xff]
    %v11997 = vld [vmem:[#allocation13 + $0x120] sm:$0xff]
    %v11998 = vld [vmem:[#allocation13 + $0x128] sm:$0xff]
    %v11999 = vld [vmem:[#allocation13 + $0x130] sm:$0xff]
    %v12000 = vld [vmem:[#allocation13 + $0x138] sm:$0xff]
    %v12001 = vld [vmem:[#allocation13 + $0x140] sm:$0xff]
    %v12002 = vld [vmem:[#allocation13 + $0x148] sm:$0xff]
    %v12003 = vld [vmem:[#allocation13 + $0x150] sm:$0xff]
    %v12004 = vld [vmem:[#allocation13 + $0x158] sm:$0xff]
    %v12005 = vld [vmem:[#allocation13 + $0x160] sm:$0xff]
    %v12006 = vld [vmem:[#allocation13 + $0x168] sm:$0xff]
    %v12007 = vld [vmem:[#allocation13 + $0x170] sm:$0xff]
    %v12008 = vld [vmem:[#allocation13 + $0x178] sm:$0xff]
    %v12009 = vld [vmem:[#allocation13 + $0x180] sm:$0xff]
    %v12010 = vld [vmem:[#allocation13 + $0x188] sm:$0xff]
    %v12011 = vld [vmem:[#allocation13 + $0x190] sm:$0xff]
    %v12012 = vld [vmem:[#allocation13 + $0x198] sm:$0xff]
    %v12013 = vld [vmem:[#allocation13 + $0x1a0] sm:$0xff]
    %v12014 = vld [vmem:[#allocation13 + $0x1a8] sm:$0xff]
    %v12015 = vld [vmem:[#allocation13 + $0x1b0] sm:$0xff]
    %v12016 = vld [vmem:[#allocation13 + $0x1b8] sm:$0xff]
    %v12017 = vld [vmem:[#allocation13 + $0x1c0] sm:$0xff]
    %v12018 = vld [vmem:[#allocation13 + $0x1c8] sm:$0xff]
    %v12019 = vld [vmem:[#allocation13 + $0x1d0] sm:$0xff]
    %v12020 = vld [vmem:[#allocation13 + $0x1d8] sm:$0xff]
    %v12021 = vld [vmem:[#allocation13 + $0x1e0] sm:$0xff]
    %v12022 = vld [vmem:[#allocation13 + $0x1e8] sm:$0xff]
    %v12023 = vld [vmem:[#allocation13 + $0x1f0] sm:$0xff]
    %v12024 = vld [vmem:[#allocation13 + $0x1f8] sm:$0xff]
    %v12025 = vld [vmem:[#allocation13 + $0x200] sm:$0xff]
    %v12026 = vld [vmem:[#allocation13 + $0x208] sm:$0xff]
    %v12027 = vld [vmem:[#allocation13 + $0x210] sm:$0xff]
    %v12028 = vld [vmem:[#allocation13 + $0x218] sm:$0xff]
    %v12029 = vld [vmem:[#allocation13 + $0x220] sm:$0xff]
    %v12030 = vld [vmem:[#allocation13 + $0x228] sm:$0xff]
    %v12031 = vld [vmem:[#allocation13 + $0x230] sm:$0xff]
    %v12032 = vld [vmem:[#allocation13 + $0x238] sm:$0xff]
    %v12033 = vld [vmem:[#allocation13 + $0x240] sm:$0xff]
    %v12034 = vld [vmem:[#allocation13 + $0x248] sm:$0xff]
    %v12035 = vld [vmem:[#allocation13 + $0x250] sm:$0xff]
    %v12036 = vld [vmem:[#allocation13 + $0x258] sm:$0xff]
    %v12037 = vld [vmem:[#allocation13 + $0x260] sm:$0xff]
    %v12038 = vld [vmem:[#allocation13 + $0x268] sm:$0xff]
    %v12039 = vld [vmem:[#allocation13 + $0x270] sm:$0xff]
    %v12040 = vld [vmem:[#allocation13 + $0x278] sm:$0xff]
    %v12041 = vld [vmem:[#allocation13 + $0x280] sm:$0xff]
    %v12042 = vld [vmem:[#allocation13 + $0x288] sm:$0xff]
    %v12043 = vld [vmem:[#allocation13 + $0x290] sm:$0xff]
    %v12044 = vld [vmem:[#allocation13 + $0x298] sm:$0xff]
    %v12045 = vld [vmem:[#allocation13 + $0x2a0] sm:$0xff]
    %v12046 = vld [vmem:[#allocation13 + $0x2a8] sm:$0xff]
    %v12047 = vld [vmem:[#allocation13 + $0x2b0] sm:$0xff]
    %v12048 = vld [vmem:[#allocation13 + $0x2b8] sm:$0xff]
    %v12049 = vld [vmem:[#allocation13 + $0x2c0] sm:$0xff]
    %v12050 = vld [vmem:[#allocation13 + $0x2c8] sm:$0xff]
    %v12051 = vld [vmem:[#allocation13 + $0x2d0] sm:$0xff]
    %v12052 = vld [vmem:[#allocation13 + $0x2d8] sm:$0xff]
    %v12053 = vld [vmem:[#allocation13 + $0x2e0] sm:$0xff]
    %v12054 = vld [vmem:[#allocation13 + $0x2e8] sm:$0xff]
    %v12055 = vld [vmem:[#allocation13 + $0x2f0] sm:$0xff]
    %v12056 = vld [vmem:[#allocation13 + $0x2f8] sm:$0xff]
    %v12057 = vld [vmem:[#allocation13 + $0x300] sm:$0xff]
    %v12058 = vld [vmem:[#allocation13 + $0x308] sm:$0xff]
    %v12059 = vld [vmem:[#allocation13 + $0x310] sm:$0xff]
    %v12060 = vld [vmem:[#allocation13 + $0x318] sm:$0xff]
    %v12061 = vld [vmem:[#allocation13 + $0x320] sm:$0xff]
    %v12062 = vld [vmem:[#allocation13 + $0x328] sm:$0xff]
    %v12063 = vld [vmem:[#allocation13 + $0x330] sm:$0xff]
    %v12064 = vld [vmem:[#allocation13 + $0x338] sm:$0xff]
    %v12065 = vld [vmem:[#allocation13 + $0x340] sm:$0xff]
    %v12066 = vld [vmem:[#allocation13 + $0x348] sm:$0xff]
    %v12067 = vld [vmem:[#allocation13 + $0x350] sm:$0xff]
    %v12068 = vld [vmem:[#allocation13 + $0x358] sm:$0xff]
    %v12069 = vld [vmem:[#allocation13 + $0x360] sm:$0xff]
    %v12070 = vld [vmem:[#allocation13 + $0x368] sm:$0xff]
    %v12071 = vld [vmem:[#allocation13 + $0x370] sm:$0xff]
    %v12072 = vld [vmem:[#allocation13 + $0x378] sm:$0xff]
    %v12073 = vld [vmem:[#allocation13 + $0x380] sm:$0xff]
    %v12074 = vld [vmem:[#allocation13 + $0x388] sm:$0xff]
    %v12075 = vld [vmem:[#allocation13 + $0x390] sm:$0xff]
    %v12076 = vld [vmem:[#allocation13 + $0x398] sm:$0xff]
    %v12077 = vld [vmem:[#allocation13 + $0x3a0] sm:$0xff]
    %v12078 = vld [vmem:[#allocation13 + $0x3a8] sm:$0xff]
    %v12079 = vld [vmem:[#allocation13 + $0x3b0] sm:$0xff]
    %v12080 = vld [vmem:[#allocation13 + $0x3b8] sm:$0xff]
    %v12081 = vld [vmem:[#allocation13 + $0x3c0] sm:$0xff]
    %v12082 = vld [vmem:[#allocation13 + $0x3c8] sm:$0xff]
    %v12083 = vld [vmem:[#allocation13 + $0x3d0] sm:$0xff]
    %v12084 = vld [vmem:[#allocation13 + $0x3d8] sm:$0xff]
    %v12085 = vld [vmem:[#allocation13 + $0x3e0] sm:$0xff]
    %v12086 = vld [vmem:[#allocation13 + $0x3e8] sm:$0xff]
    %v12087 = vld [vmem:[#allocation13 + $0x3f0] sm:$0xff]
    %v12088 = vld [vmem:[#allocation13 + $0x3f8] sm:$0xff]
    %v12090 = vlaneseq
    %v12091 = vshrl.u32 %v12090, 7
    %v12092 = vsub.s32 0, %v12091
    %v12093 = vrot.slane %v11956, %v12092
    %v12094 = vlaneseq
    %v12095 = vshrl.u32 %v12094, 7
    %v12096 = vsub.s32 1, %v12095
    %v12097 = vrot.slane %v11956, %v12096
    %v12098 = vlaneseq
    %v12099 = vshrl.u32 %v12098, 7
    %v12100 = vsub.s32 2, %v12099
    %v12101 = vrot.slane %v11956, %v12100
    %v12102 = vlaneseq
    %v12103 = vshrl.u32 %v12102, 7
    %v12104 = vsub.s32 3, %v12103
    %v12105 = vrot.slane %v11956, %v12104
    %v12238 = vunpack.c.l.b16 %v11961
    %v12239 = vunpack.c.h.b16 %v11961
    %v12240 = vunpack.c.l.b16 %v11962
    %v12241 = vunpack.c.h.b16 %v11962
    %v12242 = vunpack.c.l.b16 %v11963
    %v12243 = vunpack.c.h.b16 %v11963
    %v12244 = vunpack.c.l.b16 %v11964
    %v12245 = vunpack.c.h.b16 %v11964
    %v12246 = vunpack.c.l.b16 %v11965
    %v12247 = vunpack.c.h.b16 %v11965
    %v12248 = vunpack.c.l.b16 %v11966
    %v12249 = vunpack.c.h.b16 %v11966
    %v12250 = vunpack.c.l.b16 %v11967
    %v12251 = vunpack.c.h.b16 %v11967
    %v12252 = vunpack.c.l.b16 %v11968
    %v12253 = vunpack.c.h.b16 %v11968
    %v12254 = vunpack.c.l.b16 %v11969
    %v12255 = vunpack.c.h.b16 %v11969
    %v12256 = vunpack.c.l.b16 %v11970
    %v12257 = vunpack.c.h.b16 %v11970
    %v12258 = vunpack.c.l.b16 %v11971
    %v12259 = vunpack.c.h.b16 %v11971
    %v12260 = vunpack.c.l.b16 %v11972
    %v12261 = vunpack.c.h.b16 %v11972
    %v12262 = vunpack.c.l.b16 %v11973
    %v12263 = vunpack.c.h.b16 %v11973
    %v12264 = vunpack.c.l.b16 %v11974
    %v12265 = vunpack.c.h.b16 %v11974
    %v12266 = vunpack.c.l.b16 %v11975
    %v12267 = vunpack.c.h.b16 %v11975
    %v12268 = vunpack.c.l.b16 %v11976
    %v12269 = vunpack.c.h.b16 %v11976
    %v12270 = vunpack.c.l.b16 %v11977
    %v12271 = vunpack.c.h.b16 %v11977
    %v12272 = vunpack.c.l.b16 %v11978
    %v12273 = vunpack.c.h.b16 %v11978
    %v12274 = vunpack.c.l.b16 %v11979
    %v12275 = vunpack.c.h.b16 %v11979
    %v12276 = vunpack.c.l.b16 %v11980
    %v12277 = vunpack.c.h.b16 %v11980
    %v12278 = vunpack.c.l.b16 %v11981
    %v12279 = vunpack.c.h.b16 %v11981
    %v12280 = vunpack.c.l.b16 %v11982
    %v12281 = vunpack.c.h.b16 %v11982
    %v12282 = vunpack.c.l.b16 %v11983
    %v12283 = vunpack.c.h.b16 %v11983
    %v12284 = vunpack.c.l.b16 %v11984
    %v12285 = vunpack.c.h.b16 %v11984
    %v12286 = vunpack.c.l.b16 %v11985
    %v12287 = vunpack.c.h.b16 %v11985
    %v12288 = vunpack.c.l.b16 %v11986
    %v12289 = vunpack.c.h.b16 %v11986
    %v12290 = vunpack.c.l.b16 %v11987
    %v12291 = vunpack.c.h.b16 %v11987
    %v12292 = vunpack.c.l.b16 %v11988
    %v12293 = vunpack.c.h.b16 %v11988
    %v12294 = vunpack.c.l.b16 %v11989
    %v12295 = vunpack.c.h.b16 %v11989
    %v12296 = vunpack.c.l.b16 %v11990
    %v12297 = vunpack.c.h.b16 %v11990
    %v12298 = vunpack.c.l.b16 %v11991
    %v12299 = vunpack.c.h.b16 %v11991
    %v12300 = vunpack.c.l.b16 %v11992
    %v12301 = vunpack.c.h.b16 %v11992
    %v12302 = vunpack.c.l.b16 %v11993
    %v12303 = vunpack.c.h.b16 %v11993
    %v12304 = vunpack.c.l.b16 %v11994
    %v12305 = vunpack.c.h.b16 %v11994
    %v12306 = vunpack.c.l.b16 %v11995
    %v12307 = vunpack.c.h.b16 %v11995
    %v12308 = vunpack.c.l.b16 %v11996
    %v12309 = vunpack.c.h.b16 %v11996
    %v12310 = vunpack.c.l.b16 %v11997
    %v12311 = vunpack.c.h.b16 %v11997
    %v12312 = vunpack.c.l.b16 %v11998
    %v12313 = vunpack.c.h.b16 %v11998
    %v12314 = vunpack.c.l.b16 %v11999
    %v12315 = vunpack.c.h.b16 %v11999
    %v12316 = vunpack.c.l.b16 %v12000
    %v12317 = vunpack.c.h.b16 %v12000
    %v12318 = vunpack.c.l.b16 %v12001
    %v12319 = vunpack.c.h.b16 %v12001
    %v12320 = vunpack.c.l.b16 %v12002
    %v12321 = vunpack.c.h.b16 %v12002
    %v12322 = vunpack.c.l.b16 %v12003
    %v12323 = vunpack.c.h.b16 %v12003
    %v12324 = vunpack.c.l.b16 %v12004
    %v12325 = vunpack.c.h.b16 %v12004
    %v12326 = vunpack.c.l.b16 %v12005
    %v12327 = vunpack.c.h.b16 %v12005
    %v12328 = vunpack.c.l.b16 %v12006
    %v12329 = vunpack.c.h.b16 %v12006
    %v12330 = vunpack.c.l.b16 %v12007
    %v12331 = vunpack.c.h.b16 %v12007
    %v12332 = vunpack.c.l.b16 %v12008
    %v12333 = vunpack.c.h.b16 %v12008
    %v12334 = vunpack.c.l.b16 %v12009
    %v12335 = vunpack.c.h.b16 %v12009
    %v12336 = vunpack.c.l.b16 %v12010
    %v12337 = vunpack.c.h.b16 %v12010
    %v12338 = vunpack.c.l.b16 %v12011
    %v12339 = vunpack.c.h.b16 %v12011
    %v12340 = vunpack.c.l.b16 %v12012
    %v12341 = vunpack.c.h.b16 %v12012
    %v12342 = vunpack.c.l.b16 %v12013
    %v12343 = vunpack.c.h.b16 %v12013
    %v12344 = vunpack.c.l.b16 %v12014
    %v12345 = vunpack.c.h.b16 %v12014
    %v12346 = vunpack.c.l.b16 %v12015
    %v12347 = vunpack.c.h.b16 %v12015
    %v12348 = vunpack.c.l.b16 %v12016
    %v12349 = vunpack.c.h.b16 %v12016
    %v12350 = vunpack.c.l.b16 %v12017
    %v12351 = vunpack.c.h.b16 %v12017
    %v12352 = vunpack.c.l.b16 %v12018
    %v12353 = vunpack.c.h.b16 %v12018
    %v12354 = vunpack.c.l.b16 %v12019
    %v12355 = vunpack.c.h.b16 %v12019
    %v12356 = vunpack.c.l.b16 %v12020
    %v12357 = vunpack.c.h.b16 %v12020
    %v12358 = vunpack.c.l.b16 %v12021
    %v12359 = vunpack.c.h.b16 %v12021
    %v12360 = vunpack.c.l.b16 %v12022
    %v12361 = vunpack.c.h.b16 %v12022
    %v12362 = vunpack.c.l.b16 %v12023
    %v12363 = vunpack.c.h.b16 %v12023
    %v12364 = vunpack.c.l.b16 %v12024
    %v12365 = vunpack.c.h.b16 %v12024
    %v12366 = vunpack.c.l.b16 %v12025
    %v12367 = vunpack.c.h.b16 %v12025
    %v12368 = vunpack.c.l.b16 %v12026
    %v12369 = vunpack.c.h.b16 %v12026
    %v12370 = vunpack.c.l.b16 %v12027
    %v12371 = vunpack.c.h.b16 %v12027
    %v12372 = vunpack.c.l.b16 %v12028
    %v12373 = vunpack.c.h.b16 %v12028
    %v12374 = vunpack.c.l.b16 %v12029
    %v12375 = vunpack.c.h.b16 %v12029
    %v12376 = vunpack.c.l.b16 %v12030
    %v12377 = vunpack.c.h.b16 %v12030
    %v12378 = vunpack.c.l.b16 %v12031
    %v12379 = vunpack.c.h.b16 %v12031
    %v12380 = vunpack.c.l.b16 %v12032
    %v12381 = vunpack.c.h.b16 %v12032
    %v12382 = vunpack.c.l.b16 %v12033
    %v12383 = vunpack.c.h.b16 %v12033
    %v12384 = vunpack.c.l.b16 %v12034
    %v12385 = vunpack.c.h.b16 %v12034
    %v12386 = vunpack.c.l.b16 %v12035
    %v12387 = vunpack.c.h.b16 %v12035
    %v12388 = vunpack.c.l.b16 %v12036
    %v12389 = vunpack.c.h.b16 %v12036
    %v12390 = vunpack.c.l.b16 %v12037
    %v12391 = vunpack.c.h.b16 %v12037
    %v12392 = vunpack.c.l.b16 %v12038
    %v12393 = vunpack.c.h.b16 %v12038
    %v12394 = vunpack.c.l.b16 %v12039
    %v12395 = vunpack.c.h.b16 %v12039
    %v12396 = vunpack.c.l.b16 %v12040
    %v12397 = vunpack.c.h.b16 %v12040
    %v12398 = vunpack.c.l.b16 %v12041
    %v12399 = vunpack.c.h.b16 %v12041
    %v12400 = vunpack.c.l.b16 %v12042
    %v12401 = vunpack.c.h.b16 %v12042
    %v12402 = vunpack.c.l.b16 %v12043
    %v12403 = vunpack.c.h.b16 %v12043
    %v12404 = vunpack.c.l.b16 %v12044
    %v12405 = vunpack.c.h.b16 %v12044
    %v12406 = vunpack.c.l.b16 %v12045
    %v12407 = vunpack.c.h.b16 %v12045
    %v12408 = vunpack.c.l.b16 %v12046
    %v12409 = vunpack.c.h.b16 %v12046
    %v12410 = vunpack.c.l.b16 %v12047
    %v12411 = vunpack.c.h.b16 %v12047
    %v12412 = vunpack.c.l.b16 %v12048
    %v12413 = vunpack.c.h.b16 %v12048
    %v12414 = vunpack.c.l.b16 %v12049
    %v12415 = vunpack.c.h.b16 %v12049
    %v12416 = vunpack.c.l.b16 %v12050
    %v12417 = vunpack.c.h.b16 %v12050
    %v12418 = vunpack.c.l.b16 %v12051
    %v12419 = vunpack.c.h.b16 %v12051
    %v12420 = vunpack.c.l.b16 %v12052
    %v12421 = vunpack.c.h.b16 %v12052
    %v12422 = vunpack.c.l.b16 %v12053
    %v12423 = vunpack.c.h.b16 %v12053
    %v12424 = vunpack.c.l.b16 %v12054
    %v12425 = vunpack.c.h.b16 %v12054
    %v12426 = vunpack.c.l.b16 %v12055
    %v12427 = vunpack.c.h.b16 %v12055
    %v12428 = vunpack.c.l.b16 %v12056
    %v12429 = vunpack.c.h.b16 %v12056
    %v12430 = vunpack.c.l.b16 %v12057
    %v12431 = vunpack.c.h.b16 %v12057
    %v12432 = vunpack.c.l.b16 %v12058
    %v12433 = vunpack.c.h.b16 %v12058
    %v12434 = vunpack.c.l.b16 %v12059
    %v12435 = vunpack.c.h.b16 %v12059
    %v12436 = vunpack.c.l.b16 %v12060
    %v12437 = vunpack.c.h.b16 %v12060
    %v12438 = vunpack.c.l.b16 %v12061
    %v12439 = vunpack.c.h.b16 %v12061
    %v12440 = vunpack.c.l.b16 %v12062
    %v12441 = vunpack.c.h.b16 %v12062
    %v12442 = vunpack.c.l.b16 %v12063
    %v12443 = vunpack.c.h.b16 %v12063
    %v12444 = vunpack.c.l.b16 %v12064
    %v12445 = vunpack.c.h.b16 %v12064
    %v12446 = vunpack.c.l.b16 %v12065
    %v12447 = vunpack.c.h.b16 %v12065
    %v12448 = vunpack.c.l.b16 %v12066
    %v12449 = vunpack.c.h.b16 %v12066
    %v12450 = vunpack.c.l.b16 %v12067
    %v12451 = vunpack.c.h.b16 %v12067
    %v12452 = vunpack.c.l.b16 %v12068
    %v12453 = vunpack.c.h.b16 %v12068
    %v12454 = vunpack.c.l.b16 %v12069
    %v12455 = vunpack.c.h.b16 %v12069
    %v12456 = vunpack.c.l.b16 %v12070
    %v12457 = vunpack.c.h.b16 %v12070
    %v12458 = vunpack.c.l.b16 %v12071
    %v12459 = vunpack.c.h.b16 %v12071
    %v12460 = vunpack.c.l.b16 %v12072
    %v12461 = vunpack.c.h.b16 %v12072
    %v12462 = vunpack.c.l.b16 %v12073
    %v12463 = vunpack.c.h.b16 %v12073
    %v12464 = vunpack.c.l.b16 %v12074
    %v12465 = vunpack.c.h.b16 %v12074
    %v12466 = vunpack.c.l.b16 %v12075
    %v12467 = vunpack.c.h.b16 %v12075
    %v12468 = vunpack.c.l.b16 %v12076
    %v12469 = vunpack.c.h.b16 %v12076
    %v12470 = vunpack.c.l.b16 %v12077
    %v12471 = vunpack.c.h.b16 %v12077
    %v12472 = vunpack.c.l.b16 %v12078
    %v12473 = vunpack.c.h.b16 %v12078
    %v12474 = vunpack.c.l.b16 %v12079
    %v12475 = vunpack.c.h.b16 %v12079
    %v12476 = vunpack.c.l.b16 %v12080
    %v12477 = vunpack.c.h.b16 %v12080
    %v12478 = vunpack.c.l.b16 %v12081
    %v12479 = vunpack.c.h.b16 %v12081
    %v12480 = vunpack.c.l.b16 %v12082
    %v12481 = vunpack.c.h.b16 %v12082
    %v12482 = vunpack.c.l.b16 %v12083
    %v12483 = vunpack.c.h.b16 %v12083
    %v12484 = vunpack.c.l.b16 %v12084
    %v12485 = vunpack.c.h.b16 %v12084
    %v12486 = vunpack.c.l.b16 %v12085
    %v12487 = vunpack.c.h.b16 %v12085
    %v12488 = vunpack.c.l.b16 %v12086
    %v12489 = vunpack.c.h.b16 %v12086
    %v12490 = vunpack.c.l.b16 %v12087
    %v12491 = vunpack.c.h.b16 %v12087
    %v12492 = vunpack.c.l.b16 %v12088
    %v12493 = vunpack.c.h.b16 %v12088
    %v12494 = vpack.c.b16 %v12242, %v12238
    %v12495 = vpack.c.b16 %v12243, %v12239
    %v12496 = vpack.c.b16 %v12244, %v12240
    %v12497 = vpack.c.b16 %v12245, %v12241
    %v12498 = vpack.c.b16 %v12250, %v12246
    %v12499 = vpack.c.b16 %v12251, %v12247
    %v12500 = vpack.c.b16 %v12252, %v12248
    %v12501 = vpack.c.b16 %v12253, %v12249
    %v12502 = vpack.c.b16 %v12258, %v12254
    %v12503 = vpack.c.b16 %v12259, %v12255
    %v12504 = vpack.c.b16 %v12260, %v12256
    %v12505 = vpack.c.b16 %v12261, %v12257
    %v12506 = vpack.c.b16 %v12266, %v12262
    %v12507 = vpack.c.b16 %v12267, %v12263
    %v12508 = vpack.c.b16 %v12268, %v12264
    %v12509 = vpack.c.b16 %v12269, %v12265
    %v12510 = vpack.c.b16 %v12274, %v12270
    %v12511 = vpack.c.b16 %v12275, %v12271
    %v12512 = vpack.c.b16 %v12276, %v12272
    %v12513 = vpack.c.b16 %v12277, %v12273
    %v12514 = vpack.c.b16 %v12282, %v12278
    %v12515 = vpack.c.b16 %v12283, %v12279
    %v12516 = vpack.c.b16 %v12284, %v12280
    %v12517 = vpack.c.b16 %v12285, %v12281
    %v12518 = vpack.c.b16 %v12290, %v12286
    %v12519 = vpack.c.b16 %v12291, %v12287
    %v12520 = vpack.c.b16 %v12292, %v12288
    %v12521 = vpack.c.b16 %v12293, %v12289
    %v12522 = vpack.c.b16 %v12298, %v12294
    %v12523 = vpack.c.b16 %v12299, %v12295
    %v12524 = vpack.c.b16 %v12300, %v12296
    %v12525 = vpack.c.b16 %v12301, %v12297
    %v12526 = vpack.c.b16 %v12306, %v12302
    %v12527 = vpack.c.b16 %v12307, %v12303
    %v12528 = vpack.c.b16 %v12308, %v12304
    %v12529 = vpack.c.b16 %v12309, %v12305
    %v12530 = vpack.c.b16 %v12314, %v12310
    %v12531 = vpack.c.b16 %v12315, %v12311
    %v12532 = vpack.c.b16 %v12316, %v12312
    %v12533 = vpack.c.b16 %v12317, %v12313
    %v12534 = vpack.c.b16 %v12322, %v12318
    %v12535 = vpack.c.b16 %v12323, %v12319
    %v12536 = vpack.c.b16 %v12324, %v12320
    %v12537 = vpack.c.b16 %v12325, %v12321
    %v12538 = vpack.c.b16 %v12330, %v12326
    %v12539 = vpack.c.b16 %v12331, %v12327
    %v12540 = vpack.c.b16 %v12332, %v12328
    %v12541 = vpack.c.b16 %v12333, %v12329
    %v12542 = vpack.c.b16 %v12338, %v12334
    %v12543 = vpack.c.b16 %v12339, %v12335
    %v12544 = vpack.c.b16 %v12340, %v12336
    %v12545 = vpack.c.b16 %v12341, %v12337
    %v12546 = vpack.c.b16 %v12346, %v12342
    %v12547 = vpack.c.b16 %v12347, %v12343
    %v12548 = vpack.c.b16 %v12348, %v12344
    %v12549 = vpack.c.b16 %v12349, %v12345
    %v12550 = vpack.c.b16 %v12354, %v12350
    %v12551 = vpack.c.b16 %v12355, %v12351
    %v12552 = vpack.c.b16 %v12356, %v12352
    %v12553 = vpack.c.b16 %v12357, %v12353
    %v12554 = vpack.c.b16 %v12362, %v12358
    %v12555 = vpack.c.b16 %v12363, %v12359
    %v12556 = vpack.c.b16 %v12364, %v12360
    %v12557 = vpack.c.b16 %v12365, %v12361
    %v12558 = vpack.c.b16 %v12370, %v12366
    %v12559 = vpack.c.b16 %v12371, %v12367
    %v12560 = vpack.c.b16 %v12372, %v12368
    %v12561 = vpack.c.b16 %v12373, %v12369
    %v12562 = vpack.c.b16 %v12378, %v12374
    %v12563 = vpack.c.b16 %v12379, %v12375
    %v12564 = vpack.c.b16 %v12380, %v12376
    %v12565 = vpack.c.b16 %v12381, %v12377
    %v12566 = vpack.c.b16 %v12386, %v12382
    %v12567 = vpack.c.b16 %v12387, %v12383
    %v12568 = vpack.c.b16 %v12388, %v12384
    %v12569 = vpack.c.b16 %v12389, %v12385
    %v12570 = vpack.c.b16 %v12394, %v12390
    %v12571 = vpack.c.b16 %v12395, %v12391
    %v12572 = vpack.c.b16 %v12396, %v12392
    %v12573 = vpack.c.b16 %v12397, %v12393
    %v12574 = vpack.c.b16 %v12402, %v12398
    %v12575 = vpack.c.b16 %v12403, %v12399
    %v12576 = vpack.c.b16 %v12404, %v12400
    %v12577 = vpack.c.b16 %v12405, %v12401
    %v12578 = vpack.c.b16 %v12410, %v12406
    %v12579 = vpack.c.b16 %v12411, %v12407
    %v12580 = vpack.c.b16 %v12412, %v12408
    %v12581 = vpack.c.b16 %v12413, %v12409
    %v12582 = vpack.c.b16 %v12418, %v12414
    %v12583 = vpack.c.b16 %v12419, %v12415
    %v12584 = vpack.c.b16 %v12420, %v12416
    %v12585 = vpack.c.b16 %v12421, %v12417
    %v12586 = vpack.c.b16 %v12426, %v12422
    %v12587 = vpack.c.b16 %v12427, %v12423
    %v12588 = vpack.c.b16 %v12428, %v12424
    %v12589 = vpack.c.b16 %v12429, %v12425
    %v12590 = vpack.c.b16 %v12434, %v12430
    %v12591 = vpack.c.b16 %v12435, %v12431
    %v12592 = vpack.c.b16 %v12436, %v12432
    %v12593 = vpack.c.b16 %v12437, %v12433
    %v12594 = vpack.c.b16 %v12442, %v12438
    %v12595 = vpack.c.b16 %v12443, %v12439
    %v12596 = vpack.c.b16 %v12444, %v12440
    %v12597 = vpack.c.b16 %v12445, %v12441
    %v12598 = vpack.c.b16 %v12450, %v12446
    %v12599 = vpack.c.b16 %v12451, %v12447
    %v12600 = vpack.c.b16 %v12452, %v12448
    %v12601 = vpack.c.b16 %v12453, %v12449
    %v12602 = vpack.c.b16 %v12458, %v12454
    %v12603 = vpack.c.b16 %v12459, %v12455
    %v12604 = vpack.c.b16 %v12460, %v12456
    %v12605 = vpack.c.b16 %v12461, %v12457
    %v12606 = vpack.c.b16 %v12466, %v12462
    %v12607 = vpack.c.b16 %v12467, %v12463
    %v12608 = vpack.c.b16 %v12468, %v12464
    %v12609 = vpack.c.b16 %v12469, %v12465
    %v12610 = vpack.c.b16 %v12474, %v12470
    %v12611 = vpack.c.b16 %v12475, %v12471
    %v12612 = vpack.c.b16 %v12476, %v12472
    %v12613 = vpack.c.b16 %v12477, %v12473
    %v12614 = vpack.c.b16 %v12482, %v12478
    %v12615 = vpack.c.b16 %v12483, %v12479
    %v12616 = vpack.c.b16 %v12484, %v12480
    %v12617 = vpack.c.b16 %v12485, %v12481
    %v12618 = vpack.c.b16 %v12490, %v12486
    %v12619 = vpack.c.b16 %v12491, %v12487
    %v12620 = vpack.c.b16 %v12492, %v12488
    %v12621 = vpack.c.b16 %v12493, %v12489
    %12750 = vmatprep.subr.bf16.mxu0 %v12495
    %12751 = vmatpush1.bf16.msra.mxu0 %v12494
    %12752 = vmatprep.subr.bf16.mxu0 %v12499
    %12753 = vmatpush1.bf16.msra.mxu0 %v12498
    %12754 = vmatprep.subr.bf16.mxu0 %v12503
    %12755 = vmatpush1.bf16.msra.mxu0 %v12502
    %12756 = vmatprep.subr.bf16.mxu0 %v12507
    %12757 = vmatpush1.bf16.msra.mxu0 %v12506
    %12758 = vmatprep.subr.bf16.mxu0 %v12511
    %12759 = vmatpush1.bf16.msra.mxu0 %v12510
    %12760 = vmatprep.subr.bf16.mxu0 %v12515
    %12761 = vmatpush1.bf16.msra.mxu0 %v12514
    %12762 = vmatprep.subr.bf16.mxu0 %v12519
    %12763 = vmatpush1.bf16.msra.mxu0 %v12518
    %12764 = vmatprep.subr.bf16.mxu0 %v12523
    %12765 = vmatpush1.bf16.msra.mxu0 %v12522
    %12766 = vmatprep.subr.bf16.mxu0 %v12527
    %12767 = vmatpush1.bf16.msra.mxu0 %v12526
    %12768 = vmatprep.subr.bf16.mxu0 %v12531
    %12769 = vmatpush1.bf16.msra.mxu0 %v12530
    %12770 = vmatprep.subr.bf16.mxu0 %v12535
    %12771 = vmatpush1.bf16.msra.mxu0 %v12534
    %12772 = vmatprep.subr.bf16.mxu0 %v12539
    %12773 = vmatpush1.bf16.msra.mxu0 %v12538
    %12774 = vmatprep.subr.bf16.mxu0 %v12543
    %12775 = vmatpush1.bf16.msra.mxu0 %v12542
    %12776 = vmatprep.subr.bf16.mxu0 %v12547
    %12777 = vmatpush1.bf16.msra.mxu0 %v12546
    %12778 = vmatprep.subr.bf16.mxu0 %v12551
    %12779 = vmatpush1.bf16.msra.mxu0 %v12550
    %12780 = vmatprep.subr.bf16.mxu0 %v12555
    %12781 = vmatpush1.bf16.msra.mxu0 %v12554
    %12782 = vmatprep.mubr.bf16.mxu0 %v11958
    %12783 = vmatmul.mubr.bf16.gmra.mrb[0].mxu0 %v11957
    %v12784 = vpop.f32.mrb[0].mxu0
    %v12785 = vadd.f32 %v12093, %v12784
    %v12786 = vpop.f32.mrb[0].mxu0
    %v12787 = vadd.f32 %v12097, %v12786
    %v12788 = vpop.f32.mrb[0].mxu0
    %v12789 = vpop.f32.mrb[0].mxu0
    %12790 = vdwg.mxu0
    %12791 = vmatprep.subr.bf16.mxu0 %v12559
    %12792 = vmatpush1.bf16.msra.mxu0 %v12558
    %12793 = vmatprep.subr.bf16.mxu0 %v12563
    %12794 = vmatpush1.bf16.msra.mxu0 %v12562
    %12795 = vmatprep.subr.bf16.mxu0 %v12567
    %12796 = vmatpush1.bf16.msra.mxu0 %v12566
    %12797 = vmatprep.subr.bf16.mxu0 %v12571
    %12798 = vmatpush1.bf16.msra.mxu0 %v12570
    %12799 = vmatprep.subr.bf16.mxu0 %v12575
    %12800 = vmatpush1.bf16.msra.mxu0 %v12574
    %12801 = vmatprep.subr.bf16.mxu0 %v12579
    %12802 = vmatpush1.bf16.msra.mxu0 %v12578
    %12803 = vmatprep.subr.bf16.mxu0 %v12583
    %12804 = vmatpush1.bf16.msra.mxu0 %v12582
    %12805 = vmatprep.subr.bf16.mxu0 %v12587
    %12806 = vmatpush1.bf16.msra.mxu0 %v12586
    %12807 = vmatprep.subr.bf16.mxu0 %v12591
    %12808 = vmatpush1.bf16.msra.mxu0 %v12590
    %12809 = vmatprep.subr.bf16.mxu0 %v12595
    %12810 = vmatpush1.bf16.msra.mxu0 %v12594
    %12811 = vmatprep.subr.bf16.mxu0 %v12599
    %12812 = vmatpush1.bf16.msra.mxu0 %v12598
    %12813 = vmatprep.subr.bf16.mxu0 %v12603
    %12814 = vmatpush1.bf16.msra.mxu0 %v12602
    %12815 = vmatprep.subr.bf16.mxu0 %v12607
    %12816 = vmatpush1.bf16.msra.mxu0 %v12606
    %12817 = vmatprep.subr.bf16.mxu0 %v12611
    %12818 = vmatpush1.bf16.msra.mxu0 %v12610
    %12819 = vmatprep.subr.bf16.mxu0 %v12615
    %12820 = vmatpush1.bf16.msra.mxu0 %v12614
    %12821 = vmatprep.subr.bf16.mxu0 %v12619
    %12822 = vmatpush1.bf16.msra.mxu0 %v12618
    %12823 = vmatprep.mubr.bf16.mxu0 %v11960
    %12824 = vmatmul.mubr.bf16.gmra.mrb[0].mxu0 %v11959
    %v12825 = vpop.f32.mrb[0].mxu0
    %v12826 = vadd.f32 %v12785, %v12825
    %v12827 = vpop.f32.mrb[0].mxu0
    %v12828 = vadd.f32 %v12787, %v12827
    %v12829 = vpop.f32.mrb[0].mxu0
    %v12830 = vpop.f32.mrb[0].mxu0
    %12831 = vdwg.mxu0
    %12832 = vmatprep.subr.bf16.mxu0 %v12497
    %12833 = vmatpush1.bf16.msra.mxu0 %v12496
    %12834 = vmatprep.subr.bf16.mxu0 %v12501
    %12835 = vmatpush1.bf16.msra.mxu0 %v12500
    %12836 = vmatprep.subr.bf16.mxu0 %v12505
    %12837 = vmatpush1.bf16.msra.mxu0 %v12504
    %12838 = vmatprep.subr.bf16.mxu0 %v12509
    %12839 = vmatpush1.bf16.msra.mxu0 %v12508
    %12840 = vmatprep.subr.bf16.mxu0 %v12513
    %12841 = vmatpush1.bf16.msra.mxu0 %v12512
    %12842 = vmatprep.subr.bf16.mxu0 %v12517
    %12843 = vmatpush1.bf16.msra.mxu0 %v12516
    %12844 = vmatprep.subr.bf16.mxu0 %v12521
    %12845 = vmatpush1.bf16.msra.mxu0 %v12520
    %12846 = vmatprep.subr.bf16.mxu0 %v12525
    %12847 = vmatpush1.bf16.msra.mxu0 %v12524
    %12848 = vmatprep.subr.bf16.mxu0 %v12529
    %12849 = vmatpush1.bf16.msra.mxu0 %v12528
    %12850 = vmatprep.subr.bf16.mxu0 %v12533
    %12851 = vmatpush1.bf16.msra.mxu0 %v12532
    %12852 = vmatprep.subr.bf16.mxu0 %v12537
    %12853 = vmatpush1.bf16.msra.mxu0 %v12536
    %12854 = vmatprep.subr.bf16.mxu0 %v12541
    %12855 = vmatpush1.bf16.msra.mxu0 %v12540
    %12856 = vmatprep.subr.bf16.mxu0 %v12545
    %12857 = vmatpush1.bf16.msra.mxu0 %v12544
    %12858 = vmatprep.subr.bf16.mxu0 %v12549
    %12859 = vmatpush1.bf16.msra.mxu0 %v12548
    %12860 = vmatprep.subr.bf16.mxu0 %v12553
    %12861 = vmatpush1.bf16.msra.mxu0 %v12552
    %12862 = vmatprep.subr.bf16.mxu0 %v12557
    %12863 = vmatpush1.bf16.msra.mxu0 %v12556
    %12864 = vmatprep.mubr.bf16.mxu0 %v11958
    %12865 = vmatmul.mubr.bf16.gmra.mrb[0].mxu0 %v11957
    %v12866 = vpop.f32.mrb[0].mxu0
    %v12867 = vadd.f32 %v12101, %v12866
    %v12868 = vpop.f32.mrb[0].mxu0
    %v12869 = vadd.f32 %v12105, %v12868
    %v12870 = vpop.f32.mrb[0].mxu0
    %v12871 = vpop.f32.mrb[0].mxu0
    %12872 = vdwg.mxu0
    %12873 = vmatprep.subr.bf16.mxu0 %v12561
    %12874 = vmatpush1.bf16.msra.mxu0 %v12560
    %12875 = vmatprep.subr.bf16.mxu0 %v12565
    %12876 = vmatpush1.bf16.msra.mxu0 %v12564
    %12877 = vmatprep.subr.bf16.mxu0 %v12569
    %12878 = vmatpush1.bf16.msra.mxu0 %v12568
    %12879 = vmatprep.subr.bf16.mxu0 %v12573
    %12880 = vmatpush1.bf16.msra.mxu0 %v12572
    %12881 = vmatprep.subr.bf16.mxu0 %v12577
    %12882 = vmatpush1.bf16.msra.mxu0 %v12576
    %12883 = vmatprep.subr.bf16.mxu0 %v12581
    %12884 = vmatpush1.bf16.msra.mxu0 %v12580
    %12885 = vmatprep.subr.bf16.mxu0 %v12585
    %12886 = vmatpush1.bf16.msra.mxu0 %v12584
    %12887 = vmatprep.subr.bf16.mxu0 %v12589
    %12888 = vmatpush1.bf16.msra.mxu0 %v12588
    %12889 = vmatprep.subr.bf16.mxu0 %v12593
    %12890 = vmatpush1.bf16.msra.mxu0 %v12592
    %12891 = vmatprep.subr.bf16.mxu0 %v12597
    %12892 = vmatpush1.bf16.msra.mxu0 %v12596
    %12893 = vmatprep.subr.bf16.mxu0 %v12601
    %12894 = vmatpush1.bf16.msra.mxu0 %v12600
    %12895 = vmatprep.subr.bf16.mxu0 %v12605
    %12896 = vmatpush1.bf16.msra.mxu0 %v12604
    %12897 = vmatprep.subr.bf16.mxu0 %v12609
    %12898 = vmatpush1.bf16.msra.mxu0 %v12608
    %12899 = vmatprep.subr.bf16.mxu0 %v12613
    %12900 = vmatpush1.bf16.msra.mxu0 %v12612
    %12901 = vmatprep.subr.bf16.mxu0 %v12617
    %12902 = vmatpush1.bf16.msra.mxu0 %v12616
    %12903 = vmatprep.subr.bf16.mxu0 %v12621
    %12904 = vmatpush1.bf16.msra.mxu0 %v12620
    %12905 = vmatprep.mubr.bf16.mxu0 %v11960
    %12906 = vmatmul.mubr.bf16.gmra.mrb[0].mxu0 %v11959
    %v12907 = vpop.f32.mrb[0].mxu0
    %v12908 = vadd.f32 %v12867, %v12907
    %v12909 = vpop.f32.mrb[0].mxu0
    %v12910 = vadd.f32 %v12869, %v12909
    %v12911 = vpop.f32.mrb[0].mxu0
    %v12912 = vpop.f32.mrb[0].mxu0
    %12913 = vdwg.mxu0
    %s12914 = scalar_lea.vmem [#allocation17], 7
    %v12915 = vld [vmem:[%s12914] ss:$8 sm:$0xf]
    %s12916 = scalar_lea.vmem [#allocation17], 32
    %v12917 = vld [vmem:[%s12916] ss:$8 sm:$0xf]
    %v12918 = vadd.f32 %v12826, %v12828
    %v12919 = vadd.f32 %v12918, %v12908
    %v12920 = vadd.f32 %v12919, %v12910
    %12921 = vadd.xlane.f32.xlu0 %v12920
    %v12922 = vpop.xlane.xlu0 %12921
    %v12923 = vmul.f32 %v12922, %v10798
    %v12924 = vmul.f32 %v12826, %v12826
    %v12925 = vmul.f32 %v12828, %v12828
    %v12926 = vmul.f32 %v12908, %v12908
    %v12927 = vmul.f32 %v12910, %v12910
    %v12928 = vadd.f32 %v12924, %v12925
    %v12929 = vadd.f32 %v12928, %v12926
    %v12930 = vadd.f32 %v12929, %v12927
    %12931 = vadd.xlane.f32.xlu0 %v12930
    %v12932 = vpop.xlane.xlu0 %12931
    %v12933 = vmul.f32 %v12932, %v10798
    %v12934 = vmul.f32 %v12923, %v12923
    %v12935 = vsub.f32 %v12933, %v12934
    %v12936 = vmax.f32 %v12935, 0.0
    %v12937 = vadd.f32 %v12936, 1e-05
    %v12938 = vrsqrt.pop %v12937
    %v12939 = vsub.f32 %v12826, %v12923
    %v12940 = vsub.f32 %v12828, %v12923
    %v12941 = vsub.f32 %v12908, %v12923
    %v12942 = vsub.f32 %v12910, %v12923
    %v12943 = vmul.f32 %v12939, %v12938
    %v12944 = vmul.f32 %v12940, %v12938
    %v12945 = vmul.f32 %v12941, %v12938
    %v12946 = vmul.f32 %v12942, %v12938
    %v12948 = vlaneseq
    %v12949 = vshrl.u32 %v12948, 7
    %v12950 = vsub.s32 0, %v12949
    %v12951 = vrot.slane %v12915, %v12950
    %v12952 = vlaneseq
    %v12953 = vshrl.u32 %v12952, 7
    %v12954 = vsub.s32 1, %v12953
    %v12955 = vrot.slane %v12915, %v12954
    %v12956 = vlaneseq
    %v12957 = vshrl.u32 %v12956, 7
    %v12958 = vsub.s32 2, %v12957
    %v12959 = vrot.slane %v12915, %v12958
    %v12960 = vlaneseq
    %v12961 = vshrl.u32 %v12960, 7
    %v12962 = vsub.s32 3, %v12961
    %v12963 = vrot.slane %v12915, %v12962
    %v12968 = vmul.f32 %v12943, %v12951
    %v12969 = vmul.f32 %v12944, %v12955
    %v12970 = vmul.f32 %v12945, %v12959
    %v12971 = vmul.f32 %v12946, %v12963
    %v12973 = vlaneseq
    %v12974 = vshrl.u32 %v12973, 7
    %v12975 = vsub.s32 0, %v12974
    %v12976 = vrot.slane %v12917, %v12975
    %v12977 = vlaneseq
    %v12978 = vshrl.u32 %v12977, 7
    %v12979 = vsub.s32 1, %v12978
    %v12980 = vrot.slane %v12917, %v12979
    %v12981 = vlaneseq
    %v12982 = vshrl.u32 %v12981, 7
    %v12983 = vsub.s32 2, %v12982
    %v12984 = vrot.slane %v12917, %v12983
    %v12985 = vlaneseq
    %v12986 = vshrl.u32 %v12985, 7
    %v12987 = vsub.s32 3, %v12986
    %v12988 = vrot.slane %v12917, %v12987
    %v12993 = vadd.f32 %v12968, %v12976
    %v12994 = vadd.f32 %v12969, %v12980
    %v12995 = vadd.f32 %v12970, %v12984
    %v12996 = vadd.f32 %v12971, %v12988
    %v12997 = vadd.f32 %v10889, %v12993
    %v12998 = vadd.f32 %v10890, %v12994
    %v12999 = vadd.f32 %v10891, %v12995
    %v13000 = vadd.f32 %v10892, %v12996
    %v13001 = vld [vmem:[#allocation19] sm:$0x1]
    %v13002 = vpack.c.bf16 %v12997, %v12997
    %v13003 = vpack.c.bf16 %v12998, %v12998
    %v13004 = vpack.c.bf16 %v12999, %v12999
    %v13005 = vpack.c.bf16 %v13000, %v13000
    %v13006 = vld [vmem:[#allocation14] sm:$0xf]
    %v13007 = vld [vmem:[#allocation14 + $0x4] sm:$0xf]
    %v13008 = vld [vmem:[#allocation14 + $0x8] sm:$0xf]
    %v13009 = vld [vmem:[#allocation14 + $0xc] sm:$0xf]
    %v13010 = vld [vmem:[#allocation14 + $0x10] sm:$0xf]
    %v13011 = vld [vmem:[#allocation14 + $0x14] sm:$0xf]
    %v13012 = vld [vmem:[#allocation14 + $0x18] sm:$0xf]
    %v13013 = vld [vmem:[#allocation14 + $0x1c] sm:$0xf]
    %v13014 = vld [vmem:[#allocation14 + $0x20] sm:$0xf]
    %v13015 = vld [vmem:[#allocation14 + $0x24] sm:$0xf]
    %v13016 = vld [vmem:[#allocation14 + $0x28] sm:$0xf]
    %v13017 = vld [vmem:[#allocation14 + $0x2c] sm:$0xf]
    %v13018 = vld [vmem:[#allocation14 + $0x30] sm:$0xf]
    %v13019 = vld [vmem:[#allocation14 + $0x34] sm:$0xf]
    %v13020 = vld [vmem:[#allocation14 + $0x38] sm:$0xf]
    %v13021 = vld [vmem:[#allocation14 + $0x3c] sm:$0xf]
    %v13022 = vld [vmem:[#allocation14 + $0x40] sm:$0xf]
    %v13023 = vld [vmem:[#allocation14 + $0x44] sm:$0xf]
    %v13024 = vld [vmem:[#allocation14 + $0x48] sm:$0xf]
    %v13025 = vld [vmem:[#allocation14 + $0x4c] sm:$0xf]
    %v13026 = vld [vmem:[#allocation14 + $0x50] sm:$0xf]
    %v13027 = vld [vmem:[#allocation14 + $0x54] sm:$0xf]
    %v13028 = vld [vmem:[#allocation14 + $0x58] sm:$0xf]
    %v13029 = vld [vmem:[#allocation14 + $0x5c] sm:$0xf]
    %v13030 = vld [vmem:[#allocation14 + $0x60] sm:$0xf]
    %v13031 = vld [vmem:[#allocation14 + $0x64] sm:$0xf]
    %v13032 = vld [vmem:[#allocation14 + $0x68] sm:$0xf]
    %v13033 = vld [vmem:[#allocation14 + $0x6c] sm:$0xf]
    %v13034 = vld [vmem:[#allocation14 + $0x70] sm:$0xf]
    %v13035 = vld [vmem:[#allocation14 + $0x74] sm:$0xf]
    %v13036 = vld [vmem:[#allocation14 + $0x78] sm:$0xf]
    %v13037 = vld [vmem:[#allocation14 + $0x7c] sm:$0xf]
    %v13038 = vld [vmem:[#allocation14 + $0x80] sm:$0xf]
    %v13039 = vld [vmem:[#allocation14 + $0x84] sm:$0xf]
    %v13040 = vld [vmem:[#allocation14 + $0x88] sm:$0xf]
    %v13041 = vld [vmem:[#allocation14 + $0x8c] sm:$0xf]
    %v13042 = vld [vmem:[#allocation14 + $0x90] sm:$0xf]
    %v13043 = vld [vmem:[#allocation14 + $0x94] sm:$0xf]
    %v13044 = vld [vmem:[#allocation14 + $0x98] sm:$0xf]
    %v13045 = vld [vmem:[#allocation14 + $0x9c] sm:$0xf]
    %v13046 = vld [vmem:[#allocation14 + $0xa0] sm:$0xf]
    %v13047 = vld [vmem:[#allocation14 + $0xa4] sm:$0xf]
    %v13048 = vld [vmem:[#allocation14 + $0xa8] sm:$0xf]
    %v13049 = vld [vmem:[#allocation14 + $0xac] sm:$0xf]
    %v13050 = vld [vmem:[#allocation14 + $0xb0] sm:$0xf]
    %v13051 = vld [vmem:[#allocation14 + $0xb4] sm:$0xf]
    %v13052 = vld [vmem:[#allocation14 + $0xb8] sm:$0xf]
    %v13053 = vld [vmem:[#allocation14 + $0xbc] sm:$0xf]
    %v13054 = vld [vmem:[#allocation14 + $0xc0] sm:$0xf]
    %v13055 = vld [vmem:[#allocation14 + $0xc4] sm:$0xf]
    %v13056 = vld [vmem:[#allocation14 + $0xc8] sm:$0xf]
    %v13057 = vld [vmem:[#allocation14 + $0xcc] sm:$0xf]
    %v13058 = vld [vmem:[#allocation14 + $0xd0] sm:$0xf]
    %v13059 = vld [vmem:[#allocation14 + $0xd4] sm:$0xf]
    %v13060 = vld [vmem:[#allocation14 + $0xd8] sm:$0xf]
    %v13061 = vld [vmem:[#allocation14 + $0xdc] sm:$0xf]
    %v13062 = vld [vmem:[#allocation14 + $0xe0] sm:$0xf]
    %v13063 = vld [vmem:[#allocation14 + $0xe4] sm:$0xf]
    %v13064 = vld [vmem:[#allocation14 + $0xe8] sm:$0xf]
    %v13065 = vld [vmem:[#allocation14 + $0xec] sm:$0xf]
    %v13066 = vld [vmem:[#allocation14 + $0xf0] sm:$0xf]
    %v13067 = vld [vmem:[#allocation14 + $0xf4] sm:$0xf]
    %v13068 = vld [vmem:[#allocation14 + $0xf8] sm:$0xf]
    %v13069 = vld [vmem:[#allocation14 + $0xfc] sm:$0xf]
    %v13071 = vlaneseq
    %v13072 = vshrl.u32 %v13071, 7
    %v13073 = vsub.s32 0, %v13072
    %v13074 = vrot.slane %v13001, %v13073
    %v13140 = vunpack.c.l.b16 %v13006
    %v13141 = vunpack.c.l.b16 %v13007
    %v13142 = vunpack.c.l.b16 %v13008
    %v13143 = vunpack.c.l.b16 %v13009
    %v13144 = vunpack.c.l.b16 %v13010
    %v13145 = vunpack.c.l.b16 %v13011
    %v13146 = vunpack.c.l.b16 %v13012
    %v13147 = vunpack.c.l.b16 %v13013
    %v13148 = vunpack.c.l.b16 %v13014
    %v13149 = vunpack.c.l.b16 %v13015
    %v13150 = vunpack.c.l.b16 %v13016
    %v13151 = vunpack.c.l.b16 %v13017
    %v13152 = vunpack.c.l.b16 %v13018
    %v13153 = vunpack.c.l.b16 %v13019
    %v13154 = vunpack.c.l.b16 %v13020
    %v13155 = vunpack.c.l.b16 %v13021
    %v13156 = vunpack.c.l.b16 %v13022
    %v13157 = vunpack.c.l.b16 %v13023
    %v13158 = vunpack.c.l.b16 %v13024
    %v13159 = vunpack.c.l.b16 %v13025
    %v13160 = vunpack.c.l.b16 %v13026
    %v13161 = vunpack.c.l.b16 %v13027
    %v13162 = vunpack.c.l.b16 %v13028
    %v13163 = vunpack.c.l.b16 %v13029
    %v13164 = vunpack.c.l.b16 %v13030
    %v13165 = vunpack.c.l.b16 %v13031
    %v13166 = vunpack.c.l.b16 %v13032
    %v13167 = vunpack.c.l.b16 %v13033
    %v13168 = vunpack.c.l.b16 %v13034
    %v13169 = vunpack.c.l.b16 %v13035
    %v13170 = vunpack.c.l.b16 %v13036
    %v13171 = vunpack.c.l.b16 %v13037
    %v13172 = vunpack.c.l.b16 %v13038
    %v13173 = vunpack.c.l.b16 %v13039
    %v13174 = vunpack.c.l.b16 %v13040
    %v13175 = vunpack.c.l.b16 %v13041
    %v13176 = vunpack.c.l.b16 %v13042
    %v13177 = vunpack.c.l.b16 %v13043
    %v13178 = vunpack.c.l.b16 %v13044
    %v13179 = vunpack.c.l.b16 %v13045
    %v13180 = vunpack.c.l.b16 %v13046
    %v13181 = vunpack.c.l.b16 %v13047
    %v13182 = vunpack.c.l.b16 %v13048
    %v13183 = vunpack.c.l.b16 %v13049
    %v13184 = vunpack.c.l.b16 %v13050
    %v13185 = vunpack.c.l.b16 %v13051
    %v13186 = vunpack.c.l.b16 %v13052
    %v13187 = vunpack.c.l.b16 %v13053
    %v13188 = vunpack.c.l.b16 %v13054
    %v13189 = vunpack.c.l.b16 %v13055
    %v13190 = vunpack.c.l.b16 %v13056
    %v13191 = vunpack.c.l.b16 %v13057
    %v13192 = vunpack.c.l.b16 %v13058
    %v13193 = vunpack.c.l.b16 %v13059
    %v13194 = vunpack.c.l.b16 %v13060
    %v13195 = vunpack.c.l.b16 %v13061
    %v13196 = vunpack.c.l.b16 %v13062
    %v13197 = vunpack.c.l.b16 %v13063
    %v13198 = vunpack.c.l.b16 %v13064
    %v13199 = vunpack.c.l.b16 %v13065
    %v13200 = vunpack.c.l.b16 %v13066
    %v13201 = vunpack.c.l.b16 %v13067
    %v13202 = vunpack.c.l.b16 %v13068
    %v13203 = vunpack.c.l.b16 %v13069
    %v13204 = vpack.c.b16 %v13141, %v13140
    %v13205 = vpack.c.b16 %v13143, %v13142
    %v13206 = vpack.c.b16 %v13145, %v13144
    %v13207 = vpack.c.b16 %v13147, %v13146
    %v13208 = vpack.c.b16 %v13149, %v13148
    %v13209 = vpack.c.b16 %v13151, %v13150
    %v13210 = vpack.c.b16 %v13153, %v13152
    %v13211 = vpack.c.b16 %v13155, %v13154
    %v13212 = vpack.c.b16 %v13157, %v13156
    %v13213 = vpack.c.b16 %v13159, %v13158
    %v13214 = vpack.c.b16 %v13161, %v13160
    %v13215 = vpack.c.b16 %v13163, %v13162
    %v13216 = vpack.c.b16 %v13165, %v13164
    %v13217 = vpack.c.b16 %v13167, %v13166
    %v13218 = vpack.c.b16 %v13169, %v13168
    %v13219 = vpack.c.b16 %v13171, %v13170
    %v13220 = vpack.c.b16 %v13173, %v13172
    %v13221 = vpack.c.b16 %v13175, %v13174
    %v13222 = vpack.c.b16 %v13177, %v13176
    %v13223 = vpack.c.b16 %v13179, %v13178
    %v13224 = vpack.c.b16 %v13181, %v13180
    %v13225 = vpack.c.b16 %v13183, %v13182
    %v13226 = vpack.c.b16 %v13185, %v13184
    %v13227 = vpack.c.b16 %v13187, %v13186
    %v13228 = vpack.c.b16 %v13189, %v13188
    %v13229 = vpack.c.b16 %v13191, %v13190
    %v13230 = vpack.c.b16 %v13193, %v13192
    %v13231 = vpack.c.b16 %v13195, %v13194
    %v13232 = vpack.c.b16 %v13197, %v13196
    %v13233 = vpack.c.b16 %v13199, %v13198
    %v13234 = vpack.c.b16 %v13201, %v13200
    %v13235 = vpack.c.b16 %v13203, %v13202
    %13268 = vmatprep.subr.bf16.mxu0 0
    %13269 = vmatpush1.bf16.msra.mxu0 %v13204
    %13270 = vmatprep.subr.bf16.mxu0 0
    %13271 = vmatpush1.bf16.msra.mxu0 %v13205
    %13272 = vmatprep.subr.bf16.mxu0 0
    %13273 = vmatpush1.bf16.msra.mxu0 %v13206
    %13274 = vmatprep.subr.bf16.mxu0 0
    %13275 = vmatpush1.bf16.msra.mxu0 %v13207
    %13276 = vmatprep.subr.bf16.mxu0 0
    %13277 = vmatpush1.bf16.msra.mxu0 %v13208
    %13278 = vmatprep.subr.bf16.mxu0 0
    %13279 = vmatpush1.bf16.msra.mxu0 %v13209
    %13280 = vmatprep.subr.bf16.mxu0 0
    %13281 = vmatpush1.bf16.msra.mxu0 %v13210
    %13282 = vmatprep.subr.bf16.mxu0 0
    %13283 = vmatpush1.bf16.msra.mxu0 %v13211
    %13284 = vmatprep.subr.bf16.mxu0 0
    %13285 = vmatpush1.bf16.msra.mxu0 %v13212
    %13286 = vmatprep.subr.bf16.mxu0 0
    %13287 = vmatpush1.bf16.msra.mxu0 %v13213
    %13288 = vmatprep.subr.bf16.mxu0 0
    %13289 = vmatpush1.bf16.msra.mxu0 %v13214
    %13290 = vmatprep.subr.bf16.mxu0 0
    %13291 = vmatpush1.bf16.msra.mxu0 %v13215
    %13292 = vmatprep.subr.bf16.mxu0 0
    %13293 = vmatpush1.bf16.msra.mxu0 %v13216
    %13294 = vmatprep.subr.bf16.mxu0 0
    %13295 = vmatpush1.bf16.msra.mxu0 %v13217
    %13296 = vmatprep.subr.bf16.mxu0 0
    %13297 = vmatpush1.bf16.msra.mxu0 %v13218
    %13298 = vmatprep.subr.bf16.mxu0 0
    %13299 = vmatpush1.bf16.msra.mxu0 %v13219
    %13300 = vmatprep.mubr.bf16.mxu0 %v13003
    %13301 = vmatmul.mubr.bf16.gmra.mrb[0].mxu0 %v13002
    %v13302 = vpop.f32.mrb[0].mxu0
    %v13303 = vadd.f32 %v13074, %v13302
    %v13304 = vpop.f32.mrb[0].mxu0
    %v13305 = vpop.f32.mrb[0].mxu0
    %v13306 = vpop.f32.mrb[0].mxu0
    %13307 = vdwg.mxu0
    %13308 = vmatprep.subr.bf16.mxu0 0
    %13309 = vmatpush1.bf16.msra.mxu0 %v13220
    %13310 = vmatprep.subr.bf16.mxu0 0
    %13311 = vmatpush1.bf16.msra.mxu0 %v13221
    %13312 = vmatprep.subr.bf16.mxu0 0
    %13313 = vmatpush1.bf16.msra.mxu0 %v13222
    %13314 = vmatprep.subr.bf16.mxu0 0
    %13315 = vmatpush1.bf16.msra.mxu0 %v13223
    %13316 = vmatprep.subr.bf16.mxu0 0
    %13317 = vmatpush1.bf16.msra.mxu0 %v13224
    %13318 = vmatprep.subr.bf16.mxu0 0
    %13319 = vmatpush1.bf16.msra.mxu0 %v13225
    %13320 = vmatprep.subr.bf16.mxu0 0
    %13321 = vmatpush1.bf16.msra.mxu0 %v13226
    %13322 = vmatprep.subr.bf16.mxu0 0
    %13323 = vmatpush1.bf16.msra.mxu0 %v13227
    %13324 = vmatprep.subr.bf16.mxu0 0
    %13325 = vmatpush1.bf16.msra.mxu0 %v13228
    %13326 = vmatprep.subr.bf16.mxu0 0
    %13327 = vmatpush1.bf16.msra.mxu0 %v13229
    %13328 = vmatprep.subr.bf16.mxu0 0
    %13329 = vmatpush1.bf16.msra.mxu0 %v13230
    %13330 = vmatprep.subr.bf16.mxu0 0
    %13331 = vmatpush1.bf16.msra.mxu0 %v13231
    %13332 = vmatprep.subr.bf16.mxu0 0
    %13333 = vmatpush1.bf16.msra.mxu0 %v13232
    %13334 = vmatprep.subr.bf16.mxu0 0
    %13335 = vmatpush1.bf16.msra.mxu0 %v13233
    %13336 = vmatprep.subr.bf16.mxu0 0
    %13337 = vmatpush1.bf16.msra.mxu0 %v13234
    %13338 = vmatprep.subr.bf16.mxu0 0
    %13339 = vmatpush1.bf16.msra.mxu0 %v13235
    %13340 = vmatprep.mubr.bf16.mxu0 %v13005
    %13341 = vmatmul.mubr.bf16.gmra.mrb[0].mxu0 %v13004
    %v13342 = vpop.f32.mrb[0].mxu0
    %v13343 = vadd.f32 %v13303, %v13342
    %v13344 = vpop.f32.mrb[0].mxu0
    %v13345 = vpop.f32.mrb[0].mxu0
    %v13346 = vpop.f32.mrb[0].mxu0
    %13347 = vdwg.mxu0
    %13348 = vst [vmem:[#allocation20] sm:$0xff] %v13343
    // Predicated region
    $region90: #{tpu_custom_call.1} parent=1 // pred_check
      _
    $region91: #{tpu_custom_call.1} parent=1 // pred_check_branch
      %13350 = sbr.rel (0) target = $region93
    $region92: #{tpu_custom_call.1} parent=1 // pred_region
      %s13352 = ssub.s32 128, 128
      %13353 = vsyncadd [#allocation4], %s13352
      %s13355 = sshll.u32 [#allocation20], 4
      %s13356 = int_to_ptr.vmem [resolvable:$true] %s13355
      %13358 = dma.vmem_to_hbm [thread:$0]  %s13356, 128, %s11, [#allocation4]
    $region93: #{tpu_custom_call.1} parent=1 // pred_fallthru
      _
    // Predicated region
    $region94: #{tpu_custom_call.1} parent=1 // pred_check
      _
    $region95: #{tpu_custom_call.1} parent=1 // pred_check_branch
      %13360 = sbr.rel (0) target = $region97
    $region96: #{tpu_custom_call.1} parent=1 // pred_region
      %13361 = dma.done [#allocation4], 128
    $region97: #{tpu_custom_call.1} parent=1 // pred_fallthru
      _
    %13362 = vsyncpa [#allocation3], 1
    %13363 = vsyncpa [#allocation6], 1
    %13364 = vsyncpa [#allocation9], 1
    %13365 = vsyncpa [#allocation12], 1
    %13366 = vsyncpa [#allocation15], 1
    %13367 = vsyncpa [#allocation18], 1
    %13368 = vsyncpa [#allocation4], 1

</llo_original>
